<compile_context>
chip_gen: v6e
topology: v6e:2x2x1
jax: 0.10.0
libtpu: 0.0.40
codegen_flags: <defaults>
</compile_context>

<pallas_src>
from functools import partial

import jax
import jax.numpy as jnp
from jax import lax
from jax.experimental import pallas as pl
from jax.experimental.pallas import tpu as pltpu


# ----------------------------------------------------------------------------
# Per-generation sizing helpers (review: don't hard-code 32 MiB / tile sizes).
# ----------------------------------------------------------------------------
def _vmem_limit_bytes():
    """Scoped-VMEM limit derived from the chip: v5e/v6e have 128 MiB physical
    (default scoped limit leaves half unused), v7x only 64 MiB."""
    try:
        cap = int(pltpu.get_tpu_info().vmem_capacity_bytes)
    except Exception:  # interpret mode / older runtimes
        cap = 128 * 1024 * 1024
    return max(32 * 1024 * 1024, min(3 * cap // 4, 96 * 1024 * 1024))


def _pick_row_tile(H, W, C, itemsize, target_bytes=512 * 1024):
    """Row-tile height TH used by both kernels.

    Wants: TH | H, TH % 8 == 0 (sublane-aligned blocks), TH*W % 128 == 0
    (lane-dense conv output store, unmasked vst), >= 2 tiles per image (keeps
    both v7x TensorCores busy) and enough rows per step to amortise per-step
    overhead and the 8-row halo over-fetch.  Falls back to the whole image
    (degenerate single tile, halo gates stay off) when no such divisor exists.
    """
    if H % 8 != 0 or H < 16:
        return H
    cands = [th for th in range(8, H // 2 + 1, 8)
             if H % th == 0 and (th * W) % 128 == 0]
    if not cands:
        return H
    for th in cands:
        if th >= 64 and th * W * C * itemsize >= target_bytes:
            return th
    return cands[-1]


# ----------------------------------------------------------------------------
# Kernel 1: row-tiled global average pool   x (B, C, H, W) -> (B, C, 1) f32
# ----------------------------------------------------------------------------
def _pool_kernel(x_ref, out_ref, *, inv_hw):
    h = pl.program_id(1)

    @pl.when(h == 0)
    def _():
        out_ref[...] = jnp.zeros_like(out_ref)

    x = x_ref[0].astype(jnp.float32)                          # (C, TH, W)
    part = jnp.sum(jnp.sum(x, axis=2), axis=1, keepdims=True)  # (C, 1)
    out_ref[0] = out_ref[0] + part

    @pl.when(h == pl.num_programs(1) - 1)
    def _():
        out_ref[0] = out_ref[0] * inv_hw


def global_avg_pool_nchw(x, th, *, vmem_limit):
    B, C, H, W = x.shape
    return pl.pallas_call(
        partial(_pool_kernel, inv_hw=1.0 / float(H * W)),
        out_shape=jax.ShapeDtypeStruct((B, C, 1), jnp.float32),
        grid=(B, H // th),
        in_specs=[pl.BlockSpec((1, C, th, W), lambda b, h: (b, 0, h, 0))],
        out_specs=pl.BlockSpec((1, C, 1), lambda b, h: (b, 0, 0)),
        compiler_params=pltpu.CompilerParams(
            dimension_semantics=("parallel", "arbitrary"),
            vmem_limit_bytes=vmem_limit),
        cost_estimate=pl.CostEstimate(
            flops=B * C * H * W, transcendentals=0,
            bytes_accessed=x.size * x.dtype.itemsize + B * C * 4),
    )(x)


# ----------------------------------------------------------------------------
# Kernel 2: fused channel-attention scale + zero pad + 3x3 SAME conv (NCHW).
# Per (batch, row-tile) step: 9-tap accumulation of (C,C)@(C,TH*W) matmuls.
# ----------------------------------------------------------------------------
def _attn_conv3x3_kernel(x_ref, up_ref, dn_ref, s_ref, w_ref, b_ref, out_ref,
                         xpad_ref, *, C, TH, W, TOP_ROW):
    h = pl.program_id(1)
    last = pl.num_programs(1) - 1

    # Channel-attention scale folded into the weights (conv is linear in x):
    #   ws[t, co, ci] = w[t, co, ci] * s[ci]     (f32 -> bf16 for the MXU)
    ws = (w_ref[...] * s_ref[...]).astype(jnp.bfloat16)        # (9, C, C)

    # Padded scratch (C, TH+2, W+2): zero the two W-border columns (covers the
    # corners), then write the body rows and the two gated halo rows.  The
    # zero border + halo gating give SAME-conv zero padding with no concats.
    zcol = jnp.zeros((C, TH + 2, 1), jnp.float32)
    xpad_ref[:, :, 0:1] = zcol
    xpad_ref[:, :, W + 1:W + 2] = zcol
    xpad_ref[:, 1:TH + 1, 1:W + 1] = x_ref[0].astype(jnp.float32)

    top = up_ref[0, :, TOP_ROW:TOP_ROW + 1, :]                 # (C, 1, W)
    bot = dn_ref[0, :, 0:1, :]                                 # (C, 1, W)
    gate_t = (h > 0).astype(top.dtype)                         # 0 at image top
    gate_b = (h < last).astype(bot.dtype)                      # 0 at image bottom
    xpad_ref[:, 0:1, 1:W + 1] = (top * gate_t).astype(jnp.float32)
    xpad_ref[:, TH + 1:TH + 2, 1:W + 1] = (bot * gate_b).astype(jnp.float32)

    # 9-tap accumulation straight from the padded scratch (no im2col buffer).
    acc = jnp.zeros((C, TH * W), jnp.float32)
    for dy in range(3):
        for dx in range(3):
            tap = xpad_ref[:, dy:dy + TH, dx:dx + W]           # (C, TH, W) f32
            tap = tap.reshape(C, TH * W).astype(jnp.bfloat16)
            acc = acc + jnp.dot(ws[dy * 3 + dx], tap,
                                preferred_element_type=jnp.float32)

    # NCHW lane-dense store: out block is (1, C, TH*W) with TH*W % 128 == 0
    # (or the full H*W), so the store is unmasked.
    out_ref[0] = acc + b_ref[...]                              # bias (C, 1)


def attn_conv3x3_nchw(x, s_b1c, w9, bias_c1, th, *, vmem_limit):
    """conv3x3(s (.) x, SAME) + bias.  NCHW in, (B, C, H*W) f32 out."""
    B, C, H, W = x.shape
    nh = H // th
    hb = 8 if H % 8 == 0 else H          # halo-source block height (sublane legal)
    t_blk = th // hb                     # th is a multiple of hb by construction
    nhb = H // hb

    in_specs = [
        # main TH rows of the tile
        pl.BlockSpec((1, C, th, W), lambda b, h: (b, 0, h, 0)),
        # 8-row blocks containing the single halo row above / below the tile
        # (clamped at the image borders; their content is gated to zero there)
        pl.BlockSpec((1, C, hb, W),
                     lambda b, h: (b, 0, jnp.maximum(h * t_blk - 1, 0), 0)),
        pl.BlockSpec((1, C, hb, W),
                     lambda b, h: (b, 0, jnp.minimum((h + 1) * t_blk, nhb - 1), 0)),
        pl.BlockSpec((1, 1, C), lambda b, h: (b, 0, 0)),   # attention scale (B,1,C)
        pl.BlockSpec((9, C, C), lambda b, h: (0, 0, 0)),   # 3x3 weights (resident)
        pl.BlockSpec((C, 1), lambda b, h: (0, 0)),         # bias (resident)
    ]

    x_bytes = x.size * x.dtype.itemsize
    return pl.pallas_call(
        partial(_attn_conv3x3_kernel, C=C, TH=th, W=W, TOP_ROW=hb - 1),
        out_shape=jax.ShapeDtypeStruct((B, C, H * W), jnp.float32),
        grid=(B, nh),
        in_specs=in_specs,
        out_specs=pl.BlockSpec((1, C, th * W), lambda b, h: (b, 0, h)),
        scratch_shapes=[pltpu.VMEM((C, th + 2, W + 2), jnp.float32)],
        compiler_params=pltpu.CompilerParams(
            dimension_semantics=("parallel", "parallel"),
            vmem_limit_bytes=vmem_limit),
        cost_estimate=pl.CostEstimate(
            flops=2 * B * H * W * 9 * C * C, transcendentals=0,
            bytes_accessed=x_bytes + B * C * H * W * 4 + w9.size * 4),
    )(x, x, x, s_b1c, w9, bias_c1)


# ----------------------------------------------------------------------------
# Parameter conversion from PyTorch layouts, and the CAS forward pass.
# ----------------------------------------------------------------------------
def convert_params(pt_params):
    C = pt_params["down_w"].shape[0]
    w1 = pt_params["fc0_w"][:, :, 0, 0].T            # Conv2d(C, Cr, 1) -> (C, Cr)
    w2 = pt_params["fc2_w"][:, :, 0, 0].T            # Conv2d(Cr, C, 1) -> (Cr, C)
    # Conv2d(C, C, 3) weight (C_out, C_in, 3, 3) -> (ky, kx, C_out, C_in) -> (9, C_out, C_in)
    w9 = jnp.transpose(pt_params["down_w"], (2, 3, 0, 1)).reshape(9, C, C)
    return {
        "w1": w1, "b1": pt_params["fc0_b"],
        "w2": w2, "b2": pt_params["fc2_b"],
        # kept in f32: scaled by the per-batch attention and cast bf16 in-kernel
        "w9": w9.astype(jnp.float32),
        "bc": pt_params["down_b"].reshape(C, 1).astype(jnp.float32),
    }


def cas_forward(x_nchw, params, is_up=False):
    if is_up:
        # TODO(synk): UpsamplingBilinear2d(scale_factor=2) path not implemented.
        raise NotImplementedError("is_up=True path not implemented")
    B, C, H, W = x_nchw.shape
    # NOTE: if the surrounding model already holds bf16 activations, pass them
    # straight in -- both kernels accept any input dtype and cast in-kernel.
    th = _pick_row_tile(H, W, C, x_nchw.dtype.itemsize)
    vmem_limit = _vmem_limit_bytes()

    pooled = global_avg_pool_nchw(x_nchw, th, vmem_limit=vmem_limit)[:, :, 0]   # (B, C)
    hid = jax.nn.gelu(pooled @ params["w1"] + params["b1"], approximate=False)
    s = jax.nn.sigmoid(hid @ params["w2"] + params["b2"])                        # (B, C)

    out = attn_conv3x3_nchw(x_nchw, s[:, None, :], params["w9"], params["bc"],
                            th, vmem_limit=vmem_limit)
    return out.reshape(B, C, H, W)                                               # free relabel


# ----------------------------------------------------------------------------
# Pure-JAX reference directly from PyTorch-layout weights (NCHW throughout).
# ----------------------------------------------------------------------------
def cas_reference(x_nchw, pt_params, conv_dtype=jnp.float32):
    x = x_nchw.astype(jnp.float32)
    pooled = x.mean(axis=(2, 3))                                                 # (B, C)
    hid = jax.nn.gelu(pooled @ pt_params["fc0_w"][:, :, 0, 0].T + pt_params["fc0_b"],
                      approximate=False)
    s = jax.nn.sigmoid(hid @ pt_params["fc2_w"][:, :, 0, 0].T + pt_params["fc2_b"])
    att = x * s[:, :, None, None]
    out = lax.conv_general_dilated(
        att.astype(conv_dtype), pt_params["down_w"].astype(conv_dtype),
        window_strides=(1, 1), padding="SAME",
        dimension_numbers=("NCHW", "OIHW", "NCHW"),
        preferred_element_type=jnp.float32)
    return out + pt_params["down_b"][None, :, None, None]


if __name__ == "__main__":
    B, C, H, W = 2, 32, 16, 16
    reduction = 16
    Cr = C // reduction

    key = jax.random.PRNGKey(0)
    k = jax.random.split(key, 7)
    # parameters in native PyTorch layouts
    pt_params = {
        "fc0_w": jax.random.normal(k[0], (Cr, C, 1, 1), jnp.float32) * 0.2,   # Conv2d(C, Cr, 1)
        "fc0_b": jax.random.normal(k[1], (Cr,), jnp.float32) * 0.05,
        "fc2_w": jax.random.normal(k[2], (C, Cr, 1, 1), jnp.float32) * 0.2,   # Conv2d(Cr, C, 1)
        "fc2_b": jax.random.normal(k[3], (C,), jnp.float32) * 0.05,
        "down_w": jax.random.normal(k[4], (C, C, 3, 3), jnp.float32) * 0.05,  # Conv2d(C, C, 3, 1, 1)
        "down_b": jax.random.normal(k[5], (C,), jnp.float32) * 0.05,
    }
    x = jax.random.normal(k[6], (B, C, H, W), jnp.float32)

    params = convert_params(pt_params)
    out = jax.block_until_ready(jax.jit(cas_forward)(x, params))
    assert out.shape == (B, C, H, W)

    # full-f32 reference (ground-truth semantics, bf16-MXU precision budget)
    ref_f32 = jax.block_until_ready(cas_reference(x, pt_params, conv_dtype=jnp.float32))
    assert jnp.allclose(out, ref_f32, rtol=2.5e-2, atol=2.5e-2), "mismatch vs f32 reference"

    # bf16-conv reference (rounding points differ slightly: the kernel folds the
    # attention scale into the weights before the bf16 cast)
    ref_bf16 = jax.block_until_ready(cas_reference(x, pt_params, conv_dtype=jnp.bfloat16))
    assert jnp.allclose(out, ref_bf16, rtol=2.5e-2, atol=2.5e-2), "mismatch vs bf16 reference"

    print("KERNEL_OK")
</pallas_src>

<mosaic_0001>
module attributes {stable_mosaic.version = 11 : i64} {
  func.func @_pool_kernel(%arg0: i32, %arg1: i32, %arg2: memref<1x32x8x16xf32, #tpu.memory_space<vmem>>, %arg3: memref<1x32x1xf32, #tpu.memory_space<vmem>>) attributes {dimension_semantics = [#tpu.dimension_semantics<parallel>, #tpu.dimension_semantics<arbitrary>], iteration_bounds = array<i64: 2, 2>, scalar_prefetch = 0 : i64, scratch_operands = 0 : i64, tpu.core_type = #tpu.core_type<tc>, window_params = [{transform_indices = @transform_0, window_bounds = array<i64: 1, 32, 8, 16>}, {transform_indices = @transform_1, window_bounds = array<i64: 1, 32, 1>}]} {
    %c0_i32 = arith.constant 0 : i32
    %0 = arith.cmpi eq, %arg1, %c0_i32 : i32
    %1 = arith.extui %0 : i1 to i32
    %c0_i32_0 = arith.constant 0 : i32
    %2 = arith.cmpi ne, %1, %c0_i32_0 : i32
    scf.if %2 {
      %cst_12 = arith.constant 0.000000e+00 : f32
      %17 = vector.broadcast %cst_12 : f32 to vector<1x32x1xf32>
      %c0_13 = arith.constant 0 : index
      %c0_14 = arith.constant 0 : index
      %c0_15 = arith.constant 0 : index
      %18 = vector.load %arg3[%c0_13, %c0_14, %c0_15] : memref<1x32x1xf32, #tpu.memory_space<vmem>>, vector<1x32x1xf32>
      tpu.vector_store %arg3[%c0_13, %c0_14, %c0_15], %17 {strides = array<i32>} : memref<1x32x1xf32, #tpu.memory_space<vmem>>, vector<1x32x1xf32>,
    } else {
    }
    %c0 = arith.constant 0 : index
    %c0_1 = arith.constant 0 : index
    %c0_2 = arith.constant 0 : index
    %c0_3 = arith.constant 0 : index
    %3 = vector.load %arg2[%c0, %c0_1, %c0_2, %c0_3] : memref<1x32x8x16xf32, #tpu.memory_space<vmem>>, vector<1x32x8x16xf32>
    %4 = vector.shape_cast %3 : vector<1x32x8x16xf32> to vector<32x8x16xf32>
    %cst = arith.constant dense<0.000000e+00> : vector<32x8xf32>
    %5 = vector.multi_reduction <add>, %4, %cst [2] : vector<32x8x16xf32> to vector<32x8xf32>
    %cst_4 = arith.constant dense<0.000000e+00> : vector<32xf32>
    %6 = vector.multi_reduction <add>, %5, %cst_4 [1] : vector<32x8xf32> to vector<32xf32>
    %7 = vector.shape_cast %6 : vector<32xf32> to vector<32x1xf32>
    %c0_5 = arith.constant 0 : index
    %c0_6 = arith.constant 0 : index
    %c0_7 = arith.constant 0 : index
    %8 = vector.load %arg3[%c0_5, %c0_6, %c0_7] : memref<1x32x1xf32, #tpu.memory_space<vmem>>, vector<1x32x1xf32>
    %9 = vector.shape_cast %8 : vector<1x32x1xf32> to vector<32x1xf32>
    %10 = arith.addf %9, %7 : vector<32x1xf32>
    %c0_8 = arith.constant 0 : index
    %c0_9 = arith.constant 0 : index
    %c0_10 = arith.constant 0 : index
    %11 = vector.load %arg3[%c0_8, %c0_9, %c0_10] : memref<1x32x1xf32, #tpu.memory_space<vmem>>, vector<1x32x1xf32>
    %12 = vector.shape_cast %11 : vector<1x32x1xf32> to vector<32x1xf32>
    %13 = vector.shape_cast %10 : vector<32x1xf32> to vector<1x32x1xf32>
    tpu.vector_store %arg3[%c0_8, %c0_9, %c0_10], %13 {strides = array<i32>} : memref<1x32x1xf32, #tpu.memory_space<vmem>>, vector<1x32x1xf32>,
    %c1_i32 = arith.constant 1 : i32
    %14 = arith.cmpi eq, %arg1, %c1_i32 : i32
    %15 = arith.extui %14 : i1 to i32
    %c0_i32_11 = arith.constant 0 : i32
    %16 = arith.cmpi ne, %15, %c0_i32_11 : i32
    scf.if %16 {
      %c0_12 = arith.constant 0 : index
      %c0_13 = arith.constant 0 : index
      %c0_14 = arith.constant 0 : index
      %17 = vector.load %arg3[%c0_12, %c0_13, %c0_14] : memref<1x32x1xf32, #tpu.memory_space<vmem>>, vector<1x32x1xf32>
      %18 = vector.shape_cast %17 : vector<1x32x1xf32> to vector<32x1xf32>
      %cst_15 = arith.constant 3.906250e-03 : f32
      %19 = vector.broadcast %cst_15 : f32 to vector<32x1xf32>
      %20 = arith.mulf %18, %19 : vector<32x1xf32>
      %c0_16 = arith.constant 0 : index
      %c0_17 = arith.constant 0 : index
      %c0_18 = arith.constant 0 : index
      %21 = vector.load %arg3[%c0_16, %c0_17, %c0_18] : memref<1x32x1xf32, #tpu.memory_space<vmem>>, vector<1x32x1xf32>
      %22 = vector.shape_cast %21 : vector<1x32x1xf32> to vector<32x1xf32>
      %23 = vector.shape_cast %20 : vector<32x1xf32> to vector<1x32x1xf32>
      tpu.vector_store %arg3[%c0_16, %c0_17, %c0_18], %23 {strides = array<i32>} : memref<1x32x1xf32, #tpu.memory_space<vmem>>, vector<1x32x1xf32>,
    } else {
    }
    return
  }
  func.func @transform_0(%arg0: i32, %arg1: i32) -> (i32, i32, i32, i32) {
    %c0_i32 = arith.constant 0 : i32
    %c0_i32_0 = arith.constant 0 : i32
    %c0_i32_1 = arith.constant 0 : i32
    return %arg0, %c0_i32, %arg1, %c0_i32_0 : i32, i32, i32, i32
  }
  func.func @transform_1(%arg0: i32, %arg1: i32) -> (i32, i32, i32) {
    %c0_i32 = arith.constant 0 : i32
    %c0_i32_0 = arith.constant 0 : i32
    %c0_i32_1 = arith.constant 0 : i32
    return %arg0, %c0_i32, %c0_i32_0 : i32, i32, i32
  }
}

module attributes {stable_mosaic.version = 11 : i64} {
  func.func @_attn_conv3x3_kernel(%arg0: i32, %arg1: i32, %arg2: memref<1x32x8x16xf32, #tpu.memory_space<vmem>>, %arg3: memref<1x32x8x16xf32, #tpu.memory_space<vmem>>, %arg4: memref<1x32x8x16xf32, #tpu.memory_space<vmem>>, %arg5: memref<1x1x32xf32, #tpu.memory_space<vmem>>, %arg6: memref<9x32x32xf32, #tpu.memory_space<vmem>>, %arg7: memref<32x1xf32, #tpu.memory_space<vmem>>, %arg8: memref<1x32x128xf32, #tpu.memory_space<vmem>>, %arg9: memref<32x10x18xf32, #tpu.memory_space<vmem>>) attributes {dimension_semantics = [#tpu.dimension_semantics<parallel>, #tpu.dimension_semantics<parallel>], iteration_bounds = array<i64: 2, 2>, scalar_prefetch = 0 : i64, scratch_operands = 1 : i64, tpu.core_type = #tpu.core_type<tc>, window_params = [{transform_indices = @transform_0, window_bounds = array<i64: 1, 32, 8, 16>}, {transform_indices = @transform_1, window_bounds = array<i64: 1, 32, 8, 16>}, {transform_indices = @transform_2, window_bounds = array<i64: 1, 32, 8, 16>}, {transform_indices = @transform_3, window_bounds = array<i64: 1, 1, 32>}, {pipeline_mode = #tpu.pipeline_mode<synchronous>, transform_indices = @transform_4, window_bounds = array<i64: 9, 32, 32>}, {pipeline_mode = #tpu.pipeline_mode<synchronous>, transform_indices = @transform_5, window_bounds = array<i64: 32, 1>}, {transform_indices = @transform_6, window_bounds = array<i64: 1, 32, 128>}]} {
    %c0 = arith.constant 0 : index
    %c0_0 = arith.constant 0 : index
    %c0_1 = arith.constant 0 : index
    %0 = vector.load %arg6[%c0, %c0_0, %c0_1] : memref<9x32x32xf32, #tpu.memory_space<vmem>>, vector<9x32x32xf32>
    %c0_2 = arith.constant 0 : index
    %c0_3 = arith.constant 0 : index
    %c0_4 = arith.constant 0 : index
    %1 = vector.load %arg5[%c0_2, %c0_3, %c0_4] : memref<1x1x32xf32, #tpu.memory_space<vmem>>, vector<1x1x32xf32>
    %2 = vector.broadcast %1 : vector<1x1x32xf32> to vector<9x32x32xf32>
    %3 = arith.mulf %0, %2 : vector<9x32x32xf32>
    %4 = arith.truncf %3 : vector<9x32x32xf32> to vector<9x32x32xbf16>
    %cst = arith.constant 0.000000e+00 : f32
    %5 = vector.broadcast %cst : f32 to vector<32x10x1xf32>
    %c0_5 = arith.constant 0 : index
    %c0_6 = arith.constant 0 : index
    %c0_7 = arith.constant 0 : index
    %6 = vector.load %arg9[%c0_5, %c0_6, %c0_7] : memref<32x10x18xf32, #tpu.memory_space<vmem>>, vector<32x10x1xf32>
    tpu.vector_store %arg9[%c0_5, %c0_6, %c0_7], %5 {strides = array<i32>} : memref<32x10x18xf32, #tpu.memory_space<vmem>>, vector<32x10x1xf32>,
    %c0_8 = arith.constant 0 : index
    %c0_9 = arith.constant 0 : index
    %c17 = arith.constant 17 : index
    %7 = vector.load %arg9[%c0_8, %c0_9, %c17] : memref<32x10x18xf32, #tpu.memory_space<vmem>>, vector<32x10x1xf32>
    tpu.vector_store %arg9[%c0_8, %c0_9, %c17], %5 {strides = array<i32>} : memref<32x10x18xf32, #tpu.memory_space<vmem>>, vector<32x10x1xf32>,
    %c0_10 = arith.constant 0 : index
    %c0_11 = arith.constant 0 : index
    %c0_12 = arith.constant 0 : index
    %c0_13 = arith.constant 0 : index
    %8 = vector.load %arg2[%c0_10, %c0_11, %c0_12, %c0_13] : memref<1x32x8x16xf32, #tpu.memory_space<vmem>>, vector<1x32x8x16xf32>
    %9 = vector.shape_cast %8 : vector<1x32x8x16xf32> to vector<32x8x16xf32>
    %c0_14 = arith.constant 0 : index
    %c1 = arith.constant 1 : index
    %c1_15 = arith.constant 1 : index
    %10 = vector.load %arg9[%c0_14, %c1, %c1_15] : memref<32x10x18xf32, #tpu.memory_space<vmem>>, vector<32x8x16xf32>
    tpu.vector_store %arg9[%c0_14, %c1, %c1_15], %9 {strides = array<i32>} : memref<32x10x18xf32, #tpu.memory_space<vmem>>, vector<32x8x16xf32>,
    %c0_16 = arith.constant 0 : index
    %c0_17 = arith.constant 0 : index
    %c7 = arith.constant 7 : index
    %c0_18 = arith.constant 0 : index
    %11 = vector.load %arg3[%c0_16, %c0_17, %c7, %c0_18] : memref<1x32x8x16xf32, #tpu.memory_space<vmem>>, vector<1x32x1x16xf32>
    %12 = vector.shape_cast %11 : vector<1x32x1x16xf32> to vector<32x1x16xf32>
    %c0_19 = arith.constant 0 : index
    %c0_20 = arith.constant 0 : index
    %c0_21 = arith.constant 0 : index
    %c0_22 = arith.constant 0 : index
    %13 = vector.load %arg4[%c0_19, %c0_20, %c0_21, %c0_22] : memref<1x32x8x16xf32, #tpu.memory_space<vmem>>, vector<1x32x1x16xf32>
    %14 = vector.shape_cast %13 : vector<1x32x1x16xf32> to vector<32x1x16xf32>
    %c0_i32 = arith.constant 0 : i32
    %15 = arith.cmpi sgt, %arg1, %c0_i32 : i32
    %16 = arith.extui %15 : i1 to i32
    %17 = arith.sitofp %16 : i32 to f32
    %c1_i32 = arith.constant 1 : i32
    %18 = arith.cmpi slt, %arg1, %c1_i32 : i32
    %19 = arith.extui %18 : i1 to i32
    %20 = arith.sitofp %19 : i32 to f32
    %21 = vector.broadcast %17 : f32 to vector<32x1x16xf32>
    %22 = arith.mulf %12, %21 : vector<32x1x16xf32>
    %c0_23 = arith.constant 0 : index
    %c0_24 = arith.constant 0 : index
    %c1_25 = arith.constant 1 : index
    %23 = vector.load %arg9[%c0_23, %c0_24, %c1_25] : memref<32x10x18xf32, #tpu.memory_space<vmem>>, vector<32x1x16xf32>
    tpu.vector_store %arg9[%c0_23, %c0_24, %c1_25], %22 {strides = array<i32>} : memref<32x10x18xf32, #tpu.memory_space<vmem>>, vector<32x1x16xf32>,
    %24 = vector.broadcast %20 : f32 to vector<32x1x16xf32>
    %25 = arith.mulf %14, %24 : vector<32x1x16xf32>
    %c0_26 = arith.constant 0 : index
    %c9 = arith.constant 9 : index
    %c1_27 = arith.constant 1 : index
    %26 = vector.load %arg9[%c0_26, %c9, %c1_27] : memref<32x10x18xf32, #tpu.memory_space<vmem>>, vector<32x1x16xf32>
    tpu.vector_store %arg9[%c0_26, %c9, %c1_27], %25 {strides = array<i32>} : memref<32x10x18xf32, #tpu.memory_space<vmem>>, vector<32x1x16xf32>,
    %cst_28 = arith.constant 0.000000e+00 : f32
    %27 = vector.broadcast %cst_28 : f32 to vector<32x128xf32>
    %c0_29 = arith.constant 0 : index
    %c0_30 = arith.constant 0 : index
    %c0_31 = arith.constant 0 : index
    %28 = vector.load %arg9[%c0_29, %c0_30, %c0_31] : memref<32x10x18xf32, #tpu.memory_space<vmem>>, vector<32x8x16xf32>
    %29 = vector.shape_cast %28 : vector<32x8x16xf32> to vector<32x128xf32>
    %30 = arith.truncf %29 : vector<32x128xf32> to vector<32x128xbf16>
    %31 = vector.extract_strided_slice %4 {offsets = [0, 0, 0], sizes = [1, 32, 32], strides = [1, 1, 1]} : vector<9x32x32xbf16> to vector<1x32x32xbf16>
    %32 = vector.shape_cast %31 : vector<1x32x32xbf16> to vector<32x32xbf16>
    %cst_32 = arith.constant dense<0.000000e+00> : vector<32x128xf32>
    %33 = tpu.matmul %32, %30, %cst_32 {dimension_numbers = #tpu.dot_dimension_numbers<[1], [0], [0], [1], [0, 0, 1, 1], [], []>} : vector<32x32xbf16>, vector<32x128xbf16>, vector<32x128xf32> -> vector<32x128xf32>
    %34 = arith.addf %27, %33 : vector<32x128xf32>
    %c0_33 = arith.constant 0 : index
    %c0_34 = arith.constant 0 : index
    %c1_35 = arith.constant 1 : index
    %35 = vector.load %arg9[%c0_33, %c0_34, %c1_35] : memref<32x10x18xf32, #tpu.memory_space<vmem>>, vector<32x8x16xf32>
    %36 = vector.shape_cast %35 : vector<32x8x16xf32> to vector<32x128xf32>
    %37 = arith.truncf %36 : vector<32x128xf32> to vector<32x128xbf16>
    %38 = vector.extract_strided_slice %4 {offsets = [1, 0, 0], sizes = [1, 32, 32], strides = [1, 1, 1]} : vector<9x32x32xbf16> to vector<1x32x32xbf16>
    %39 = vector.shape_cast %38 : vector<1x32x32xbf16> to vector<32x32xbf16>
    %cst_36 = arith.constant dense<0.000000e+00> : vector<32x128xf32>
    %40 = tpu.matmul %39, %37, %cst_36 {dimension_numbers = #tpu.dot_dimension_numbers<[1], [0], [0], [1], [0, 0, 1, 1], [], []>} : vector<32x32xbf16>, vector<32x128xbf16>, vector<32x128xf32> -> vector<32x128xf32>
    %41 = arith.addf %34, %40 : vector<32x128xf32>
    %c0_37 = arith.constant 0 : index
    %c0_38 = arith.constant 0 : index
    %c2 = arith.constant 2 : index
    %42 = vector.load %arg9[%c0_37, %c0_38, %c2] : memref<32x10x18xf32, #tpu.memory_space<vmem>>, vector<32x8x16xf32>
    %43 = vector.shape_cast %42 : vector<32x8x16xf32> to vector<32x128xf32>
    %44 = arith.truncf %43 : vector<32x128xf32> to vector<32x128xbf16>
    %45 = vector.extract_strided_slice %4 {offsets = [2, 0, 0], sizes = [1, 32, 32], strides = [1, 1, 1]} : vector<9x32x32xbf16> to vector<1x32x32xbf16>
    %46 = vector.shape_cast %45 : vector<1x32x32xbf16> to vector<32x32xbf16>
    %cst_39 = arith.constant dense<0.000000e+00> : vector<32x128xf32>
    %47 = tpu.matmul %46, %44, %cst_39 {dimension_numbers = #tpu.dot_dimension_numbers<[1], [0], [0], [1], [0, 0, 1, 1], [], []>} : vector<32x32xbf16>, vector<32x128xbf16>, vector<32x128xf32> -> vector<32x128xf32>
    %48 = arith.addf %41, %47 : vector<32x128xf32>
    %c0_40 = arith.constant 0 : index
    %c1_41 = arith.constant 1 : index
    %c0_42 = arith.constant 0 : index
    %49 = vector.load %arg9[%c0_40, %c1_41, %c0_42] : memref<32x10x18xf32, #tpu.memory_space<vmem>>, vector<32x8x16xf32>
    %50 = vector.shape_cast %49 : vector<32x8x16xf32> to vector<32x128xf32>
    %51 = arith.truncf %50 : vector<32x128xf32> to vector<32x128xbf16>
    %52 = vector.extract_strided_slice %4 {offsets = [3, 0, 0], sizes = [1, 32, 32], strides = [1, 1, 1]} : vector<9x32x32xbf16> to vector<1x32x32xbf16>
    %53 = vector.shape_cast %52 : vector<1x32x32xbf16> to vector<32x32xbf16>
    %cst_43 = arith.constant dense<0.000000e+00> : vector<32x128xf32>
    %54 = tpu.matmul %53, %51, %cst_43 {dimension_numbers = #tpu.dot_dimension_numbers<[1], [0], [0], [1], [0, 0, 1, 1], [], []>} : vector<32x32xbf16>, vector<32x128xbf16>, vector<32x128xf32> -> vector<32x128xf32>
    %55 = arith.addf %48, %54 : vector<32x128xf32>
    %c0_44 = arith.constant 0 : index
    %c1_45 = arith.constant 1 : index
    %c1_46 = arith.constant 1 : index
    %56 = vector.load %arg9[%c0_44, %c1_45, %c1_46] : memref<32x10x18xf32, #tpu.memory_space<vmem>>, vector<32x8x16xf32>
    %57 = vector.shape_cast %56 : vector<32x8x16xf32> to vector<32x128xf32>
    %58 = arith.truncf %57 : vector<32x128xf32> to vector<32x128xbf16>
    %59 = vector.extract_strided_slice %4 {offsets = [4, 0, 0], sizes = [1, 32, 32], strides = [1, 1, 1]} : vector<9x32x32xbf16> to vector<1x32x32xbf16>
    %60 = vector.shape_cast %59 : vector<1x32x32xbf16> to vector<32x32xbf16>
    %cst_47 = arith.constant dense<0.000000e+00> : vector<32x128xf32>
    %61 = tpu.matmul %60, %58, %cst_47 {dimension_numbers = #tpu.dot_dimension_numbers<[1], [0], [0], [1], [0, 0, 1, 1], [], []>} : vector<32x32xbf16>, vector<32x128xbf16>, vector<32x128xf32> -> vector<32x128xf32>
    %62 = arith.addf %55, %61 : vector<32x128xf32>
    %c0_48 = arith.constant 0 : index
    %c1_49 = arith.constant 1 : index
    %c2_50 = arith.constant 2 : index
    %63 = vector.load %arg9[%c0_48, %c1_49, %c2_50] : memref<32x10x18xf32, #tpu.memory_space<vmem>>, vector<32x8x16xf32>
    %64 = vector.shape_cast %63 : vector<32x8x16xf32> to vector<32x128xf32>
    %65 = arith.truncf %64 : vector<32x128xf32> to vector<32x128xbf16>
    %66 = vector.extract_strided_slice %4 {offsets = [5, 0, 0], sizes = [1, 32, 32], strides = [1, 1, 1]} : vector<9x32x32xbf16> to vector<1x32x32xbf16>
    %67 = vector.shape_cast %66 : vector<1x32x32xbf16> to vector<32x32xbf16>
    %cst_51 = arith.constant dense<0.000000e+00> : vector<32x128xf32>
    %68 = tpu.matmul %67, %65, %cst_51 {dimension_numbers = #tpu.dot_dimension_numbers<[1], [0], [0], [1], [0, 0, 1, 1], [], []>} : vector<32x32xbf16>, vector<32x128xbf16>, vector<32x128xf32> -> vector<32x128xf32>
    %69 = arith.addf %62, %68 : vector<32x128xf32>
    %c0_52 = arith.constant 0 : index
    %c2_53 = arith.constant 2 : index
    %c0_54 = arith.constant 0 : index
    %70 = vector.load %arg9[%c0_52, %c2_53, %c0_54] : memref<32x10x18xf32, #tpu.memory_space<vmem>>, vector<32x8x16xf32>
    %71 = vector.shape_cast %70 : vector<32x8x16xf32> to vector<32x128xf32>
    %72 = arith.truncf %71 : vector<32x128xf32> to vector<32x128xbf16>
    %73 = vector.extract_strided_slice %4 {offsets = [6, 0, 0], sizes = [1, 32, 32], strides = [1, 1, 1]} : vector<9x32x32xbf16> to vector<1x32x32xbf16>
    %74 = vector.shape_cast %73 : vector<1x32x32xbf16> to vector<32x32xbf16>
    %cst_55 = arith.constant dense<0.000000e+00> : vector<32x128xf32>
    %75 = tpu.matmul %74, %72, %cst_55 {dimension_numbers = #tpu.dot_dimension_numbers<[1], [0], [0], [1], [0, 0, 1, 1], [], []>} : vector<32x32xbf16>, vector<32x128xbf16>, vector<32x128xf32> -> vector<32x128xf32>
    %76 = arith.addf %69, %75 : vector<32x128xf32>
    %c0_56 = arith.constant 0 : index
    %c2_57 = arith.constant 2 : index
    %c1_58 = arith.constant 1 : index
    %77 = vector.load %arg9[%c0_56, %c2_57, %c1_58] : memref<32x10x18xf32, #tpu.memory_space<vmem>>, vector<32x8x16xf32>
    %78 = vector.shape_cast %77 : vector<32x8x16xf32> to vector<32x128xf32>
    %79 = arith.truncf %78 : vector<32x128xf32> to vector<32x128xbf16>
    %80 = vector.extract_strided_slice %4 {offsets = [7, 0, 0], sizes = [1, 32, 32], strides = [1, 1, 1]} : vector<9x32x32xbf16> to vector<1x32x32xbf16>
    %81 = vector.shape_cast %80 : vector<1x32x32xbf16> to vector<32x32xbf16>
    %cst_59 = arith.constant dense<0.000000e+00> : vector<32x128xf32>
    %82 = tpu.matmul %81, %79, %cst_59 {dimension_numbers = #tpu.dot_dimension_numbers<[1], [0], [0], [1], [0, 0, 1, 1], [], []>} : vector<32x32xbf16>, vector<32x128xbf16>, vector<32x128xf32> -> vector<32x128xf32>
    %83 = arith.addf %76, %82 : vector<32x128xf32>
    %c0_60 = arith.constant 0 : index
    %c2_61 = arith.constant 2 : index
    %c2_62 = arith.constant 2 : index
    %84 = vector.load %arg9[%c0_60, %c2_61, %c2_62] : memref<32x10x18xf32, #tpu.memory_space<vmem>>, vector<32x8x16xf32>
    %85 = vector.shape_cast %84 : vector<32x8x16xf32> to vector<32x128xf32>
    %86 = arith.truncf %85 : vector<32x128xf32> to vector<32x128xbf16>
    %87 = vector.extract_strided_slice %4 {offsets = [8, 0, 0], sizes = [1, 32, 32], strides = [1, 1, 1]} : vector<9x32x32xbf16> to vector<1x32x32xbf16>
    %88 = vector.shape_cast %87 : vector<1x32x32xbf16> to vector<32x32xbf16>
    %cst_63 = arith.constant dense<0.000000e+00> : vector<32x128xf32>
    %89 = tpu.matmul %88, %86, %cst_63 {dimension_numbers = #tpu.dot_dimension_numbers<[1], [0], [0], [1], [0, 0, 1, 1], [], []>} : vector<32x32xbf16>, vector<32x128xbf16>, vector<32x128xf32> -> vector<32x128xf32>
    %90 = arith.addf %83, %89 : vector<32x128xf32>
    %c0_64 = arith.constant 0 : index
    %c0_65 = arith.constant 0 : index
    %91 = vector.load %arg7[%c0_64, %c0_65] : memref<32x1xf32, #tpu.memory_space<vmem>>, vector<32x1xf32>
    %92 = vector.broadcast %91 : vector<32x1xf32> to vector<32x128xf32>
    %93 = arith.addf %90, %92 : vector<32x128xf32>
    %c0_66 = arith.constant 0 : index
    %c0_67 = arith.constant 0 : index
    %c0_68 = arith.constant 0 : index
    %94 = vector.load %arg8[%c0_66, %c0_67, %c0_68] : memref<1x32x128xf32, #tpu.memory_space<vmem>>, vector<1x32x128xf32>
    %95 = vector.shape_cast %94 : vector<1x32x128xf32> to vector<32x128xf32>
    %96 = vector.shape_cast %93 : vector<32x128xf32> to vector<1x32x128xf32>
    tpu.vector_store %arg8[%c0_66, %c0_67, %c0_68], %96 {strides = array<i32>} : memref<1x32x128xf32, #tpu.memory_space<vmem>>, vector<1x32x128xf32>,
    return
  }
  func.func @transform_0(%arg0: i32, %arg1: i32) -> (i32, i32, i32, i32) {
    %c0_i32 = arith.constant 0 : i32
    %c0_i32_0 = arith.constant 0 : i32
    %c0_i32_1 = arith.constant 0 : i32
    return %arg0, %c0_i32, %arg1, %c0_i32_0 : i32, i32, i32, i32
  }
  func.func @transform_1(%arg0: i32, %arg1: i32) -> (i32, i32, i32, i32) {
    %c1_i32 = arith.constant 1 : i32
    %0 = arith.muli %arg1, %c1_i32 : i32
    %c1_i32_0 = arith.constant 1 : i32
    %1 = arith.subi %0, %c1_i32_0 : i32
    %c0_i32 = arith.constant 0 : i32
    %2 = arith.maxsi %1, %c0_i32 : i32
    %c0_i32_1 = arith.constant 0 : i32
    %c0_i32_2 = arith.constant 0 : i32
    %c0_i32_3 = arith.constant 0 : i32
    return %arg0, %c0_i32_1, %2, %c0_i32_2 : i32, i32, i32, i32
  }
  func.func @transform_2(%arg0: i32, %arg1: i32) -> (i32, i32, i32, i32) {
    %c1_i32 = arith.constant 1 : i32
    %0 = arith.addi %arg1, %c1_i32 : i32
    %c1_i32_0 = arith.constant 1 : i32
    %1 = arith.muli %0, %c1_i32_0 : i32
    %c1_i32_1 = arith.constant 1 : i32
    %2 = arith.minsi %1, %c1_i32_1 : i32
    %c0_i32 = arith.constant 0 : i32
    %c0_i32_2 = arith.constant 0 : i32
    %c0_i32_3 = arith.constant 0 : i32
    return %arg0, %c0_i32, %2, %c0_i32_2 : i32, i32, i32, i32
  }
  func.func @transform_3(%arg0: i32, %arg1: i32) -> (i32, i32, i32) {
    %c0_i32 = arith.constant 0 : i32
    %c0_i32_0 = arith.constant 0 : i32
    %c0_i32_1 = arith.constant 0 : i32
    return %arg0, %c0_i32, %c0_i32_0 : i32, i32, i32
  }
  func.func @transform_4(%arg0: i32, %arg1: i32) -> (i32, i32, i32) {
    %c0_i32 = arith.constant 0 : i32
    %c0_i32_0 = arith.constant 0 : i32
    %c0_i32_1 = arith.constant 0 : i32
    %c0_i32_2 = arith.constant 0 : i32
    return %c0_i32, %c0_i32_0, %c0_i32_1 : i32, i32, i32
  }
  func.func @transform_5(%arg0: i32, %arg1: i32) -> (i32, i32) {
    %c0_i32 = arith.constant 0 : i32
    %c0_i32_0 = arith.constant 0 : i32
    %c0_i32_1 = arith.constant 0 : i32
    return %c0_i32, %c0_i32_0 : i32, i32
  }
  func.func @transform_6(%arg0: i32, %arg1: i32) -> (i32, i32, i32) {
    %c0_i32 = arith.constant 0 : i32
    %c0_i32_0 = arith.constant 0 : i32
    return %arg0, %c0_i32, %arg1 : i32, i32, i32
  }
}

</mosaic_0001>

<llo_original>
// kernel: cas_forward.2
$region0: #{cas_forward.2}
  #allocation0 [shape = 'u32[]', space=smem, size = 0x4, offset = 0x4, fixed_abs, tag = 'smem constant byte address 0x4 - core index']
  #allocation1 [shape = 'u32[144,128]{1,0:T(1,128)}', space=vmem, size = 0x12000, scoped, tag = 'internal scratch']
  %s0 = inlined_call_operand.vmem [shape: f32[2,32,16,16], index: 0, kind: input, shape index: {}]
  %s1 = inlined_call_operand.vmem [shape: f32[2,32,1], index: 1, kind: output, shape index: {}]
  %s2 = sld [smem:[#allocation0]]
  $region83: #{cas_forward.2} parent=0
    _
  %s4 = ssub.s32 1, %s2
  %s5 = scalar_select 0, %s4, %s2
  $region1: #{cas_forward.2} parent=0
    #allocation2 [shape = 'u8[262144]{0}', space=vmem, size = 0x40000, scoped, tag = 'input window, operand 0']
    loop: start=0, step=1, limit=6
    $region2: #{cas_forward.2} parent=1 // loop_pre_header
      _
    $region3: #{cas_forward.2} parent=1 // loop_header
      %s7 = sphi 0, %s11
      %p8 = scmp.ge.s32.totalorder %s7, 6
      %s14 = sphi 0, %s26
      %s15 = sphi 0, %s22
      %s16 = sphi 0, %s14
      %s17 = sphi 0, %s15
      %s18 = sphi 0, %s16
      %s19 = sphi 0, %s17
      %s31 = sphi 0, %s33
      %s34 = sphi 0, %s31
      %s35 = sphi 0, %s34
      %s51 = sphi 0, %s35
      %s57 = sphi 0, %s59
      %s60 = sphi 0, %s57
      %s61 = sphi 0, %s60
      %s77 = sphi 0, %s61
    $region4: #{cas_forward.2} parent=1 // loop_header_branch
      %10 = sbr.rel (%p8) target = $region8
    $region5: #{cas_forward.2} parent=1 // loop_body
      %s12 = ssub.s32 %s7, 1
      %s13 = ssub.s32 %s7, 2
      %s20 = sadd.s32 1, %s15
      %p21 = scmp.ge.s32.totalorder %s20, 2
      %s22 = scalar_select %p21, 0, %s20
      %s23 = sadd.s32 1, %s14
      %s24 = scalar_select %p21, %s23, %s14
      %p25 = scmp.ge.s32.totalorder %s24, 2
      %s26 = scalar_select %p25, 0, %s24
      %s27 = ssub.s32 %s14, %s26
      %s28 = ssub.s32 %s15, %s22
      %s29 = sor.u32 %s27, %s28
      %p30 = scmp.eq.s32.totalorder %s29, 0
      %s32 = sadd.s32 %s31, 1
      %s33 = scalar_select %p30, %s31, %s32
      %p36 = pneg %p30
      %p37 = scmp.eq.s32.totalorder %s7, 3
      %p38 = por %p36, %p37
      %p39 = scmp.ne.s32.totalorder %s31, %s34
      %p40 = scmp.eq.s32.totalorder %s7, 0
      %p41 = por %p39, %p40
      %p42 = scmp.ne.s32.totalorder %s31, %s34
      %p43 = scmp.eq.s32.totalorder %s12, 3
      %p44 = por %p42, %p43
      %p45 = scmp.ne.s32.totalorder %s34, %s35
      %p46 = scmp.eq.s32.totalorder %s12, 0
      %p47 = por %p45, %p46
      %p48 = scmp.ne.s32.totalorder %s34, %s35
      %p49 = scmp.eq.s32.totalorder %s13, 3
      %p50 = por %p48, %p49
      %p52 = scmp.ne.s32.totalorder %s35, %s51
      %p53 = scmp.eq.s32.totalorder %s13, 0
      %p54 = por %p52, %p53
      %s55 = ssub.s32 %s14, %s26
      %p56 = scmp.eq.s32.totalorder %s55, 0
      %s58 = sadd.s32 %s57, 1
      %s59 = scalar_select %p56, %s57, %s58
      %p62 = pneg %p56
      %p63 = scmp.eq.s32.totalorder %s7, 3
      %p64 = por %p62, %p63
      %p65 = scmp.ne.s32.totalorder %s57, %s60
      %p66 = scmp.eq.s32.totalorder %s7, 0
      %p67 = por %p65, %p66
      %p68 = scmp.ne.s32.totalorder %s57, %s60
      %p69 = scmp.eq.s32.totalorder %s12, 3
      %p70 = por %p68, %p69
      %p71 = scmp.ne.s32.totalorder %s60, %s61
      %p72 = scmp.eq.s32.totalorder %s12, 0
      %p73 = por %p71, %p72
      %p74 = scmp.ne.s32.totalorder %s60, %s61
      %p75 = scmp.eq.s32.totalorder %s13, 3
      %p76 = por %p74, %p75
      %p78 = scmp.ne.s32.totalorder %s61, %s77
      %p79 = scmp.eq.s32.totalorder %s13, 0
      %p80 = por %p78, %p79
      %p81 = scmp.le.s32.totalorder 1, %s7
      %p82 = scmp.lt.s32.totalorder %s7, 5
      %p83 = pnand %p81, %p82
      %p84 = pneg %p83
      // Predicated region
      $region9: #{cas_forward.2} parent=5 // pred_check
        _
      $region10: #{cas_forward.2} parent=5 // pred_check_branch
        %86 = sbr.rel (%p83) target = $region12
      $region11: #{cas_forward.2} parent=5 // pred_region
        %s87 = ssub.s32 %s7, 1
      $region12: #{cas_forward.2} parent=5 // pred_fallthru
        _
      %p88 = scmp.lt.s32.totalorder %s7, 4
      // Predicated region
      $region13: #{cas_forward.2} parent=5 // pred_check
        %p89 = pneg %p88
      $region14: #{cas_forward.2} parent=5 // pred_check_branch
        %91 = sbr.rel (%p89) target = $region16
      $region15: #{cas_forward.2} parent=5 // pred_region
        // Predicated region
        $region17: #{cas_forward.2} parent=15 // pred_check
          %p92 = pneg %p41
        $region18: #{cas_forward.2} parent=15 // pred_check_branch
          %94 = sbr.rel (%p92) target = $region20
        $region19: #{cas_forward.2} parent=15 // pred_region
          %s95 = sand.u32 %s31, 1
          %s96 = sand.u32 %s31, 1
          %s97 = smul.addr %s96, 256
          %s98 = scalar_lea.vmem [#allocation2], %s97
          %s99 = smul.addr %s14, 64
          %s100 = sadd.s32 %s15, %s99
          %s101 = smul.addr %s100, 8
          %s102 = scalar_lea.vmem %s0, %s101
          // Predicated region
          $region21: #{cas_forward.2} parent=19 // pred_check
            _
          $region22: #{cas_forward.2} parent=19 // pred_check_branch
            %104 = sbr.rel (0) target = $region24
          $region23: #{cas_forward.2} parent=19 // pred_region
            // Predicated region
            $region25: #{cas_forward.2} parent=23 // pred_check
              _
            $region26: #{cas_forward.2} parent=23 // pred_check_branch
              %106 = sbr.rel (0) target = $region28
            $region27: #{cas_forward.2} parent=23 // pred_region
              // Predicated region
              $region40: #{cas_forward.2} parent=27 // pred_check
                _
              $region41: #{cas_forward.2} parent=27 // pred_check_branch
                %184 = sbr.rel (0) target = $region43
              $region42: #{cas_forward.2} parent=27 // pred_region
                loop: start=0, step=1, limit=1
                $region44: #{cas_forward.2} parent=42 // loop_pre_header
                  _
                $region45: #{cas_forward.2} parent=42 // loop_header
                  %s186 = sphi 0, %s190
                  %p187 = scmp.ge.s32.totalorder %s186, 1
                  %s191 = sphi %s102, %s102
                  %s192 = sphi %s98, %s98
                $region46: #{cas_forward.2} parent=42 // loop_header_branch
                  %189 = sbr.rel (%p187) target = $region50
                $region47: #{cas_forward.2} parent=42 // loop_body
                  %v193 = vld [vmem:[%s191] sm:$0xff]
                  %194 = vst [vmem:[%s192] sm:$0xff] %v193
                  %v195 = vld [vmem:[%s191 + $0x10] sm:$0xff]
                  %196 = vst [vmem:[%s192 + $0x8] sm:$0xff] %v195
                  %v197 = vld [vmem:[%s191 + $0x20] sm:$0xff]
                  %198 = vst [vmem:[%s192 + $0x10] sm:$0xff] %v197
                  %v199 = vld [vmem:[%s191 + $0x30] sm:$0xff]
                  %200 = vst [vmem:[%s192 + $0x18] sm:$0xff] %v199
                  %v201 = vld [vmem:[%s191 + $0x40] sm:$0xff]
                  %202 = vst [vmem:[%s192 + $0x20] sm:$0xff] %v201
                  %v203 = vld [vmem:[%s191 + $0x50] sm:$0xff]
                  %204 = vst [vmem:[%s192 + $0x28] sm:$0xff] %v203
                  %v205 = vld [vmem:[%s191 + $0x60] sm:$0xff]
                  %206 = vst [vmem:[%s192 + $0x30] sm:$0xff] %v205
                  %v207 = vld [vmem:[%s191 + $0x70] sm:$0xff]
                  %208 = vst [vmem:[%s192 + $0x38] sm:$0xff] %v207
                  %v209 = vld [vmem:[%s191 + $0x80] sm:$0xff]
                  %210 = vst [vmem:[%s192 + $0x40] sm:$0xff] %v209
                  %v211 = vld [vmem:[%s191 + $0x90] sm:$0xff]
                  %212 = vst [vmem:[%s192 + $0x48] sm:$0xff] %v211
                  %v213 = vld [vmem:[%s191 + $0xa0] sm:$0xff]
                  %214 = vst [vmem:[%s192 + $0x50] sm:$0xff] %v213
                  %v215 = vld [vmem:[%s191 + $0xb0] sm:$0xff]
                  %216 = vst [vmem:[%s192 + $0x58] sm:$0xff] %v215
                  %v217 = vld [vmem:[%s191 + $0xc0] sm:$0xff]
                  %218 = vst [vmem:[%s192 + $0x60] sm:$0xff] %v217
                  %v219 = vld [vmem:[%s191 + $0xd0] sm:$0xff]
                  %220 = vst [vmem:[%s192 + $0x68] sm:$0xff] %v219
                  %v221 = vld [vmem:[%s191 + $0xe0] sm:$0xff]
                  %222 = vst [vmem:[%s192 + $0x70] sm:$0xff] %v221
                  %v223 = vld [vmem:[%s191 + $0xf0] sm:$0xff]
                  %224 = vst [vmem:[%s192 + $0x78] sm:$0xff] %v223
                  %v225 = vld [vmem:[%s191 + $0x100] sm:$0xff]
                  %226 = vst [vmem:[%s192 + $0x80] sm:$0xff] %v225
                  %v227 = vld [vmem:[%s191 + $0x110] sm:$0xff]
                  %228 = vst [vmem:[%s192 + $0x88] sm:$0xff] %v227
                  %v229 = vld [vmem:[%s191 + $0x120] sm:$0xff]
                  %230 = vst [vmem:[%s192 + $0x90] sm:$0xff] %v229
                  %v231 = vld [vmem:[%s191 + $0x130] sm:$0xff]
                  %232 = vst [vmem:[%s192 + $0x98] sm:$0xff] %v231
                  %v233 = vld [vmem:[%s191 + $0x140] sm:$0xff]
                  %234 = vst [vmem:[%s192 + $0xa0] sm:$0xff] %v233
                  %v235 = vld [vmem:[%s191 + $0x150] sm:$0xff]
                  %236 = vst [vmem:[%s192 + $0xa8] sm:$0xff] %v235
                  %v237 = vld [vmem:[%s191 + $0x160] sm:$0xff]
                  %238 = vst [vmem:[%s192 + $0xb0] sm:$0xff] %v237
                  %v239 = vld [vmem:[%s191 + $0x170] sm:$0xff]
                  %240 = vst [vmem:[%s192 + $0xb8] sm:$0xff] %v239
                  %v241 = vld [vmem:[%s191 + $0x180] sm:$0xff]
                  %242 = vst [vmem:[%s192 + $0xc0] sm:$0xff] %v241
                  %v243 = vld [vmem:[%s191 + $0x190] sm:$0xff]
                  %244 = vst [vmem:[%s192 + $0xc8] sm:$0xff] %v243
                  %v245 = vld [vmem:[%s191 + $0x1a0] sm:$0xff]
                  %246 = vst [vmem:[%s192 + $0xd0] sm:$0xff] %v245
                  %v247 = vld [vmem:[%s191 + $0x1b0] sm:$0xff]
                  %248 = vst [vmem:[%s192 + $0xd8] sm:$0xff] %v247
                  %v249 = vld [vmem:[%s191 + $0x1c0] sm:$0xff]
                  %250 = vst [vmem:[%s192 + $0xe0] sm:$0xff] %v249
                  %v251 = vld [vmem:[%s191 + $0x1d0] sm:$0xff]
                  %252 = vst [vmem:[%s192 + $0xe8] sm:$0xff] %v251
                  %v253 = vld [vmem:[%s191 + $0x1e0] sm:$0xff]
                  %254 = vst [vmem:[%s192 + $0xf0] sm:$0xff] %v253
                  %v255 = vld [vmem:[%s191 + $0x1f0] sm:$0xff]
                  %256 = vst [vmem:[%s192 + $0xf8] sm:$0xff] %v255
                $region48: #{cas_forward.2} parent=42 // loop_footer
                  %s190 = sadd.s32 1, %s186
                $region49: #{cas_forward.2} parent=42 // loop_footer_branch
                  %185 = sbr.rel target = $region45
                $region50: #{cas_forward.2} parent=42 // loop_exit
                  _
              $region43: #{cas_forward.2} parent=27 // pred_fallthru
                _
              // Predicated region
              $region51: #{cas_forward.2} parent=27 // pred_check
                _
              $region52: #{cas_forward.2} parent=27 // pred_check_branch
                %258 = sbr.rel target = $region54
              $region53: #{cas_forward.2} parent=27 // pred_region
                _
              $region54: #{cas_forward.2} parent=27 // pred_fallthru
                _
            $region28: #{cas_forward.2} parent=23 // pred_fallthru
              _
            // Predicated region
            $region29: #{cas_forward.2} parent=23 // pred_check
              _
            $region30: #{cas_forward.2} parent=23 // pred_check_branch
              %108 = sbr.rel target = $region32
            $region31: #{cas_forward.2} parent=23 // pred_region
              %s110 = ssub.s32 256, 1
              loop: start=0, step=1, limit=1
              $region33: #{cas_forward.2} parent=31 // loop_pre_header
                _
              $region34: #{cas_forward.2} parent=31 // loop_header
                %s112 = sphi 0, %s116
                %p113 = scmp.ge.s32.totalorder %s112, 1
                %s117 = sphi %s102, %s102
                %s118 = sphi %s98, %s98
              $region35: #{cas_forward.2} parent=31 // loop_header_branch
                %115 = sbr.rel (%p113) target = $region39
              $region36: #{cas_forward.2} parent=31 // loop_body
                %v119 = vld [vmem:[%s117] sm:%s110]
                %120 = vst [vmem:[%s118] sm:%s110] %v119
                %v121 = vld [vmem:[%s117 + $0x10] sm:%s110]
                %122 = vst [vmem:[%s118 + $0x8] sm:%s110] %v121
                %v123 = vld [vmem:[%s117 + $0x20] sm:%s110]
                %124 = vst [vmem:[%s118 + $0x10] sm:%s110] %v123
                %v125 = vld [vmem:[%s117 + $0x30] sm:%s110]
                %126 = vst [vmem:[%s118 + $0x18] sm:%s110] %v125
                %v127 = vld [vmem:[%s117 + $0x40] sm:%s110]
                %128 = vst [vmem:[%s118 + $0x20] sm:%s110] %v127
                %v129 = vld [vmem:[%s117 + $0x50] sm:%s110]
                %130 = vst [vmem:[%s118 + $0x28] sm:%s110] %v129
                %v131 = vld [vmem:[%s117 + $0x60] sm:%s110]
                %132 = vst [vmem:[%s118 + $0x30] sm:%s110] %v131
                %v133 = vld [vmem:[%s117 + $0x70] sm:%s110]
                %134 = vst [vmem:[%s118 + $0x38] sm:%s110] %v133
                %v135 = vld [vmem:[%s117 + $0x80] sm:%s110]
                %136 = vst [vmem:[%s118 + $0x40] sm:%s110] %v135
                %v137 = vld [vmem:[%s117 + $0x90] sm:%s110]
                %138 = vst [vmem:[%s118 + $0x48] sm:%s110] %v137
                %v139 = vld [vmem:[%s117 + $0xa0] sm:%s110]
                %140 = vst [vmem:[%s118 + $0x50] sm:%s110] %v139
                %v141 = vld [vmem:[%s117 + $0xb0] sm:%s110]
                %142 = vst [vmem:[%s118 + $0x58] sm:%s110] %v141
                %v143 = vld [vmem:[%s117 + $0xc0] sm:%s110]
                %144 = vst [vmem:[%s118 + $0x60] sm:%s110] %v143
                %v145 = vld [vmem:[%s117 + $0xd0] sm:%s110]
                %146 = vst [vmem:[%s118 + $0x68] sm:%s110] %v145
                %v147 = vld [vmem:[%s117 + $0xe0] sm:%s110]
                %148 = vst [vmem:[%s118 + $0x70] sm:%s110] %v147
                %v149 = vld [vmem:[%s117 + $0xf0] sm:%s110]
                %150 = vst [vmem:[%s118 + $0x78] sm:%s110] %v149
                %v151 = vld [vmem:[%s117 + $0x100] sm:%s110]
                %152 = vst [vmem:[%s118 + $0x80] sm:%s110] %v151
                %v153 = vld [vmem:[%s117 + $0x110] sm:%s110]
                %154 = vst [vmem:[%s118 + $0x88] sm:%s110] %v153
                %v155 = vld [vmem:[%s117 + $0x120] sm:%s110]
                %156 = vst [vmem:[%s118 + $0x90] sm:%s110] %v155
                %v157 = vld [vmem:[%s117 + $0x130] sm:%s110]
                %158 = vst [vmem:[%s118 + $0x98] sm:%s110] %v157
                %v159 = vld [vmem:[%s117 + $0x140] sm:%s110]
                %160 = vst [vmem:[%s118 + $0xa0] sm:%s110] %v159
                %v161 = vld [vmem:[%s117 + $0x150] sm:%s110]
                %162 = vst [vmem:[%s118 + $0xa8] sm:%s110] %v161
                %v163 = vld [vmem:[%s117 + $0x160] sm:%s110]
                %164 = vst [vmem:[%s118 + $0xb0] sm:%s110] %v163
                %v165 = vld [vmem:[%s117 + $0x170] sm:%s110]
                %166 = vst [vmem:[%s118 + $0xb8] sm:%s110] %v165
                %v167 = vld [vmem:[%s117 + $0x180] sm:%s110]
                %168 = vst [vmem:[%s118 + $0xc0] sm:%s110] %v167
                %v169 = vld [vmem:[%s117 + $0x190] sm:%s110]
                %170 = vst [vmem:[%s118 + $0xc8] sm:%s110] %v169
                %v171 = vld [vmem:[%s117 + $0x1a0] sm:%s110]
                %172 = vst [vmem:[%s118 + $0xd0] sm:%s110] %v171
                %v173 = vld [vmem:[%s117 + $0x1b0] sm:%s110]
                %174 = vst [vmem:[%s118 + $0xd8] sm:%s110] %v173
                %v175 = vld [vmem:[%s117 + $0x1c0] sm:%s110]
                %176 = vst [vmem:[%s118 + $0xe0] sm:%s110] %v175
                %v177 = vld [vmem:[%s117 + $0x1d0] sm:%s110]
                %178 = vst [vmem:[%s118 + $0xe8] sm:%s110] %v177
                %v179 = vld [vmem:[%s117 + $0x1e0] sm:%s110]
                %180 = vst [vmem:[%s118 + $0xf0] sm:%s110] %v179
                %v181 = vld [vmem:[%s117 + $0x1f0] sm:%s110]
                %182 = vst [vmem:[%s118 + $0xf8] sm:%s110] %v181
              $region37: #{cas_forward.2} parent=31 // loop_footer
                %s116 = sadd.s32 1, %s112
              $region38: #{cas_forward.2} parent=31 // loop_footer_branch
                %111 = sbr.rel target = $region34
              $region39: #{cas_forward.2} parent=31 // loop_exit
                _
            $region32: #{cas_forward.2} parent=23 // pred_fallthru
              _
          $region24: #{cas_forward.2} parent=19 // pred_fallthru
            _
          %259 = vnop
        $region20: #{cas_forward.2} parent=15 // pred_fallthru
          _
      $region16: #{cas_forward.2} parent=5 // pred_fallthru
        _
      %p260 = scmp.le.s32.totalorder 1, %s7
      %p261 = scmp.lt.s32.totalorder %s7, 5
      %p262 = pnand %p260, %p261
      %p263 = pneg %p262
      // Predicated region
      $region55: #{cas_forward.2} parent=5 // pred_check
        _
      $region56: #{cas_forward.2} parent=5 // pred_check_branch
        %265 = sbr.rel (%p262) target = $region58
      $region57: #{cas_forward.2} parent=5 // pred_region
        %s266 = ssub.s32 %s7, 1
        %s267 = sand.u32 %s34, 1
        %s268 = sand.u32 %s34, 1
        %s269 = smul.addr %s268, 256
        %s270 = scalar_lea.vmem [#allocation2], %s269
        // Predicated region
        $region59: #{cas_forward.2} parent=57 // pred_check
          %p271 = pneg %p47
        $region60: #{cas_forward.2} parent=57 // pred_check_branch
          %273 = sbr.rel (%p271) target = $region62
        $region61: #{cas_forward.2} parent=57 // pred_region
          _
        $region62: #{cas_forward.2} parent=57 // pred_fallthru
          _
        %s274 = sand.u32 %s34, 1
        %s275 = sand.u32 %s34, 1
        %s276 = smul.addr %s275, 256
        %s277 = scalar_lea.vmem [#allocation2], %s276
        %p278 = pneg %p47
        %p279 = pneg %p44
        %p280 = pneg %p73
        %p281 = pneg %p70
        %p282 = scmp.lt.s32.totalorder %s16, 1
        %s283 = scalar_select %p282, %s16, 1
        %s284 = smul.addr %s283, 4
        %s285 = smul.addr %s284, 8
        %s286 = scalar_lea.vmem %s1, %s285
        %p287 = scmp.lt.s32.totalorder %s16, 1
        %s288 = scalar_select %p287, %s16, 1
        %s289 = smul.addr %s288, 4
        %s290 = smul.addr %s289, 8
        %s291 = scalar_lea.vmem %s1, %s290
        %p292 = scmp.eq.s32.totalorder %s17, 0
        // Predicated region
        $region63: #{cas_forward.2} parent=57 // pred_check
          %p293 = pneg %p292
        $region64: #{cas_forward.2} parent=57 // pred_check_branch
          %295 = sbr.rel (%p293) target = $region66
        $region65: #{cas_forward.2} parent=57 // pred_region
          %vm296 = vcmask 7168
          %297 = vst.msk [vmem:[%s291] sm:$0xff] %vm296, 0.0
          %298 = vst.msk [vmem:[%s291 + $0x8] sm:$0xff] %vm296, 0.0
          %299 = vst.msk [vmem:[%s291 + $0x10] sm:$0xff] %vm296, 0.0
          %300 = vst.msk [vmem:[%s291 + $0x18] sm:$0xff] %vm296, 0.0
        $region66: #{cas_forward.2} parent=57 // pred_fallthru
          _
        %v301 = vld [vmem:[%s270] sm:$0xff]
        %v302 = vld [vmem:[%s270 + $0x8] sm:$0xff]
        %v303 = vld [vmem:[%s270 + $0x10] sm:$0xff]
        %v304 = vld [vmem:[%s270 + $0x18] sm:$0xff]
        %v305 = vld [vmem:[%s270 + $0x20] sm:$0xff]
        %v306 = vld [vmem:[%s270 + $0x28] sm:$0xff]
        %v307 = vld [vmem:[%s270 + $0x30] sm:$0xff]
        %v308 = vld [vmem:[%s270 + $0x38] sm:$0xff]
        %v309 = vld [vmem:[%s270 + $0x40] sm:$0xff]
        %v310 = vld [vmem:[%s270 + $0x48] sm:$0xff]
        %v311 = vld [vmem:[%s270 + $0x50] sm:$0xff]
        %v312 = vld [vmem:[%s270 + $0x58] sm:$0xff]
        %v313 = vld [vmem:[%s270 + $0x60] sm:$0xff]
        %v314 = vld [vmem:[%s270 + $0x68] sm:$0xff]
        %v315 = vld [vmem:[%s270 + $0x70] sm:$0xff]
        %v316 = vld [vmem:[%s270 + $0x78] sm:$0xff]
        %v317 = vld [vmem:[%s270 + $0x80] sm:$0xff]
        %v318 = vld [vmem:[%s270 + $0x88] sm:$0xff]
        %v319 = vld [vmem:[%s270 + $0x90] sm:$0xff]
        %v320 = vld [vmem:[%s270 + $0x98] sm:$0xff]
        %v321 = vld [vmem:[%s270 + $0xa0] sm:$0xff]
        %v322 = vld [vmem:[%s270 + $0xa8] sm:$0xff]
        %v323 = vld [vmem:[%s270 + $0xb0] sm:$0xff]
        %v324 = vld [vmem:[%s270 + $0xb8] sm:$0xff]
        %v325 = vld [vmem:[%s270 + $0xc0] sm:$0xff]
        %v326 = vld [vmem:[%s270 + $0xc8] sm:$0xff]
        %v327 = vld [vmem:[%s270 + $0xd0] sm:$0xff]
        %v328 = vld [vmem:[%s270 + $0xd8] sm:$0xff]
        %v329 = vld [vmem:[%s270 + $0xe0] sm:$0xff]
        %v330 = vld [vmem:[%s270 + $0xe8] sm:$0xff]
        %v331 = vld [vmem:[%s270 + $0xf0] sm:$0xff]
        %v332 = vld [vmem:[%s270 + $0xf8] sm:$0xff]
        %vm333 = vcmask 130048
        %v334 = vsel %vm333, %v301, 0.0
        %335 = vadd.xlane.f32.xlu0 %v334
        %v336 = vpop.xlane.xlu0 %335
        %v337 = vsel %vm333, %v302, 0.0
        %338 = vadd.xlane.f32.xlu0 %v337
        %v339 = vpop.xlane.xlu0 %338
        %v340 = vsel %vm333, %v303, 0.0
        %341 = vadd.xlane.f32.xlu0 %v340
        %v342 = vpop.xlane.xlu0 %341
        %v343 = vsel %vm333, %v304, 0.0
        %344 = vadd.xlane.f32.xlu0 %v343
        %v345 = vpop.xlane.xlu0 %344
        %v346 = vsel %vm333, %v305, 0.0
        %347 = vadd.xlane.f32.xlu0 %v346
        %v348 = vpop.xlane.xlu0 %347
        %v349 = vsel %vm333, %v306, 0.0
        %350 = vadd.xlane.f32.xlu0 %v349
        %v351 = vpop.xlane.xlu0 %350
        %v352 = vsel %vm333, %v307, 0.0
        %353 = vadd.xlane.f32.xlu0 %v352
        %v354 = vpop.xlane.xlu0 %353
        %v355 = vsel %vm333, %v308, 0.0
        %356 = vadd.xlane.f32.xlu0 %v355
        %v357 = vpop.xlane.xlu0 %356
        %v358 = vsel %vm333, %v309, 0.0
        %359 = vadd.xlane.f32.xlu0 %v358
        %v360 = vpop.xlane.xlu0 %359
        %v361 = vsel %vm333, %v310, 0.0
        %362 = vadd.xlane.f32.xlu0 %v361
        %v363 = vpop.xlane.xlu0 %362
        %v364 = vsel %vm333, %v311, 0.0
        %365 = vadd.xlane.f32.xlu0 %v364
        %v366 = vpop.xlane.xlu0 %365
        %v367 = vsel %vm333, %v312, 0.0
        %368 = vadd.xlane.f32.xlu0 %v367
        %v369 = vpop.xlane.xlu0 %368
        %v370 = vsel %vm333, %v313, 0.0
        %371 = vadd.xlane.f32.xlu0 %v370
        %v372 = vpop.xlane.xlu0 %371
        %v373 = vsel %vm333, %v314, 0.0
        %374 = vadd.xlane.f32.xlu0 %v373
        %v375 = vpop.xlane.xlu0 %374
        %v376 = vsel %vm333, %v315, 0.0
        %377 = vadd.xlane.f32.xlu0 %v376
        %v378 = vpop.xlane.xlu0 %377
        %v379 = vsel %vm333, %v316, 0.0
        %380 = vadd.xlane.f32.xlu0 %v379
        %v381 = vpop.xlane.xlu0 %380
        %v382 = vsel %vm333, %v317, 0.0
        %383 = vadd.xlane.f32.xlu0 %v382
        %v384 = vpop.xlane.xlu0 %383
        %v385 = vsel %vm333, %v318, 0.0
        %386 = vadd.xlane.f32.xlu0 %v385
        %v387 = vpop.xlane.xlu0 %386
        %v388 = vsel %vm333, %v319, 0.0
        %389 = vadd.xlane.f32.xlu0 %v388
        %v390 = vpop.xlane.xlu0 %389
        %v391 = vsel %vm333, %v320, 0.0
        %392 = vadd.xlane.f32.xlu0 %v391
        %v393 = vpop.xlane.xlu0 %392
        %v394 = vsel %vm333, %v321, 0.0
        %395 = vadd.xlane.f32.xlu0 %v394
        %v396 = vpop.xlane.xlu0 %395
        %v397 = vsel %vm333, %v322, 0.0
        %398 = vadd.xlane.f32.xlu0 %v397
        %v399 = vpop.xlane.xlu0 %398
        %v400 = vsel %vm333, %v323, 0.0
        %401 = vadd.xlane.f32.xlu0 %v400
        %v402 = vpop.xlane.xlu0 %401
        %v403 = vsel %vm333, %v324, 0.0
        %404 = vadd.xlane.f32.xlu0 %v403
        %v405 = vpop.xlane.xlu0 %404
        %v406 = vsel %vm333, %v325, 0.0
        %407 = vadd.xlane.f32.xlu0 %v406
        %v408 = vpop.xlane.xlu0 %407
        %v409 = vsel %vm333, %v326, 0.0
        %410 = vadd.xlane.f32.xlu0 %v409
        %v411 = vpop.xlane.xlu0 %410
        %v412 = vsel %vm333, %v327, 0.0
        %413 = vadd.xlane.f32.xlu0 %v412
        %v414 = vpop.xlane.xlu0 %413
        %v415 = vsel %vm333, %v328, 0.0
        %416 = vadd.xlane.f32.xlu0 %v415
        %v417 = vpop.xlane.xlu0 %416
        %v418 = vsel %vm333, %v329, 0.0
        %419 = vadd.xlane.f32.xlu0 %v418
        %v420 = vpop.xlane.xlu0 %419
        %v421 = vsel %vm333, %v330, 0.0
        %422 = vadd.xlane.f32.xlu0 %v421
        %v423 = vpop.xlane.xlu0 %422
        %v424 = vsel %vm333, %v331, 0.0
        %425 = vadd.xlane.f32.xlu0 %v424
        %v426 = vpop.xlane.xlu0 %425
        %v427 = vsel %vm333, %v332, 0.0
        %428 = vadd.xlane.f32.xlu0 %v427
        %v429 = vpop.xlane.xlu0 %428
        %v462 = vlaneseq
        %v463 = vand.u32 %v462, 127
        %v464 = vlaneseq
        %v465 = vshrl.u32 %v464, 7
        %v466 = vsub.s32 %v463, %v465
        %v467 = vrot.slane %v336, %v466
        %v468 = vlaneseq
        %v469 = vshrl.u32 %v468, 7
        %v470 = vsub.s32 %v463, %v469
        %v471 = vrot.slane %v339, %v470
        %v472 = vlaneseq
        %v473 = vshrl.u32 %v472, 7
        %v474 = vsub.s32 %v463, %v473
        %v475 = vrot.slane %v342, %v474
        %v476 = vlaneseq
        %v477 = vshrl.u32 %v476, 7
        %v478 = vsub.s32 %v463, %v477
        %v479 = vrot.slane %v345, %v478
        %v480 = vlaneseq
        %v481 = vshrl.u32 %v480, 7
        %v482 = vsub.s32 %v463, %v481
        %v483 = vrot.slane %v348, %v482
        %v484 = vlaneseq
        %v485 = vshrl.u32 %v484, 7
        %v486 = vsub.s32 %v463, %v485
        %v487 = vrot.slane %v351, %v486
        %v488 = vlaneseq
        %v489 = vshrl.u32 %v488, 7
        %v490 = vsub.s32 %v463, %v489
        %v491 = vrot.slane %v354, %v490
        %v492 = vlaneseq
        %v493 = vshrl.u32 %v492, 7
        %v494 = vsub.s32 %v463, %v493
        %v495 = vrot.slane %v357, %v494
        %v496 = vlaneseq
        %v497 = vshrl.u32 %v496, 7
        %v498 = vsub.s32 %v463, %v497
        %v499 = vrot.slane %v360, %v498
        %v500 = vlaneseq
        %v501 = vshrl.u32 %v500, 7
        %v502 = vsub.s32 %v463, %v501
        %v503 = vrot.slane %v363, %v502
        %v504 = vlaneseq
        %v505 = vshrl.u32 %v504, 7
        %v506 = vsub.s32 %v463, %v505
        %v507 = vrot.slane %v366, %v506
        %v508 = vlaneseq
        %v509 = vshrl.u32 %v508, 7
        %v510 = vsub.s32 %v463, %v509
        %v511 = vrot.slane %v369, %v510
        %v512 = vlaneseq
        %v513 = vshrl.u32 %v512, 7
        %v514 = vsub.s32 %v463, %v513
        %v515 = vrot.slane %v372, %v514
        %v516 = vlaneseq
        %v517 = vshrl.u32 %v516, 7
        %v518 = vsub.s32 %v463, %v517
        %v519 = vrot.slane %v375, %v518
        %v520 = vlaneseq
        %v521 = vshrl.u32 %v520, 7
        %v522 = vsub.s32 %v463, %v521
        %v523 = vrot.slane %v378, %v522
        %v524 = vlaneseq
        %v525 = vshrl.u32 %v524, 7
        %v526 = vsub.s32 %v463, %v525
        %v527 = vrot.slane %v381, %v526
        %v528 = vlaneseq
        %v529 = vshrl.u32 %v528, 7
        %v530 = vsub.s32 %v463, %v529
        %v531 = vrot.slane %v384, %v530
        %v532 = vlaneseq
        %v533 = vshrl.u32 %v532, 7
        %v534 = vsub.s32 %v463, %v533
        %v535 = vrot.slane %v387, %v534
        %v536 = vlaneseq
        %v537 = vshrl.u32 %v536, 7
        %v538 = vsub.s32 %v463, %v537
        %v539 = vrot.slane %v390, %v538
        %v540 = vlaneseq
        %v541 = vshrl.u32 %v540, 7
        %v542 = vsub.s32 %v463, %v541
        %v543 = vrot.slane %v393, %v542
        %v544 = vlaneseq
        %v545 = vshrl.u32 %v544, 7
        %v546 = vsub.s32 %v463, %v545
        %v547 = vrot.slane %v396, %v546
        %v548 = vlaneseq
        %v549 = vshrl.u32 %v548, 7
        %v550 = vsub.s32 %v463, %v549
        %v551 = vrot.slane %v399, %v550
        %v552 = vlaneseq
        %v553 = vshrl.u32 %v552, 7
        %v554 = vsub.s32 %v463, %v553
        %v555 = vrot.slane %v402, %v554
        %v556 = vlaneseq
        %v557 = vshrl.u32 %v556, 7
        %v558 = vsub.s32 %v463, %v557
        %v559 = vrot.slane %v405, %v558
        %v560 = vlaneseq
        %v561 = vshrl.u32 %v560, 7
        %v562 = vsub.s32 %v463, %v561
        %v563 = vrot.slane %v408, %v562
        %v564 = vlaneseq
        %v565 = vshrl.u32 %v564, 7
        %v566 = vsub.s32 %v463, %v565
        %v567 = vrot.slane %v411, %v566
        %v568 = vlaneseq
        %v569 = vshrl.u32 %v568, 7
        %v570 = vsub.s32 %v463, %v569
        %v571 = vrot.slane %v414, %v570
        %v572 = vlaneseq
        %v573 = vshrl.u32 %v572, 7
        %v574 = vsub.s32 %v463, %v573
        %v575 = vrot.slane %v417, %v574
        %v576 = vlaneseq
        %v577 = vshrl.u32 %v576, 7
        %v578 = vsub.s32 %v463, %v577
        %v579 = vrot.slane %v420, %v578
        %v580 = vlaneseq
        %v581 = vshrl.u32 %v580, 7
        %v582 = vsub.s32 %v463, %v581
        %v583 = vrot.slane %v423, %v582
        %v584 = vlaneseq
        %v585 = vshrl.u32 %v584, 7
        %v586 = vsub.s32 %v463, %v585
        %v587 = vrot.slane %v426, %v586
        %v588 = vlaneseq
        %v589 = vshrl.u32 %v588, 7
        %v590 = vsub.s32 %v463, %v589
        %v591 = vrot.slane %v429, %v590
        %vm592 = vcmask 1041409
        %v593 = vsel %vm592, %v471, %v467
        %vm594 = vcmask 1042434
        %v595 = vsel %vm594, %v475, %v593
        %vm596 = vcmask 1043459
        %v597 = vsel %vm596, %v479, %v595
        %vm598 = vcmask 1044484
        %v599 = vsel %vm598, %v483, %v597
        %vm600 = vcmask 1045509
        %v601 = vsel %vm600, %v487, %v599
        %vm602 = vcmask 1046534
        %v603 = vsel %vm602, %v491, %v601
        %vm604 = vcmask 1047559
        %v605 = vsel %vm604, %v495, %v603
        %v606 = vsel %vm592, %v503, %v499
        %v607 = vsel %vm594, %v507, %v606
        %v608 = vsel %vm596, %v511, %v607
        %v609 = vsel %vm598, %v515, %v608
        %v610 = vsel %vm600, %v519, %v609
        %v611 = vsel %vm602, %v523, %v610
        %v612 = vsel %vm604, %v527, %v611
        %v613 = vsel %vm592, %v535, %v531
        %v614 = vsel %vm594, %v539, %v613
        %v615 = vsel %vm596, %v543, %v614
        %v616 = vsel %vm598, %v547, %v615
        %v617 = vsel %vm600, %v551, %v616
        %v618 = vsel %vm602, %v555, %v617
        %v619 = vsel %vm604, %v559, %v618
        %v620 = vsel %vm592, %v567, %v563
        %v621 = vsel %vm594, %v571, %v620
        %v622 = vsel %vm596, %v575, %v621
        %v623 = vsel %vm598, %v579, %v622
        %v624 = vsel %vm600, %v583, %v623
        %v625 = vsel %vm602, %v587, %v624
        %v626 = vsel %vm604, %v591, %v625
        %vm631 = vcmask 64512
        %v632 = vsel %vm631, %v605, 0.0
        %633 = vadd.xlane.f32.xlu0 %v632
        %v634 = vpop.xlane.xlu0 %633
        %v635 = vsel %vm631, %v612, 0.0
        %636 = vadd.xlane.f32.xlu0 %v635
        %v637 = vpop.xlane.xlu0 %636
        %v638 = vsel %vm631, %v619, 0.0
        %639 = vadd.xlane.f32.xlu0 %v638
        %v640 = vpop.xlane.xlu0 %639
        %v641 = vsel %vm631, %v626, 0.0
        %642 = vadd.xlane.f32.xlu0 %v641
        %v643 = vpop.xlane.xlu0 %642
        %v644 = vld [vmem:[%s291] sm:$0xff]
        %v645 = vld [vmem:[%s291 + $0x8] sm:$0xff]
        %v646 = vld [vmem:[%s291 + $0x10] sm:$0xff]
        %v647 = vld [vmem:[%s291 + $0x18] sm:$0xff]
        %v648 = vadd.f32 %v644, %v634
        %v649 = vadd.f32 %v645, %v637
        %v650 = vadd.f32 %v646, %v640
        %v651 = vadd.f32 %v647, %v643
        %vm652 = vcmask 7168
        %653 = vst.msk [vmem:[%s291] sm:$0xff] %vm652, %v648
        %654 = vst.msk [vmem:[%s291 + $0x8] sm:$0xff] %vm652, %v649
        %655 = vst.msk [vmem:[%s291 + $0x10] sm:$0xff] %vm652, %v650
        %656 = vst.msk [vmem:[%s291 + $0x18] sm:$0xff] %vm652, %v651
        %p657 = scmp.eq.s32.totalorder %s17, 1
        // Predicated region
        $region67: #{cas_forward.2} parent=57 // pred_check
          %p658 = pneg %p657
        $region68: #{cas_forward.2} parent=57 // pred_check_branch
          %660 = sbr.rel (%p658) target = $region70
        $region69: #{cas_forward.2} parent=57 // pred_region
          %v661 = vld [vmem:[%s291] sm:$0xff]
          %v662 = vld [vmem:[%s291 + $0x8] sm:$0xff]
          %v663 = vld [vmem:[%s291 + $0x10] sm:$0xff]
          %v664 = vld [vmem:[%s291 + $0x18] sm:$0xff]
          %v665 = vmul.f32 %v661, 0.00390625
          %v666 = vmul.f32 %v662, 0.00390625
          %v667 = vmul.f32 %v663, 0.00390625
          %v668 = vmul.f32 %v664, 0.00390625
          %669 = vst.msk [vmem:[%s291] sm:$0xff] %vm652, %v665
          %670 = vst.msk [vmem:[%s291 + $0x8] sm:$0xff] %vm652, %v666
          %671 = vst.msk [vmem:[%s291 + $0x10] sm:$0xff] %vm652, %v667
          %672 = vst.msk [vmem:[%s291 + $0x18] sm:$0xff] %vm652, %v668
        $region70: #{cas_forward.2} parent=57 // pred_fallthru
          _
        %p673 = scmp.lt.s32.totalorder %s16, 1
        %s674 = scalar_select %p673, %s16, 1
        %s675 = smul.addr %s674, 4
        %s676 = smul.addr %s675, 8
        %s677 = scalar_lea.vmem %s1, %s676
        // Predicated region
        $region71: #{cas_forward.2} parent=57 // pred_check
          %p678 = pneg %p70
        $region72: #{cas_forward.2} parent=57 // pred_check_branch
          %680 = sbr.rel (%p678) target = $region74
        $region73: #{cas_forward.2} parent=57 // pred_region
          _
        $region74: #{cas_forward.2} parent=57 // pred_fallthru
          _
      $region58: #{cas_forward.2} parent=5 // pred_fallthru
        _
      %p681 = scmp.le.s32.totalorder 2, %s7
      // Predicated region
      $region75: #{cas_forward.2} parent=5 // pred_check
        %p682 = pneg %p681
      $region76: #{cas_forward.2} parent=5 // pred_check_branch
        %684 = sbr.rel (%p682) target = $region78
      $region77: #{cas_forward.2} parent=5 // pred_region
        %s685 = ssub.s32 %s7, 2
        // Predicated region
        $region79: #{cas_forward.2} parent=77 // pred_check
          %p686 = pneg %p76
        $region80: #{cas_forward.2} parent=77 // pred_check_branch
          %688 = sbr.rel (%p686) target = $region82
        $region81: #{cas_forward.2} parent=77 // pred_region
          %p689 = scmp.lt.s32.totalorder %s18, 1
          %s690 = scalar_select %p689, %s18, 1
          %s691 = smul.addr %s690, 4
          %s692 = smul.addr %s691, 8
          %s693 = scalar_lea.vmem %s1, %s692
        $region82: #{cas_forward.2} parent=77 // pred_fallthru
          _
      $region78: #{cas_forward.2} parent=5 // pred_fallthru
        _
    $region6: #{cas_forward.2} parent=1 // loop_footer
      %s11 = sadd.s32 1, %s7
    $region7: #{cas_forward.2} parent=1 // loop_footer_branch
      %6 = sbr.rel target = $region3
    $region8: #{cas_forward.2} parent=1 // loop_exit
      _

// kernel: cas_forward.3
$region0: #{cas_forward.3}
  #allocation0 [shape = 'u32[]', space=smem, size = 0x4, offset = 0x4, fixed_abs, tag = 'smem constant byte address 0x4 - core index']
  #allocation1 [shape = 'u32[144,128]{1,0:T(1,128)}', space=vmem, size = 0x12000, scoped, tag = 'internal scratch']
  #allocation2 [shape = 'f32[32,10,18]{2,1,0:T(8,128)}', space=vmem, size = 0x40000, scoped, tag = 'scratch operand']
  %s0 = inlined_call_operand.vmem [shape: f32[2,32,16,16], index: 0, kind: input, shape index: {}, may-alias: {0,1,2}]
  %s1 = inlined_call_operand.vmem [shape: f32[2,32,16,16], index: 1, kind: input, shape index: {}, may-alias: {0,1,2}]
  %s2 = inlined_call_operand.vmem [shape: f32[2,32,16,16], index: 2, kind: input, shape index: {}, may-alias: {0,1,2}]
  %s3 = inlined_call_operand.vmem [shape: f32[2,1,32], index: 3, kind: input, shape index: {}]
  %s4 = inlined_call_operand.vmem [shape: f32[9,32,32], index: 4, kind: input, shape index: {}]
  %s5 = inlined_call_operand.vmem [shape: f32[32,1], index: 5, kind: input, shape index: {}]
  %s6 = inlined_call_operand.vmem [shape: f32[2,32,256], index: 6, kind: output, shape index: {}]
  %s7 = sld [smem:[#allocation0]]
  $region205: #{cas_forward.3} parent=0
    _
  %s9 = ssub.s32 1, %s7
  %s10 = scalar_select 0, %s9, %s7
  $region1: #{cas_forward.3} parent=0
    #allocation3 [shape = 'u8[262144]{0}', space=vmem, size = 0x40000, scoped, tag = 'input window, operand 0']
    #allocation4 [shape = 'u8[262144]{0}', space=vmem, size = 0x40000, scoped, tag = 'input window, operand 1']
    #allocation5 [shape = 'u8[262144]{0}', space=vmem, size = 0x40000, scoped, tag = 'input window, operand 2']
    #allocation6 [shape = 'u8[32768]{0}', space=vmem, size = 0x8000, scoped, tag = 'output window, operand 0']
    loop: start=0, step=1, limit=6
    $region2: #{cas_forward.3} parent=1 // loop_pre_header
      _
    $region3: #{cas_forward.3} parent=1 // loop_header
      %s12 = sphi 0, %s16
      %p13 = scmp.ge.s32.totalorder %s12, 6
      %s19 = sphi 0, %s31
      %s20 = sphi 0, %s27
      %s21 = sphi 0, %s19
      %s22 = sphi 0, %s20
      %s23 = sphi 0, %s21
      %s24 = sphi 0, %s22
      %s36 = sphi 0, %s38
      %s39 = sphi 0, %s36
      %s40 = sphi 0, %s39
      %s56 = sphi 0, %s40
      %s70 = sphi 0, %s72
      %s73 = sphi 0, %s70
      %s74 = sphi 0, %s73
      %s90 = sphi 0, %s74
      %s104 = sphi 0, %s106
      %s107 = sphi 0, %s104
      %s108 = sphi 0, %s107
      %s124 = sphi 0, %s108
      %s130 = sphi 0, %s132
      %s133 = sphi 0, %s130
      %s134 = sphi 0, %s133
      %s150 = sphi 0, %s134
      %s154 = sphi 0, %s154
      %s156 = sphi 0, %s154
      %s157 = sphi 0, %s156
      %s171 = sphi 0, %s157
      %s175 = sphi 0, %s175
      %s177 = sphi 0, %s175
      %s178 = sphi 0, %s177
      %s192 = sphi 0, %s178
      %s200 = sphi 0, %s202
      %s203 = sphi 0, %s200
      %s204 = sphi 0, %s203
      %s220 = sphi 0, %s204
    $region4: #{cas_forward.3} parent=1 // loop_header_branch
      %15 = sbr.rel (%p13) target = $region8
    $region5: #{cas_forward.3} parent=1 // loop_body
      %s17 = ssub.s32 %s12, 1
      %s18 = ssub.s32 %s12, 2
      %s25 = sadd.s32 1, %s20
      %p26 = scmp.ge.s32.totalorder %s25, 2
      %s27 = scalar_select %p26, 0, %s25
      %s28 = sadd.s32 1, %s19
      %s29 = scalar_select %p26, %s28, %s19
      %p30 = scmp.ge.s32.totalorder %s29, 2
      %s31 = scalar_select %p30, 0, %s29
      %s32 = ssub.s32 %s19, %s31
      %s33 = ssub.s32 %s20, %s27
      %s34 = sor.u32 %s32, %s33
      %p35 = scmp.eq.s32.totalorder %s34, 0
      %s37 = sadd.s32 %s36, 1
      %s38 = scalar_select %p35, %s36, %s37
      %p41 = pneg %p35
      %p42 = scmp.eq.s32.totalorder %s12, 3
      %p43 = por %p41, %p42
      %p44 = scmp.ne.s32.totalorder %s36, %s39
      %p45 = scmp.eq.s32.totalorder %s12, 0
      %p46 = por %p44, %p45
      %p47 = scmp.ne.s32.totalorder %s36, %s39
      %p48 = scmp.eq.s32.totalorder %s17, 3
      %p49 = por %p47, %p48
      %p50 = scmp.ne.s32.totalorder %s39, %s40
      %p51 = scmp.eq.s32.totalorder %s17, 0
      %p52 = por %p50, %p51
      %p53 = scmp.ne.s32.totalorder %s39, %s40
      %p54 = scmp.eq.s32.totalorder %s18, 3
      %p55 = por %p53, %p54
      %p57 = scmp.ne.s32.totalorder %s40, %s56
      %p58 = scmp.eq.s32.totalorder %s18, 0
      %p59 = por %p57, %p58
      %s60 = ssub.s32 %s20, 1
      %p61 = scmp.gt.s32.totalorder %s60, 0
      %s62 = scalar_select %p61, %s60, 0
      %s63 = ssub.s32 %s27, 1
      %p64 = scmp.gt.s32.totalorder %s63, 0
      %s65 = scalar_select %p64, %s63, 0
      %s66 = ssub.s32 %s19, %s31
      %s67 = ssub.s32 %s62, %s65
      %s68 = sor.u32 %s66, %s67
      %p69 = scmp.eq.s32.totalorder %s68, 0
      %s71 = sadd.s32 %s70, 1
      %s72 = scalar_select %p69, %s70, %s71
      %p75 = pneg %p69
      %p76 = scmp.eq.s32.totalorder %s12, 3
      %p77 = por %p75, %p76
      %p78 = scmp.ne.s32.totalorder %s70, %s73
      %p79 = scmp.eq.s32.totalorder %s12, 0
      %p80 = por %p78, %p79
      %p81 = scmp.ne.s32.totalorder %s70, %s73
      %p82 = scmp.eq.s32.totalorder %s17, 3
      %p83 = por %p81, %p82
      %p84 = scmp.ne.s32.totalorder %s73, %s74
      %p85 = scmp.eq.s32.totalorder %s17, 0
      %p86 = por %p84, %p85
      %p87 = scmp.ne.s32.totalorder %s73, %s74
      %p88 = scmp.eq.s32.totalorder %s18, 3
      %p89 = por %p87, %p88
      %p91 = scmp.ne.s32.totalorder %s74, %s90
      %p92 = scmp.eq.s32.totalorder %s18, 0
      %p93 = por %p91, %p92
      %s94 = sadd.s32 %s20, 1
      %p95 = scmp.lt.s32.totalorder %s94, 1
      %s96 = scalar_select %p95, %s94, 1
      %s97 = sadd.s32 %s27, 1
      %p98 = scmp.lt.s32.totalorder %s97, 1
      %s99 = scalar_select %p98, %s97, 1
      %s100 = ssub.s32 %s19, %s31
      %s101 = ssub.s32 %s96, %s99
      %s102 = sor.u32 %s100, %s101
      %p103 = scmp.eq.s32.totalorder %s102, 0
      %s105 = sadd.s32 %s104, 1
      %s106 = scalar_select %p103, %s104, %s105
      %p109 = pneg %p103
      %p110 = scmp.eq.s32.totalorder %s12, 3
      %p111 = por %p109, %p110
      %p112 = scmp.ne.s32.totalorder %s104, %s107
      %p113 = scmp.eq.s32.totalorder %s12, 0
      %p114 = por %p112, %p113
      %p115 = scmp.ne.s32.totalorder %s104, %s107
      %p116 = scmp.eq.s32.totalorder %s17, 3
      %p117 = por %p115, %p116
      %p118 = scmp.ne.s32.totalorder %s107, %s108
      %p119 = scmp.eq.s32.totalorder %s17, 0
      %p120 = por %p118, %p119
      %p121 = scmp.ne.s32.totalorder %s107, %s108
      %p122 = scmp.eq.s32.totalorder %s18, 3
      %p123 = por %p121, %p122
      %p125 = scmp.ne.s32.totalorder %s108, %s124
      %p126 = scmp.eq.s32.totalorder %s18, 0
      %p127 = por %p125, %p126
      %s128 = ssub.s32 %s19, %s31
      %p129 = scmp.eq.s32.totalorder %s128, 0
      %s131 = sadd.s32 %s130, 1
      %s132 = scalar_select %p129, %s130, %s131
      %p135 = pneg %p129
      %p136 = scmp.eq.s32.totalorder %s12, 3
      %p137 = por %p135, %p136
      %p138 = scmp.ne.s32.totalorder %s130, %s133
      %p139 = scmp.eq.s32.totalorder %s12, 0
      %p140 = por %p138, %p139
      %p141 = scmp.ne.s32.totalorder %s130, %s133
      %p142 = scmp.eq.s32.totalorder %s17, 3
      %p143 = por %p141, %p142
      %p144 = scmp.ne.s32.totalorder %s133, %s134
      %p145 = scmp.eq.s32.totalorder %s17, 0
      %p146 = por %p144, %p145
      %p147 = scmp.ne.s32.totalorder %s133, %s134
      %p148 = scmp.eq.s32.totalorder %s18, 3
      %p149 = por %p147, %p148
      %p151 = scmp.ne.s32.totalorder %s134, %s150
      %p152 = scmp.eq.s32.totalorder %s18, 0
      %p153 = por %p151, %p152
      %s155 = sadd.s32 %s154, 1
      %p158 = scmp.eq.s32.totalorder %s12, 3
      %p159 = scmp.ne.s32.totalorder %s154, %s156
      %p160 = scmp.eq.s32.totalorder %s12, 0
      %p161 = por %p159, %p160
      %p162 = scmp.ne.s32.totalorder %s154, %s156
      %p163 = scmp.eq.s32.totalorder %s17, 3
      %p164 = por %p162, %p163
      %p165 = scmp.ne.s32.totalorder %s156, %s157
      %p166 = scmp.eq.s32.totalorder %s17, 0
      %p167 = por %p165, %p166
      %p168 = scmp.ne.s32.totalorder %s156, %s157
      %p169 = scmp.eq.s32.totalorder %s18, 3
      %p170 = por %p168, %p169
      %p172 = scmp.ne.s32.totalorder %s157, %s171
      %p173 = scmp.eq.s32.totalorder %s18, 0
      %p174 = por %p172, %p173
      %s176 = sadd.s32 %s175, 1
      %p179 = scmp.eq.s32.totalorder %s12, 3
      %p180 = scmp.ne.s32.totalorder %s175, %s177
      %p181 = scmp.eq.s32.totalorder %s12, 0
      %p182 = por %p180, %p181
      %p183 = scmp.ne.s32.totalorder %s175, %s177
      %p184 = scmp.eq.s32.totalorder %s17, 3
      %p185 = por %p183, %p184
      %p186 = scmp.ne.s32.totalorder %s177, %s178
      %p187 = scmp.eq.s32.totalorder %s17, 0
      %p188 = por %p186, %p187
      %p189 = scmp.ne.s32.totalorder %s177, %s178
      %p190 = scmp.eq.s32.totalorder %s18, 3
      %p191 = por %p189, %p190
      %p193 = scmp.ne.s32.totalorder %s178, %s192
      %p194 = scmp.eq.s32.totalorder %s18, 0
      %p195 = por %p193, %p194
      %s196 = ssub.s32 %s19, %s31
      %s197 = ssub.s32 %s20, %s27
      %s198 = sor.u32 %s196, %s197
      %p199 = scmp.eq.s32.totalorder %s198, 0
      %s201 = sadd.s32 %s200, 1
      %s202 = scalar_select %p199, %s200, %s201
      %p205 = pneg %p199
      %p206 = scmp.eq.s32.totalorder %s12, 3
      %p207 = por %p205, %p206
      %p208 = scmp.ne.s32.totalorder %s200, %s203
      %p209 = scmp.eq.s32.totalorder %s12, 0
      %p210 = por %p208, %p209
      %p211 = scmp.ne.s32.totalorder %s200, %s203
      %p212 = scmp.eq.s32.totalorder %s17, 3
      %p213 = por %p211, %p212
      %p214 = scmp.ne.s32.totalorder %s203, %s204
      %p215 = scmp.eq.s32.totalorder %s17, 0
      %p216 = por %p214, %p215
      %p217 = scmp.ne.s32.totalorder %s203, %s204
      %p218 = scmp.eq.s32.totalorder %s18, 3
      %p219 = por %p217, %p218
      %p221 = scmp.ne.s32.totalorder %s204, %s220
      %p222 = scmp.eq.s32.totalorder %s18, 0
      %p223 = por %p221, %p222
      %p224 = scmp.le.s32.totalorder 1, %s12
      %p225 = scmp.lt.s32.totalorder %s12, 5
      %p226 = pnand %p224, %p225
      %p227 = pneg %p226
      // Predicated region
      $region9: #{cas_forward.3} parent=5 // pred_check
        _
      $region10: #{cas_forward.3} parent=5 // pred_check_branch
        %229 = sbr.rel (%p226) target = $region12
      $region11: #{cas_forward.3} parent=5 // pred_region
        %s230 = ssub.s32 %s12, 1
        // Predicated region
        $region13: #{cas_forward.3} parent=11 // pred_check
          %p231 = pneg %p167
        $region14: #{cas_forward.3} parent=11 // pred_check_branch
          %233 = sbr.rel (%p231) target = $region16
        $region15: #{cas_forward.3} parent=11 // pred_region
          _
        $region16: #{cas_forward.3} parent=11 // pred_fallthru
          _
        // Predicated region
        $region17: #{cas_forward.3} parent=11 // pred_check
          %p234 = pneg %p188
        $region18: #{cas_forward.3} parent=11 // pred_check_branch
          %236 = sbr.rel (%p234) target = $region20
        $region19: #{cas_forward.3} parent=11 // pred_region
          _
        $region20: #{cas_forward.3} parent=11 // pred_fallthru
          _
      $region12: #{cas_forward.3} parent=5 // pred_fallthru
        _
      %p237 = scmp.lt.s32.totalorder %s12, 4
      // Predicated region
      $region21: #{cas_forward.3} parent=5 // pred_check
        %p238 = pneg %p237
      $region22: #{cas_forward.3} parent=5 // pred_check_branch
        %240 = sbr.rel (%p238) target = $region24
      $region23: #{cas_forward.3} parent=5 // pred_region
        // Predicated region
        $region25: #{cas_forward.3} parent=23 // pred_check
          %p241 = pneg %p46
        $region26: #{cas_forward.3} parent=23 // pred_check_branch
          %243 = sbr.rel (%p241) target = $region28
        $region27: #{cas_forward.3} parent=23 // pred_region
          %s244 = sand.u32 %s36, 1
          %s245 = sand.u32 %s36, 1
          %s246 = smul.addr %s245, 256
          %s247 = scalar_lea.vmem [#allocation3], %s246
          %s248 = smul.addr %s19, 64
          %s249 = sadd.s32 %s20, %s248
          %s250 = smul.addr %s249, 8
          %s251 = scalar_lea.vmem %s0, %s250
          // Predicated region
          $region29: #{cas_forward.3} parent=27 // pred_check
            _
          $region30: #{cas_forward.3} parent=27 // pred_check_branch
            %253 = sbr.rel (0) target = $region32
          $region31: #{cas_forward.3} parent=27 // pred_region
            // Predicated region
            $region33: #{cas_forward.3} parent=31 // pred_check
              _
            $region34: #{cas_forward.3} parent=31 // pred_check_branch
              %255 = sbr.rel (0) target = $region36
            $region35: #{cas_forward.3} parent=31 // pred_region
              // Predicated region
              $region48: #{cas_forward.3} parent=35 // pred_check
                _
              $region49: #{cas_forward.3} parent=35 // pred_check_branch
                %333 = sbr.rel (0) target = $region51
              $region50: #{cas_forward.3} parent=35 // pred_region
                loop: start=0, step=1, limit=1
                $region52: #{cas_forward.3} parent=50 // loop_pre_header
                  _
                $region53: #{cas_forward.3} parent=50 // loop_header
                  %s335 = sphi 0, %s339
                  %p336 = scmp.ge.s32.totalorder %s335, 1
                  %s340 = sphi %s251, %s251
                  %s341 = sphi %s247, %s247
                $region54: #{cas_forward.3} parent=50 // loop_header_branch
                  %338 = sbr.rel (%p336) target = $region58
                $region55: #{cas_forward.3} parent=50 // loop_body
                  %v342 = vld [vmem:[%s340] sm:$0xff]
                  %343 = vst [vmem:[%s341] sm:$0xff] %v342
                  %v344 = vld [vmem:[%s340 + $0x10] sm:$0xff]
                  %345 = vst [vmem:[%s341 + $0x8] sm:$0xff] %v344
                  %v346 = vld [vmem:[%s340 + $0x20] sm:$0xff]
                  %347 = vst [vmem:[%s341 + $0x10] sm:$0xff] %v346
                  %v348 = vld [vmem:[%s340 + $0x30] sm:$0xff]
                  %349 = vst [vmem:[%s341 + $0x18] sm:$0xff] %v348
                  %v350 = vld [vmem:[%s340 + $0x40] sm:$0xff]
                  %351 = vst [vmem:[%s341 + $0x20] sm:$0xff] %v350
                  %v352 = vld [vmem:[%s340 + $0x50] sm:$0xff]
                  %353 = vst [vmem:[%s341 + $0x28] sm:$0xff] %v352
                  %v354 = vld [vmem:[%s340 + $0x60] sm:$0xff]
                  %355 = vst [vmem:[%s341 + $0x30] sm:$0xff] %v354
                  %v356 = vld [vmem:[%s340 + $0x70] sm:$0xff]
                  %357 = vst [vmem:[%s341 + $0x38] sm:$0xff] %v356
                  %v358 = vld [vmem:[%s340 + $0x80] sm:$0xff]
                  %359 = vst [vmem:[%s341 + $0x40] sm:$0xff] %v358
                  %v360 = vld [vmem:[%s340 + $0x90] sm:$0xff]
                  %361 = vst [vmem:[%s341 + $0x48] sm:$0xff] %v360
                  %v362 = vld [vmem:[%s340 + $0xa0] sm:$0xff]
                  %363 = vst [vmem:[%s341 + $0x50] sm:$0xff] %v362
                  %v364 = vld [vmem:[%s340 + $0xb0] sm:$0xff]
                  %365 = vst [vmem:[%s341 + $0x58] sm:$0xff] %v364
                  %v366 = vld [vmem:[%s340 + $0xc0] sm:$0xff]
                  %367 = vst [vmem:[%s341 + $0x60] sm:$0xff] %v366
                  %v368 = vld [vmem:[%s340 + $0xd0] sm:$0xff]
                  %369 = vst [vmem:[%s341 + $0x68] sm:$0xff] %v368
                  %v370 = vld [vmem:[%s340 + $0xe0] sm:$0xff]
                  %371 = vst [vmem:[%s341 + $0x70] sm:$0xff] %v370
                  %v372 = vld [vmem:[%s340 + $0xf0] sm:$0xff]
                  %373 = vst [vmem:[%s341 + $0x78] sm:$0xff] %v372
                  %v374 = vld [vmem:[%s340 + $0x100] sm:$0xff]
                  %375 = vst [vmem:[%s341 + $0x80] sm:$0xff] %v374
                  %v376 = vld [vmem:[%s340 + $0x110] sm:$0xff]
                  %377 = vst [vmem:[%s341 + $0x88] sm:$0xff] %v376
                  %v378 = vld [vmem:[%s340 + $0x120] sm:$0xff]
                  %379 = vst [vmem:[%s341 + $0x90] sm:$0xff] %v378
                  %v380 = vld [vmem:[%s340 + $0x130] sm:$0xff]
                  %381 = vst [vmem:[%s341 + $0x98] sm:$0xff] %v380
                  %v382 = vld [vmem:[%s340 + $0x140] sm:$0xff]
                  %383 = vst [vmem:[%s341 + $0xa0] sm:$0xff] %v382
                  %v384 = vld [vmem:[%s340 + $0x150] sm:$0xff]
                  %385 = vst [vmem:[%s341 + $0xa8] sm:$0xff] %v384
                  %v386 = vld [vmem:[%s340 + $0x160] sm:$0xff]
                  %387 = vst [vmem:[%s341 + $0xb0] sm:$0xff] %v386
                  %v388 = vld [vmem:[%s340 + $0x170] sm:$0xff]
                  %389 = vst [vmem:[%s341 + $0xb8] sm:$0xff] %v388
                  %v390 = vld [vmem:[%s340 + $0x180] sm:$0xff]
                  %391 = vst [vmem:[%s341 + $0xc0] sm:$0xff] %v390
                  %v392 = vld [vmem:[%s340 + $0x190] sm:$0xff]
                  %393 = vst [vmem:[%s341 + $0xc8] sm:$0xff] %v392
                  %v394 = vld [vmem:[%s340 + $0x1a0] sm:$0xff]
                  %395 = vst [vmem:[%s341 + $0xd0] sm:$0xff] %v394
                  %v396 = vld [vmem:[%s340 + $0x1b0] sm:$0xff]
                  %397 = vst [vmem:[%s341 + $0xd8] sm:$0xff] %v396
                  %v398 = vld [vmem:[%s340 + $0x1c0] sm:$0xff]
                  %399 = vst [vmem:[%s341 + $0xe0] sm:$0xff] %v398
                  %v400 = vld [vmem:[%s340 + $0x1d0] sm:$0xff]
                  %401 = vst [vmem:[%s341 + $0xe8] sm:$0xff] %v400
                  %v402 = vld [vmem:[%s340 + $0x1e0] sm:$0xff]
                  %403 = vst [vmem:[%s341 + $0xf0] sm:$0xff] %v402
                  %v404 = vld [vmem:[%s340 + $0x1f0] sm:$0xff]
                  %405 = vst [vmem:[%s341 + $0xf8] sm:$0xff] %v404
                $region56: #{cas_forward.3} parent=50 // loop_footer
                  %s339 = sadd.s32 1, %s335
                $region57: #{cas_forward.3} parent=50 // loop_footer_branch
                  %334 = sbr.rel target = $region53
                $region58: #{cas_forward.3} parent=50 // loop_exit
                  _
              $region51: #{cas_forward.3} parent=35 // pred_fallthru
                _
              // Predicated region
              $region59: #{cas_forward.3} parent=35 // pred_check
                _
              $region60: #{cas_forward.3} parent=35 // pred_check_branch
                %407 = sbr.rel target = $region62
              $region61: #{cas_forward.3} parent=35 // pred_region
                _
              $region62: #{cas_forward.3} parent=35 // pred_fallthru
                _
            $region36: #{cas_forward.3} parent=31 // pred_fallthru
              _
            // Predicated region
            $region37: #{cas_forward.3} parent=31 // pred_check
              _
            $region38: #{cas_forward.3} parent=31 // pred_check_branch
              %257 = sbr.rel target = $region40
            $region39: #{cas_forward.3} parent=31 // pred_region
              %s259 = ssub.s32 256, 1
              loop: start=0, step=1, limit=1
              $region41: #{cas_forward.3} parent=39 // loop_pre_header
                _
              $region42: #{cas_forward.3} parent=39 // loop_header
                %s261 = sphi 0, %s265
                %p262 = scmp.ge.s32.totalorder %s261, 1
                %s266 = sphi %s251, %s251
                %s267 = sphi %s247, %s247
              $region43: #{cas_forward.3} parent=39 // loop_header_branch
                %264 = sbr.rel (%p262) target = $region47
              $region44: #{cas_forward.3} parent=39 // loop_body
                %v268 = vld [vmem:[%s266] sm:%s259]
                %269 = vst [vmem:[%s267] sm:%s259] %v268
                %v270 = vld [vmem:[%s266 + $0x10] sm:%s259]
                %271 = vst [vmem:[%s267 + $0x8] sm:%s259] %v270
                %v272 = vld [vmem:[%s266 + $0x20] sm:%s259]
                %273 = vst [vmem:[%s267 + $0x10] sm:%s259] %v272
                %v274 = vld [vmem:[%s266 + $0x30] sm:%s259]
                %275 = vst [vmem:[%s267 + $0x18] sm:%s259] %v274
                %v276 = vld [vmem:[%s266 + $0x40] sm:%s259]
                %277 = vst [vmem:[%s267 + $0x20] sm:%s259] %v276
                %v278 = vld [vmem:[%s266 + $0x50] sm:%s259]
                %279 = vst [vmem:[%s267 + $0x28] sm:%s259] %v278
                %v280 = vld [vmem:[%s266 + $0x60] sm:%s259]
                %281 = vst [vmem:[%s267 + $0x30] sm:%s259] %v280
                %v282 = vld [vmem:[%s266 + $0x70] sm:%s259]
                %283 = vst [vmem:[%s267 + $0x38] sm:%s259] %v282
                %v284 = vld [vmem:[%s266 + $0x80] sm:%s259]
                %285 = vst [vmem:[%s267 + $0x40] sm:%s259] %v284
                %v286 = vld [vmem:[%s266 + $0x90] sm:%s259]
                %287 = vst [vmem:[%s267 + $0x48] sm:%s259] %v286
                %v288 = vld [vmem:[%s266 + $0xa0] sm:%s259]
                %289 = vst [vmem:[%s267 + $0x50] sm:%s259] %v288
                %v290 = vld [vmem:[%s266 + $0xb0] sm:%s259]
                %291 = vst [vmem:[%s267 + $0x58] sm:%s259] %v290
                %v292 = vld [vmem:[%s266 + $0xc0] sm:%s259]
                %293 = vst [vmem:[%s267 + $0x60] sm:%s259] %v292
                %v294 = vld [vmem:[%s266 + $0xd0] sm:%s259]
                %295 = vst [vmem:[%s267 + $0x68] sm:%s259] %v294
                %v296 = vld [vmem:[%s266 + $0xe0] sm:%s259]
                %297 = vst [vmem:[%s267 + $0x70] sm:%s259] %v296
                %v298 = vld [vmem:[%s266 + $0xf0] sm:%s259]
                %299 = vst [vmem:[%s267 + $0x78] sm:%s259] %v298
                %v300 = vld [vmem:[%s266 + $0x100] sm:%s259]
                %301 = vst [vmem:[%s267 + $0x80] sm:%s259] %v300
                %v302 = vld [vmem:[%s266 + $0x110] sm:%s259]
                %303 = vst [vmem:[%s267 + $0x88] sm:%s259] %v302
                %v304 = vld [vmem:[%s266 + $0x120] sm:%s259]
                %305 = vst [vmem:[%s267 + $0x90] sm:%s259] %v304
                %v306 = vld [vmem:[%s266 + $0x130] sm:%s259]
                %307 = vst [vmem:[%s267 + $0x98] sm:%s259] %v306
                %v308 = vld [vmem:[%s266 + $0x140] sm:%s259]
                %309 = vst [vmem:[%s267 + $0xa0] sm:%s259] %v308
                %v310 = vld [vmem:[%s266 + $0x150] sm:%s259]
                %311 = vst [vmem:[%s267 + $0xa8] sm:%s259] %v310
                %v312 = vld [vmem:[%s266 + $0x160] sm:%s259]
                %313 = vst [vmem:[%s267 + $0xb0] sm:%s259] %v312
                %v314 = vld [vmem:[%s266 + $0x170] sm:%s259]
                %315 = vst [vmem:[%s267 + $0xb8] sm:%s259] %v314
                %v316 = vld [vmem:[%s266 + $0x180] sm:%s259]
                %317 = vst [vmem:[%s267 + $0xc0] sm:%s259] %v316
                %v318 = vld [vmem:[%s266 + $0x190] sm:%s259]
                %319 = vst [vmem:[%s267 + $0xc8] sm:%s259] %v318
                %v320 = vld [vmem:[%s266 + $0x1a0] sm:%s259]
                %321 = vst [vmem:[%s267 + $0xd0] sm:%s259] %v320
                %v322 = vld [vmem:[%s266 + $0x1b0] sm:%s259]
                %323 = vst [vmem:[%s267 + $0xd8] sm:%s259] %v322
                %v324 = vld [vmem:[%s266 + $0x1c0] sm:%s259]
                %325 = vst [vmem:[%s267 + $0xe0] sm:%s259] %v324
                %v326 = vld [vmem:[%s266 + $0x1d0] sm:%s259]
                %327 = vst [vmem:[%s267 + $0xe8] sm:%s259] %v326
                %v328 = vld [vmem:[%s266 + $0x1e0] sm:%s259]
                %329 = vst [vmem:[%s267 + $0xf0] sm:%s259] %v328
                %v330 = vld [vmem:[%s266 + $0x1f0] sm:%s259]
                %331 = vst [vmem:[%s267 + $0xf8] sm:%s259] %v330
              $region45: #{cas_forward.3} parent=39 // loop_footer
                %s265 = sadd.s32 1, %s261
              $region46: #{cas_forward.3} parent=39 // loop_footer_branch
                %260 = sbr.rel target = $region42
              $region47: #{cas_forward.3} parent=39 // loop_exit
                _
            $region40: #{cas_forward.3} parent=31 // pred_fallthru
              _
          $region32: #{cas_forward.3} parent=27 // pred_fallthru
            _
          %408 = vnop
        $region28: #{cas_forward.3} parent=23 // pred_fallthru
          _
        // Predicated region
        $region63: #{cas_forward.3} parent=23 // pred_check
          %p409 = pneg %p80
        $region64: #{cas_forward.3} parent=23 // pred_check_branch
          %411 = sbr.rel (%p409) target = $region66
        $region65: #{cas_forward.3} parent=23 // pred_region
          %s412 = sand.u32 %s70, 1
          %s413 = sand.u32 %s70, 1
          %s414 = smul.addr %s413, 256
          %s415 = scalar_lea.vmem [#allocation4], %s414
          %s416 = ssub.s32 %s20, 1
          %p417 = scmp.gt.s32.totalorder %s416, 0
          %s418 = scalar_select %p417, %s416, 0
          %s419 = smul.addr %s19, 64
          %s420 = sadd.s32 %s418, %s419
          %s421 = smul.addr %s420, 8
          %s422 = scalar_lea.vmem %s1, %s421
          // Predicated region
          $region67: #{cas_forward.3} parent=65 // pred_check
            _
          $region68: #{cas_forward.3} parent=65 // pred_check_branch
            %424 = sbr.rel (0) target = $region70
          $region69: #{cas_forward.3} parent=65 // pred_region
            // Predicated region
            $region71: #{cas_forward.3} parent=69 // pred_check
              _
            $region72: #{cas_forward.3} parent=69 // pred_check_branch
              %426 = sbr.rel (0) target = $region74
            $region73: #{cas_forward.3} parent=69 // pred_region
              // Predicated region
              $region86: #{cas_forward.3} parent=73 // pred_check
                _
              $region87: #{cas_forward.3} parent=73 // pred_check_branch
                %504 = sbr.rel (0) target = $region89
              $region88: #{cas_forward.3} parent=73 // pred_region
                loop: start=0, step=1, limit=1
                $region90: #{cas_forward.3} parent=88 // loop_pre_header
                  _
                $region91: #{cas_forward.3} parent=88 // loop_header
                  %s506 = sphi 0, %s510
                  %p507 = scmp.ge.s32.totalorder %s506, 1
                  %s511 = sphi %s422, %s422
                  %s512 = sphi %s415, %s415
                $region92: #{cas_forward.3} parent=88 // loop_header_branch
                  %509 = sbr.rel (%p507) target = $region96
                $region93: #{cas_forward.3} parent=88 // loop_body
                  %v513 = vld [vmem:[%s511] sm:$0xff]
                  %514 = vst [vmem:[%s512] sm:$0xff] %v513
                  %v515 = vld [vmem:[%s511 + $0x10] sm:$0xff]
                  %516 = vst [vmem:[%s512 + $0x8] sm:$0xff] %v515
                  %v517 = vld [vmem:[%s511 + $0x20] sm:$0xff]
                  %518 = vst [vmem:[%s512 + $0x10] sm:$0xff] %v517
                  %v519 = vld [vmem:[%s511 + $0x30] sm:$0xff]
                  %520 = vst [vmem:[%s512 + $0x18] sm:$0xff] %v519
                  %v521 = vld [vmem:[%s511 + $0x40] sm:$0xff]
                  %522 = vst [vmem:[%s512 + $0x20] sm:$0xff] %v521
                  %v523 = vld [vmem:[%s511 + $0x50] sm:$0xff]
                  %524 = vst [vmem:[%s512 + $0x28] sm:$0xff] %v523
                  %v525 = vld [vmem:[%s511 + $0x60] sm:$0xff]
                  %526 = vst [vmem:[%s512 + $0x30] sm:$0xff] %v525
                  %v527 = vld [vmem:[%s511 + $0x70] sm:$0xff]
                  %528 = vst [vmem:[%s512 + $0x38] sm:$0xff] %v527
                  %v529 = vld [vmem:[%s511 + $0x80] sm:$0xff]
                  %530 = vst [vmem:[%s512 + $0x40] sm:$0xff] %v529
                  %v531 = vld [vmem:[%s511 + $0x90] sm:$0xff]
                  %532 = vst [vmem:[%s512 + $0x48] sm:$0xff] %v531
                  %v533 = vld [vmem:[%s511 + $0xa0] sm:$0xff]
                  %534 = vst [vmem:[%s512 + $0x50] sm:$0xff] %v533
                  %v535 = vld [vmem:[%s511 + $0xb0] sm:$0xff]
                  %536 = vst [vmem:[%s512 + $0x58] sm:$0xff] %v535
                  %v537 = vld [vmem:[%s511 + $0xc0] sm:$0xff]
                  %538 = vst [vmem:[%s512 + $0x60] sm:$0xff] %v537
                  %v539 = vld [vmem:[%s511 + $0xd0] sm:$0xff]
                  %540 = vst [vmem:[%s512 + $0x68] sm:$0xff] %v539
                  %v541 = vld [vmem:[%s511 + $0xe0] sm:$0xff]
                  %542 = vst [vmem:[%s512 + $0x70] sm:$0xff] %v541
                  %v543 = vld [vmem:[%s511 + $0xf0] sm:$0xff]
                  %544 = vst [vmem:[%s512 + $0x78] sm:$0xff] %v543
                  %v545 = vld [vmem:[%s511 + $0x100] sm:$0xff]
                  %546 = vst [vmem:[%s512 + $0x80] sm:$0xff] %v545
                  %v547 = vld [vmem:[%s511 + $0x110] sm:$0xff]
                  %548 = vst [vmem:[%s512 + $0x88] sm:$0xff] %v547
                  %v549 = vld [vmem:[%s511 + $0x120] sm:$0xff]
                  %550 = vst [vmem:[%s512 + $0x90] sm:$0xff] %v549
                  %v551 = vld [vmem:[%s511 + $0x130] sm:$0xff]
                  %552 = vst [vmem:[%s512 + $0x98] sm:$0xff] %v551
                  %v553 = vld [vmem:[%s511 + $0x140] sm:$0xff]
                  %554 = vst [vmem:[%s512 + $0xa0] sm:$0xff] %v553
                  %v555 = vld [vmem:[%s511 + $0x150] sm:$0xff]
                  %556 = vst [vmem:[%s512 + $0xa8] sm:$0xff] %v555
                  %v557 = vld [vmem:[%s511 + $0x160] sm:$0xff]
                  %558 = vst [vmem:[%s512 + $0xb0] sm:$0xff] %v557
                  %v559 = vld [vmem:[%s511 + $0x170] sm:$0xff]
                  %560 = vst [vmem:[%s512 + $0xb8] sm:$0xff] %v559
                  %v561 = vld [vmem:[%s511 + $0x180] sm:$0xff]
                  %562 = vst [vmem:[%s512 + $0xc0] sm:$0xff] %v561
                  %v563 = vld [vmem:[%s511 + $0x190] sm:$0xff]
                  %564 = vst [vmem:[%s512 + $0xc8] sm:$0xff] %v563
                  %v565 = vld [vmem:[%s511 + $0x1a0] sm:$0xff]
                  %566 = vst [vmem:[%s512 + $0xd0] sm:$0xff] %v565
                  %v567 = vld [vmem:[%s511 + $0x1b0] sm:$0xff]
                  %568 = vst [vmem:[%s512 + $0xd8] sm:$0xff] %v567
                  %v569 = vld [vmem:[%s511 + $0x1c0] sm:$0xff]
                  %570 = vst [vmem:[%s512 + $0xe0] sm:$0xff] %v569
                  %v571 = vld [vmem:[%s511 + $0x1d0] sm:$0xff]
                  %572 = vst [vmem:[%s512 + $0xe8] sm:$0xff] %v571
                  %v573 = vld [vmem:[%s511 + $0x1e0] sm:$0xff]
                  %574 = vst [vmem:[%s512 + $0xf0] sm:$0xff] %v573
                  %v575 = vld [vmem:[%s511 + $0x1f0] sm:$0xff]
                  %576 = vst [vmem:[%s512 + $0xf8] sm:$0xff] %v575
                $region94: #{cas_forward.3} parent=88 // loop_footer
                  %s510 = sadd.s32 1, %s506
                $region95: #{cas_forward.3} parent=88 // loop_footer_branch
                  %505 = sbr.rel target = $region91
                $region96: #{cas_forward.3} parent=88 // loop_exit
                  _
              $region89: #{cas_forward.3} parent=73 // pred_fallthru
                _
              // Predicated region
              $region97: #{cas_forward.3} parent=73 // pred_check
                _
              $region98: #{cas_forward.3} parent=73 // pred_check_branch
                %578 = sbr.rel target = $region100
              $region99: #{cas_forward.3} parent=73 // pred_region
                _
              $region100: #{cas_forward.3} parent=73 // pred_fallthru
                _
            $region74: #{cas_forward.3} parent=69 // pred_fallthru
              _
            // Predicated region
            $region75: #{cas_forward.3} parent=69 // pred_check
              _
            $region76: #{cas_forward.3} parent=69 // pred_check_branch
              %428 = sbr.rel target = $region78
            $region77: #{cas_forward.3} parent=69 // pred_region
              %s430 = ssub.s32 256, 1
              loop: start=0, step=1, limit=1
              $region79: #{cas_forward.3} parent=77 // loop_pre_header
                _
              $region80: #{cas_forward.3} parent=77 // loop_header
                %s432 = sphi 0, %s436
                %p433 = scmp.ge.s32.totalorder %s432, 1
                %s437 = sphi %s422, %s422
                %s438 = sphi %s415, %s415
              $region81: #{cas_forward.3} parent=77 // loop_header_branch
                %435 = sbr.rel (%p433) target = $region85
              $region82: #{cas_forward.3} parent=77 // loop_body
                %v439 = vld [vmem:[%s437] sm:%s430]
                %440 = vst [vmem:[%s438] sm:%s430] %v439
                %v441 = vld [vmem:[%s437 + $0x10] sm:%s430]
                %442 = vst [vmem:[%s438 + $0x8] sm:%s430] %v441
                %v443 = vld [vmem:[%s437 + $0x20] sm:%s430]
                %444 = vst [vmem:[%s438 + $0x10] sm:%s430] %v443
                %v445 = vld [vmem:[%s437 + $0x30] sm:%s430]
                %446 = vst [vmem:[%s438 + $0x18] sm:%s430] %v445
                %v447 = vld [vmem:[%s437 + $0x40] sm:%s430]
                %448 = vst [vmem:[%s438 + $0x20] sm:%s430] %v447
                %v449 = vld [vmem:[%s437 + $0x50] sm:%s430]
                %450 = vst [vmem:[%s438 + $0x28] sm:%s430] %v449
                %v451 = vld [vmem:[%s437 + $0x60] sm:%s430]
                %452 = vst [vmem:[%s438 + $0x30] sm:%s430] %v451
                %v453 = vld [vmem:[%s437 + $0x70] sm:%s430]
                %454 = vst [vmem:[%s438 + $0x38] sm:%s430] %v453
                %v455 = vld [vmem:[%s437 + $0x80] sm:%s430]
                %456 = vst [vmem:[%s438 + $0x40] sm:%s430] %v455
                %v457 = vld [vmem:[%s437 + $0x90] sm:%s430]
                %458 = vst [vmem:[%s438 + $0x48] sm:%s430] %v457
                %v459 = vld [vmem:[%s437 + $0xa0] sm:%s430]
                %460 = vst [vmem:[%s438 + $0x50] sm:%s430] %v459
                %v461 = vld [vmem:[%s437 + $0xb0] sm:%s430]
                %462 = vst [vmem:[%s438 + $0x58] sm:%s430] %v461
                %v463 = vld [vmem:[%s437 + $0xc0] sm:%s430]
                %464 = vst [vmem:[%s438 + $0x60] sm:%s430] %v463
                %v465 = vld [vmem:[%s437 + $0xd0] sm:%s430]
                %466 = vst [vmem:[%s438 + $0x68] sm:%s430] %v465
                %v467 = vld [vmem:[%s437 + $0xe0] sm:%s430]
                %468 = vst [vmem:[%s438 + $0x70] sm:%s430] %v467
                %v469 = vld [vmem:[%s437 + $0xf0] sm:%s430]
                %470 = vst [vmem:[%s438 + $0x78] sm:%s430] %v469
                %v471 = vld [vmem:[%s437 + $0x100] sm:%s430]
                %472 = vst [vmem:[%s438 + $0x80] sm:%s430] %v471
                %v473 = vld [vmem:[%s437 + $0x110] sm:%s430]
                %474 = vst [vmem:[%s438 + $0x88] sm:%s430] %v473
                %v475 = vld [vmem:[%s437 + $0x120] sm:%s430]
                %476 = vst [vmem:[%s438 + $0x90] sm:%s430] %v475
                %v477 = vld [vmem:[%s437 + $0x130] sm:%s430]
                %478 = vst [vmem:[%s438 + $0x98] sm:%s430] %v477
                %v479 = vld [vmem:[%s437 + $0x140] sm:%s430]
                %480 = vst [vmem:[%s438 + $0xa0] sm:%s430] %v479
                %v481 = vld [vmem:[%s437 + $0x150] sm:%s430]
                %482 = vst [vmem:[%s438 + $0xa8] sm:%s430] %v481
                %v483 = vld [vmem:[%s437 + $0x160] sm:%s430]
                %484 = vst [vmem:[%s438 + $0xb0] sm:%s430] %v483
                %v485 = vld [vmem:[%s437 + $0x170] sm:%s430]
                %486 = vst [vmem:[%s438 + $0xb8] sm:%s430] %v485
                %v487 = vld [vmem:[%s437 + $0x180] sm:%s430]
                %488 = vst [vmem:[%s438 + $0xc0] sm:%s430] %v487
                %v489 = vld [vmem:[%s437 + $0x190] sm:%s430]
                %490 = vst [vmem:[%s438 + $0xc8] sm:%s430] %v489
                %v491 = vld [vmem:[%s437 + $0x1a0] sm:%s430]
                %492 = vst [vmem:[%s438 + $0xd0] sm:%s430] %v491
                %v493 = vld [vmem:[%s437 + $0x1b0] sm:%s430]
                %494 = vst [vmem:[%s438 + $0xd8] sm:%s430] %v493
                %v495 = vld [vmem:[%s437 + $0x1c0] sm:%s430]
                %496 = vst [vmem:[%s438 + $0xe0] sm:%s430] %v495
                %v497 = vld [vmem:[%s437 + $0x1d0] sm:%s430]
                %498 = vst [vmem:[%s438 + $0xe8] sm:%s430] %v497
                %v499 = vld [vmem:[%s437 + $0x1e0] sm:%s430]
                %500 = vst [vmem:[%s438 + $0xf0] sm:%s430] %v499
                %v501 = vld [vmem:[%s437 + $0x1f0] sm:%s430]
                %502 = vst [vmem:[%s438 + $0xf8] sm:%s430] %v501
              $region83: #{cas_forward.3} parent=77 // loop_footer
                %s436 = sadd.s32 1, %s432
              $region84: #{cas_forward.3} parent=77 // loop_footer_branch
                %431 = sbr.rel target = $region80
              $region85: #{cas_forward.3} parent=77 // loop_exit
                _
            $region78: #{cas_forward.3} parent=69 // pred_fallthru
              _
          $region70: #{cas_forward.3} parent=65 // pred_fallthru
            _
          %579 = vnop
        $region66: #{cas_forward.3} parent=23 // pred_fallthru
          _
        // Predicated region
        $region101: #{cas_forward.3} parent=23 // pred_check
          %p580 = pneg %p114
        $region102: #{cas_forward.3} parent=23 // pred_check_branch
          %582 = sbr.rel (%p580) target = $region104
        $region103: #{cas_forward.3} parent=23 // pred_region
          %s583 = sand.u32 %s104, 1
          %s584 = sand.u32 %s104, 1
          %s585 = smul.addr %s584, 256
          %s586 = scalar_lea.vmem [#allocation5], %s585
          %s587 = sadd.s32 %s20, 1
          %p588 = scmp.lt.s32.totalorder %s587, 1
          %s589 = scalar_select %p588, %s587, 1
          %s590 = smul.addr %s19, 64
          %s591 = sadd.s32 %s589, %s590
          %s592 = smul.addr %s591, 8
          %s593 = scalar_lea.vmem %s2, %s592
          // Predicated region
          $region105: #{cas_forward.3} parent=103 // pred_check
            _
          $region106: #{cas_forward.3} parent=103 // pred_check_branch
            %595 = sbr.rel (0) target = $region108
          $region107: #{cas_forward.3} parent=103 // pred_region
            // Predicated region
            $region109: #{cas_forward.3} parent=107 // pred_check
              _
            $region110: #{cas_forward.3} parent=107 // pred_check_branch
              %597 = sbr.rel (0) target = $region112
            $region111: #{cas_forward.3} parent=107 // pred_region
              // Predicated region
              $region124: #{cas_forward.3} parent=111 // pred_check
                _
              $region125: #{cas_forward.3} parent=111 // pred_check_branch
                %675 = sbr.rel (0) target = $region127
              $region126: #{cas_forward.3} parent=111 // pred_region
                loop: start=0, step=1, limit=1
                $region128: #{cas_forward.3} parent=126 // loop_pre_header
                  _
                $region129: #{cas_forward.3} parent=126 // loop_header
                  %s677 = sphi 0, %s681
                  %p678 = scmp.ge.s32.totalorder %s677, 1
                  %s682 = sphi %s593, %s593
                  %s683 = sphi %s586, %s586
                $region130: #{cas_forward.3} parent=126 // loop_header_branch
                  %680 = sbr.rel (%p678) target = $region134
                $region131: #{cas_forward.3} parent=126 // loop_body
                  %v684 = vld [vmem:[%s682] sm:$0xff]
                  %685 = vst [vmem:[%s683] sm:$0xff] %v684
                  %v686 = vld [vmem:[%s682 + $0x10] sm:$0xff]
                  %687 = vst [vmem:[%s683 + $0x8] sm:$0xff] %v686
                  %v688 = vld [vmem:[%s682 + $0x20] sm:$0xff]
                  %689 = vst [vmem:[%s683 + $0x10] sm:$0xff] %v688
                  %v690 = vld [vmem:[%s682 + $0x30] sm:$0xff]
                  %691 = vst [vmem:[%s683 + $0x18] sm:$0xff] %v690
                  %v692 = vld [vmem:[%s682 + $0x40] sm:$0xff]
                  %693 = vst [vmem:[%s683 + $0x20] sm:$0xff] %v692
                  %v694 = vld [vmem:[%s682 + $0x50] sm:$0xff]
                  %695 = vst [vmem:[%s683 + $0x28] sm:$0xff] %v694
                  %v696 = vld [vmem:[%s682 + $0x60] sm:$0xff]
                  %697 = vst [vmem:[%s683 + $0x30] sm:$0xff] %v696
                  %v698 = vld [vmem:[%s682 + $0x70] sm:$0xff]
                  %699 = vst [vmem:[%s683 + $0x38] sm:$0xff] %v698
                  %v700 = vld [vmem:[%s682 + $0x80] sm:$0xff]
                  %701 = vst [vmem:[%s683 + $0x40] sm:$0xff] %v700
                  %v702 = vld [vmem:[%s682 + $0x90] sm:$0xff]
                  %703 = vst [vmem:[%s683 + $0x48] sm:$0xff] %v702
                  %v704 = vld [vmem:[%s682 + $0xa0] sm:$0xff]
                  %705 = vst [vmem:[%s683 + $0x50] sm:$0xff] %v704
                  %v706 = vld [vmem:[%s682 + $0xb0] sm:$0xff]
                  %707 = vst [vmem:[%s683 + $0x58] sm:$0xff] %v706
                  %v708 = vld [vmem:[%s682 + $0xc0] sm:$0xff]
                  %709 = vst [vmem:[%s683 + $0x60] sm:$0xff] %v708
                  %v710 = vld [vmem:[%s682 + $0xd0] sm:$0xff]
                  %711 = vst [vmem:[%s683 + $0x68] sm:$0xff] %v710
                  %v712 = vld [vmem:[%s682 + $0xe0] sm:$0xff]
                  %713 = vst [vmem:[%s683 + $0x70] sm:$0xff] %v712
                  %v714 = vld [vmem:[%s682 + $0xf0] sm:$0xff]
                  %715 = vst [vmem:[%s683 + $0x78] sm:$0xff] %v714
                  %v716 = vld [vmem:[%s682 + $0x100] sm:$0xff]
                  %717 = vst [vmem:[%s683 + $0x80] sm:$0xff] %v716
                  %v718 = vld [vmem:[%s682 + $0x110] sm:$0xff]
                  %719 = vst [vmem:[%s683 + $0x88] sm:$0xff] %v718
                  %v720 = vld [vmem:[%s682 + $0x120] sm:$0xff]
                  %721 = vst [vmem:[%s683 + $0x90] sm:$0xff] %v720
                  %v722 = vld [vmem:[%s682 + $0x130] sm:$0xff]
                  %723 = vst [vmem:[%s683 + $0x98] sm:$0xff] %v722
                  %v724 = vld [vmem:[%s682 + $0x140] sm:$0xff]
                  %725 = vst [vmem:[%s683 + $0xa0] sm:$0xff] %v724
                  %v726 = vld [vmem:[%s682 + $0x150] sm:$0xff]
                  %727 = vst [vmem:[%s683 + $0xa8] sm:$0xff] %v726
                  %v728 = vld [vmem:[%s682 + $0x160] sm:$0xff]
                  %729 = vst [vmem:[%s683 + $0xb0] sm:$0xff] %v728
                  %v730 = vld [vmem:[%s682 + $0x170] sm:$0xff]
                  %731 = vst [vmem:[%s683 + $0xb8] sm:$0xff] %v730
                  %v732 = vld [vmem:[%s682 + $0x180] sm:$0xff]
                  %733 = vst [vmem:[%s683 + $0xc0] sm:$0xff] %v732
                  %v734 = vld [vmem:[%s682 + $0x190] sm:$0xff]
                  %735 = vst [vmem:[%s683 + $0xc8] sm:$0xff] %v734
                  %v736 = vld [vmem:[%s682 + $0x1a0] sm:$0xff]
                  %737 = vst [vmem:[%s683 + $0xd0] sm:$0xff] %v736
                  %v738 = vld [vmem:[%s682 + $0x1b0] sm:$0xff]
                  %739 = vst [vmem:[%s683 + $0xd8] sm:$0xff] %v738
                  %v740 = vld [vmem:[%s682 + $0x1c0] sm:$0xff]
                  %741 = vst [vmem:[%s683 + $0xe0] sm:$0xff] %v740
                  %v742 = vld [vmem:[%s682 + $0x1d0] sm:$0xff]
                  %743 = vst [vmem:[%s683 + $0xe8] sm:$0xff] %v742
                  %v744 = vld [vmem:[%s682 + $0x1e0] sm:$0xff]
                  %745 = vst [vmem:[%s683 + $0xf0] sm:$0xff] %v744
                  %v746 = vld [vmem:[%s682 + $0x1f0] sm:$0xff]
                  %747 = vst [vmem:[%s683 + $0xf8] sm:$0xff] %v746
                $region132: #{cas_forward.3} parent=126 // loop_footer
                  %s681 = sadd.s32 1, %s677
                $region133: #{cas_forward.3} parent=126 // loop_footer_branch
                  %676 = sbr.rel target = $region129
                $region134: #{cas_forward.3} parent=126 // loop_exit
                  _
              $region127: #{cas_forward.3} parent=111 // pred_fallthru
                _
              // Predicated region
              $region135: #{cas_forward.3} parent=111 // pred_check
                _
              $region136: #{cas_forward.3} parent=111 // pred_check_branch
                %749 = sbr.rel target = $region138
              $region137: #{cas_forward.3} parent=111 // pred_region
                _
              $region138: #{cas_forward.3} parent=111 // pred_fallthru
                _
            $region112: #{cas_forward.3} parent=107 // pred_fallthru
              _
            // Predicated region
            $region113: #{cas_forward.3} parent=107 // pred_check
              _
            $region114: #{cas_forward.3} parent=107 // pred_check_branch
              %599 = sbr.rel target = $region116
            $region115: #{cas_forward.3} parent=107 // pred_region
              %s601 = ssub.s32 256, 1
              loop: start=0, step=1, limit=1
              $region117: #{cas_forward.3} parent=115 // loop_pre_header
                _
              $region118: #{cas_forward.3} parent=115 // loop_header
                %s603 = sphi 0, %s607
                %p604 = scmp.ge.s32.totalorder %s603, 1
                %s608 = sphi %s593, %s593
                %s609 = sphi %s586, %s586
              $region119: #{cas_forward.3} parent=115 // loop_header_branch
                %606 = sbr.rel (%p604) target = $region123
              $region120: #{cas_forward.3} parent=115 // loop_body
                %v610 = vld [vmem:[%s608] sm:%s601]
                %611 = vst [vmem:[%s609] sm:%s601] %v610
                %v612 = vld [vmem:[%s608 + $0x10] sm:%s601]
                %613 = vst [vmem:[%s609 + $0x8] sm:%s601] %v612
                %v614 = vld [vmem:[%s608 + $0x20] sm:%s601]
                %615 = vst [vmem:[%s609 + $0x10] sm:%s601] %v614
                %v616 = vld [vmem:[%s608 + $0x30] sm:%s601]
                %617 = vst [vmem:[%s609 + $0x18] sm:%s601] %v616
                %v618 = vld [vmem:[%s608 + $0x40] sm:%s601]
                %619 = vst [vmem:[%s609 + $0x20] sm:%s601] %v618
                %v620 = vld [vmem:[%s608 + $0x50] sm:%s601]
                %621 = vst [vmem:[%s609 + $0x28] sm:%s601] %v620
                %v622 = vld [vmem:[%s608 + $0x60] sm:%s601]
                %623 = vst [vmem:[%s609 + $0x30] sm:%s601] %v622
                %v624 = vld [vmem:[%s608 + $0x70] sm:%s601]
                %625 = vst [vmem:[%s609 + $0x38] sm:%s601] %v624
                %v626 = vld [vmem:[%s608 + $0x80] sm:%s601]
                %627 = vst [vmem:[%s609 + $0x40] sm:%s601] %v626
                %v628 = vld [vmem:[%s608 + $0x90] sm:%s601]
                %629 = vst [vmem:[%s609 + $0x48] sm:%s601] %v628
                %v630 = vld [vmem:[%s608 + $0xa0] sm:%s601]
                %631 = vst [vmem:[%s609 + $0x50] sm:%s601] %v630
                %v632 = vld [vmem:[%s608 + $0xb0] sm:%s601]
                %633 = vst [vmem:[%s609 + $0x58] sm:%s601] %v632
                %v634 = vld [vmem:[%s608 + $0xc0] sm:%s601]
                %635 = vst [vmem:[%s609 + $0x60] sm:%s601] %v634
                %v636 = vld [vmem:[%s608 + $0xd0] sm:%s601]
                %637 = vst [vmem:[%s609 + $0x68] sm:%s601] %v636
                %v638 = vld [vmem:[%s608 + $0xe0] sm:%s601]
                %639 = vst [vmem:[%s609 + $0x70] sm:%s601] %v638
                %v640 = vld [vmem:[%s608 + $0xf0] sm:%s601]
                %641 = vst [vmem:[%s609 + $0x78] sm:%s601] %v640
                %v642 = vld [vmem:[%s608 + $0x100] sm:%s601]
                %643 = vst [vmem:[%s609 + $0x80] sm:%s601] %v642
                %v644 = vld [vmem:[%s608 + $0x110] sm:%s601]
                %645 = vst [vmem:[%s609 + $0x88] sm:%s601] %v644
                %v646 = vld [vmem:[%s608 + $0x120] sm:%s601]
                %647 = vst [vmem:[%s609 + $0x90] sm:%s601] %v646
                %v648 = vld [vmem:[%s608 + $0x130] sm:%s601]
                %649 = vst [vmem:[%s609 + $0x98] sm:%s601] %v648
                %v650 = vld [vmem:[%s608 + $0x140] sm:%s601]
                %651 = vst [vmem:[%s609 + $0xa0] sm:%s601] %v650
                %v652 = vld [vmem:[%s608 + $0x150] sm:%s601]
                %653 = vst [vmem:[%s609 + $0xa8] sm:%s601] %v652
                %v654 = vld [vmem:[%s608 + $0x160] sm:%s601]
                %655 = vst [vmem:[%s609 + $0xb0] sm:%s601] %v654
                %v656 = vld [vmem:[%s608 + $0x170] sm:%s601]
                %657 = vst [vmem:[%s609 + $0xb8] sm:%s601] %v656
                %v658 = vld [vmem:[%s608 + $0x180] sm:%s601]
                %659 = vst [vmem:[%s609 + $0xc0] sm:%s601] %v658
                %v660 = vld [vmem:[%s608 + $0x190] sm:%s601]
                %661 = vst [vmem:[%s609 + $0xc8] sm:%s601] %v660
                %v662 = vld [vmem:[%s608 + $0x1a0] sm:%s601]
                %663 = vst [vmem:[%s609 + $0xd0] sm:%s601] %v662
                %v664 = vld [vmem:[%s608 + $0x1b0] sm:%s601]
                %665 = vst [vmem:[%s609 + $0xd8] sm:%s601] %v664
                %v666 = vld [vmem:[%s608 + $0x1c0] sm:%s601]
                %667 = vst [vmem:[%s609 + $0xe0] sm:%s601] %v666
                %v668 = vld [vmem:[%s608 + $0x1d0] sm:%s601]
                %669 = vst [vmem:[%s609 + $0xe8] sm:%s601] %v668
                %v670 = vld [vmem:[%s608 + $0x1e0] sm:%s601]
                %671 = vst [vmem:[%s609 + $0xf0] sm:%s601] %v670
                %v672 = vld [vmem:[%s608 + $0x1f0] sm:%s601]
                %673 = vst [vmem:[%s609 + $0xf8] sm:%s601] %v672
              $region121: #{cas_forward.3} parent=115 // loop_footer
                %s607 = sadd.s32 1, %s603
              $region122: #{cas_forward.3} parent=115 // loop_footer_branch
                %602 = sbr.rel target = $region118
              $region123: #{cas_forward.3} parent=115 // loop_exit
                _
            $region116: #{cas_forward.3} parent=107 // pred_fallthru
              _
          $region108: #{cas_forward.3} parent=103 // pred_fallthru
            _
          %750 = vnop
        $region104: #{cas_forward.3} parent=23 // pred_fallthru
          _
        // Predicated region
        $region139: #{cas_forward.3} parent=23 // pred_check
          %p751 = pneg %p140
        $region140: #{cas_forward.3} parent=23 // pred_check_branch
          %753 = sbr.rel (%p751) target = $region142
        $region141: #{cas_forward.3} parent=23 // pred_region
          %p754 = scmp.lt.s32.totalorder %s19, 1
          %s755 = scalar_select %p754, %s19, 1
          %s756 = scalar_lea.vmem %s3, %s755
        $region142: #{cas_forward.3} parent=23 // pred_fallthru
          _
      $region24: #{cas_forward.3} parent=5 // pred_fallthru
        _
      %p757 = scmp.le.s32.totalorder 1, %s12
      %p758 = scmp.lt.s32.totalorder %s12, 5
      %p759 = pnand %p757, %p758
      %p760 = pneg %p759
      // Predicated region
      $region143: #{cas_forward.3} parent=5 // pred_check
        _
      $region144: #{cas_forward.3} parent=5 // pred_check_branch
        %762 = sbr.rel (%p759) target = $region146
      $region145: #{cas_forward.3} parent=5 // pred_region
        %s763 = ssub.s32 %s12, 1
        %s764 = sand.u32 %s39, 1
        %s765 = sand.u32 %s39, 1
        %s766 = smul.addr %s765, 256
        %s767 = scalar_lea.vmem [#allocation3], %s766
        // Predicated region
        $region147: #{cas_forward.3} parent=145 // pred_check
          %p768 = pneg %p52
        $region148: #{cas_forward.3} parent=145 // pred_check_branch
          %770 = sbr.rel (%p768) target = $region150
        $region149: #{cas_forward.3} parent=145 // pred_region
          _
        $region150: #{cas_forward.3} parent=145 // pred_fallthru
          _
        %s771 = sand.u32 %s73, 1
        %s772 = sand.u32 %s73, 1
        %s773 = smul.addr %s772, 256
        %s774 = scalar_lea.vmem [#allocation4], %s773
        // Predicated region
        $region151: #{cas_forward.3} parent=145 // pred_check
          %p775 = pneg %p86
        $region152: #{cas_forward.3} parent=145 // pred_check_branch
          %777 = sbr.rel (%p775) target = $region154
        $region153: #{cas_forward.3} parent=145 // pred_region
          _
        $region154: #{cas_forward.3} parent=145 // pred_fallthru
          _
        %s778 = sand.u32 %s107, 1
        %s779 = sand.u32 %s107, 1
        %s780 = smul.addr %s779, 256
        %s781 = scalar_lea.vmem [#allocation5], %s780
        // Predicated region
        $region155: #{cas_forward.3} parent=145 // pred_check
          %p782 = pneg %p120
        $region156: #{cas_forward.3} parent=145 // pred_check_branch
          %784 = sbr.rel (%p782) target = $region158
        $region157: #{cas_forward.3} parent=145 // pred_region
          _
        $region158: #{cas_forward.3} parent=145 // pred_fallthru
          _
        %s785 = sand.u32 %s39, 1
        %s786 = sand.u32 %s39, 1
        %s787 = smul.addr %s786, 256
        %s788 = scalar_lea.vmem [#allocation3], %s787
        %p789 = pneg %p52
        %p790 = pneg %p49
        %s791 = sand.u32 %s73, 1
        %s792 = sand.u32 %s73, 1
        %s793 = smul.addr %s792, 256
        %s794 = scalar_lea.vmem [#allocation4], %s793
        %p795 = pneg %p86
        %p796 = pneg %p83
        %s797 = sand.u32 %s107, 1
        %s798 = sand.u32 %s107, 1
        %s799 = smul.addr %s798, 256
        %s800 = scalar_lea.vmem [#allocation5], %s799
        %p801 = pneg %p120
        %p802 = pneg %p117
        %p803 = scmp.lt.s32.totalorder %s21, 1
        %s804 = scalar_select %p803, %s21, 1
        %s805 = scalar_lea.vmem %s3, %s804
        %p806 = pneg %p146
        %p807 = pneg %p143
        %p808 = pneg %p167
        %p809 = pneg %p164
        %p810 = pneg %p188
        %p811 = pneg %p185
        %p812 = pneg %p216
        %p813 = pneg %p213
        %s814 = sand.u32 %s203, 1
        %s815 = sand.u32 %s203, 1
        %s816 = smul.addr %s815, 32
        %s817 = scalar_lea.vmem [#allocation6], %s816
        %s818 = ssub.s32 %s22, 1
        %p819 = scmp.gt.s32.totalorder %s818, 0
        %s820 = scalar_select %p819, %s818, 0
        %s821 = sadd.s32 %s22, 1
        %p822 = scmp.lt.s32.totalorder %s821, 1
        %s823 = scalar_select %p822, %s821, 1
        %p824 = scmp.lt.s32.totalorder %s21, 1
        %s825 = scalar_select %p824, %s21, 1
        %s826 = scalar_lea.vmem %s3, %s825
        %v828 = vld [vmem:[%s4] sm:$0xff]
        %v829 = vld [vmem:[%s4 + $0x8] sm:$0xff]
        %v830 = vld [vmem:[%s4 + $0x10] sm:$0xff]
        %v831 = vld [vmem:[%s4 + $0x18] sm:$0xff]
        %v832 = vld [vmem:[%s4 + $0x20] sm:$0xff]
        %v833 = vld [vmem:[%s4 + $0x28] sm:$0xff]
        %v834 = vld [vmem:[%s4 + $0x30] sm:$0xff]
        %v835 = vld [vmem:[%s4 + $0x38] sm:$0xff]
        %v836 = vld [vmem:[%s4 + $0x40] sm:$0xff]
        %v837 = vld [vmem:[%s4 + $0x48] sm:$0xff]
        %v838 = vld [vmem:[%s4 + $0x50] sm:$0xff]
        %v839 = vld [vmem:[%s4 + $0x58] sm:$0xff]
        %v840 = vld [vmem:[%s4 + $0x60] sm:$0xff]
        %v841 = vld [vmem:[%s4 + $0x68] sm:$0xff]
        %v842 = vld [vmem:[%s4 + $0x70] sm:$0xff]
        %v843 = vld [vmem:[%s4 + $0x78] sm:$0xff]
        %v844 = vld [vmem:[%s4 + $0x80] sm:$0xff]
        %v845 = vld [vmem:[%s4 + $0x88] sm:$0xff]
        %v846 = vld [vmem:[%s4 + $0x90] sm:$0xff]
        %v847 = vld [vmem:[%s4 + $0x98] sm:$0xff]
        %v848 = vld [vmem:[%s4 + $0xa0] sm:$0xff]
        %v849 = vld [vmem:[%s4 + $0xa8] sm:$0xff]
        %v850 = vld [vmem:[%s4 + $0xb0] sm:$0xff]
        %v851 = vld [vmem:[%s4 + $0xb8] sm:$0xff]
        %v852 = vld [vmem:[%s4 + $0xc0] sm:$0xff]
        %v853 = vld [vmem:[%s4 + $0xc8] sm:$0xff]
        %v854 = vld [vmem:[%s4 + $0xd0] sm:$0xff]
        %v855 = vld [vmem:[%s4 + $0xd8] sm:$0xff]
        %v856 = vld [vmem:[%s4 + $0xe0] sm:$0xff]
        %v857 = vld [vmem:[%s4 + $0xe8] sm:$0xff]
        %v858 = vld [vmem:[%s4 + $0xf0] sm:$0xff]
        %v859 = vld [vmem:[%s4 + $0xf8] sm:$0xff]
        %v860 = vld [vmem:[%s4 + $0x100] sm:$0xff]
        %v861 = vld [vmem:[%s4 + $0x108] sm:$0xff]
        %v862 = vld [vmem:[%s4 + $0x110] sm:$0xff]
        %v863 = vld [vmem:[%s4 + $0x118] sm:$0xff]
        %v864 = vld [vmem:[%s826] sm:$0x1]
        %v866 = vlaneseq
        %v867 = vshrl.u32 %v866, 7
        %v868 = vsub.s32 0, %v867
        %v869 = vrot.slane %v864, %v868
        %v871 = vmul.f32 %v828, %v869
        %v872 = vmul.f32 %v829, %v869
        %v873 = vmul.f32 %v830, %v869
        %v874 = vmul.f32 %v831, %v869
        %v875 = vmul.f32 %v832, %v869
        %v876 = vmul.f32 %v833, %v869
        %v877 = vmul.f32 %v834, %v869
        %v878 = vmul.f32 %v835, %v869
        %v879 = vmul.f32 %v836, %v869
        %v880 = vmul.f32 %v837, %v869
        %v881 = vmul.f32 %v838, %v869
        %v882 = vmul.f32 %v839, %v869
        %v883 = vmul.f32 %v840, %v869
        %v884 = vmul.f32 %v841, %v869
        %v885 = vmul.f32 %v842, %v869
        %v886 = vmul.f32 %v843, %v869
        %v887 = vmul.f32 %v844, %v869
        %v888 = vmul.f32 %v845, %v869
        %v889 = vmul.f32 %v846, %v869
        %v890 = vmul.f32 %v847, %v869
        %v891 = vmul.f32 %v848, %v869
        %v892 = vmul.f32 %v849, %v869
        %v893 = vmul.f32 %v850, %v869
        %v894 = vmul.f32 %v851, %v869
        %v895 = vmul.f32 %v852, %v869
        %v896 = vmul.f32 %v853, %v869
        %v897 = vmul.f32 %v854, %v869
        %v898 = vmul.f32 %v855, %v869
        %v899 = vmul.f32 %v856, %v869
        %v900 = vmul.f32 %v857, %v869
        %v901 = vmul.f32 %v858, %v869
        %v902 = vmul.f32 %v859, %v869
        %v903 = vmul.f32 %v860, %v869
        %v904 = vmul.f32 %v861, %v869
        %v905 = vmul.f32 %v862, %v869
        %v906 = vmul.f32 %v863, %v869
        %v907 = vpack.c.bf16 %v872, %v871
        %v908 = vpack.c.bf16 %v874, %v873
        %v909 = vpack.c.bf16 %v876, %v875
        %v910 = vpack.c.bf16 %v878, %v877
        %v911 = vpack.c.bf16 %v880, %v879
        %v912 = vpack.c.bf16 %v882, %v881
        %v913 = vpack.c.bf16 %v884, %v883
        %v914 = vpack.c.bf16 %v886, %v885
        %v915 = vpack.c.bf16 %v888, %v887
        %v916 = vpack.c.bf16 %v890, %v889
        %v917 = vpack.c.bf16 %v892, %v891
        %v918 = vpack.c.bf16 %v894, %v893
        %v919 = vpack.c.bf16 %v896, %v895
        %v920 = vpack.c.bf16 %v898, %v897
        %v921 = vpack.c.bf16 %v900, %v899
        %v922 = vpack.c.bf16 %v902, %v901
        %v923 = vpack.c.bf16 %v904, %v903
        %v924 = vpack.c.bf16 %v906, %v905
        %vm925 = vcmask 7168
        %926 = vst.msk [vmem:[#allocation2] sm:$0xff] %vm925, 0.0
        %vm927 = vcmask 1024
        %928 = vst.msk [vmem:[#allocation2 + $0x8] sm:$0x3] %vm927, 0.0
        %929 = vst.msk [vmem:[#allocation2 + $0x10] sm:$0xff] %vm925, 0.0
        %930 = vst.msk [vmem:[#allocation2 + $0x18] sm:$0x3] %vm927, 0.0
        %931 = vst.msk [vmem:[#allocation2 + $0x20] sm:$0xff] %vm925, 0.0
        %932 = vst.msk [vmem:[#allocation2 + $0x28] sm:$0x3] %vm927, 0.0
        %933 = vst.msk [vmem:[#allocation2 + $0x30] sm:$0xff] %vm925, 0.0
        %934 = vst.msk [vmem:[#allocation2 + $0x38] sm:$0x3] %vm927, 0.0
        %935 = vst.msk [vmem:[#allocation2 + $0x40] sm:$0xff] %vm925, 0.0
        %936 = vst.msk [vmem:[#allocation2 + $0x48] sm:$0x3] %vm927, 0.0
        %937 = vst.msk [vmem:[#allocation2 + $0x50] sm:$0xff] %vm925, 0.0
        %938 = vst.msk [vmem:[#allocation2 + $0x58] sm:$0x3] %vm927, 0.0
        %939 = vst.msk [vmem:[#allocation2 + $0x60] sm:$0xff] %vm925, 0.0
        %940 = vst.msk [vmem:[#allocation2 + $0x68] sm:$0x3] %vm927, 0.0
        %941 = vst.msk [vmem:[#allocation2 + $0x70] sm:$0xff] %vm925, 0.0
        %942 = vst.msk [vmem:[#allocation2 + $0x78] sm:$0x3] %vm927, 0.0
        %943 = vst.msk [vmem:[#allocation2 + $0x80] sm:$0xff] %vm925, 0.0
        %944 = vst.msk [vmem:[#allocation2 + $0x88] sm:$0x3] %vm927, 0.0
        %945 = vst.msk [vmem:[#allocation2 + $0x90] sm:$0xff] %vm925, 0.0
        %946 = vst.msk [vmem:[#allocation2 + $0x98] sm:$0x3] %vm927, 0.0
        %947 = vst.msk [vmem:[#allocation2 + $0xa0] sm:$0xff] %vm925, 0.0
        %948 = vst.msk [vmem:[#allocation2 + $0xa8] sm:$0x3] %vm927, 0.0
        %949 = vst.msk [vmem:[#allocation2 + $0xb0] sm:$0xff] %vm925, 0.0
        %950 = vst.msk [vmem:[#allocation2 + $0xb8] sm:$0x3] %vm927, 0.0
        %951 = vst.msk [vmem:[#allocation2 + $0xc0] sm:$0xff] %vm925, 0.0
        %952 = vst.msk [vmem:[#allocation2 + $0xc8] sm:$0x3] %vm927, 0.0
        %953 = vst.msk [vmem:[#allocation2 + $0xd0] sm:$0xff] %vm925, 0.0
        %954 = vst.msk [vmem:[#allocation2 + $0xd8] sm:$0x3] %vm927, 0.0
        %955 = vst.msk [vmem:[#allocation2 + $0xe0] sm:$0xff] %vm925, 0.0
        %956 = vst.msk [vmem:[#allocation2 + $0xe8] sm:$0x3] %vm927, 0.0
        %957 = vst.msk [vmem:[#allocation2 + $0xf0] sm:$0xff] %vm925, 0.0
        %958 = vst.msk [vmem:[#allocation2 + $0xf8] sm:$0x3] %vm927, 0.0
        %959 = vst.msk [vmem:[#allocation2 + $0x100] sm:$0xff] %vm925, 0.0
        %960 = vst.msk [vmem:[#allocation2 + $0x108] sm:$0x3] %vm927, 0.0
        %961 = vst.msk [vmem:[#allocation2 + $0x110] sm:$0xff] %vm925, 0.0
        %962 = vst.msk [vmem:[#allocation2 + $0x118] sm:$0x3] %vm927, 0.0
        %963 = vst.msk [vmem:[#allocation2 + $0x120] sm:$0xff] %vm925, 0.0
        %964 = vst.msk [vmem:[#allocation2 + $0x128] sm:$0x3] %vm927, 0.0
        %965 = vst.msk [vmem:[#allocation2 + $0x130] sm:$0xff] %vm925, 0.0
        %966 = vst.msk [vmem:[#allocation2 + $0x138] sm:$0x3] %vm927, 0.0
        %967 = vst.msk [vmem:[#allocation2 + $0x140] sm:$0xff] %vm925, 0.0
        %968 = vst.msk [vmem:[#allocation2 + $0x148] sm:$0x3] %vm927, 0.0
        %969 = vst.msk [vmem:[#allocation2 + $0x150] sm:$0xff] %vm925, 0.0
        %970 = vst.msk [vmem:[#allocation2 + $0x158] sm:$0x3] %vm927, 0.0
        %971 = vst.msk [vmem:[#allocation2 + $0x160] sm:$0xff] %vm925, 0.0
        %972 = vst.msk [vmem:[#allocation2 + $0x168] sm:$0x3] %vm927, 0.0
        %973 = vst.msk [vmem:[#allocation2 + $0x170] sm:$0xff] %vm925, 0.0
        %974 = vst.msk [vmem:[#allocation2 + $0x178] sm:$0x3] %vm927, 0.0
        %975 = vst.msk [vmem:[#allocation2 + $0x180] sm:$0xff] %vm925, 0.0
        %976 = vst.msk [vmem:[#allocation2 + $0x188] sm:$0x3] %vm927, 0.0
        %977 = vst.msk [vmem:[#allocation2 + $0x190] sm:$0xff] %vm925, 0.0
        %978 = vst.msk [vmem:[#allocation2 + $0x198] sm:$0x3] %vm927, 0.0
        %979 = vst.msk [vmem:[#allocation2 + $0x1a0] sm:$0xff] %vm925, 0.0
        %980 = vst.msk [vmem:[#allocation2 + $0x1a8] sm:$0x3] %vm927, 0.0
        %981 = vst.msk [vmem:[#allocation2 + $0x1b0] sm:$0xff] %vm925, 0.0
        %982 = vst.msk [vmem:[#allocation2 + $0x1b8] sm:$0x3] %vm927, 0.0
        %983 = vst.msk [vmem:[#allocation2 + $0x1c0] sm:$0xff] %vm925, 0.0
        %984 = vst.msk [vmem:[#allocation2 + $0x1c8] sm:$0x3] %vm927, 0.0
        %985 = vst.msk [vmem:[#allocation2 + $0x1d0] sm:$0xff] %vm925, 0.0
        %986 = vst.msk [vmem:[#allocation2 + $0x1d8] sm:$0x3] %vm927, 0.0
        %987 = vst.msk [vmem:[#allocation2 + $0x1e0] sm:$0xff] %vm925, 0.0
        %988 = vst.msk [vmem:[#allocation2 + $0x1e8] sm:$0x3] %vm927, 0.0
        %989 = vst.msk [vmem:[#allocation2 + $0x1f0] sm:$0xff] %vm925, 0.0
        %990 = vst.msk [vmem:[#allocation2 + $0x1f8] sm:$0x3] %vm927, 0.0
        %vm991 = vcmask 146568
        %992 = vst.msk [vmem:[#allocation2] sm:$0xff] %vm991, 0.0
        %vm993 = vcmask 140424
        %994 = vst.msk [vmem:[#allocation2 + $0x8] sm:$0x3] %vm993, 0.0
        %995 = vst.msk [vmem:[#allocation2 + $0x10] sm:$0xff] %vm991, 0.0
        %996 = vst.msk [vmem:[#allocation2 + $0x18] sm:$0x3] %vm993, 0.0
        %997 = vst.msk [vmem:[#allocation2 + $0x20] sm:$0xff] %vm991, 0.0
        %998 = vst.msk [vmem:[#allocation2 + $0x28] sm:$0x3] %vm993, 0.0
        %999 = vst.msk [vmem:[#allocation2 + $0x30] sm:$0xff] %vm991, 0.0
        %1000 = vst.msk [vmem:[#allocation2 + $0x38] sm:$0x3] %vm993, 0.0
        %1001 = vst.msk [vmem:[#allocation2 + $0x40] sm:$0xff] %vm991, 0.0
        %1002 = vst.msk [vmem:[#allocation2 + $0x48] sm:$0x3] %vm993, 0.0
        %1003 = vst.msk [vmem:[#allocation2 + $0x50] sm:$0xff] %vm991, 0.0
        %1004 = vst.msk [vmem:[#allocation2 + $0x58] sm:$0x3] %vm993, 0.0
        %1005 = vst.msk [vmem:[#allocation2 + $0x60] sm:$0xff] %vm991, 0.0
        %1006 = vst.msk [vmem:[#allocation2 + $0x68] sm:$0x3] %vm993, 0.0
        %1007 = vst.msk [vmem:[#allocation2 + $0x70] sm:$0xff] %vm991, 0.0
        %1008 = vst.msk [vmem:[#allocation2 + $0x78] sm:$0x3] %vm993, 0.0
        %1009 = vst.msk [vmem:[#allocation2 + $0x80] sm:$0xff] %vm991, 0.0
        %1010 = vst.msk [vmem:[#allocation2 + $0x88] sm:$0x3] %vm993, 0.0
        %1011 = vst.msk [vmem:[#allocation2 + $0x90] sm:$0xff] %vm991, 0.0
        %1012 = vst.msk [vmem:[#allocation2 + $0x98] sm:$0x3] %vm993, 0.0
        %1013 = vst.msk [vmem:[#allocation2 + $0xa0] sm:$0xff] %vm991, 0.0
        %1014 = vst.msk [vmem:[#allocation2 + $0xa8] sm:$0x3] %vm993, 0.0
        %1015 = vst.msk [vmem:[#allocation2 + $0xb0] sm:$0xff] %vm991, 0.0
        %1016 = vst.msk [vmem:[#allocation2 + $0xb8] sm:$0x3] %vm993, 0.0
        %1017 = vst.msk [vmem:[#allocation2 + $0xc0] sm:$0xff] %vm991, 0.0
        %1018 = vst.msk [vmem:[#allocation2 + $0xc8] sm:$0x3] %vm993, 0.0
        %1019 = vst.msk [vmem:[#allocation2 + $0xd0] sm:$0xff] %vm991, 0.0
        %1020 = vst.msk [vmem:[#allocation2 + $0xd8] sm:$0x3] %vm993, 0.0
        %1021 = vst.msk [vmem:[#allocation2 + $0xe0] sm:$0xff] %vm991, 0.0
        %1022 = vst.msk [vmem:[#allocation2 + $0xe8] sm:$0x3] %vm993, 0.0
        %1023 = vst.msk [vmem:[#allocation2 + $0xf0] sm:$0xff] %vm991, 0.0
        %1024 = vst.msk [vmem:[#allocation2 + $0xf8] sm:$0x3] %vm993, 0.0
        %1025 = vst.msk [vmem:[#allocation2 + $0x100] sm:$0xff] %vm991, 0.0
        %1026 = vst.msk [vmem:[#allocation2 + $0x108] sm:$0x3] %vm993, 0.0
        %1027 = vst.msk [vmem:[#allocation2 + $0x110] sm:$0xff] %vm991, 0.0
        %1028 = vst.msk [vmem:[#allocation2 + $0x118] sm:$0x3] %vm993, 0.0
        %1029 = vst.msk [vmem:[#allocation2 + $0x120] sm:$0xff] %vm991, 0.0
        %1030 = vst.msk [vmem:[#allocation2 + $0x128] sm:$0x3] %vm993, 0.0
        %1031 = vst.msk [vmem:[#allocation2 + $0x130] sm:$0xff] %vm991, 0.0
        %1032 = vst.msk [vmem:[#allocation2 + $0x138] sm:$0x3] %vm993, 0.0
        %1033 = vst.msk [vmem:[#allocation2 + $0x140] sm:$0xff] %vm991, 0.0
        %1034 = vst.msk [vmem:[#allocation2 + $0x148] sm:$0x3] %vm993, 0.0
        %1035 = vst.msk [vmem:[#allocation2 + $0x150] sm:$0xff] %vm991, 0.0
        %1036 = vst.msk [vmem:[#allocation2 + $0x158] sm:$0x3] %vm993, 0.0
        %1037 = vst.msk [vmem:[#allocation2 + $0x160] sm:$0xff] %vm991, 0.0
        %1038 = vst.msk [vmem:[#allocation2 + $0x168] sm:$0x3] %vm993, 0.0
        %1039 = vst.msk [vmem:[#allocation2 + $0x170] sm:$0xff] %vm991, 0.0
        %1040 = vst.msk [vmem:[#allocation2 + $0x178] sm:$0x3] %vm993, 0.0
        %1041 = vst.msk [vmem:[#allocation2 + $0x180] sm:$0xff] %vm991, 0.0
        %1042 = vst.msk [vmem:[#allocation2 + $0x188] sm:$0x3] %vm993, 0.0
        %1043 = vst.msk [vmem:[#allocation2 + $0x190] sm:$0xff] %vm991, 0.0
        %1044 = vst.msk [vmem:[#allocation2 + $0x198] sm:$0x3] %vm993, 0.0
        %1045 = vst.msk [vmem:[#allocation2 + $0x1a0] sm:$0xff] %vm991, 0.0
        %1046 = vst.msk [vmem:[#allocation2 + $0x1a8] sm:$0x3] %vm993, 0.0
        %1047 = vst.msk [vmem:[#allocation2 + $0x1b0] sm:$0xff] %vm991, 0.0
        %1048 = vst.msk [vmem:[#allocation2 + $0x1b8] sm:$0x3] %vm993, 0.0
        %1049 = vst.msk [vmem:[#allocation2 + $0x1c0] sm:$0xff] %vm991, 0.0
        %1050 = vst.msk [vmem:[#allocation2 + $0x1c8] sm:$0x3] %vm993, 0.0
        %1051 = vst.msk [vmem:[#allocation2 + $0x1d0] sm:$0xff] %vm991, 0.0
        %1052 = vst.msk [vmem:[#allocation2 + $0x1d8] sm:$0x3] %vm993, 0.0
        %1053 = vst.msk [vmem:[#allocation2 + $0x1e0] sm:$0xff] %vm991, 0.0
        %1054 = vst.msk [vmem:[#allocation2 + $0x1e8] sm:$0x3] %vm993, 0.0
        %1055 = vst.msk [vmem:[#allocation2 + $0x1f0] sm:$0xff] %vm991, 0.0
        %1056 = vst.msk [vmem:[#allocation2 + $0x1f8] sm:$0x3] %vm993, 0.0
        %v1057 = vld [vmem:[%s767] sm:$0xff]
        %v1058 = vld [vmem:[%s767 + $0x8] sm:$0xff]
        %v1059 = vld [vmem:[%s767 + $0x10] sm:$0xff]
        %v1060 = vld [vmem:[%s767 + $0x18] sm:$0xff]
        %v1061 = vld [vmem:[%s767 + $0x20] sm:$0xff]
        %v1062 = vld [vmem:[%s767 + $0x28] sm:$0xff]
        %v1063 = vld [vmem:[%s767 + $0x30] sm:$0xff]
        %v1064 = vld [vmem:[%s767 + $0x38] sm:$0xff]
        %v1065 = vld [vmem:[%s767 + $0x40] sm:$0xff]
        %v1066 = vld [vmem:[%s767 + $0x48] sm:$0xff]
        %v1067 = vld [vmem:[%s767 + $0x50] sm:$0xff]
        %v1068 = vld [vmem:[%s767 + $0x58] sm:$0xff]
        %v1069 = vld [vmem:[%s767 + $0x60] sm:$0xff]
        %v1070 = vld [vmem:[%s767 + $0x68] sm:$0xff]
        %v1071 = vld [vmem:[%s767 + $0x70] sm:$0xff]
        %v1072 = vld [vmem:[%s767 + $0x78] sm:$0xff]
        %v1073 = vld [vmem:[%s767 + $0x80] sm:$0xff]
        %v1074 = vld [vmem:[%s767 + $0x88] sm:$0xff]
        %v1075 = vld [vmem:[%s767 + $0x90] sm:$0xff]
        %v1076 = vld [vmem:[%s767 + $0x98] sm:$0xff]
        %v1077 = vld [vmem:[%s767 + $0xa0] sm:$0xff]
        %v1078 = vld [vmem:[%s767 + $0xa8] sm:$0xff]
        %v1079 = vld [vmem:[%s767 + $0xb0] sm:$0xff]
        %v1080 = vld [vmem:[%s767 + $0xb8] sm:$0xff]
        %v1081 = vld [vmem:[%s767 + $0xc0] sm:$0xff]
        %v1082 = vld [vmem:[%s767 + $0xc8] sm:$0xff]
        %v1083 = vld [vmem:[%s767 + $0xd0] sm:$0xff]
        %v1084 = vld [vmem:[%s767 + $0xd8] sm:$0xff]
        %v1085 = vld [vmem:[%s767 + $0xe0] sm:$0xff]
        %v1086 = vld [vmem:[%s767 + $0xe8] sm:$0xff]
        %v1087 = vld [vmem:[%s767 + $0xf0] sm:$0xff]
        %v1088 = vld [vmem:[%s767 + $0xf8] sm:$0xff]
        %1121 = vrot.lane.b32.xlu0 %v1057, 1
        %v1122 = vpop.permute.xlu0 %1121
        %1123 = vrot.lane.b32.xlu0 %v1058, 1
        %v1124 = vpop.permute.xlu0 %1123
        %1125 = vrot.lane.b32.xlu0 %v1059, 1
        %v1126 = vpop.permute.xlu0 %1125
        %1127 = vrot.lane.b32.xlu0 %v1060, 1
        %v1128 = vpop.permute.xlu0 %1127
        %1129 = vrot.lane.b32.xlu0 %v1061, 1
        %v1130 = vpop.permute.xlu0 %1129
        %1131 = vrot.lane.b32.xlu0 %v1062, 1
        %v1132 = vpop.permute.xlu0 %1131
        %1133 = vrot.lane.b32.xlu0 %v1063, 1
        %v1134 = vpop.permute.xlu0 %1133
        %1135 = vrot.lane.b32.xlu0 %v1064, 1
        %v1136 = vpop.permute.xlu0 %1135
        %1137 = vrot.lane.b32.xlu0 %v1065, 1
        %v1138 = vpop.permute.xlu0 %1137
        %1139 = vrot.lane.b32.xlu0 %v1066, 1
        %v1140 = vpop.permute.xlu0 %1139
        %1141 = vrot.lane.b32.xlu0 %v1067, 1
        %v1142 = vpop.permute.xlu0 %1141
        %1143 = vrot.lane.b32.xlu0 %v1068, 1
        %v1144 = vpop.permute.xlu0 %1143
        %1145 = vrot.lane.b32.xlu0 %v1069, 1
        %v1146 = vpop.permute.xlu0 %1145
        %1147 = vrot.lane.b32.xlu0 %v1070, 1
        %v1148 = vpop.permute.xlu0 %1147
        %1149 = vrot.lane.b32.xlu0 %v1071, 1
        %v1150 = vpop.permute.xlu0 %1149
        %1151 = vrot.lane.b32.xlu0 %v1072, 1
        %v1152 = vpop.permute.xlu0 %1151
        %1153 = vrot.lane.b32.xlu0 %v1073, 1
        %v1154 = vpop.permute.xlu0 %1153
        %1155 = vrot.lane.b32.xlu0 %v1074, 1
        %v1156 = vpop.permute.xlu0 %1155
        %1157 = vrot.lane.b32.xlu0 %v1075, 1
        %v1158 = vpop.permute.xlu0 %1157
        %1159 = vrot.lane.b32.xlu0 %v1076, 1
        %v1160 = vpop.permute.xlu0 %1159
        %1161 = vrot.lane.b32.xlu0 %v1077, 1
        %v1162 = vpop.permute.xlu0 %1161
        %1163 = vrot.lane.b32.xlu0 %v1078, 1
        %v1164 = vpop.permute.xlu0 %1163
        %1165 = vrot.lane.b32.xlu0 %v1079, 1
        %v1166 = vpop.permute.xlu0 %1165
        %1167 = vrot.lane.b32.xlu0 %v1080, 1
        %v1168 = vpop.permute.xlu0 %1167
        %1169 = vrot.lane.b32.xlu0 %v1081, 1
        %v1170 = vpop.permute.xlu0 %1169
        %1171 = vrot.lane.b32.xlu0 %v1082, 1
        %v1172 = vpop.permute.xlu0 %1171
        %1173 = vrot.lane.b32.xlu0 %v1083, 1
        %v1174 = vpop.permute.xlu0 %1173
        %1175 = vrot.lane.b32.xlu0 %v1084, 1
        %v1176 = vpop.permute.xlu0 %1175
        %1177 = vrot.lane.b32.xlu0 %v1085, 1
        %v1178 = vpop.permute.xlu0 %1177
        %1179 = vrot.lane.b32.xlu0 %v1086, 1
        %v1180 = vpop.permute.xlu0 %1179
        %1181 = vrot.lane.b32.xlu0 %v1087, 1
        %v1182 = vpop.permute.xlu0 %1181
        %1183 = vrot.lane.b32.xlu0 %v1088, 1
        %v1184 = vpop.permute.xlu0 %1183
        %vm1217 = vcmask 138248
        %1218 = vst.msk [vmem:[#allocation2 + $0x1] sm:$0xff] %vm1217, %v1122
        %1219 = vst.msk [vmem:[#allocation2 + $0x11] sm:$0xff] %vm1217, %v1124
        %1220 = vst.msk [vmem:[#allocation2 + $0x21] sm:$0xff] %vm1217, %v1126
        %1221 = vst.msk [vmem:[#allocation2 + $0x31] sm:$0xff] %vm1217, %v1128
        %1222 = vst.msk [vmem:[#allocation2 + $0x41] sm:$0xff] %vm1217, %v1130
        %1223 = vst.msk [vmem:[#allocation2 + $0x51] sm:$0xff] %vm1217, %v1132
        %1224 = vst.msk [vmem:[#allocation2 + $0x61] sm:$0xff] %vm1217, %v1134
        %1225 = vst.msk [vmem:[#allocation2 + $0x71] sm:$0xff] %vm1217, %v1136
        %1226 = vst.msk [vmem:[#allocation2 + $0x81] sm:$0xff] %vm1217, %v1138
        %1227 = vst.msk [vmem:[#allocation2 + $0x91] sm:$0xff] %vm1217, %v1140
        %1228 = vst.msk [vmem:[#allocation2 + $0xa1] sm:$0xff] %vm1217, %v1142
        %1229 = vst.msk [vmem:[#allocation2 + $0xb1] sm:$0xff] %vm1217, %v1144
        %1230 = vst.msk [vmem:[#allocation2 + $0xc1] sm:$0xff] %vm1217, %v1146
        %1231 = vst.msk [vmem:[#allocation2 + $0xd1] sm:$0xff] %vm1217, %v1148
        %1232 = vst.msk [vmem:[#allocation2 + $0xe1] sm:$0xff] %vm1217, %v1150
        %1233 = vst.msk [vmem:[#allocation2 + $0xf1] sm:$0xff] %vm1217, %v1152
        %1234 = vst.msk [vmem:[#allocation2 + $0x101] sm:$0xff] %vm1217, %v1154
        %1235 = vst.msk [vmem:[#allocation2 + $0x111] sm:$0xff] %vm1217, %v1156
        %1236 = vst.msk [vmem:[#allocation2 + $0x121] sm:$0xff] %vm1217, %v1158
        %1237 = vst.msk [vmem:[#allocation2 + $0x131] sm:$0xff] %vm1217, %v1160
        %1238 = vst.msk [vmem:[#allocation2 + $0x141] sm:$0xff] %vm1217, %v1162
        %1239 = vst.msk [vmem:[#allocation2 + $0x151] sm:$0xff] %vm1217, %v1164
        %1240 = vst.msk [vmem:[#allocation2 + $0x161] sm:$0xff] %vm1217, %v1166
        %1241 = vst.msk [vmem:[#allocation2 + $0x171] sm:$0xff] %vm1217, %v1168
        %1242 = vst.msk [vmem:[#allocation2 + $0x181] sm:$0xff] %vm1217, %v1170
        %1243 = vst.msk [vmem:[#allocation2 + $0x191] sm:$0xff] %vm1217, %v1172
        %1244 = vst.msk [vmem:[#allocation2 + $0x1a1] sm:$0xff] %vm1217, %v1174
        %1245 = vst.msk [vmem:[#allocation2 + $0x1b1] sm:$0xff] %vm1217, %v1176
        %1246 = vst.msk [vmem:[#allocation2 + $0x1c1] sm:$0xff] %vm1217, %v1178
        %1247 = vst.msk [vmem:[#allocation2 + $0x1d1] sm:$0xff] %vm1217, %v1180
        %1248 = vst.msk [vmem:[#allocation2 + $0x1e1] sm:$0xff] %vm1217, %v1182
        %1249 = vst.msk [vmem:[#allocation2 + $0x1f1] sm:$0xff] %vm1217, %v1184
        %v1250 = vld [vmem:[%s774 + $0x7] sm:$0x1]
        %v1251 = vld [vmem:[%s774 + $0xf] sm:$0x1]
        %v1252 = vld [vmem:[%s774 + $0x17] sm:$0x1]
        %v1253 = vld [vmem:[%s774 + $0x1f] sm:$0x1]
        %v1254 = vld [vmem:[%s774 + $0x27] sm:$0x1]
        %v1255 = vld [vmem:[%s774 + $0x2f] sm:$0x1]
        %v1256 = vld [vmem:[%s774 + $0x37] sm:$0x1]
        %v1257 = vld [vmem:[%s774 + $0x3f] sm:$0x1]
        %v1258 = vld [vmem:[%s774 + $0x47] sm:$0x1]
        %v1259 = vld [vmem:[%s774 + $0x4f] sm:$0x1]
        %v1260 = vld [vmem:[%s774 + $0x57] sm:$0x1]
        %v1261 = vld [vmem:[%s774 + $0x5f] sm:$0x1]
        %v1262 = vld [vmem:[%s774 + $0x67] sm:$0x1]
        %v1263 = vld [vmem:[%s774 + $0x6f] sm:$0x1]
        %v1264 = vld [vmem:[%s774 + $0x77] sm:$0x1]
        %v1265 = vld [vmem:[%s774 + $0x7f] sm:$0x1]
        %v1266 = vld [vmem:[%s774 + $0x87] sm:$0x1]
        %v1267 = vld [vmem:[%s774 + $0x8f] sm:$0x1]
        %v1268 = vld [vmem:[%s774 + $0x97] sm:$0x1]
        %v1269 = vld [vmem:[%s774 + $0x9f] sm:$0x1]
        %v1270 = vld [vmem:[%s774 + $0xa7] sm:$0x1]
        %v1271 = vld [vmem:[%s774 + $0xaf] sm:$0x1]
        %v1272 = vld [vmem:[%s774 + $0xb7] sm:$0x1]
        %v1273 = vld [vmem:[%s774 + $0xbf] sm:$0x1]
        %v1274 = vld [vmem:[%s774 + $0xc7] sm:$0x1]
        %v1275 = vld [vmem:[%s774 + $0xcf] sm:$0x1]
        %v1276 = vld [vmem:[%s774 + $0xd7] sm:$0x1]
        %v1277 = vld [vmem:[%s774 + $0xdf] sm:$0x1]
        %v1278 = vld [vmem:[%s774 + $0xe7] sm:$0x1]
        %v1279 = vld [vmem:[%s774 + $0xef] sm:$0x1]
        %v1280 = vld [vmem:[%s774 + $0xf7] sm:$0x1]
        %v1281 = vld [vmem:[%s774 + $0xff] sm:$0x1]
        %v1282 = vld [vmem:[%s781] sm:$0x1]
        %v1283 = vld [vmem:[%s781 + $0x8] sm:$0x1]
        %v1284 = vld [vmem:[%s781 + $0x10] sm:$0x1]
        %v1285 = vld [vmem:[%s781 + $0x18] sm:$0x1]
        %v1286 = vld [vmem:[%s781 + $0x20] sm:$0x1]
        %v1287 = vld [vmem:[%s781 + $0x28] sm:$0x1]
        %v1288 = vld [vmem:[%s781 + $0x30] sm:$0x1]
        %v1289 = vld [vmem:[%s781 + $0x38] sm:$0x1]
        %v1290 = vld [vmem:[%s781 + $0x40] sm:$0x1]
        %v1291 = vld [vmem:[%s781 + $0x48] sm:$0x1]
        %v1292 = vld [vmem:[%s781 + $0x50] sm:$0x1]
        %v1293 = vld [vmem:[%s781 + $0x58] sm:$0x1]
        %v1294 = vld [vmem:[%s781 + $0x60] sm:$0x1]
        %v1295 = vld [vmem:[%s781 + $0x68] sm:$0x1]
        %v1296 = vld [vmem:[%s781 + $0x70] sm:$0x1]
        %v1297 = vld [vmem:[%s781 + $0x78] sm:$0x1]
        %v1298 = vld [vmem:[%s781 + $0x80] sm:$0x1]
        %v1299 = vld [vmem:[%s781 + $0x88] sm:$0x1]
        %v1300 = vld [vmem:[%s781 + $0x90] sm:$0x1]
        %v1301 = vld [vmem:[%s781 + $0x98] sm:$0x1]
        %v1302 = vld [vmem:[%s781 + $0xa0] sm:$0x1]
        %v1303 = vld [vmem:[%s781 + $0xa8] sm:$0x1]
        %v1304 = vld [vmem:[%s781 + $0xb0] sm:$0x1]
        %v1305 = vld [vmem:[%s781 + $0xb8] sm:$0x1]
        %v1306 = vld [vmem:[%s781 + $0xc0] sm:$0x1]
        %v1307 = vld [vmem:[%s781 + $0xc8] sm:$0x1]
        %v1308 = vld [vmem:[%s781 + $0xd0] sm:$0x1]
        %v1309 = vld [vmem:[%s781 + $0xd8] sm:$0x1]
        %v1310 = vld [vmem:[%s781 + $0xe0] sm:$0x1]
        %v1311 = vld [vmem:[%s781 + $0xe8] sm:$0x1]
        %v1312 = vld [vmem:[%s781 + $0xf0] sm:$0x1]
        %v1313 = vld [vmem:[%s781 + $0xf8] sm:$0x1]
        %p1314 = scmp.gt.s32.totalorder %s22, 0
        %s1315 = scalar_select %p1314, 1, 0
        %s1316 = scvt.s32.f32 %s1315
        %p1317 = scmp.lt.s32.totalorder %s22, 1
        %s1318 = scalar_select %p1317, 1, 0
        %s1319 = scvt.s32.f32 %s1318
        %v1320 = vstv %s1316
        %v1321 = vmul.f32 %v1250, %v1320
        %v1322 = vmul.f32 %v1251, %v1320
        %v1323 = vmul.f32 %v1252, %v1320
        %v1324 = vmul.f32 %v1253, %v1320
        %v1325 = vmul.f32 %v1254, %v1320
        %v1326 = vmul.f32 %v1255, %v1320
        %v1327 = vmul.f32 %v1256, %v1320
        %v1328 = vmul.f32 %v1257, %v1320
        %v1329 = vmul.f32 %v1258, %v1320
        %v1330 = vmul.f32 %v1259, %v1320
        %v1331 = vmul.f32 %v1260, %v1320
        %v1332 = vmul.f32 %v1261, %v1320
        %v1333 = vmul.f32 %v1262, %v1320
        %v1334 = vmul.f32 %v1263, %v1320
        %v1335 = vmul.f32 %v1264, %v1320
        %v1336 = vmul.f32 %v1265, %v1320
        %v1337 = vmul.f32 %v1266, %v1320
        %v1338 = vmul.f32 %v1267, %v1320
        %v1339 = vmul.f32 %v1268, %v1320
        %v1340 = vmul.f32 %v1269, %v1320
        %v1341 = vmul.f32 %v1270, %v1320
        %v1342 = vmul.f32 %v1271, %v1320
        %v1343 = vmul.f32 %v1272, %v1320
        %v1344 = vmul.f32 %v1273, %v1320
        %v1345 = vmul.f32 %v1274, %v1320
        %v1346 = vmul.f32 %v1275, %v1320
        %v1347 = vmul.f32 %v1276, %v1320
        %v1348 = vmul.f32 %v1277, %v1320
        %v1349 = vmul.f32 %v1278, %v1320
        %v1350 = vmul.f32 %v1279, %v1320
        %v1351 = vmul.f32 %v1280, %v1320
        %v1352 = vmul.f32 %v1281, %v1320
        %1385 = vrot.lane.b32.xlu0 %v1321, 1
        %v1386 = vpop.permute.xlu0 %1385
        %1387 = vrot.lane.b32.xlu0 %v1322, 1
        %v1388 = vpop.permute.xlu0 %1387
        %1389 = vrot.lane.b32.xlu0 %v1323, 1
        %v1390 = vpop.permute.xlu0 %1389
        %1391 = vrot.lane.b32.xlu0 %v1324, 1
        %v1392 = vpop.permute.xlu0 %1391
        %1393 = vrot.lane.b32.xlu0 %v1325, 1
        %v1394 = vpop.permute.xlu0 %1393
        %1395 = vrot.lane.b32.xlu0 %v1326, 1
        %v1396 = vpop.permute.xlu0 %1395
        %1397 = vrot.lane.b32.xlu0 %v1327, 1
        %v1398 = vpop.permute.xlu0 %1397
        %1399 = vrot.lane.b32.xlu0 %v1328, 1
        %v1400 = vpop.permute.xlu0 %1399
        %1401 = vrot.lane.b32.xlu0 %v1329, 1
        %v1402 = vpop.permute.xlu0 %1401
        %1403 = vrot.lane.b32.xlu0 %v1330, 1
        %v1404 = vpop.permute.xlu0 %1403
        %1405 = vrot.lane.b32.xlu0 %v1331, 1
        %v1406 = vpop.permute.xlu0 %1405
        %1407 = vrot.lane.b32.xlu0 %v1332, 1
        %v1408 = vpop.permute.xlu0 %1407
        %1409 = vrot.lane.b32.xlu0 %v1333, 1
        %v1410 = vpop.permute.xlu0 %1409
        %1411 = vrot.lane.b32.xlu0 %v1334, 1
        %v1412 = vpop.permute.xlu0 %1411
        %1413 = vrot.lane.b32.xlu0 %v1335, 1
        %v1414 = vpop.permute.xlu0 %1413
        %1415 = vrot.lane.b32.xlu0 %v1336, 1
        %v1416 = vpop.permute.xlu0 %1415
        %1417 = vrot.lane.b32.xlu0 %v1337, 1
        %v1418 = vpop.permute.xlu0 %1417
        %1419 = vrot.lane.b32.xlu0 %v1338, 1
        %v1420 = vpop.permute.xlu0 %1419
        %1421 = vrot.lane.b32.xlu0 %v1339, 1
        %v1422 = vpop.permute.xlu0 %1421
        %1423 = vrot.lane.b32.xlu0 %v1340, 1
        %v1424 = vpop.permute.xlu0 %1423
        %1425 = vrot.lane.b32.xlu0 %v1341, 1
        %v1426 = vpop.permute.xlu0 %1425
        %1427 = vrot.lane.b32.xlu0 %v1342, 1
        %v1428 = vpop.permute.xlu0 %1427
        %1429 = vrot.lane.b32.xlu0 %v1343, 1
        %v1430 = vpop.permute.xlu0 %1429
        %1431 = vrot.lane.b32.xlu0 %v1344, 1
        %v1432 = vpop.permute.xlu0 %1431
        %1433 = vrot.lane.b32.xlu0 %v1345, 1
        %v1434 = vpop.permute.xlu0 %1433
        %1435 = vrot.lane.b32.xlu0 %v1346, 1
        %v1436 = vpop.permute.xlu0 %1435
        %1437 = vrot.lane.b32.xlu0 %v1347, 1
        %v1438 = vpop.permute.xlu0 %1437
        %1439 = vrot.lane.b32.xlu0 %v1348, 1
        %v1440 = vpop.permute.xlu0 %1439
        %1441 = vrot.lane.b32.xlu0 %v1349, 1
        %v1442 = vpop.permute.xlu0 %1441
        %1443 = vrot.lane.b32.xlu0 %v1350, 1
        %v1444 = vpop.permute.xlu0 %1443
        %1445 = vrot.lane.b32.xlu0 %v1351, 1
        %v1446 = vpop.permute.xlu0 %1445
        %1447 = vrot.lane.b32.xlu0 %v1352, 1
        %v1448 = vpop.permute.xlu0 %1447
        %vm1481 = vcmask 131080
        %1482 = vst.msk [vmem:[#allocation2] sm:$0x1] %vm1481, %v1386
        %1483 = vst.msk [vmem:[#allocation2 + $0x10] sm:$0x1] %vm1481, %v1388
        %1484 = vst.msk [vmem:[#allocation2 + $0x20] sm:$0x1] %vm1481, %v1390
        %1485 = vst.msk [vmem:[#allocation2 + $0x30] sm:$0x1] %vm1481, %v1392
        %1486 = vst.msk [vmem:[#allocation2 + $0x40] sm:$0x1] %vm1481, %v1394
        %1487 = vst.msk [vmem:[#allocation2 + $0x50] sm:$0x1] %vm1481, %v1396
        %1488 = vst.msk [vmem:[#allocation2 + $0x60] sm:$0x1] %vm1481, %v1398
        %1489 = vst.msk [vmem:[#allocation2 + $0x70] sm:$0x1] %vm1481, %v1400
        %1490 = vst.msk [vmem:[#allocation2 + $0x80] sm:$0x1] %vm1481, %v1402
        %1491 = vst.msk [vmem:[#allocation2 + $0x90] sm:$0x1] %vm1481, %v1404
        %1492 = vst.msk [vmem:[#allocation2 + $0xa0] sm:$0x1] %vm1481, %v1406
        %1493 = vst.msk [vmem:[#allocation2 + $0xb0] sm:$0x1] %vm1481, %v1408
        %1494 = vst.msk [vmem:[#allocation2 + $0xc0] sm:$0x1] %vm1481, %v1410
        %1495 = vst.msk [vmem:[#allocation2 + $0xd0] sm:$0x1] %vm1481, %v1412
        %1496 = vst.msk [vmem:[#allocation2 + $0xe0] sm:$0x1] %vm1481, %v1414
        %1497 = vst.msk [vmem:[#allocation2 + $0xf0] sm:$0x1] %vm1481, %v1416
        %1498 = vst.msk [vmem:[#allocation2 + $0x100] sm:$0x1] %vm1481, %v1418
        %1499 = vst.msk [vmem:[#allocation2 + $0x110] sm:$0x1] %vm1481, %v1420
        %1500 = vst.msk [vmem:[#allocation2 + $0x120] sm:$0x1] %vm1481, %v1422
        %1501 = vst.msk [vmem:[#allocation2 + $0x130] sm:$0x1] %vm1481, %v1424
        %1502 = vst.msk [vmem:[#allocation2 + $0x140] sm:$0x1] %vm1481, %v1426
        %1503 = vst.msk [vmem:[#allocation2 + $0x150] sm:$0x1] %vm1481, %v1428
        %1504 = vst.msk [vmem:[#allocation2 + $0x160] sm:$0x1] %vm1481, %v1430
        %1505 = vst.msk [vmem:[#allocation2 + $0x170] sm:$0x1] %vm1481, %v1432
        %1506 = vst.msk [vmem:[#allocation2 + $0x180] sm:$0x1] %vm1481, %v1434
        %1507 = vst.msk [vmem:[#allocation2 + $0x190] sm:$0x1] %vm1481, %v1436
        %1508 = vst.msk [vmem:[#allocation2 + $0x1a0] sm:$0x1] %vm1481, %v1438
        %1509 = vst.msk [vmem:[#allocation2 + $0x1b0] sm:$0x1] %vm1481, %v1440
        %1510 = vst.msk [vmem:[#allocation2 + $0x1c0] sm:$0x1] %vm1481, %v1442
        %1511 = vst.msk [vmem:[#allocation2 + $0x1d0] sm:$0x1] %vm1481, %v1444
        %1512 = vst.msk [vmem:[#allocation2 + $0x1e0] sm:$0x1] %vm1481, %v1446
        %1513 = vst.msk [vmem:[#allocation2 + $0x1f0] sm:$0x1] %vm1481, %v1448
        %v1514 = vstv %s1319
        %v1515 = vmul.f32 %v1282, %v1514
        %v1516 = vmul.f32 %v1283, %v1514
        %v1517 = vmul.f32 %v1284, %v1514
        %v1518 = vmul.f32 %v1285, %v1514
        %v1519 = vmul.f32 %v1286, %v1514
        %v1520 = vmul.f32 %v1287, %v1514
        %v1521 = vmul.f32 %v1288, %v1514
        %v1522 = vmul.f32 %v1289, %v1514
        %v1523 = vmul.f32 %v1290, %v1514
        %v1524 = vmul.f32 %v1291, %v1514
        %v1525 = vmul.f32 %v1292, %v1514
        %v1526 = vmul.f32 %v1293, %v1514
        %v1527 = vmul.f32 %v1294, %v1514
        %v1528 = vmul.f32 %v1295, %v1514
        %v1529 = vmul.f32 %v1296, %v1514
        %v1530 = vmul.f32 %v1297, %v1514
        %v1531 = vmul.f32 %v1298, %v1514
        %v1532 = vmul.f32 %v1299, %v1514
        %v1533 = vmul.f32 %v1300, %v1514
        %v1534 = vmul.f32 %v1301, %v1514
        %v1535 = vmul.f32 %v1302, %v1514
        %v1536 = vmul.f32 %v1303, %v1514
        %v1537 = vmul.f32 %v1304, %v1514
        %v1538 = vmul.f32 %v1305, %v1514
        %v1539 = vmul.f32 %v1306, %v1514
        %v1540 = vmul.f32 %v1307, %v1514
        %v1541 = vmul.f32 %v1308, %v1514
        %v1542 = vmul.f32 %v1309, %v1514
        %v1543 = vmul.f32 %v1310, %v1514
        %v1544 = vmul.f32 %v1311, %v1514
        %v1545 = vmul.f32 %v1312, %v1514
        %v1546 = vmul.f32 %v1313, %v1514
        %1579 = vrot.lane.b32.xlu0 %v1515, 1
        %v1580 = vpop.permute.xlu0 %1579
        %1581 = vrot.lane.b32.xlu0 %v1516, 1
        %v1582 = vpop.permute.xlu0 %1581
        %1583 = vrot.lane.b32.xlu0 %v1517, 1
        %v1584 = vpop.permute.xlu0 %1583
        %1585 = vrot.lane.b32.xlu0 %v1518, 1
        %v1586 = vpop.permute.xlu0 %1585
        %1587 = vrot.lane.b32.xlu0 %v1519, 1
        %v1588 = vpop.permute.xlu0 %1587
        %1589 = vrot.lane.b32.xlu0 %v1520, 1
        %v1590 = vpop.permute.xlu0 %1589
        %1591 = vrot.lane.b32.xlu0 %v1521, 1
        %v1592 = vpop.permute.xlu0 %1591
        %1593 = vrot.lane.b32.xlu0 %v1522, 1
        %v1594 = vpop.permute.xlu0 %1593
        %1595 = vrot.lane.b32.xlu0 %v1523, 1
        %v1596 = vpop.permute.xlu0 %1595
        %1597 = vrot.lane.b32.xlu0 %v1524, 1
        %v1598 = vpop.permute.xlu0 %1597
        %1599 = vrot.lane.b32.xlu0 %v1525, 1
        %v1600 = vpop.permute.xlu0 %1599
        %1601 = vrot.lane.b32.xlu0 %v1526, 1
        %v1602 = vpop.permute.xlu0 %1601
        %1603 = vrot.lane.b32.xlu0 %v1527, 1
        %v1604 = vpop.permute.xlu0 %1603
        %1605 = vrot.lane.b32.xlu0 %v1528, 1
        %v1606 = vpop.permute.xlu0 %1605
        %1607 = vrot.lane.b32.xlu0 %v1529, 1
        %v1608 = vpop.permute.xlu0 %1607
        %1609 = vrot.lane.b32.xlu0 %v1530, 1
        %v1610 = vpop.permute.xlu0 %1609
        %1611 = vrot.lane.b32.xlu0 %v1531, 1
        %v1612 = vpop.permute.xlu0 %1611
        %1613 = vrot.lane.b32.xlu0 %v1532, 1
        %v1614 = vpop.permute.xlu0 %1613
        %1615 = vrot.lane.b32.xlu0 %v1533, 1
        %v1616 = vpop.permute.xlu0 %1615
        %1617 = vrot.lane.b32.xlu0 %v1534, 1
        %v1618 = vpop.permute.xlu0 %1617
        %1619 = vrot.lane.b32.xlu0 %v1535, 1
        %v1620 = vpop.permute.xlu0 %1619
        %1621 = vrot.lane.b32.xlu0 %v1536, 1
        %v1622 = vpop.permute.xlu0 %1621
        %1623 = vrot.lane.b32.xlu0 %v1537, 1
        %v1624 = vpop.permute.xlu0 %1623
        %1625 = vrot.lane.b32.xlu0 %v1538, 1
        %v1626 = vpop.permute.xlu0 %1625
        %1627 = vrot.lane.b32.xlu0 %v1539, 1
        %v1628 = vpop.permute.xlu0 %1627
        %1629 = vrot.lane.b32.xlu0 %v1540, 1
        %v1630 = vpop.permute.xlu0 %1629
        %1631 = vrot.lane.b32.xlu0 %v1541, 1
        %v1632 = vpop.permute.xlu0 %1631
        %1633 = vrot.lane.b32.xlu0 %v1542, 1
        %v1634 = vpop.permute.xlu0 %1633
        %1635 = vrot.lane.b32.xlu0 %v1543, 1
        %v1636 = vpop.permute.xlu0 %1635
        %1637 = vrot.lane.b32.xlu0 %v1544, 1
        %v1638 = vpop.permute.xlu0 %1637
        %1639 = vrot.lane.b32.xlu0 %v1545, 1
        %v1640 = vpop.permute.xlu0 %1639
        %1641 = vrot.lane.b32.xlu0 %v1546, 1
        %v1642 = vpop.permute.xlu0 %1641
        %1675 = vst.msk [vmem:[#allocation2 + $0x9] sm:$0x1] %vm1481, %v1580
        %1676 = vst.msk [vmem:[#allocation2 + $0x19] sm:$0x1] %vm1481, %v1582
        %1677 = vst.msk [vmem:[#allocation2 + $0x29] sm:$0x1] %vm1481, %v1584
        %1678 = vst.msk [vmem:[#allocation2 + $0x39] sm:$0x1] %vm1481, %v1586
        %1679 = vst.msk [vmem:[#allocation2 + $0x49] sm:$0x1] %vm1481, %v1588
        %1680 = vst.msk [vmem:[#allocation2 + $0x59] sm:$0x1] %vm1481, %v1590
        %1681 = vst.msk [vmem:[#allocation2 + $0x69] sm:$0x1] %vm1481, %v1592
        %1682 = vst.msk [vmem:[#allocation2 + $0x79] sm:$0x1] %vm1481, %v1594
        %1683 = vst.msk [vmem:[#allocation2 + $0x89] sm:$0x1] %vm1481, %v1596
        %1684 = vst.msk [vmem:[#allocation2 + $0x99] sm:$0x1] %vm1481, %v1598
        %1685 = vst.msk [vmem:[#allocation2 + $0xa9] sm:$0x1] %vm1481, %v1600
        %1686 = vst.msk [vmem:[#allocation2 + $0xb9] sm:$0x1] %vm1481, %v1602
        %1687 = vst.msk [vmem:[#allocation2 + $0xc9] sm:$0x1] %vm1481, %v1604
        %1688 = vst.msk [vmem:[#allocation2 + $0xd9] sm:$0x1] %vm1481, %v1606
        %1689 = vst.msk [vmem:[#allocation2 + $0xe9] sm:$0x1] %vm1481, %v1608
        %1690 = vst.msk [vmem:[#allocation2 + $0xf9] sm:$0x1] %vm1481, %v1610
        %1691 = vst.msk [vmem:[#allocation2 + $0x109] sm:$0x1] %vm1481, %v1612
        %1692 = vst.msk [vmem:[#allocation2 + $0x119] sm:$0x1] %vm1481, %v1614
        %1693 = vst.msk [vmem:[#allocation2 + $0x129] sm:$0x1] %vm1481, %v1616
        %1694 = vst.msk [vmem:[#allocation2 + $0x139] sm:$0x1] %vm1481, %v1618
        %1695 = vst.msk [vmem:[#allocation2 + $0x149] sm:$0x1] %vm1481, %v1620
        %1696 = vst.msk [vmem:[#allocation2 + $0x159] sm:$0x1] %vm1481, %v1622
        %1697 = vst.msk [vmem:[#allocation2 + $0x169] sm:$0x1] %vm1481, %v1624
        %1698 = vst.msk [vmem:[#allocation2 + $0x179] sm:$0x1] %vm1481, %v1626
        %1699 = vst.msk [vmem:[#allocation2 + $0x189] sm:$0x1] %vm1481, %v1628
        %1700 = vst.msk [vmem:[#allocation2 + $0x199] sm:$0x1] %vm1481, %v1630
        %1701 = vst.msk [vmem:[#allocation2 + $0x1a9] sm:$0x1] %vm1481, %v1632
        %1702 = vst.msk [vmem:[#allocation2 + $0x1b9] sm:$0x1] %vm1481, %v1634
        %1703 = vst.msk [vmem:[#allocation2 + $0x1c9] sm:$0x1] %vm1481, %v1636
        %1704 = vst.msk [vmem:[#allocation2 + $0x1d9] sm:$0x1] %vm1481, %v1638
        %1705 = vst.msk [vmem:[#allocation2 + $0x1e9] sm:$0x1] %vm1481, %v1640
        %1706 = vst.msk [vmem:[#allocation2 + $0x1f9] sm:$0x1] %vm1481, %v1642
        %v1707 = vld [vmem:[#allocation2] sm:$0xff]
        %v1708 = vld [vmem:[#allocation2 + $0x10] sm:$0xff]
        %v1709 = vld [vmem:[#allocation2 + $0x20] sm:$0xff]
        %v1710 = vld [vmem:[#allocation2 + $0x30] sm:$0xff]
        %v1711 = vld [vmem:[#allocation2 + $0x40] sm:$0xff]
        %v1712 = vld [vmem:[#allocation2 + $0x50] sm:$0xff]
        %v1713 = vld [vmem:[#allocation2 + $0x60] sm:$0xff]
        %v1714 = vld [vmem:[#allocation2 + $0x70] sm:$0xff]
        %v1715 = vld [vmem:[#allocation2 + $0x80] sm:$0xff]
        %v1716 = vld [vmem:[#allocation2 + $0x90] sm:$0xff]
        %v1717 = vld [vmem:[#allocation2 + $0xa0] sm:$0xff]
        %v1718 = vld [vmem:[#allocation2 + $0xb0] sm:$0xff]
        %v1719 = vld [vmem:[#allocation2 + $0xc0] sm:$0xff]
        %v1720 = vld [vmem:[#allocation2 + $0xd0] sm:$0xff]
        %v1721 = vld [vmem:[#allocation2 + $0xe0] sm:$0xff]
        %v1722 = vld [vmem:[#allocation2 + $0xf0] sm:$0xff]
        %v1723 = vld [vmem:[#allocation2 + $0x100] sm:$0xff]
        %v1724 = vld [vmem:[#allocation2 + $0x110] sm:$0xff]
        %v1725 = vld [vmem:[#allocation2 + $0x120] sm:$0xff]
        %v1726 = vld [vmem:[#allocation2 + $0x130] sm:$0xff]
        %v1727 = vld [vmem:[#allocation2 + $0x140] sm:$0xff]
        %v1728 = vld [vmem:[#allocation2 + $0x150] sm:$0xff]
        %v1729 = vld [vmem:[#allocation2 + $0x160] sm:$0xff]
        %v1730 = vld [vmem:[#allocation2 + $0x170] sm:$0xff]
        %v1731 = vld [vmem:[#allocation2 + $0x180] sm:$0xff]
        %v1732 = vld [vmem:[#allocation2 + $0x190] sm:$0xff]
        %v1733 = vld [vmem:[#allocation2 + $0x1a0] sm:$0xff]
        %v1734 = vld [vmem:[#allocation2 + $0x1b0] sm:$0xff]
        %v1735 = vld [vmem:[#allocation2 + $0x1c0] sm:$0xff]
        %v1736 = vld [vmem:[#allocation2 + $0x1d0] sm:$0xff]
        %v1737 = vld [vmem:[#allocation2 + $0x1e0] sm:$0xff]
        %v1738 = vld [vmem:[#allocation2 + $0x1f0] sm:$0xff]
        %v1739 = vcombine.low %v1707, %v1709
        %v1740 = vcombine.high %v1707, %v1709
        %v1742 = vunpack.c.l.s4 1983009808
        %v1743 = vunpack.c.0.s8 %v1742
        %v1744 = vlaneseq
        %v1745 = vshrl.u32 %v1744, 7
        %v1746 = vsub.s32 %v1743, %v1745
        %v1747 = vrot.slane %v1739, %v1746
        %v1749 = vunpack.c.l.s4 1983009808
        %v1750 = vunpack.c.0.s8 %v1749
        %v1751 = vlaneseq
        %v1752 = vshrl.u32 %v1751, 7
        %v1753 = vsub.s32 %v1750, %v1752
        %v1754 = vrot.slane %v1740, %v1753
        %v1755 = vcombine.low %v1708, %v1710
        %v1756 = vcombine.high %v1708, %v1710
        %v1758 = vunpack.c.l.s4 1983009808
        %v1759 = vunpack.c.0.s8 %v1758
        %v1760 = vlaneseq
        %v1761 = vshrl.u32 %v1760, 7
        %v1762 = vsub.s32 %v1759, %v1761
        %v1763 = vrot.slane %v1755, %v1762
        %v1765 = vunpack.c.l.s4 1983009808
        %v1766 = vunpack.c.0.s8 %v1765
        %v1767 = vlaneseq
        %v1768 = vshrl.u32 %v1767, 7
        %v1769 = vsub.s32 %v1766, %v1768
        %v1770 = vrot.slane %v1756, %v1769
        %v1771 = vcombine.low %v1711, %v1713
        %v1772 = vcombine.high %v1711, %v1713
        %v1774 = vunpack.c.l.s4 1983009808
        %v1775 = vunpack.c.0.s8 %v1774
        %v1776 = vlaneseq
        %v1777 = vshrl.u32 %v1776, 7
        %v1778 = vsub.s32 %v1775, %v1777
        %v1779 = vrot.slane %v1771, %v1778
        %v1781 = vunpack.c.l.s4 1983009808
        %v1782 = vunpack.c.0.s8 %v1781
        %v1783 = vlaneseq
        %v1784 = vshrl.u32 %v1783, 7
        %v1785 = vsub.s32 %v1782, %v1784
        %v1786 = vrot.slane %v1772, %v1785
        %v1787 = vcombine.low %v1712, %v1714
        %v1788 = vcombine.high %v1712, %v1714
        %v1790 = vunpack.c.l.s4 1983009808
        %v1791 = vunpack.c.0.s8 %v1790
        %v1792 = vlaneseq
        %v1793 = vshrl.u32 %v1792, 7
        %v1794 = vsub.s32 %v1791, %v1793
        %v1795 = vrot.slane %v1787, %v1794
        %v1797 = vunpack.c.l.s4 1983009808
        %v1798 = vunpack.c.0.s8 %v1797
        %v1799 = vlaneseq
        %v1800 = vshrl.u32 %v1799, 7
        %v1801 = vsub.s32 %v1798, %v1800
        %v1802 = vrot.slane %v1788, %v1801
        %v1803 = vcombine.low %v1747, %v1763
        %v1804 = vcombine.high %v1747, %v1763
        %v1806 = vunpack.c.l.s4 1934713408
        %v1807 = vunpack.c.0.s8 %v1806
        %v1808 = vlaneseq
        %v1809 = vshrl.u32 %v1808, 7
        %v1810 = vsub.s32 %v1807, %v1809
        %v1811 = vrot.slane %v1803, %v1810
        %v1813 = vunpack.c.l.s4 1934713408
        %v1814 = vunpack.c.0.s8 %v1813
        %v1815 = vlaneseq
        %v1816 = vshrl.u32 %v1815, 7
        %v1817 = vsub.s32 %v1814, %v1816
        %v1818 = vrot.slane %v1804, %v1817
        %v1819 = vcombine.low %v1754, %v1770
        %v1820 = vcombine.high %v1754, %v1770
        %v1822 = vunpack.c.l.s4 1934713408
        %v1823 = vunpack.c.0.s8 %v1822
        %v1824 = vlaneseq
        %v1825 = vshrl.u32 %v1824, 7
        %v1826 = vsub.s32 %v1823, %v1825
        %v1827 = vrot.slane %v1819, %v1826
        %v1829 = vunpack.c.l.s4 1934713408
        %v1830 = vunpack.c.0.s8 %v1829
        %v1831 = vlaneseq
        %v1832 = vshrl.u32 %v1831, 7
        %v1833 = vsub.s32 %v1830, %v1832
        %v1834 = vrot.slane %v1820, %v1833
        %v1835 = vcombine.low %v1779, %v1795
        %v1836 = vcombine.high %v1779, %v1795
        %v1838 = vunpack.c.l.s4 1934713408
        %v1839 = vunpack.c.0.s8 %v1838
        %v1840 = vlaneseq
        %v1841 = vshrl.u32 %v1840, 7
        %v1842 = vsub.s32 %v1839, %v1841
        %v1843 = vrot.slane %v1835, %v1842
        %v1845 = vunpack.c.l.s4 1934713408
        %v1846 = vunpack.c.0.s8 %v1845
        %v1847 = vlaneseq
        %v1848 = vshrl.u32 %v1847, 7
        %v1849 = vsub.s32 %v1846, %v1848
        %v1850 = vrot.slane %v1836, %v1849
        %v1851 = vcombine.low %v1786, %v1802
        %v1852 = vcombine.high %v1786, %v1802
        %v1854 = vunpack.c.l.s4 1934713408
        %v1855 = vunpack.c.0.s8 %v1854
        %v1856 = vlaneseq
        %v1857 = vshrl.u32 %v1856, 7
        %v1858 = vsub.s32 %v1855, %v1857
        %v1859 = vrot.slane %v1851, %v1858
        %v1861 = vunpack.c.l.s4 1934713408
        %v1862 = vunpack.c.0.s8 %v1861
        %v1863 = vlaneseq
        %v1864 = vshrl.u32 %v1863, 7
        %v1865 = vsub.s32 %v1862, %v1864
        %v1866 = vrot.slane %v1852, %v1865
        %v1867 = vcombine.low %v1811, %v1843
        %v1868 = vcombine.high %v1811, %v1843
        %v1869 = vcombine.low %v1818, %v1850
        %v1870 = vcombine.high %v1818, %v1850
        %v1871 = vcombine.low %v1827, %v1859
        %v1872 = vcombine.high %v1827, %v1859
        %v1873 = vcombine.low %v1834, %v1866
        %v1874 = vcombine.high %v1834, %v1866
        %v1875 = vcombine.low %v1715, %v1717
        %v1876 = vcombine.high %v1715, %v1717
        %v1878 = vunpack.c.l.s4 1983009808
        %v1879 = vunpack.c.0.s8 %v1878
        %v1880 = vlaneseq
        %v1881 = vshrl.u32 %v1880, 7
        %v1882 = vsub.s32 %v1879, %v1881
        %v1883 = vrot.slane %v1875, %v1882
        %v1885 = vunpack.c.l.s4 1983009808
        %v1886 = vunpack.c.0.s8 %v1885
        %v1887 = vlaneseq
        %v1888 = vshrl.u32 %v1887, 7
        %v1889 = vsub.s32 %v1886, %v1888
        %v1890 = vrot.slane %v1876, %v1889
        %v1891 = vcombine.low %v1716, %v1718
        %v1892 = vcombine.high %v1716, %v1718
        %v1894 = vunpack.c.l.s4 1983009808
        %v1895 = vunpack.c.0.s8 %v1894
        %v1896 = vlaneseq
        %v1897 = vshrl.u32 %v1896, 7
        %v1898 = vsub.s32 %v1895, %v1897
        %v1899 = vrot.slane %v1891, %v1898
        %v1901 = vunpack.c.l.s4 1983009808
        %v1902 = vunpack.c.0.s8 %v1901
        %v1903 = vlaneseq
        %v1904 = vshrl.u32 %v1903, 7
        %v1905 = vsub.s32 %v1902, %v1904
        %v1906 = vrot.slane %v1892, %v1905
        %v1907 = vcombine.low %v1719, %v1721
        %v1908 = vcombine.high %v1719, %v1721
        %v1910 = vunpack.c.l.s4 1983009808
        %v1911 = vunpack.c.0.s8 %v1910
        %v1912 = vlaneseq
        %v1913 = vshrl.u32 %v1912, 7
        %v1914 = vsub.s32 %v1911, %v1913
        %v1915 = vrot.slane %v1907, %v1914
        %v1917 = vunpack.c.l.s4 1983009808
        %v1918 = vunpack.c.0.s8 %v1917
        %v1919 = vlaneseq
        %v1920 = vshrl.u32 %v1919, 7
        %v1921 = vsub.s32 %v1918, %v1920
        %v1922 = vrot.slane %v1908, %v1921
        %v1923 = vcombine.low %v1720, %v1722
        %v1924 = vcombine.high %v1720, %v1722
        %v1926 = vunpack.c.l.s4 1983009808
        %v1927 = vunpack.c.0.s8 %v1926
        %v1928 = vlaneseq
        %v1929 = vshrl.u32 %v1928, 7
        %v1930 = vsub.s32 %v1927, %v1929
        %v1931 = vrot.slane %v1923, %v1930
        %v1933 = vunpack.c.l.s4 1983009808
        %v1934 = vunpack.c.0.s8 %v1933
        %v1935 = vlaneseq
        %v1936 = vshrl.u32 %v1935, 7
        %v1937 = vsub.s32 %v1934, %v1936
        %v1938 = vrot.slane %v1924, %v1937
        %v1939 = vcombine.low %v1883, %v1899
        %v1940 = vcombine.high %v1883, %v1899
        %v1942 = vunpack.c.l.s4 1934713408
        %v1943 = vunpack.c.0.s8 %v1942
        %v1944 = vlaneseq
        %v1945 = vshrl.u32 %v1944, 7
        %v1946 = vsub.s32 %v1943, %v1945
        %v1947 = vrot.slane %v1939, %v1946
        %v1949 = vunpack.c.l.s4 1934713408
        %v1950 = vunpack.c.0.s8 %v1949
        %v1951 = vlaneseq
        %v1952 = vshrl.u32 %v1951, 7
        %v1953 = vsub.s32 %v1950, %v1952
        %v1954 = vrot.slane %v1940, %v1953
        %v1955 = vcombine.low %v1890, %v1906
        %v1956 = vcombine.high %v1890, %v1906
        %v1958 = vunpack.c.l.s4 1934713408
        %v1959 = vunpack.c.0.s8 %v1958
        %v1960 = vlaneseq
        %v1961 = vshrl.u32 %v1960, 7
        %v1962 = vsub.s32 %v1959, %v1961
        %v1963 = vrot.slane %v1955, %v1962
        %v1965 = vunpack.c.l.s4 1934713408
        %v1966 = vunpack.c.0.s8 %v1965
        %v1967 = vlaneseq
        %v1968 = vshrl.u32 %v1967, 7
        %v1969 = vsub.s32 %v1966, %v1968
        %v1970 = vrot.slane %v1956, %v1969
        %v1971 = vcombine.low %v1915, %v1931
        %v1972 = vcombine.high %v1915, %v1931
        %v1974 = vunpack.c.l.s4 1934713408
        %v1975 = vunpack.c.0.s8 %v1974
        %v1976 = vlaneseq
        %v1977 = vshrl.u32 %v1976, 7
        %v1978 = vsub.s32 %v1975, %v1977
        %v1979 = vrot.slane %v1971, %v1978
        %v1981 = vunpack.c.l.s4 1934713408
        %v1982 = vunpack.c.0.s8 %v1981
        %v1983 = vlaneseq
        %v1984 = vshrl.u32 %v1983, 7
        %v1985 = vsub.s32 %v1982, %v1984
        %v1986 = vrot.slane %v1972, %v1985
        %v1987 = vcombine.low %v1922, %v1938
        %v1988 = vcombine.high %v1922, %v1938
        %v1990 = vunpack.c.l.s4 1934713408
        %v1991 = vunpack.c.0.s8 %v1990
        %v1992 = vlaneseq
        %v1993 = vshrl.u32 %v1992, 7
        %v1994 = vsub.s32 %v1991, %v1993
        %v1995 = vrot.slane %v1987, %v1994
        %v1997 = vunpack.c.l.s4 1934713408
        %v1998 = vunpack.c.0.s8 %v1997
        %v1999 = vlaneseq
        %v2000 = vshrl.u32 %v1999, 7
        %v2001 = vsub.s32 %v1998, %v2000
        %v2002 = vrot.slane %v1988, %v2001
        %v2003 = vcombine.low %v1947, %v1979
        %v2004 = vcombine.high %v1947, %v1979
        %v2005 = vcombine.low %v1954, %v1986
        %v2006 = vcombine.high %v1954, %v1986
        %v2007 = vcombine.low %v1963, %v1995
        %v2008 = vcombine.high %v1963, %v1995
        %v2009 = vcombine.low %v1970, %v2002
        %v2010 = vcombine.high %v1970, %v2002
        %v2011 = vcombine.low %v1723, %v1725
        %v2012 = vcombine.high %v1723, %v1725
        %v2014 = vunpack.c.l.s4 1983009808
        %v2015 = vunpack.c.0.s8 %v2014
        %v2016 = vlaneseq
        %v2017 = vshrl.u32 %v2016, 7
        %v2018 = vsub.s32 %v2015, %v2017
        %v2019 = vrot.slane %v2011, %v2018
        %v2021 = vunpack.c.l.s4 1983009808
        %v2022 = vunpack.c.0.s8 %v2021
        %v2023 = vlaneseq
        %v2024 = vshrl.u32 %v2023, 7
        %v2025 = vsub.s32 %v2022, %v2024
        %v2026 = vrot.slane %v2012, %v2025
        %v2027 = vcombine.low %v1724, %v1726
        %v2028 = vcombine.high %v1724, %v1726
        %v2030 = vunpack.c.l.s4 1983009808
        %v2031 = vunpack.c.0.s8 %v2030
        %v2032 = vlaneseq
        %v2033 = vshrl.u32 %v2032, 7
        %v2034 = vsub.s32 %v2031, %v2033
        %v2035 = vrot.slane %v2027, %v2034
        %v2037 = vunpack.c.l.s4 1983009808
        %v2038 = vunpack.c.0.s8 %v2037
        %v2039 = vlaneseq
        %v2040 = vshrl.u32 %v2039, 7
        %v2041 = vsub.s32 %v2038, %v2040
        %v2042 = vrot.slane %v2028, %v2041
        %v2043 = vcombine.low %v1727, %v1729
        %v2044 = vcombine.high %v1727, %v1729
        %v2046 = vunpack.c.l.s4 1983009808
        %v2047 = vunpack.c.0.s8 %v2046
        %v2048 = vlaneseq
        %v2049 = vshrl.u32 %v2048, 7
        %v2050 = vsub.s32 %v2047, %v2049
        %v2051 = vrot.slane %v2043, %v2050
        %v2053 = vunpack.c.l.s4 1983009808
        %v2054 = vunpack.c.0.s8 %v2053
        %v2055 = vlaneseq
        %v2056 = vshrl.u32 %v2055, 7
        %v2057 = vsub.s32 %v2054, %v2056
        %v2058 = vrot.slane %v2044, %v2057
        %v2059 = vcombine.low %v1728, %v1730
        %v2060 = vcombine.high %v1728, %v1730
        %v2062 = vunpack.c.l.s4 1983009808
        %v2063 = vunpack.c.0.s8 %v2062
        %v2064 = vlaneseq
        %v2065 = vshrl.u32 %v2064, 7
        %v2066 = vsub.s32 %v2063, %v2065
        %v2067 = vrot.slane %v2059, %v2066
        %v2069 = vunpack.c.l.s4 1983009808
        %v2070 = vunpack.c.0.s8 %v2069
        %v2071 = vlaneseq
        %v2072 = vshrl.u32 %v2071, 7
        %v2073 = vsub.s32 %v2070, %v2072
        %v2074 = vrot.slane %v2060, %v2073
        %v2075 = vcombine.low %v2019, %v2035
        %v2076 = vcombine.high %v2019, %v2035
        %v2078 = vunpack.c.l.s4 1934713408
        %v2079 = vunpack.c.0.s8 %v2078
        %v2080 = vlaneseq
        %v2081 = vshrl.u32 %v2080, 7
        %v2082 = vsub.s32 %v2079, %v2081
        %v2083 = vrot.slane %v2075, %v2082
        %v2085 = vunpack.c.l.s4 1934713408
        %v2086 = vunpack.c.0.s8 %v2085
        %v2087 = vlaneseq
        %v2088 = vshrl.u32 %v2087, 7
        %v2089 = vsub.s32 %v2086, %v2088
        %v2090 = vrot.slane %v2076, %v2089
        %v2091 = vcombine.low %v2026, %v2042
        %v2092 = vcombine.high %v2026, %v2042
        %v2094 = vunpack.c.l.s4 1934713408
        %v2095 = vunpack.c.0.s8 %v2094
        %v2096 = vlaneseq
        %v2097 = vshrl.u32 %v2096, 7
        %v2098 = vsub.s32 %v2095, %v2097
        %v2099 = vrot.slane %v2091, %v2098
        %v2101 = vunpack.c.l.s4 1934713408
        %v2102 = vunpack.c.0.s8 %v2101
        %v2103 = vlaneseq
        %v2104 = vshrl.u32 %v2103, 7
        %v2105 = vsub.s32 %v2102, %v2104
        %v2106 = vrot.slane %v2092, %v2105
        %v2107 = vcombine.low %v2051, %v2067
        %v2108 = vcombine.high %v2051, %v2067
        %v2110 = vunpack.c.l.s4 1934713408
        %v2111 = vunpack.c.0.s8 %v2110
        %v2112 = vlaneseq
        %v2113 = vshrl.u32 %v2112, 7
        %v2114 = vsub.s32 %v2111, %v2113
        %v2115 = vrot.slane %v2107, %v2114
        %v2117 = vunpack.c.l.s4 1934713408
        %v2118 = vunpack.c.0.s8 %v2117
        %v2119 = vlaneseq
        %v2120 = vshrl.u32 %v2119, 7
        %v2121 = vsub.s32 %v2118, %v2120
        %v2122 = vrot.slane %v2108, %v2121
        %v2123 = vcombine.low %v2058, %v2074
        %v2124 = vcombine.high %v2058, %v2074
        %v2126 = vunpack.c.l.s4 1934713408
        %v2127 = vunpack.c.0.s8 %v2126
        %v2128 = vlaneseq
        %v2129 = vshrl.u32 %v2128, 7
        %v2130 = vsub.s32 %v2127, %v2129
        %v2131 = vrot.slane %v2123, %v2130
        %v2133 = vunpack.c.l.s4 1934713408
        %v2134 = vunpack.c.0.s8 %v2133
        %v2135 = vlaneseq
        %v2136 = vshrl.u32 %v2135, 7
        %v2137 = vsub.s32 %v2134, %v2136
        %v2138 = vrot.slane %v2124, %v2137
        %v2139 = vcombine.low %v2083, %v2115
        %v2140 = vcombine.high %v2083, %v2115
        %v2141 = vcombine.low %v2090, %v2122
        %v2142 = vcombine.high %v2090, %v2122
        %v2143 = vcombine.low %v2099, %v2131
        %v2144 = vcombine.high %v2099, %v2131
        %v2145 = vcombine.low %v2106, %v2138
        %v2146 = vcombine.high %v2106, %v2138
        %v2147 = vcombine.low %v1731, %v1733
        %v2148 = vcombine.high %v1731, %v1733
        %v2150 = vunpack.c.l.s4 1983009808
        %v2151 = vunpack.c.0.s8 %v2150
        %v2152 = vlaneseq
        %v2153 = vshrl.u32 %v2152, 7
        %v2154 = vsub.s32 %v2151, %v2153
        %v2155 = vrot.slane %v2147, %v2154
        %v2157 = vunpack.c.l.s4 1983009808
        %v2158 = vunpack.c.0.s8 %v2157
        %v2159 = vlaneseq
        %v2160 = vshrl.u32 %v2159, 7
        %v2161 = vsub.s32 %v2158, %v2160
        %v2162 = vrot.slane %v2148, %v2161
        %v2163 = vcombine.low %v1732, %v1734
        %v2164 = vcombine.high %v1732, %v1734
        %v2166 = vunpack.c.l.s4 1983009808
        %v2167 = vunpack.c.0.s8 %v2166
        %v2168 = vlaneseq
        %v2169 = vshrl.u32 %v2168, 7
        %v2170 = vsub.s32 %v2167, %v2169
        %v2171 = vrot.slane %v2163, %v2170
        %v2173 = vunpack.c.l.s4 1983009808
        %v2174 = vunpack.c.0.s8 %v2173
        %v2175 = vlaneseq
        %v2176 = vshrl.u32 %v2175, 7
        %v2177 = vsub.s32 %v2174, %v2176
        %v2178 = vrot.slane %v2164, %v2177
        %v2179 = vcombine.low %v1735, %v1737
        %v2180 = vcombine.high %v1735, %v1737
        %v2182 = vunpack.c.l.s4 1983009808
        %v2183 = vunpack.c.0.s8 %v2182
        %v2184 = vlaneseq
        %v2185 = vshrl.u32 %v2184, 7
        %v2186 = vsub.s32 %v2183, %v2185
        %v2187 = vrot.slane %v2179, %v2186
        %v2189 = vunpack.c.l.s4 1983009808
        %v2190 = vunpack.c.0.s8 %v2189
        %v2191 = vlaneseq
        %v2192 = vshrl.u32 %v2191, 7
        %v2193 = vsub.s32 %v2190, %v2192
        %v2194 = vrot.slane %v2180, %v2193
        %v2195 = vcombine.low %v1736, %v1738
        %v2196 = vcombine.high %v1736, %v1738
        %v2198 = vunpack.c.l.s4 1983009808
        %v2199 = vunpack.c.0.s8 %v2198
        %v2200 = vlaneseq
        %v2201 = vshrl.u32 %v2200, 7
        %v2202 = vsub.s32 %v2199, %v2201
        %v2203 = vrot.slane %v2195, %v2202
        %v2205 = vunpack.c.l.s4 1983009808
        %v2206 = vunpack.c.0.s8 %v2205
        %v2207 = vlaneseq
        %v2208 = vshrl.u32 %v2207, 7
        %v2209 = vsub.s32 %v2206, %v2208
        %v2210 = vrot.slane %v2196, %v2209
        %v2211 = vcombine.low %v2155, %v2171
        %v2212 = vcombine.high %v2155, %v2171
        %v2214 = vunpack.c.l.s4 1934713408
        %v2215 = vunpack.c.0.s8 %v2214
        %v2216 = vlaneseq
        %v2217 = vshrl.u32 %v2216, 7
        %v2218 = vsub.s32 %v2215, %v2217
        %v2219 = vrot.slane %v2211, %v2218
        %v2221 = vunpack.c.l.s4 1934713408
        %v2222 = vunpack.c.0.s8 %v2221
        %v2223 = vlaneseq
        %v2224 = vshrl.u32 %v2223, 7
        %v2225 = vsub.s32 %v2222, %v2224
        %v2226 = vrot.slane %v2212, %v2225
        %v2227 = vcombine.low %v2162, %v2178
        %v2228 = vcombine.high %v2162, %v2178
        %v2230 = vunpack.c.l.s4 1934713408
        %v2231 = vunpack.c.0.s8 %v2230
        %v2232 = vlaneseq
        %v2233 = vshrl.u32 %v2232, 7
        %v2234 = vsub.s32 %v2231, %v2233
        %v2235 = vrot.slane %v2227, %v2234
        %v2237 = vunpack.c.l.s4 1934713408
        %v2238 = vunpack.c.0.s8 %v2237
        %v2239 = vlaneseq
        %v2240 = vshrl.u32 %v2239, 7
        %v2241 = vsub.s32 %v2238, %v2240
        %v2242 = vrot.slane %v2228, %v2241
        %v2243 = vcombine.low %v2187, %v2203
        %v2244 = vcombine.high %v2187, %v2203
        %v2246 = vunpack.c.l.s4 1934713408
        %v2247 = vunpack.c.0.s8 %v2246
        %v2248 = vlaneseq
        %v2249 = vshrl.u32 %v2248, 7
        %v2250 = vsub.s32 %v2247, %v2249
        %v2251 = vrot.slane %v2243, %v2250
        %v2253 = vunpack.c.l.s4 1934713408
        %v2254 = vunpack.c.0.s8 %v2253
        %v2255 = vlaneseq
        %v2256 = vshrl.u32 %v2255, 7
        %v2257 = vsub.s32 %v2254, %v2256
        %v2258 = vrot.slane %v2244, %v2257
        %v2259 = vcombine.low %v2194, %v2210
        %v2260 = vcombine.high %v2194, %v2210
        %v2262 = vunpack.c.l.s4 1934713408
        %v2263 = vunpack.c.0.s8 %v2262
        %v2264 = vlaneseq
        %v2265 = vshrl.u32 %v2264, 7
        %v2266 = vsub.s32 %v2263, %v2265
        %v2267 = vrot.slane %v2259, %v2266
        %v2269 = vunpack.c.l.s4 1934713408
        %v2270 = vunpack.c.0.s8 %v2269
        %v2271 = vlaneseq
        %v2272 = vshrl.u32 %v2271, 7
        %v2273 = vsub.s32 %v2270, %v2272
        %v2274 = vrot.slane %v2260, %v2273
        %v2275 = vcombine.low %v2219, %v2251
        %v2276 = vcombine.high %v2219, %v2251
        %v2277 = vcombine.low %v2226, %v2258
        %v2278 = vcombine.high %v2226, %v2258
        %v2279 = vcombine.low %v2235, %v2267
        %v2280 = vcombine.high %v2235, %v2267
        %v2281 = vcombine.low %v2242, %v2274
        %v2282 = vcombine.high %v2242, %v2274
        %2287 = vrot.lane.b32.xlu0 %v1868, 16
        %v2288 = vpop.permute.xlu0 %2287
        %2289 = vrot.lane.b32.xlu0 %v2004, 16
        %v2290 = vpop.permute.xlu0 %2289
        %2291 = vrot.lane.b32.xlu0 %v2140, 16
        %v2292 = vpop.permute.xlu0 %2291
        %2293 = vrot.lane.b32.xlu0 %v2276, 16
        %v2294 = vpop.permute.xlu0 %2293
        %2303 = vrot.lane.b32.xlu0 %v1869, 32
        %v2304 = vpop.permute.xlu0 %2303
        %2305 = vrot.lane.b32.xlu0 %v2005, 32
        %v2306 = vpop.permute.xlu0 %2305
        %2307 = vrot.lane.b32.xlu0 %v2141, 32
        %v2308 = vpop.permute.xlu0 %2307
        %2309 = vrot.lane.b32.xlu0 %v2277, 32
        %v2310 = vpop.permute.xlu0 %2309
        %2319 = vrot.lane.b32.xlu0 %v1870, 48
        %v2320 = vpop.permute.xlu0 %2319
        %2321 = vrot.lane.b32.xlu0 %v2006, 48
        %v2322 = vpop.permute.xlu0 %2321
        %2323 = vrot.lane.b32.xlu0 %v2142, 48
        %v2324 = vpop.permute.xlu0 %2323
        %2325 = vrot.lane.b32.xlu0 %v2278, 48
        %v2326 = vpop.permute.xlu0 %2325
        %2335 = vrot.lane.b32.xlu0 %v1871, 64
        %v2336 = vpop.permute.xlu0 %2335
        %2337 = vrot.lane.b32.xlu0 %v2007, 64
        %v2338 = vpop.permute.xlu0 %2337
        %2339 = vrot.lane.b32.xlu0 %v2143, 64
        %v2340 = vpop.permute.xlu0 %2339
        %2341 = vrot.lane.b32.xlu0 %v2279, 64
        %v2342 = vpop.permute.xlu0 %2341
        %2351 = vrot.lane.b32.xlu0 %v1872, 80
        %v2352 = vpop.permute.xlu0 %2351
        %2353 = vrot.lane.b32.xlu0 %v2008, 80
        %v2354 = vpop.permute.xlu0 %2353
        %2355 = vrot.lane.b32.xlu0 %v2144, 80
        %v2356 = vpop.permute.xlu0 %2355
        %2357 = vrot.lane.b32.xlu0 %v2280, 80
        %v2358 = vpop.permute.xlu0 %2357
        %2367 = vrot.lane.b32.xlu0 %v1873, 96
        %v2368 = vpop.permute.xlu0 %2367
        %2369 = vrot.lane.b32.xlu0 %v2009, 96
        %v2370 = vpop.permute.xlu0 %2369
        %2371 = vrot.lane.b32.xlu0 %v2145, 96
        %v2372 = vpop.permute.xlu0 %2371
        %2373 = vrot.lane.b32.xlu0 %v2281, 96
        %v2374 = vpop.permute.xlu0 %2373
        %2383 = vrot.lane.b32.xlu0 %v1874, 112
        %v2384 = vpop.permute.xlu0 %2383
        %2385 = vrot.lane.b32.xlu0 %v2010, 112
        %v2386 = vpop.permute.xlu0 %2385
        %2387 = vrot.lane.b32.xlu0 %v2146, 112
        %v2388 = vpop.permute.xlu0 %2387
        %2389 = vrot.lane.b32.xlu0 %v2282, 112
        %v2390 = vpop.permute.xlu0 %2389
        %vm2395 = vcmask 130048
        %v2396 = vsel %vm2395, %v1867, %v2288
        %v2397 = vsel %vm2395, %v2003, %v2290
        %v2398 = vsel %vm2395, %v2139, %v2292
        %v2399 = vsel %vm2395, %v2275, %v2294
        %vm2400 = vcmask 261120
        %v2401 = vsel %vm2400, %v2396, %v2304
        %v2402 = vsel %vm2400, %v2397, %v2306
        %v2403 = vsel %vm2400, %v2398, %v2308
        %v2404 = vsel %vm2400, %v2399, %v2310
        %vm2405 = vcmask 392192
        %v2406 = vsel %vm2405, %v2401, %v2320
        %v2407 = vsel %vm2405, %v2402, %v2322
        %v2408 = vsel %vm2405, %v2403, %v2324
        %v2409 = vsel %vm2405, %v2404, %v2326
        %vm2410 = vcmask 523264
        %v2411 = vsel %vm2410, %v2406, %v2336
        %v2412 = vsel %vm2410, %v2407, %v2338
        %v2413 = vsel %vm2410, %v2408, %v2340
        %v2414 = vsel %vm2410, %v2409, %v2342
        %vm2415 = vcmask 654336
        %v2416 = vsel %vm2415, %v2411, %v2352
        %v2417 = vsel %vm2415, %v2412, %v2354
        %v2418 = vsel %vm2415, %v2413, %v2356
        %v2419 = vsel %vm2415, %v2414, %v2358
        %vm2420 = vcmask 785408
        %v2421 = vsel %vm2420, %v2416, %v2368
        %v2422 = vsel %vm2420, %v2417, %v2370
        %v2423 = vsel %vm2420, %v2418, %v2372
        %v2424 = vsel %vm2420, %v2419, %v2374
        %vm2425 = vcmask 916480
        %v2426 = vsel %vm2425, %v2421, %v2384
        %v2427 = vsel %vm2425, %v2422, %v2386
        %v2428 = vsel %vm2425, %v2423, %v2388
        %v2429 = vsel %vm2425, %v2424, %v2390
        %v2430 = vpack.c.bf16 %v2427, %v2426
        %v2431 = vpack.c.bf16 %v2429, %v2428
        %2464 = vrot.lane.b32.xlu0 %v1707, 127
        %v2465 = vpop.permute.xlu0 %2464
        %2466 = vrot.lane.b32.xlu0 %v1708, 127
        %v2467 = vpop.permute.xlu0 %2466
        %2468 = vrot.lane.b32.xlu0 %v1709, 127
        %v2469 = vpop.permute.xlu0 %2468
        %2470 = vrot.lane.b32.xlu0 %v1710, 127
        %v2471 = vpop.permute.xlu0 %2470
        %2472 = vrot.lane.b32.xlu0 %v1711, 127
        %v2473 = vpop.permute.xlu0 %2472
        %2474 = vrot.lane.b32.xlu0 %v1712, 127
        %v2475 = vpop.permute.xlu0 %2474
        %2476 = vrot.lane.b32.xlu0 %v1713, 127
        %v2477 = vpop.permute.xlu0 %2476
        %2478 = vrot.lane.b32.xlu0 %v1714, 127
        %v2479 = vpop.permute.xlu0 %2478
        %2480 = vrot.lane.b32.xlu0 %v1715, 127
        %v2481 = vpop.permute.xlu0 %2480
        %2482 = vrot.lane.b32.xlu0 %v1716, 127
        %v2483 = vpop.permute.xlu0 %2482
        %2484 = vrot.lane.b32.xlu0 %v1717, 127
        %v2485 = vpop.permute.xlu0 %2484
        %2486 = vrot.lane.b32.xlu0 %v1718, 127
        %v2487 = vpop.permute.xlu0 %2486
        %2488 = vrot.lane.b32.xlu0 %v1719, 127
        %v2489 = vpop.permute.xlu0 %2488
        %2490 = vrot.lane.b32.xlu0 %v1720, 127
        %v2491 = vpop.permute.xlu0 %2490
        %2492 = vrot.lane.b32.xlu0 %v1721, 127
        %v2493 = vpop.permute.xlu0 %2492
        %2494 = vrot.lane.b32.xlu0 %v1722, 127
        %v2495 = vpop.permute.xlu0 %2494
        %2496 = vrot.lane.b32.xlu0 %v1723, 127
        %v2497 = vpop.permute.xlu0 %2496
        %2498 = vrot.lane.b32.xlu0 %v1724, 127
        %v2499 = vpop.permute.xlu0 %2498
        %2500 = vrot.lane.b32.xlu0 %v1725, 127
        %v2501 = vpop.permute.xlu0 %2500
        %2502 = vrot.lane.b32.xlu0 %v1726, 127
        %v2503 = vpop.permute.xlu0 %2502
        %2504 = vrot.lane.b32.xlu0 %v1727, 127
        %v2505 = vpop.permute.xlu0 %2504
        %2506 = vrot.lane.b32.xlu0 %v1728, 127
        %v2507 = vpop.permute.xlu0 %2506
        %2508 = vrot.lane.b32.xlu0 %v1729, 127
        %v2509 = vpop.permute.xlu0 %2508
        %2510 = vrot.lane.b32.xlu0 %v1730, 127
        %v2511 = vpop.permute.xlu0 %2510
        %2512 = vrot.lane.b32.xlu0 %v1731, 127
        %v2513 = vpop.permute.xlu0 %2512
        %2514 = vrot.lane.b32.xlu0 %v1732, 127
        %v2515 = vpop.permute.xlu0 %2514
        %2516 = vrot.lane.b32.xlu0 %v1733, 127
        %v2517 = vpop.permute.xlu0 %2516
        %2518 = vrot.lane.b32.xlu0 %v1734, 127
        %v2519 = vpop.permute.xlu0 %2518
        %2520 = vrot.lane.b32.xlu0 %v1735, 127
        %v2521 = vpop.permute.xlu0 %2520
        %2522 = vrot.lane.b32.xlu0 %v1736, 127
        %v2523 = vpop.permute.xlu0 %2522
        %2524 = vrot.lane.b32.xlu0 %v1737, 127
        %v2525 = vpop.permute.xlu0 %2524
        %2526 = vrot.lane.b32.xlu0 %v1738, 127
        %v2527 = vpop.permute.xlu0 %2526
        %v2560 = vcombine.low %v2465, %v2469
        %v2561 = vcombine.high %v2465, %v2469
        %v2563 = vunpack.c.l.s4 1983009808
        %v2564 = vunpack.c.0.s8 %v2563
        %v2565 = vlaneseq
        %v2566 = vshrl.u32 %v2565, 7
        %v2567 = vsub.s32 %v2564, %v2566
        %v2568 = vrot.slane %v2560, %v2567
        %v2570 = vunpack.c.l.s4 1983009808
        %v2571 = vunpack.c.0.s8 %v2570
        %v2572 = vlaneseq
        %v2573 = vshrl.u32 %v2572, 7
        %v2574 = vsub.s32 %v2571, %v2573
        %v2575 = vrot.slane %v2561, %v2574
        %v2576 = vcombine.low %v2467, %v2471
        %v2577 = vcombine.high %v2467, %v2471
        %v2579 = vunpack.c.l.s4 1983009808
        %v2580 = vunpack.c.0.s8 %v2579
        %v2581 = vlaneseq
        %v2582 = vshrl.u32 %v2581, 7
        %v2583 = vsub.s32 %v2580, %v2582
        %v2584 = vrot.slane %v2576, %v2583
        %v2586 = vunpack.c.l.s4 1983009808
        %v2587 = vunpack.c.0.s8 %v2586
        %v2588 = vlaneseq
        %v2589 = vshrl.u32 %v2588, 7
        %v2590 = vsub.s32 %v2587, %v2589
        %v2591 = vrot.slane %v2577, %v2590
        %v2592 = vcombine.low %v2473, %v2477
        %v2593 = vcombine.high %v2473, %v2477
        %v2595 = vunpack.c.l.s4 1983009808
        %v2596 = vunpack.c.0.s8 %v2595
        %v2597 = vlaneseq
        %v2598 = vshrl.u32 %v2597, 7
        %v2599 = vsub.s32 %v2596, %v2598
        %v2600 = vrot.slane %v2592, %v2599
        %v2602 = vunpack.c.l.s4 1983009808
        %v2603 = vunpack.c.0.s8 %v2602
        %v2604 = vlaneseq
        %v2605 = vshrl.u32 %v2604, 7
        %v2606 = vsub.s32 %v2603, %v2605
        %v2607 = vrot.slane %v2593, %v2606
        %v2608 = vcombine.low %v2475, %v2479
        %v2609 = vcombine.high %v2475, %v2479
        %v2611 = vunpack.c.l.s4 1983009808
        %v2612 = vunpack.c.0.s8 %v2611
        %v2613 = vlaneseq
        %v2614 = vshrl.u32 %v2613, 7
        %v2615 = vsub.s32 %v2612, %v2614
        %v2616 = vrot.slane %v2608, %v2615
        %v2618 = vunpack.c.l.s4 1983009808
        %v2619 = vunpack.c.0.s8 %v2618
        %v2620 = vlaneseq
        %v2621 = vshrl.u32 %v2620, 7
        %v2622 = vsub.s32 %v2619, %v2621
        %v2623 = vrot.slane %v2609, %v2622
        %v2624 = vcombine.low %v2568, %v2584
        %v2625 = vcombine.high %v2568, %v2584
        %v2627 = vunpack.c.l.s4 1934713408
        %v2628 = vunpack.c.0.s8 %v2627
        %v2629 = vlaneseq
        %v2630 = vshrl.u32 %v2629, 7
        %v2631 = vsub.s32 %v2628, %v2630
        %v2632 = vrot.slane %v2624, %v2631
        %v2634 = vunpack.c.l.s4 1934713408
        %v2635 = vunpack.c.0.s8 %v2634
        %v2636 = vlaneseq
        %v2637 = vshrl.u32 %v2636, 7
        %v2638 = vsub.s32 %v2635, %v2637
        %v2639 = vrot.slane %v2625, %v2638
        %v2640 = vcombine.low %v2575, %v2591
        %v2641 = vcombine.high %v2575, %v2591
        %v2643 = vunpack.c.l.s4 1934713408
        %v2644 = vunpack.c.0.s8 %v2643
        %v2645 = vlaneseq
        %v2646 = vshrl.u32 %v2645, 7
        %v2647 = vsub.s32 %v2644, %v2646
        %v2648 = vrot.slane %v2640, %v2647
        %v2650 = vunpack.c.l.s4 1934713408
        %v2651 = vunpack.c.0.s8 %v2650
        %v2652 = vlaneseq
        %v2653 = vshrl.u32 %v2652, 7
        %v2654 = vsub.s32 %v2651, %v2653
        %v2655 = vrot.slane %v2641, %v2654
        %v2656 = vcombine.low %v2600, %v2616
        %v2657 = vcombine.high %v2600, %v2616
        %v2659 = vunpack.c.l.s4 1934713408
        %v2660 = vunpack.c.0.s8 %v2659
        %v2661 = vlaneseq
        %v2662 = vshrl.u32 %v2661, 7
        %v2663 = vsub.s32 %v2660, %v2662
        %v2664 = vrot.slane %v2656, %v2663
        %v2666 = vunpack.c.l.s4 1934713408
        %v2667 = vunpack.c.0.s8 %v2666
        %v2668 = vlaneseq
        %v2669 = vshrl.u32 %v2668, 7
        %v2670 = vsub.s32 %v2667, %v2669
        %v2671 = vrot.slane %v2657, %v2670
        %v2672 = vcombine.low %v2607, %v2623
        %v2673 = vcombine.high %v2607, %v2623
        %v2675 = vunpack.c.l.s4 1934713408
        %v2676 = vunpack.c.0.s8 %v2675
        %v2677 = vlaneseq
        %v2678 = vshrl.u32 %v2677, 7
        %v2679 = vsub.s32 %v2676, %v2678
        %v2680 = vrot.slane %v2672, %v2679
        %v2682 = vunpack.c.l.s4 1934713408
        %v2683 = vunpack.c.0.s8 %v2682
        %v2684 = vlaneseq
        %v2685 = vshrl.u32 %v2684, 7
        %v2686 = vsub.s32 %v2683, %v2685
        %v2687 = vrot.slane %v2673, %v2686
        %v2688 = vcombine.low %v2632, %v2664
        %v2689 = vcombine.high %v2632, %v2664
        %v2690 = vcombine.low %v2639, %v2671
        %v2691 = vcombine.high %v2639, %v2671
        %v2692 = vcombine.low %v2648, %v2680
        %v2693 = vcombine.high %v2648, %v2680
        %v2694 = vcombine.low %v2655, %v2687
        %v2695 = vcombine.high %v2655, %v2687
        %v2696 = vcombine.low %v2481, %v2485
        %v2697 = vcombine.high %v2481, %v2485
        %v2699 = vunpack.c.l.s4 1983009808
        %v2700 = vunpack.c.0.s8 %v2699
        %v2701 = vlaneseq
        %v2702 = vshrl.u32 %v2701, 7
        %v2703 = vsub.s32 %v2700, %v2702
        %v2704 = vrot.slane %v2696, %v2703
        %v2706 = vunpack.c.l.s4 1983009808
        %v2707 = vunpack.c.0.s8 %v2706
        %v2708 = vlaneseq
        %v2709 = vshrl.u32 %v2708, 7
        %v2710 = vsub.s32 %v2707, %v2709
        %v2711 = vrot.slane %v2697, %v2710
        %v2712 = vcombine.low %v2483, %v2487
        %v2713 = vcombine.high %v2483, %v2487
        %v2715 = vunpack.c.l.s4 1983009808
        %v2716 = vunpack.c.0.s8 %v2715
        %v2717 = vlaneseq
        %v2718 = vshrl.u32 %v2717, 7
        %v2719 = vsub.s32 %v2716, %v2718
        %v2720 = vrot.slane %v2712, %v2719
        %v2722 = vunpack.c.l.s4 1983009808
        %v2723 = vunpack.c.0.s8 %v2722
        %v2724 = vlaneseq
        %v2725 = vshrl.u32 %v2724, 7
        %v2726 = vsub.s32 %v2723, %v2725
        %v2727 = vrot.slane %v2713, %v2726
        %v2728 = vcombine.low %v2489, %v2493
        %v2729 = vcombine.high %v2489, %v2493
        %v2731 = vunpack.c.l.s4 1983009808
        %v2732 = vunpack.c.0.s8 %v2731
        %v2733 = vlaneseq
        %v2734 = vshrl.u32 %v2733, 7
        %v2735 = vsub.s32 %v2732, %v2734
        %v2736 = vrot.slane %v2728, %v2735
        %v2738 = vunpack.c.l.s4 1983009808
        %v2739 = vunpack.c.0.s8 %v2738
        %v2740 = vlaneseq
        %v2741 = vshrl.u32 %v2740, 7
        %v2742 = vsub.s32 %v2739, %v2741
        %v2743 = vrot.slane %v2729, %v2742
        %v2744 = vcombine.low %v2491, %v2495
        %v2745 = vcombine.high %v2491, %v2495
        %v2747 = vunpack.c.l.s4 1983009808
        %v2748 = vunpack.c.0.s8 %v2747
        %v2749 = vlaneseq
        %v2750 = vshrl.u32 %v2749, 7
        %v2751 = vsub.s32 %v2748, %v2750
        %v2752 = vrot.slane %v2744, %v2751
        %v2754 = vunpack.c.l.s4 1983009808
        %v2755 = vunpack.c.0.s8 %v2754
        %v2756 = vlaneseq
        %v2757 = vshrl.u32 %v2756, 7
        %v2758 = vsub.s32 %v2755, %v2757
        %v2759 = vrot.slane %v2745, %v2758
        %v2760 = vcombine.low %v2704, %v2720
        %v2761 = vcombine.high %v2704, %v2720
        %v2763 = vunpack.c.l.s4 1934713408
        %v2764 = vunpack.c.0.s8 %v2763
        %v2765 = vlaneseq
        %v2766 = vshrl.u32 %v2765, 7
        %v2767 = vsub.s32 %v2764, %v2766
        %v2768 = vrot.slane %v2760, %v2767
        %v2770 = vunpack.c.l.s4 1934713408
        %v2771 = vunpack.c.0.s8 %v2770
        %v2772 = vlaneseq
        %v2773 = vshrl.u32 %v2772, 7
        %v2774 = vsub.s32 %v2771, %v2773
        %v2775 = vrot.slane %v2761, %v2774
        %v2776 = vcombine.low %v2711, %v2727
        %v2777 = vcombine.high %v2711, %v2727
        %v2779 = vunpack.c.l.s4 1934713408
        %v2780 = vunpack.c.0.s8 %v2779
        %v2781 = vlaneseq
        %v2782 = vshrl.u32 %v2781, 7
        %v2783 = vsub.s32 %v2780, %v2782
        %v2784 = vrot.slane %v2776, %v2783
        %v2786 = vunpack.c.l.s4 1934713408
        %v2787 = vunpack.c.0.s8 %v2786
        %v2788 = vlaneseq
        %v2789 = vshrl.u32 %v2788, 7
        %v2790 = vsub.s32 %v2787, %v2789
        %v2791 = vrot.slane %v2777, %v2790
        %v2792 = vcombine.low %v2736, %v2752
        %v2793 = vcombine.high %v2736, %v2752
        %v2795 = vunpack.c.l.s4 1934713408
        %v2796 = vunpack.c.0.s8 %v2795
        %v2797 = vlaneseq
        %v2798 = vshrl.u32 %v2797, 7
        %v2799 = vsub.s32 %v2796, %v2798
        %v2800 = vrot.slane %v2792, %v2799
        %v2802 = vunpack.c.l.s4 1934713408
        %v2803 = vunpack.c.0.s8 %v2802
        %v2804 = vlaneseq
        %v2805 = vshrl.u32 %v2804, 7
        %v2806 = vsub.s32 %v2803, %v2805
        %v2807 = vrot.slane %v2793, %v2806
        %v2808 = vcombine.low %v2743, %v2759
        %v2809 = vcombine.high %v2743, %v2759
        %v2811 = vunpack.c.l.s4 1934713408
        %v2812 = vunpack.c.0.s8 %v2811
        %v2813 = vlaneseq
        %v2814 = vshrl.u32 %v2813, 7
        %v2815 = vsub.s32 %v2812, %v2814
        %v2816 = vrot.slane %v2808, %v2815
        %v2818 = vunpack.c.l.s4 1934713408
        %v2819 = vunpack.c.0.s8 %v2818
        %v2820 = vlaneseq
        %v2821 = vshrl.u32 %v2820, 7
        %v2822 = vsub.s32 %v2819, %v2821
        %v2823 = vrot.slane %v2809, %v2822
        %v2824 = vcombine.low %v2768, %v2800
        %v2825 = vcombine.high %v2768, %v2800
        %v2826 = vcombine.low %v2775, %v2807
        %v2827 = vcombine.high %v2775, %v2807
        %v2828 = vcombine.low %v2784, %v2816
        %v2829 = vcombine.high %v2784, %v2816
        %v2830 = vcombine.low %v2791, %v2823
        %v2831 = vcombine.high %v2791, %v2823
        %v2832 = vcombine.low %v2497, %v2501
        %v2833 = vcombine.high %v2497, %v2501
        %v2835 = vunpack.c.l.s4 1983009808
        %v2836 = vunpack.c.0.s8 %v2835
        %v2837 = vlaneseq
        %v2838 = vshrl.u32 %v2837, 7
        %v2839 = vsub.s32 %v2836, %v2838
        %v2840 = vrot.slane %v2832, %v2839
        %v2842 = vunpack.c.l.s4 1983009808
        %v2843 = vunpack.c.0.s8 %v2842
        %v2844 = vlaneseq
        %v2845 = vshrl.u32 %v2844, 7
        %v2846 = vsub.s32 %v2843, %v2845
        %v2847 = vrot.slane %v2833, %v2846
        %v2848 = vcombine.low %v2499, %v2503
        %v2849 = vcombine.high %v2499, %v2503
        %v2851 = vunpack.c.l.s4 1983009808
        %v2852 = vunpack.c.0.s8 %v2851
        %v2853 = vlaneseq
        %v2854 = vshrl.u32 %v2853, 7
        %v2855 = vsub.s32 %v2852, %v2854
        %v2856 = vrot.slane %v2848, %v2855
        %v2858 = vunpack.c.l.s4 1983009808
        %v2859 = vunpack.c.0.s8 %v2858
        %v2860 = vlaneseq
        %v2861 = vshrl.u32 %v2860, 7
        %v2862 = vsub.s32 %v2859, %v2861
        %v2863 = vrot.slane %v2849, %v2862
        %v2864 = vcombine.low %v2505, %v2509
        %v2865 = vcombine.high %v2505, %v2509
        %v2867 = vunpack.c.l.s4 1983009808
        %v2868 = vunpack.c.0.s8 %v2867
        %v2869 = vlaneseq
        %v2870 = vshrl.u32 %v2869, 7
        %v2871 = vsub.s32 %v2868, %v2870
        %v2872 = vrot.slane %v2864, %v2871
        %v2874 = vunpack.c.l.s4 1983009808
        %v2875 = vunpack.c.0.s8 %v2874
        %v2876 = vlaneseq
        %v2877 = vshrl.u32 %v2876, 7
        %v2878 = vsub.s32 %v2875, %v2877
        %v2879 = vrot.slane %v2865, %v2878
        %v2880 = vcombine.low %v2507, %v2511
        %v2881 = vcombine.high %v2507, %v2511
        %v2883 = vunpack.c.l.s4 1983009808
        %v2884 = vunpack.c.0.s8 %v2883
        %v2885 = vlaneseq
        %v2886 = vshrl.u32 %v2885, 7
        %v2887 = vsub.s32 %v2884, %v2886
        %v2888 = vrot.slane %v2880, %v2887
        %v2890 = vunpack.c.l.s4 1983009808
        %v2891 = vunpack.c.0.s8 %v2890
        %v2892 = vlaneseq
        %v2893 = vshrl.u32 %v2892, 7
        %v2894 = vsub.s32 %v2891, %v2893
        %v2895 = vrot.slane %v2881, %v2894
        %v2896 = vcombine.low %v2840, %v2856
        %v2897 = vcombine.high %v2840, %v2856
        %v2899 = vunpack.c.l.s4 1934713408
        %v2900 = vunpack.c.0.s8 %v2899
        %v2901 = vlaneseq
        %v2902 = vshrl.u32 %v2901, 7
        %v2903 = vsub.s32 %v2900, %v2902
        %v2904 = vrot.slane %v2896, %v2903
        %v2906 = vunpack.c.l.s4 1934713408
        %v2907 = vunpack.c.0.s8 %v2906
        %v2908 = vlaneseq
        %v2909 = vshrl.u32 %v2908, 7
        %v2910 = vsub.s32 %v2907, %v2909
        %v2911 = vrot.slane %v2897, %v2910
        %v2912 = vcombine.low %v2847, %v2863
        %v2913 = vcombine.high %v2847, %v2863
        %v2915 = vunpack.c.l.s4 1934713408
        %v2916 = vunpack.c.0.s8 %v2915
        %v2917 = vlaneseq
        %v2918 = vshrl.u32 %v2917, 7
        %v2919 = vsub.s32 %v2916, %v2918
        %v2920 = vrot.slane %v2912, %v2919
        %v2922 = vunpack.c.l.s4 1934713408
        %v2923 = vunpack.c.0.s8 %v2922
        %v2924 = vlaneseq
        %v2925 = vshrl.u32 %v2924, 7
        %v2926 = vsub.s32 %v2923, %v2925
        %v2927 = vrot.slane %v2913, %v2926
        %v2928 = vcombine.low %v2872, %v2888
        %v2929 = vcombine.high %v2872, %v2888
        %v2931 = vunpack.c.l.s4 1934713408
        %v2932 = vunpack.c.0.s8 %v2931
        %v2933 = vlaneseq
        %v2934 = vshrl.u32 %v2933, 7
        %v2935 = vsub.s32 %v2932, %v2934
        %v2936 = vrot.slane %v2928, %v2935
        %v2938 = vunpack.c.l.s4 1934713408
        %v2939 = vunpack.c.0.s8 %v2938
        %v2940 = vlaneseq
        %v2941 = vshrl.u32 %v2940, 7
        %v2942 = vsub.s32 %v2939, %v2941
        %v2943 = vrot.slane %v2929, %v2942
        %v2944 = vcombine.low %v2879, %v2895
        %v2945 = vcombine.high %v2879, %v2895
        %v2947 = vunpack.c.l.s4 1934713408
        %v2948 = vunpack.c.0.s8 %v2947
        %v2949 = vlaneseq
        %v2950 = vshrl.u32 %v2949, 7
        %v2951 = vsub.s32 %v2948, %v2950
        %v2952 = vrot.slane %v2944, %v2951
        %v2954 = vunpack.c.l.s4 1934713408
        %v2955 = vunpack.c.0.s8 %v2954
        %v2956 = vlaneseq
        %v2957 = vshrl.u32 %v2956, 7
        %v2958 = vsub.s32 %v2955, %v2957
        %v2959 = vrot.slane %v2945, %v2958
        %v2960 = vcombine.low %v2904, %v2936
        %v2961 = vcombine.high %v2904, %v2936
        %v2962 = vcombine.low %v2911, %v2943
        %v2963 = vcombine.high %v2911, %v2943
        %v2964 = vcombine.low %v2920, %v2952
        %v2965 = vcombine.high %v2920, %v2952
        %v2966 = vcombine.low %v2927, %v2959
        %v2967 = vcombine.high %v2927, %v2959
        %v2968 = vcombine.low %v2513, %v2517
        %v2969 = vcombine.high %v2513, %v2517
        %v2971 = vunpack.c.l.s4 1983009808
        %v2972 = vunpack.c.0.s8 %v2971
        %v2973 = vlaneseq
        %v2974 = vshrl.u32 %v2973, 7
        %v2975 = vsub.s32 %v2972, %v2974
        %v2976 = vrot.slane %v2968, %v2975
        %v2978 = vunpack.c.l.s4 1983009808
        %v2979 = vunpack.c.0.s8 %v2978
        %v2980 = vlaneseq
        %v2981 = vshrl.u32 %v2980, 7
        %v2982 = vsub.s32 %v2979, %v2981
        %v2983 = vrot.slane %v2969, %v2982
        %v2984 = vcombine.low %v2515, %v2519
        %v2985 = vcombine.high %v2515, %v2519
        %v2987 = vunpack.c.l.s4 1983009808
        %v2988 = vunpack.c.0.s8 %v2987
        %v2989 = vlaneseq
        %v2990 = vshrl.u32 %v2989, 7
        %v2991 = vsub.s32 %v2988, %v2990
        %v2992 = vrot.slane %v2984, %v2991
        %v2994 = vunpack.c.l.s4 1983009808
        %v2995 = vunpack.c.0.s8 %v2994
        %v2996 = vlaneseq
        %v2997 = vshrl.u32 %v2996, 7
        %v2998 = vsub.s32 %v2995, %v2997
        %v2999 = vrot.slane %v2985, %v2998
        %v3000 = vcombine.low %v2521, %v2525
        %v3001 = vcombine.high %v2521, %v2525
        %v3003 = vunpack.c.l.s4 1983009808
        %v3004 = vunpack.c.0.s8 %v3003
        %v3005 = vlaneseq
        %v3006 = vshrl.u32 %v3005, 7
        %v3007 = vsub.s32 %v3004, %v3006
        %v3008 = vrot.slane %v3000, %v3007
        %v3010 = vunpack.c.l.s4 1983009808
        %v3011 = vunpack.c.0.s8 %v3010
        %v3012 = vlaneseq
        %v3013 = vshrl.u32 %v3012, 7
        %v3014 = vsub.s32 %v3011, %v3013
        %v3015 = vrot.slane %v3001, %v3014
        %v3016 = vcombine.low %v2523, %v2527
        %v3017 = vcombine.high %v2523, %v2527
        %v3019 = vunpack.c.l.s4 1983009808
        %v3020 = vunpack.c.0.s8 %v3019
        %v3021 = vlaneseq
        %v3022 = vshrl.u32 %v3021, 7
        %v3023 = vsub.s32 %v3020, %v3022
        %v3024 = vrot.slane %v3016, %v3023
        %v3026 = vunpack.c.l.s4 1983009808
        %v3027 = vunpack.c.0.s8 %v3026
        %v3028 = vlaneseq
        %v3029 = vshrl.u32 %v3028, 7
        %v3030 = vsub.s32 %v3027, %v3029
        %v3031 = vrot.slane %v3017, %v3030
        %v3032 = vcombine.low %v2976, %v2992
        %v3033 = vcombine.high %v2976, %v2992
        %v3035 = vunpack.c.l.s4 1934713408
        %v3036 = vunpack.c.0.s8 %v3035
        %v3037 = vlaneseq
        %v3038 = vshrl.u32 %v3037, 7
        %v3039 = vsub.s32 %v3036, %v3038
        %v3040 = vrot.slane %v3032, %v3039
        %v3042 = vunpack.c.l.s4 1934713408
        %v3043 = vunpack.c.0.s8 %v3042
        %v3044 = vlaneseq
        %v3045 = vshrl.u32 %v3044, 7
        %v3046 = vsub.s32 %v3043, %v3045
        %v3047 = vrot.slane %v3033, %v3046
        %v3048 = vcombine.low %v2983, %v2999
        %v3049 = vcombine.high %v2983, %v2999
        %v3051 = vunpack.c.l.s4 1934713408
        %v3052 = vunpack.c.0.s8 %v3051
        %v3053 = vlaneseq
        %v3054 = vshrl.u32 %v3053, 7
        %v3055 = vsub.s32 %v3052, %v3054
        %v3056 = vrot.slane %v3048, %v3055
        %v3058 = vunpack.c.l.s4 1934713408
        %v3059 = vunpack.c.0.s8 %v3058
        %v3060 = vlaneseq
        %v3061 = vshrl.u32 %v3060, 7
        %v3062 = vsub.s32 %v3059, %v3061
        %v3063 = vrot.slane %v3049, %v3062
        %v3064 = vcombine.low %v3008, %v3024
        %v3065 = vcombine.high %v3008, %v3024
        %v3067 = vunpack.c.l.s4 1934713408
        %v3068 = vunpack.c.0.s8 %v3067
        %v3069 = vlaneseq
        %v3070 = vshrl.u32 %v3069, 7
        %v3071 = vsub.s32 %v3068, %v3070
        %v3072 = vrot.slane %v3064, %v3071
        %v3074 = vunpack.c.l.s4 1934713408
        %v3075 = vunpack.c.0.s8 %v3074
        %v3076 = vlaneseq
        %v3077 = vshrl.u32 %v3076, 7
        %v3078 = vsub.s32 %v3075, %v3077
        %v3079 = vrot.slane %v3065, %v3078
        %v3080 = vcombine.low %v3015, %v3031
        %v3081 = vcombine.high %v3015, %v3031
        %v3083 = vunpack.c.l.s4 1934713408
        %v3084 = vunpack.c.0.s8 %v3083
        %v3085 = vlaneseq
        %v3086 = vshrl.u32 %v3085, 7
        %v3087 = vsub.s32 %v3084, %v3086
        %v3088 = vrot.slane %v3080, %v3087
        %v3090 = vunpack.c.l.s4 1934713408
        %v3091 = vunpack.c.0.s8 %v3090
        %v3092 = vlaneseq
        %v3093 = vshrl.u32 %v3092, 7
        %v3094 = vsub.s32 %v3091, %v3093
        %v3095 = vrot.slane %v3081, %v3094
        %v3096 = vcombine.low %v3040, %v3072
        %v3097 = vcombine.high %v3040, %v3072
        %v3098 = vcombine.low %v3047, %v3079
        %v3099 = vcombine.high %v3047, %v3079
        %v3100 = vcombine.low %v3056, %v3088
        %v3101 = vcombine.high %v3056, %v3088
        %v3102 = vcombine.low %v3063, %v3095
        %v3103 = vcombine.high %v3063, %v3095
        %3108 = vrot.lane.b32.xlu0 %v2689, 16
        %v3109 = vpop.permute.xlu0 %3108
        %3110 = vrot.lane.b32.xlu0 %v2825, 16
        %v3111 = vpop.permute.xlu0 %3110
        %3112 = vrot.lane.b32.xlu0 %v2961, 16
        %v3113 = vpop.permute.xlu0 %3112
        %3114 = vrot.lane.b32.xlu0 %v3097, 16
        %v3115 = vpop.permute.xlu0 %3114
        %3124 = vrot.lane.b32.xlu0 %v2690, 32
        %v3125 = vpop.permute.xlu0 %3124
        %3126 = vrot.lane.b32.xlu0 %v2826, 32
        %v3127 = vpop.permute.xlu0 %3126
        %3128 = vrot.lane.b32.xlu0 %v2962, 32
        %v3129 = vpop.permute.xlu0 %3128
        %3130 = vrot.lane.b32.xlu0 %v3098, 32
        %v3131 = vpop.permute.xlu0 %3130
        %3140 = vrot.lane.b32.xlu0 %v2691, 48
        %v3141 = vpop.permute.xlu0 %3140
        %3142 = vrot.lane.b32.xlu0 %v2827, 48
        %v3143 = vpop.permute.xlu0 %3142
        %3144 = vrot.lane.b32.xlu0 %v2963, 48
        %v3145 = vpop.permute.xlu0 %3144
        %3146 = vrot.lane.b32.xlu0 %v3099, 48
        %v3147 = vpop.permute.xlu0 %3146
        %3156 = vrot.lane.b32.xlu0 %v2692, 64
        %v3157 = vpop.permute.xlu0 %3156
        %3158 = vrot.lane.b32.xlu0 %v2828, 64
        %v3159 = vpop.permute.xlu0 %3158
        %3160 = vrot.lane.b32.xlu0 %v2964, 64
        %v3161 = vpop.permute.xlu0 %3160
        %3162 = vrot.lane.b32.xlu0 %v3100, 64
        %v3163 = vpop.permute.xlu0 %3162
        %3172 = vrot.lane.b32.xlu0 %v2693, 80
        %v3173 = vpop.permute.xlu0 %3172
        %3174 = vrot.lane.b32.xlu0 %v2829, 80
        %v3175 = vpop.permute.xlu0 %3174
        %3176 = vrot.lane.b32.xlu0 %v2965, 80
        %v3177 = vpop.permute.xlu0 %3176
        %3178 = vrot.lane.b32.xlu0 %v3101, 80
        %v3179 = vpop.permute.xlu0 %3178
        %3188 = vrot.lane.b32.xlu0 %v2694, 96
        %v3189 = vpop.permute.xlu0 %3188
        %3190 = vrot.lane.b32.xlu0 %v2830, 96
        %v3191 = vpop.permute.xlu0 %3190
        %3192 = vrot.lane.b32.xlu0 %v2966, 96
        %v3193 = vpop.permute.xlu0 %3192
        %3194 = vrot.lane.b32.xlu0 %v3102, 96
        %v3195 = vpop.permute.xlu0 %3194
        %3204 = vrot.lane.b32.xlu0 %v2695, 112
        %v3205 = vpop.permute.xlu0 %3204
        %3206 = vrot.lane.b32.xlu0 %v2831, 112
        %v3207 = vpop.permute.xlu0 %3206
        %3208 = vrot.lane.b32.xlu0 %v2967, 112
        %v3209 = vpop.permute.xlu0 %3208
        %3210 = vrot.lane.b32.xlu0 %v3103, 112
        %v3211 = vpop.permute.xlu0 %3210
        %v3216 = vsel %vm2395, %v2688, %v3109
        %v3217 = vsel %vm2395, %v2824, %v3111
        %v3218 = vsel %vm2395, %v2960, %v3113
        %v3219 = vsel %vm2395, %v3096, %v3115
        %v3220 = vsel %vm2400, %v3216, %v3125
        %v3221 = vsel %vm2400, %v3217, %v3127
        %v3222 = vsel %vm2400, %v3218, %v3129
        %v3223 = vsel %vm2400, %v3219, %v3131
        %v3224 = vsel %vm2405, %v3220, %v3141
        %v3225 = vsel %vm2405, %v3221, %v3143
        %v3226 = vsel %vm2405, %v3222, %v3145
        %v3227 = vsel %vm2405, %v3223, %v3147
        %v3228 = vsel %vm2410, %v3224, %v3157
        %v3229 = vsel %vm2410, %v3225, %v3159
        %v3230 = vsel %vm2410, %v3226, %v3161
        %v3231 = vsel %vm2410, %v3227, %v3163
        %v3232 = vsel %vm2415, %v3228, %v3173
        %v3233 = vsel %vm2415, %v3229, %v3175
        %v3234 = vsel %vm2415, %v3230, %v3177
        %v3235 = vsel %vm2415, %v3231, %v3179
        %v3236 = vsel %vm2420, %v3232, %v3189
        %v3237 = vsel %vm2420, %v3233, %v3191
        %v3238 = vsel %vm2420, %v3234, %v3193
        %v3239 = vsel %vm2420, %v3235, %v3195
        %v3240 = vsel %vm2425, %v3236, %v3205
        %v3241 = vsel %vm2425, %v3237, %v3207
        %v3242 = vsel %vm2425, %v3238, %v3209
        %v3243 = vsel %vm2425, %v3239, %v3211
        %v3244 = vpack.c.bf16 %v3241, %v3240
        %v3245 = vpack.c.bf16 %v3243, %v3242
        %v3247 = vsel %vm2400, %v909, 0
        %v3250 = vsel %vm2400, %v910, 0
        %3252 = vmatprep.subr.bf16.mxu0 0
        %3253 = vmatpush1.bf16.msra.mxu0 0
        %3254 = vmatprep.subr.bf16.mxu0 0
        %3255 = vmatpush1.bf16.msra.mxu0 0
        %3256 = vmatprep.subr.bf16.mxu0 0
        %3257 = vmatpush1.bf16.msra.mxu0 0
        %3258 = vmatprep.subr.bf16.mxu0 0
        %3259 = vmatpush1.bf16.msra.mxu0 0
        %3260 = vmatprep.subr.bf16.mxu0 0
        %3261 = vmatpush1.bf16.msra.mxu0 0
        %3262 = vmatprep.subr.bf16.mxu0 0
        %3263 = vmatpush1.bf16.msra.mxu0 0
        %3264 = vmatprep.subr.bf16.mxu0 0
        %3265 = vmatpush1.bf16.msra.mxu0 %v3245
        %3266 = vmatprep.subr.bf16.mxu0 0
        %3267 = vmatpush1.bf16.msra.mxu0 %v3244
        %3268 = vmatprep.subr.bf16.mxu0 0
        %3269 = vmatpush2.bf16.msra.mxu0 0
        %3270 = vmatprep.subr.bf16.mxu0 0
        %3271 = vmatpush2.bf16.msra.mxu0 0
        %3272 = vmatprep.subr.bf16.mxu0 0
        %3273 = vmatpush2.bf16.msra.mxu0 0
        %3274 = vmatprep.subr.bf16.mxu0 0
        %3275 = vmatpush2.bf16.msra.mxu0 0
        %3276 = vmatprep.subr.bf16.mxu0 0
        %3277 = vmatpush2.bf16.msra.mxu0 0
        %3278 = vmatprep.subr.bf16.mxu0 0
        %3279 = vmatpush2.bf16.msra.mxu0 0
        %3280 = vmatprep.subr.bf16.mxu0 0
        %3281 = vmatpush2.bf16.msra.mxu0 0
        %3282 = vmatprep.subr.bf16.mxu0 0
        %3283 = vmatpush2.bf16.msra.mxu0 0
        %3284 = vmatprep.mubr.bf16.mxu0 0
        %3285 = vmatmul.mubr.bf16.gmra.mxu0 %v3247
        %v3286 = vpop.f32.mrf.mxu0
        %v3287 = vadd.f32 0.0, %v3286
        %v3288 = vpop.f32.mrf.mxu0
        %v3289 = vpop.f32.mrf.mxu0
        %v3290 = vadd.f32 0.0, %v3289
        %v3291 = vpop.f32.mrf.mxu0
        %3292 = vmatprep.mubr.bf16.mxu0 0
        %3293 = vmatmul.mubr.bf16.gmra.mxu0 %v3250
        %v3294 = vpop.f32.mrf.mxu0
        %v3295 = vadd.f32 0.0, %v3294
        %v3296 = vpop.f32.mrf.mxu0
        %v3297 = vpop.f32.mrf.mxu0
        %v3298 = vadd.f32 0.0, %v3297
        %v3299 = vpop.f32.mrf.mxu0
        %3300 = vdwg.mxu0
        %v3302 = vsel %vm2400, %v907, 0
        %v3305 = vsel %vm2400, %v908, 0
        %3307 = vmatprep.subr.bf16.mxu0 0
        %3308 = vmatpush1.bf16.msra.mxu0 0
        %3309 = vmatprep.subr.bf16.mxu0 0
        %3310 = vmatpush1.bf16.msra.mxu0 0
        %3311 = vmatprep.subr.bf16.mxu0 0
        %3312 = vmatpush1.bf16.msra.mxu0 0
        %3313 = vmatprep.subr.bf16.mxu0 0
        %3314 = vmatpush1.bf16.msra.mxu0 0
        %3315 = vmatprep.subr.bf16.mxu0 0
        %3316 = vmatpush1.bf16.msra.mxu0 0
        %3317 = vmatprep.subr.bf16.mxu0 0
        %3318 = vmatpush1.bf16.msra.mxu0 0
        %3319 = vmatprep.subr.bf16.mxu0 0
        %3320 = vmatpush1.bf16.msra.mxu0 %v2431
        %3321 = vmatprep.subr.bf16.mxu0 0
        %3322 = vmatpush1.bf16.msra.mxu0 %v2430
        %3323 = vmatprep.subr.bf16.mxu0 0
        %3324 = vmatpush2.bf16.msra.mxu0 0
        %3325 = vmatprep.subr.bf16.mxu0 0
        %3326 = vmatpush2.bf16.msra.mxu0 0
        %3327 = vmatprep.subr.bf16.mxu0 0
        %3328 = vmatpush2.bf16.msra.mxu0 0
        %3329 = vmatprep.subr.bf16.mxu0 0
        %3330 = vmatpush2.bf16.msra.mxu0 0
        %3331 = vmatprep.subr.bf16.mxu0 0
        %3332 = vmatpush2.bf16.msra.mxu0 0
        %3333 = vmatprep.subr.bf16.mxu0 0
        %3334 = vmatpush2.bf16.msra.mxu0 0
        %3335 = vmatprep.subr.bf16.mxu0 0
        %3336 = vmatpush2.bf16.msra.mxu0 0
        %3337 = vmatprep.subr.bf16.mxu0 0
        %3338 = vmatpush2.bf16.msra.mxu0 0
        %3339 = vmatprep.mubr.bf16.mxu0 0
        %3340 = vmatmul.mubr.bf16.gmra.mxu0 %v3302
        %v3341 = vpop.f32.mrf.mxu0
        %v3342 = vadd.f32 %v3287, %v3341
        %v3343 = vpop.f32.mrf.mxu0
        %v3344 = vpop.f32.mrf.mxu0
        %v3345 = vadd.f32 %v3290, %v3344
        %v3346 = vpop.f32.mrf.mxu0
        %3347 = vmatprep.mubr.bf16.mxu0 0
        %3348 = vmatmul.mubr.bf16.gmra.mxu0 %v3305
        %v3349 = vpop.f32.mrf.mxu0
        %v3350 = vadd.f32 %v3295, %v3349
        %v3351 = vpop.f32.mrf.mxu0
        %v3352 = vpop.f32.mrf.mxu0
        %v3353 = vadd.f32 %v3298, %v3352
        %v3354 = vpop.f32.mrf.mxu0
        %3355 = vdwg.mxu0
        %v3356 = vld [vmem:[#allocation2] sm:$0xff]
        %v3357 = vld [vmem:[#allocation2 + $0x10] sm:$0xff]
        %v3358 = vld [vmem:[#allocation2 + $0x20] sm:$0xff]
        %v3359 = vld [vmem:[#allocation2 + $0x30] sm:$0xff]
        %v3360 = vld [vmem:[#allocation2 + $0x40] sm:$0xff]
        %v3361 = vld [vmem:[#allocation2 + $0x50] sm:$0xff]
        %v3362 = vld [vmem:[#allocation2 + $0x60] sm:$0xff]
        %v3363 = vld [vmem:[#allocation2 + $0x70] sm:$0xff]
        %v3364 = vld [vmem:[#allocation2 + $0x80] sm:$0xff]
        %v3365 = vld [vmem:[#allocation2 + $0x90] sm:$0xff]
        %v3366 = vld [vmem:[#allocation2 + $0xa0] sm:$0xff]
        %v3367 = vld [vmem:[#allocation2 + $0xb0] sm:$0xff]
        %v3368 = vld [vmem:[#allocation2 + $0xc0] sm:$0xff]
        %v3369 = vld [vmem:[#allocation2 + $0xd0] sm:$0xff]
        %v3370 = vld [vmem:[#allocation2 + $0xe0] sm:$0xff]
        %v3371 = vld [vmem:[#allocation2 + $0xf0] sm:$0xff]
        %v3372 = vld [vmem:[#allocation2 + $0x100] sm:$0xff]
        %v3373 = vld [vmem:[#allocation2 + $0x110] sm:$0xff]
        %v3374 = vld [vmem:[#allocation2 + $0x120] sm:$0xff]
        %v3375 = vld [vmem:[#allocation2 + $0x130] sm:$0xff]
        %v3376 = vld [vmem:[#allocation2 + $0x140] sm:$0xff]
        %v3377 = vld [vmem:[#allocation2 + $0x150] sm:$0xff]
        %v3378 = vld [vmem:[#allocation2 + $0x160] sm:$0xff]
        %v3379 = vld [vmem:[#allocation2 + $0x170] sm:$0xff]
        %v3380 = vld [vmem:[#allocation2 + $0x180] sm:$0xff]
        %v3381 = vld [vmem:[#allocation2 + $0x190] sm:$0xff]
        %v3382 = vld [vmem:[#allocation2 + $0x1a0] sm:$0xff]
        %v3383 = vld [vmem:[#allocation2 + $0x1b0] sm:$0xff]
        %v3384 = vld [vmem:[#allocation2 + $0x1c0] sm:$0xff]
        %v3385 = vld [vmem:[#allocation2 + $0x1d0] sm:$0xff]
        %v3386 = vld [vmem:[#allocation2 + $0x1e0] sm:$0xff]
        %v3387 = vld [vmem:[#allocation2 + $0x1f0] sm:$0xff]
        %3420 = vrot.lane.b32.xlu0 %v3356, 126
        %v3421 = vpop.permute.xlu0 %3420
        %3422 = vrot.lane.b32.xlu0 %v3357, 126
        %v3423 = vpop.permute.xlu0 %3422
        %3424 = vrot.lane.b32.xlu0 %v3358, 126
        %v3425 = vpop.permute.xlu0 %3424
        %3426 = vrot.lane.b32.xlu0 %v3359, 126
        %v3427 = vpop.permute.xlu0 %3426
        %3428 = vrot.lane.b32.xlu0 %v3360, 126
        %v3429 = vpop.permute.xlu0 %3428
        %3430 = vrot.lane.b32.xlu0 %v3361, 126
        %v3431 = vpop.permute.xlu0 %3430
        %3432 = vrot.lane.b32.xlu0 %v3362, 126
        %v3433 = vpop.permute.xlu0 %3432
        %3434 = vrot.lane.b32.xlu0 %v3363, 126
        %v3435 = vpop.permute.xlu0 %3434
        %3436 = vrot.lane.b32.xlu0 %v3364, 126
        %v3437 = vpop.permute.xlu0 %3436
        %3438 = vrot.lane.b32.xlu0 %v3365, 126
        %v3439 = vpop.permute.xlu0 %3438
        %3440 = vrot.lane.b32.xlu0 %v3366, 126
        %v3441 = vpop.permute.xlu0 %3440
        %3442 = vrot.lane.b32.xlu0 %v3367, 126
        %v3443 = vpop.permute.xlu0 %3442
        %3444 = vrot.lane.b32.xlu0 %v3368, 126
        %v3445 = vpop.permute.xlu0 %3444
        %3446 = vrot.lane.b32.xlu0 %v3369, 126
        %v3447 = vpop.permute.xlu0 %3446
        %3448 = vrot.lane.b32.xlu0 %v3370, 126
        %v3449 = vpop.permute.xlu0 %3448
        %3450 = vrot.lane.b32.xlu0 %v3371, 126
        %v3451 = vpop.permute.xlu0 %3450
        %3452 = vrot.lane.b32.xlu0 %v3372, 126
        %v3453 = vpop.permute.xlu0 %3452
        %3454 = vrot.lane.b32.xlu0 %v3373, 126
        %v3455 = vpop.permute.xlu0 %3454
        %3456 = vrot.lane.b32.xlu0 %v3374, 126
        %v3457 = vpop.permute.xlu0 %3456
        %3458 = vrot.lane.b32.xlu0 %v3375, 126
        %v3459 = vpop.permute.xlu0 %3458
        %3460 = vrot.lane.b32.xlu0 %v3376, 126
        %v3461 = vpop.permute.xlu0 %3460
        %3462 = vrot.lane.b32.xlu0 %v3377, 126
        %v3463 = vpop.permute.xlu0 %3462
        %3464 = vrot.lane.b32.xlu0 %v3378, 126
        %v3465 = vpop.permute.xlu0 %3464
        %3466 = vrot.lane.b32.xlu0 %v3379, 126
        %v3467 = vpop.permute.xlu0 %3466
        %3468 = vrot.lane.b32.xlu0 %v3380, 126
        %v3469 = vpop.permute.xlu0 %3468
        %3470 = vrot.lane.b32.xlu0 %v3381, 126
        %v3471 = vpop.permute.xlu0 %3470
        %3472 = vrot.lane.b32.xlu0 %v3382, 126
        %v3473 = vpop.permute.xlu0 %3472
        %3474 = vrot.lane.b32.xlu0 %v3383, 126
        %v3475 = vpop.permute.xlu0 %3474
        %3476 = vrot.lane.b32.xlu0 %v3384, 126
        %v3477 = vpop.permute.xlu0 %3476
        %3478 = vrot.lane.b32.xlu0 %v3385, 126
        %v3479 = vpop.permute.xlu0 %3478
        %3480 = vrot.lane.b32.xlu0 %v3386, 126
        %v3481 = vpop.permute.xlu0 %3480
        %3482 = vrot.lane.b32.xlu0 %v3387, 126
        %v3483 = vpop.permute.xlu0 %3482
        %v3516 = vcombine.low %v3421, %v3425
        %v3517 = vcombine.high %v3421, %v3425
        %v3519 = vunpack.c.l.s4 1983009808
        %v3520 = vunpack.c.0.s8 %v3519
        %v3521 = vlaneseq
        %v3522 = vshrl.u32 %v3521, 7
        %v3523 = vsub.s32 %v3520, %v3522
        %v3524 = vrot.slane %v3516, %v3523
        %v3526 = vunpack.c.l.s4 1983009808
        %v3527 = vunpack.c.0.s8 %v3526
        %v3528 = vlaneseq
        %v3529 = vshrl.u32 %v3528, 7
        %v3530 = vsub.s32 %v3527, %v3529
        %v3531 = vrot.slane %v3517, %v3530
        %v3532 = vcombine.low %v3423, %v3427
        %v3533 = vcombine.high %v3423, %v3427
        %v3535 = vunpack.c.l.s4 1983009808
        %v3536 = vunpack.c.0.s8 %v3535
        %v3537 = vlaneseq
        %v3538 = vshrl.u32 %v3537, 7
        %v3539 = vsub.s32 %v3536, %v3538
        %v3540 = vrot.slane %v3532, %v3539
        %v3542 = vunpack.c.l.s4 1983009808
        %v3543 = vunpack.c.0.s8 %v3542
        %v3544 = vlaneseq
        %v3545 = vshrl.u32 %v3544, 7
        %v3546 = vsub.s32 %v3543, %v3545
        %v3547 = vrot.slane %v3533, %v3546
        %v3548 = vcombine.low %v3429, %v3433
        %v3549 = vcombine.high %v3429, %v3433
        %v3551 = vunpack.c.l.s4 1983009808
        %v3552 = vunpack.c.0.s8 %v3551
        %v3553 = vlaneseq
        %v3554 = vshrl.u32 %v3553, 7
        %v3555 = vsub.s32 %v3552, %v3554
        %v3556 = vrot.slane %v3548, %v3555
        %v3558 = vunpack.c.l.s4 1983009808
        %v3559 = vunpack.c.0.s8 %v3558
        %v3560 = vlaneseq
        %v3561 = vshrl.u32 %v3560, 7
        %v3562 = vsub.s32 %v3559, %v3561
        %v3563 = vrot.slane %v3549, %v3562
        %v3564 = vcombine.low %v3431, %v3435
        %v3565 = vcombine.high %v3431, %v3435
        %v3567 = vunpack.c.l.s4 1983009808
        %v3568 = vunpack.c.0.s8 %v3567
        %v3569 = vlaneseq
        %v3570 = vshrl.u32 %v3569, 7
        %v3571 = vsub.s32 %v3568, %v3570
        %v3572 = vrot.slane %v3564, %v3571
        %v3574 = vunpack.c.l.s4 1983009808
        %v3575 = vunpack.c.0.s8 %v3574
        %v3576 = vlaneseq
        %v3577 = vshrl.u32 %v3576, 7
        %v3578 = vsub.s32 %v3575, %v3577
        %v3579 = vrot.slane %v3565, %v3578
        %v3580 = vcombine.low %v3524, %v3540
        %v3581 = vcombine.high %v3524, %v3540
        %v3583 = vunpack.c.l.s4 1934713408
        %v3584 = vunpack.c.0.s8 %v3583
        %v3585 = vlaneseq
        %v3586 = vshrl.u32 %v3585, 7
        %v3587 = vsub.s32 %v3584, %v3586
        %v3588 = vrot.slane %v3580, %v3587
        %v3590 = vunpack.c.l.s4 1934713408
        %v3591 = vunpack.c.0.s8 %v3590
        %v3592 = vlaneseq
        %v3593 = vshrl.u32 %v3592, 7
        %v3594 = vsub.s32 %v3591, %v3593
        %v3595 = vrot.slane %v3581, %v3594
        %v3596 = vcombine.low %v3531, %v3547
        %v3597 = vcombine.high %v3531, %v3547
        %v3599 = vunpack.c.l.s4 1934713408
        %v3600 = vunpack.c.0.s8 %v3599
        %v3601 = vlaneseq
        %v3602 = vshrl.u32 %v3601, 7
        %v3603 = vsub.s32 %v3600, %v3602
        %v3604 = vrot.slane %v3596, %v3603
        %v3606 = vunpack.c.l.s4 1934713408
        %v3607 = vunpack.c.0.s8 %v3606
        %v3608 = vlaneseq
        %v3609 = vshrl.u32 %v3608, 7
        %v3610 = vsub.s32 %v3607, %v3609
        %v3611 = vrot.slane %v3597, %v3610
        %v3612 = vcombine.low %v3556, %v3572
        %v3613 = vcombine.high %v3556, %v3572
        %v3615 = vunpack.c.l.s4 1934713408
        %v3616 = vunpack.c.0.s8 %v3615
        %v3617 = vlaneseq
        %v3618 = vshrl.u32 %v3617, 7
        %v3619 = vsub.s32 %v3616, %v3618
        %v3620 = vrot.slane %v3612, %v3619
        %v3622 = vunpack.c.l.s4 1934713408
        %v3623 = vunpack.c.0.s8 %v3622
        %v3624 = vlaneseq
        %v3625 = vshrl.u32 %v3624, 7
        %v3626 = vsub.s32 %v3623, %v3625
        %v3627 = vrot.slane %v3613, %v3626
        %v3628 = vcombine.low %v3563, %v3579
        %v3629 = vcombine.high %v3563, %v3579
        %v3631 = vunpack.c.l.s4 1934713408
        %v3632 = vunpack.c.0.s8 %v3631
        %v3633 = vlaneseq
        %v3634 = vshrl.u32 %v3633, 7
        %v3635 = vsub.s32 %v3632, %v3634
        %v3636 = vrot.slane %v3628, %v3635
        %v3638 = vunpack.c.l.s4 1934713408
        %v3639 = vunpack.c.0.s8 %v3638
        %v3640 = vlaneseq
        %v3641 = vshrl.u32 %v3640, 7
        %v3642 = vsub.s32 %v3639, %v3641
        %v3643 = vrot.slane %v3629, %v3642
        %v3644 = vcombine.low %v3588, %v3620
        %v3645 = vcombine.high %v3588, %v3620
        %v3646 = vcombine.low %v3595, %v3627
        %v3647 = vcombine.high %v3595, %v3627
        %v3648 = vcombine.low %v3604, %v3636
        %v3649 = vcombine.high %v3604, %v3636
        %v3650 = vcombine.low %v3611, %v3643
        %v3651 = vcombine.high %v3611, %v3643
        %v3652 = vcombine.low %v3437, %v3441
        %v3653 = vcombine.high %v3437, %v3441
        %v3655 = vunpack.c.l.s4 1983009808
        %v3656 = vunpack.c.0.s8 %v3655
        %v3657 = vlaneseq
        %v3658 = vshrl.u32 %v3657, 7
        %v3659 = vsub.s32 %v3656, %v3658
        %v3660 = vrot.slane %v3652, %v3659
        %v3662 = vunpack.c.l.s4 1983009808
        %v3663 = vunpack.c.0.s8 %v3662
        %v3664 = vlaneseq
        %v3665 = vshrl.u32 %v3664, 7
        %v3666 = vsub.s32 %v3663, %v3665
        %v3667 = vrot.slane %v3653, %v3666
        %v3668 = vcombine.low %v3439, %v3443
        %v3669 = vcombine.high %v3439, %v3443
        %v3671 = vunpack.c.l.s4 1983009808
        %v3672 = vunpack.c.0.s8 %v3671
        %v3673 = vlaneseq
        %v3674 = vshrl.u32 %v3673, 7
        %v3675 = vsub.s32 %v3672, %v3674
        %v3676 = vrot.slane %v3668, %v3675
        %v3678 = vunpack.c.l.s4 1983009808
        %v3679 = vunpack.c.0.s8 %v3678
        %v3680 = vlaneseq
        %v3681 = vshrl.u32 %v3680, 7
        %v3682 = vsub.s32 %v3679, %v3681
        %v3683 = vrot.slane %v3669, %v3682
        %v3684 = vcombine.low %v3445, %v3449
        %v3685 = vcombine.high %v3445, %v3449
        %v3687 = vunpack.c.l.s4 1983009808
        %v3688 = vunpack.c.0.s8 %v3687
        %v3689 = vlaneseq
        %v3690 = vshrl.u32 %v3689, 7
        %v3691 = vsub.s32 %v3688, %v3690
        %v3692 = vrot.slane %v3684, %v3691
        %v3694 = vunpack.c.l.s4 1983009808
        %v3695 = vunpack.c.0.s8 %v3694
        %v3696 = vlaneseq
        %v3697 = vshrl.u32 %v3696, 7
        %v3698 = vsub.s32 %v3695, %v3697
        %v3699 = vrot.slane %v3685, %v3698
        %v3700 = vcombine.low %v3447, %v3451
        %v3701 = vcombine.high %v3447, %v3451
        %v3703 = vunpack.c.l.s4 1983009808
        %v3704 = vunpack.c.0.s8 %v3703
        %v3705 = vlaneseq
        %v3706 = vshrl.u32 %v3705, 7
        %v3707 = vsub.s32 %v3704, %v3706
        %v3708 = vrot.slane %v3700, %v3707
        %v3710 = vunpack.c.l.s4 1983009808
        %v3711 = vunpack.c.0.s8 %v3710
        %v3712 = vlaneseq
        %v3713 = vshrl.u32 %v3712, 7
        %v3714 = vsub.s32 %v3711, %v3713
        %v3715 = vrot.slane %v3701, %v3714
        %v3716 = vcombine.low %v3660, %v3676
        %v3717 = vcombine.high %v3660, %v3676
        %v3719 = vunpack.c.l.s4 1934713408
        %v3720 = vunpack.c.0.s8 %v3719
        %v3721 = vlaneseq
        %v3722 = vshrl.u32 %v3721, 7
        %v3723 = vsub.s32 %v3720, %v3722
        %v3724 = vrot.slane %v3716, %v3723
        %v3726 = vunpack.c.l.s4 1934713408
        %v3727 = vunpack.c.0.s8 %v3726
        %v3728 = vlaneseq
        %v3729 = vshrl.u32 %v3728, 7
        %v3730 = vsub.s32 %v3727, %v3729
        %v3731 = vrot.slane %v3717, %v3730
        %v3732 = vcombine.low %v3667, %v3683
        %v3733 = vcombine.high %v3667, %v3683
        %v3735 = vunpack.c.l.s4 1934713408
        %v3736 = vunpack.c.0.s8 %v3735
        %v3737 = vlaneseq
        %v3738 = vshrl.u32 %v3737, 7
        %v3739 = vsub.s32 %v3736, %v3738
        %v3740 = vrot.slane %v3732, %v3739
        %v3742 = vunpack.c.l.s4 1934713408
        %v3743 = vunpack.c.0.s8 %v3742
        %v3744 = vlaneseq
        %v3745 = vshrl.u32 %v3744, 7
        %v3746 = vsub.s32 %v3743, %v3745
        %v3747 = vrot.slane %v3733, %v3746
        %v3748 = vcombine.low %v3692, %v3708
        %v3749 = vcombine.high %v3692, %v3708
        %v3751 = vunpack.c.l.s4 1934713408
        %v3752 = vunpack.c.0.s8 %v3751
        %v3753 = vlaneseq
        %v3754 = vshrl.u32 %v3753, 7
        %v3755 = vsub.s32 %v3752, %v3754
        %v3756 = vrot.slane %v3748, %v3755
        %v3758 = vunpack.c.l.s4 1934713408
        %v3759 = vunpack.c.0.s8 %v3758
        %v3760 = vlaneseq
        %v3761 = vshrl.u32 %v3760, 7
        %v3762 = vsub.s32 %v3759, %v3761
        %v3763 = vrot.slane %v3749, %v3762
        %v3764 = vcombine.low %v3699, %v3715
        %v3765 = vcombine.high %v3699, %v3715
        %v3767 = vunpack.c.l.s4 1934713408
        %v3768 = vunpack.c.0.s8 %v3767
        %v3769 = vlaneseq
        %v3770 = vshrl.u32 %v3769, 7
        %v3771 = vsub.s32 %v3768, %v3770
        %v3772 = vrot.slane %v3764, %v3771
        %v3774 = vunpack.c.l.s4 1934713408
        %v3775 = vunpack.c.0.s8 %v3774
        %v3776 = vlaneseq
        %v3777 = vshrl.u32 %v3776, 7
        %v3778 = vsub.s32 %v3775, %v3777
        %v3779 = vrot.slane %v3765, %v3778
        %v3780 = vcombine.low %v3724, %v3756
        %v3781 = vcombine.high %v3724, %v3756
        %v3782 = vcombine.low %v3731, %v3763
        %v3783 = vcombine.high %v3731, %v3763
        %v3784 = vcombine.low %v3740, %v3772
        %v3785 = vcombine.high %v3740, %v3772
        %v3786 = vcombine.low %v3747, %v3779
        %v3787 = vcombine.high %v3747, %v3779
        %v3788 = vcombine.low %v3453, %v3457
        %v3789 = vcombine.high %v3453, %v3457
        %v3791 = vunpack.c.l.s4 1983009808
        %v3792 = vunpack.c.0.s8 %v3791
        %v3793 = vlaneseq
        %v3794 = vshrl.u32 %v3793, 7
        %v3795 = vsub.s32 %v3792, %v3794
        %v3796 = vrot.slane %v3788, %v3795
        %v3798 = vunpack.c.l.s4 1983009808
        %v3799 = vunpack.c.0.s8 %v3798
        %v3800 = vlaneseq
        %v3801 = vshrl.u32 %v3800, 7
        %v3802 = vsub.s32 %v3799, %v3801
        %v3803 = vrot.slane %v3789, %v3802
        %v3804 = vcombine.low %v3455, %v3459
        %v3805 = vcombine.high %v3455, %v3459
        %v3807 = vunpack.c.l.s4 1983009808
        %v3808 = vunpack.c.0.s8 %v3807
        %v3809 = vlaneseq
        %v3810 = vshrl.u32 %v3809, 7
        %v3811 = vsub.s32 %v3808, %v3810
        %v3812 = vrot.slane %v3804, %v3811
        %v3814 = vunpack.c.l.s4 1983009808
        %v3815 = vunpack.c.0.s8 %v3814
        %v3816 = vlaneseq
        %v3817 = vshrl.u32 %v3816, 7
        %v3818 = vsub.s32 %v3815, %v3817
        %v3819 = vrot.slane %v3805, %v3818
        %v3820 = vcombine.low %v3461, %v3465
        %v3821 = vcombine.high %v3461, %v3465
        %v3823 = vunpack.c.l.s4 1983009808
        %v3824 = vunpack.c.0.s8 %v3823
        %v3825 = vlaneseq
        %v3826 = vshrl.u32 %v3825, 7
        %v3827 = vsub.s32 %v3824, %v3826
        %v3828 = vrot.slane %v3820, %v3827
        %v3830 = vunpack.c.l.s4 1983009808
        %v3831 = vunpack.c.0.s8 %v3830
        %v3832 = vlaneseq
        %v3833 = vshrl.u32 %v3832, 7
        %v3834 = vsub.s32 %v3831, %v3833
        %v3835 = vrot.slane %v3821, %v3834
        %v3836 = vcombine.low %v3463, %v3467
        %v3837 = vcombine.high %v3463, %v3467
        %v3839 = vunpack.c.l.s4 1983009808
        %v3840 = vunpack.c.0.s8 %v3839
        %v3841 = vlaneseq
        %v3842 = vshrl.u32 %v3841, 7
        %v3843 = vsub.s32 %v3840, %v3842
        %v3844 = vrot.slane %v3836, %v3843
        %v3846 = vunpack.c.l.s4 1983009808
        %v3847 = vunpack.c.0.s8 %v3846
        %v3848 = vlaneseq
        %v3849 = vshrl.u32 %v3848, 7
        %v3850 = vsub.s32 %v3847, %v3849
        %v3851 = vrot.slane %v3837, %v3850
        %v3852 = vcombine.low %v3796, %v3812
        %v3853 = vcombine.high %v3796, %v3812
        %v3855 = vunpack.c.l.s4 1934713408
        %v3856 = vunpack.c.0.s8 %v3855
        %v3857 = vlaneseq
        %v3858 = vshrl.u32 %v3857, 7
        %v3859 = vsub.s32 %v3856, %v3858
        %v3860 = vrot.slane %v3852, %v3859
        %v3862 = vunpack.c.l.s4 1934713408
        %v3863 = vunpack.c.0.s8 %v3862
        %v3864 = vlaneseq
        %v3865 = vshrl.u32 %v3864, 7
        %v3866 = vsub.s32 %v3863, %v3865
        %v3867 = vrot.slane %v3853, %v3866
        %v3868 = vcombine.low %v3803, %v3819
        %v3869 = vcombine.high %v3803, %v3819
        %v3871 = vunpack.c.l.s4 1934713408
        %v3872 = vunpack.c.0.s8 %v3871
        %v3873 = vlaneseq
        %v3874 = vshrl.u32 %v3873, 7
        %v3875 = vsub.s32 %v3872, %v3874
        %v3876 = vrot.slane %v3868, %v3875
        %v3878 = vunpack.c.l.s4 1934713408
        %v3879 = vunpack.c.0.s8 %v3878
        %v3880 = vlaneseq
        %v3881 = vshrl.u32 %v3880, 7
        %v3882 = vsub.s32 %v3879, %v3881
        %v3883 = vrot.slane %v3869, %v3882
        %v3884 = vcombine.low %v3828, %v3844
        %v3885 = vcombine.high %v3828, %v3844
        %v3887 = vunpack.c.l.s4 1934713408
        %v3888 = vunpack.c.0.s8 %v3887
        %v3889 = vlaneseq
        %v3890 = vshrl.u32 %v3889, 7
        %v3891 = vsub.s32 %v3888, %v3890
        %v3892 = vrot.slane %v3884, %v3891
        %v3894 = vunpack.c.l.s4 1934713408
        %v3895 = vunpack.c.0.s8 %v3894
        %v3896 = vlaneseq
        %v3897 = vshrl.u32 %v3896, 7
        %v3898 = vsub.s32 %v3895, %v3897
        %v3899 = vrot.slane %v3885, %v3898
        %v3900 = vcombine.low %v3835, %v3851
        %v3901 = vcombine.high %v3835, %v3851
        %v3903 = vunpack.c.l.s4 1934713408
        %v3904 = vunpack.c.0.s8 %v3903
        %v3905 = vlaneseq
        %v3906 = vshrl.u32 %v3905, 7
        %v3907 = vsub.s32 %v3904, %v3906
        %v3908 = vrot.slane %v3900, %v3907
        %v3910 = vunpack.c.l.s4 1934713408
        %v3911 = vunpack.c.0.s8 %v3910
        %v3912 = vlaneseq
        %v3913 = vshrl.u32 %v3912, 7
        %v3914 = vsub.s32 %v3911, %v3913
        %v3915 = vrot.slane %v3901, %v3914
        %v3916 = vcombine.low %v3860, %v3892
        %v3917 = vcombine.high %v3860, %v3892
        %v3918 = vcombine.low %v3867, %v3899
        %v3919 = vcombine.high %v3867, %v3899
        %v3920 = vcombine.low %v3876, %v3908
        %v3921 = vcombine.high %v3876, %v3908
        %v3922 = vcombine.low %v3883, %v3915
        %v3923 = vcombine.high %v3883, %v3915
        %v3924 = vcombine.low %v3469, %v3473
        %v3925 = vcombine.high %v3469, %v3473
        %v3927 = vunpack.c.l.s4 1983009808
        %v3928 = vunpack.c.0.s8 %v3927
        %v3929 = vlaneseq
        %v3930 = vshrl.u32 %v3929, 7
        %v3931 = vsub.s32 %v3928, %v3930
        %v3932 = vrot.slane %v3924, %v3931
        %v3934 = vunpack.c.l.s4 1983009808
        %v3935 = vunpack.c.0.s8 %v3934
        %v3936 = vlaneseq
        %v3937 = vshrl.u32 %v3936, 7
        %v3938 = vsub.s32 %v3935, %v3937
        %v3939 = vrot.slane %v3925, %v3938
        %v3940 = vcombine.low %v3471, %v3475
        %v3941 = vcombine.high %v3471, %v3475
        %v3943 = vunpack.c.l.s4 1983009808
        %v3944 = vunpack.c.0.s8 %v3943
        %v3945 = vlaneseq
        %v3946 = vshrl.u32 %v3945, 7
        %v3947 = vsub.s32 %v3944, %v3946
        %v3948 = vrot.slane %v3940, %v3947
        %v3950 = vunpack.c.l.s4 1983009808
        %v3951 = vunpack.c.0.s8 %v3950
        %v3952 = vlaneseq
        %v3953 = vshrl.u32 %v3952, 7
        %v3954 = vsub.s32 %v3951, %v3953
        %v3955 = vrot.slane %v3941, %v3954
        %v3956 = vcombine.low %v3477, %v3481
        %v3957 = vcombine.high %v3477, %v3481
        %v3959 = vunpack.c.l.s4 1983009808
        %v3960 = vunpack.c.0.s8 %v3959
        %v3961 = vlaneseq
        %v3962 = vshrl.u32 %v3961, 7
        %v3963 = vsub.s32 %v3960, %v3962
        %v3964 = vrot.slane %v3956, %v3963
        %v3966 = vunpack.c.l.s4 1983009808
        %v3967 = vunpack.c.0.s8 %v3966
        %v3968 = vlaneseq
        %v3969 = vshrl.u32 %v3968, 7
        %v3970 = vsub.s32 %v3967, %v3969
        %v3971 = vrot.slane %v3957, %v3970
        %v3972 = vcombine.low %v3479, %v3483
        %v3973 = vcombine.high %v3479, %v3483
        %v3975 = vunpack.c.l.s4 1983009808
        %v3976 = vunpack.c.0.s8 %v3975
        %v3977 = vlaneseq
        %v3978 = vshrl.u32 %v3977, 7
        %v3979 = vsub.s32 %v3976, %v3978
        %v3980 = vrot.slane %v3972, %v3979
        %v3982 = vunpack.c.l.s4 1983009808
        %v3983 = vunpack.c.0.s8 %v3982
        %v3984 = vlaneseq
        %v3985 = vshrl.u32 %v3984, 7
        %v3986 = vsub.s32 %v3983, %v3985
        %v3987 = vrot.slane %v3973, %v3986
        %v3988 = vcombine.low %v3932, %v3948
        %v3989 = vcombine.high %v3932, %v3948
        %v3991 = vunpack.c.l.s4 1934713408
        %v3992 = vunpack.c.0.s8 %v3991
        %v3993 = vlaneseq
        %v3994 = vshrl.u32 %v3993, 7
        %v3995 = vsub.s32 %v3992, %v3994
        %v3996 = vrot.slane %v3988, %v3995
        %v3998 = vunpack.c.l.s4 1934713408
        %v3999 = vunpack.c.0.s8 %v3998
        %v4000 = vlaneseq
        %v4001 = vshrl.u32 %v4000, 7
        %v4002 = vsub.s32 %v3999, %v4001
        %v4003 = vrot.slane %v3989, %v4002
        %v4004 = vcombine.low %v3939, %v3955
        %v4005 = vcombine.high %v3939, %v3955
        %v4007 = vunpack.c.l.s4 1934713408
        %v4008 = vunpack.c.0.s8 %v4007
        %v4009 = vlaneseq
        %v4010 = vshrl.u32 %v4009, 7
        %v4011 = vsub.s32 %v4008, %v4010
        %v4012 = vrot.slane %v4004, %v4011
        %v4014 = vunpack.c.l.s4 1934713408
        %v4015 = vunpack.c.0.s8 %v4014
        %v4016 = vlaneseq
        %v4017 = vshrl.u32 %v4016, 7
        %v4018 = vsub.s32 %v4015, %v4017
        %v4019 = vrot.slane %v4005, %v4018
        %v4020 = vcombine.low %v3964, %v3980
        %v4021 = vcombine.high %v3964, %v3980
        %v4023 = vunpack.c.l.s4 1934713408
        %v4024 = vunpack.c.0.s8 %v4023
        %v4025 = vlaneseq
        %v4026 = vshrl.u32 %v4025, 7
        %v4027 = vsub.s32 %v4024, %v4026
        %v4028 = vrot.slane %v4020, %v4027
        %v4030 = vunpack.c.l.s4 1934713408
        %v4031 = vunpack.c.0.s8 %v4030
        %v4032 = vlaneseq
        %v4033 = vshrl.u32 %v4032, 7
        %v4034 = vsub.s32 %v4031, %v4033
        %v4035 = vrot.slane %v4021, %v4034
        %v4036 = vcombine.low %v3971, %v3987
        %v4037 = vcombine.high %v3971, %v3987
        %v4039 = vunpack.c.l.s4 1934713408
        %v4040 = vunpack.c.0.s8 %v4039
        %v4041 = vlaneseq
        %v4042 = vshrl.u32 %v4041, 7
        %v4043 = vsub.s32 %v4040, %v4042
        %v4044 = vrot.slane %v4036, %v4043
        %v4046 = vunpack.c.l.s4 1934713408
        %v4047 = vunpack.c.0.s8 %v4046
        %v4048 = vlaneseq
        %v4049 = vshrl.u32 %v4048, 7
        %v4050 = vsub.s32 %v4047, %v4049
        %v4051 = vrot.slane %v4037, %v4050
        %v4052 = vcombine.low %v3996, %v4028
        %v4053 = vcombine.high %v3996, %v4028
        %v4054 = vcombine.low %v4003, %v4035
        %v4055 = vcombine.high %v4003, %v4035
        %v4056 = vcombine.low %v4012, %v4044
        %v4057 = vcombine.high %v4012, %v4044
        %v4058 = vcombine.low %v4019, %v4051
        %v4059 = vcombine.high %v4019, %v4051
        %4064 = vrot.lane.b32.xlu0 %v3645, 16
        %v4065 = vpop.permute.xlu0 %4064
        %4066 = vrot.lane.b32.xlu0 %v3781, 16
        %v4067 = vpop.permute.xlu0 %4066
        %4068 = vrot.lane.b32.xlu0 %v3917, 16
        %v4069 = vpop.permute.xlu0 %4068
        %4070 = vrot.lane.b32.xlu0 %v4053, 16
        %v4071 = vpop.permute.xlu0 %4070
        %4080 = vrot.lane.b32.xlu0 %v3646, 32
        %v4081 = vpop.permute.xlu0 %4080
        %4082 = vrot.lane.b32.xlu0 %v3782, 32
        %v4083 = vpop.permute.xlu0 %4082
        %4084 = vrot.lane.b32.xlu0 %v3918, 32
        %v4085 = vpop.permute.xlu0 %4084
        %4086 = vrot.lane.b32.xlu0 %v4054, 32
        %v4087 = vpop.permute.xlu0 %4086
        %4096 = vrot.lane.b32.xlu0 %v3647, 48
        %v4097 = vpop.permute.xlu0 %4096
        %4098 = vrot.lane.b32.xlu0 %v3783, 48
        %v4099 = vpop.permute.xlu0 %4098
        %4100 = vrot.lane.b32.xlu0 %v3919, 48
        %v4101 = vpop.permute.xlu0 %4100
        %4102 = vrot.lane.b32.xlu0 %v4055, 48
        %v4103 = vpop.permute.xlu0 %4102
        %4112 = vrot.lane.b32.xlu0 %v3648, 64
        %v4113 = vpop.permute.xlu0 %4112
        %4114 = vrot.lane.b32.xlu0 %v3784, 64
        %v4115 = vpop.permute.xlu0 %4114
        %4116 = vrot.lane.b32.xlu0 %v3920, 64
        %v4117 = vpop.permute.xlu0 %4116
        %4118 = vrot.lane.b32.xlu0 %v4056, 64
        %v4119 = vpop.permute.xlu0 %4118
        %4128 = vrot.lane.b32.xlu0 %v3649, 80
        %v4129 = vpop.permute.xlu0 %4128
        %4130 = vrot.lane.b32.xlu0 %v3785, 80
        %v4131 = vpop.permute.xlu0 %4130
        %4132 = vrot.lane.b32.xlu0 %v3921, 80
        %v4133 = vpop.permute.xlu0 %4132
        %4134 = vrot.lane.b32.xlu0 %v4057, 80
        %v4135 = vpop.permute.xlu0 %4134
        %4144 = vrot.lane.b32.xlu0 %v3650, 96
        %v4145 = vpop.permute.xlu0 %4144
        %4146 = vrot.lane.b32.xlu0 %v3786, 96
        %v4147 = vpop.permute.xlu0 %4146
        %4148 = vrot.lane.b32.xlu0 %v3922, 96
        %v4149 = vpop.permute.xlu0 %4148
        %4150 = vrot.lane.b32.xlu0 %v4058, 96
        %v4151 = vpop.permute.xlu0 %4150
        %4160 = vrot.lane.b32.xlu0 %v3651, 112
        %v4161 = vpop.permute.xlu0 %4160
        %4162 = vrot.lane.b32.xlu0 %v3787, 112
        %v4163 = vpop.permute.xlu0 %4162
        %4164 = vrot.lane.b32.xlu0 %v3923, 112
        %v4165 = vpop.permute.xlu0 %4164
        %4166 = vrot.lane.b32.xlu0 %v4059, 112
        %v4167 = vpop.permute.xlu0 %4166
        %v4172 = vsel %vm2395, %v3644, %v4065
        %v4173 = vsel %vm2395, %v3780, %v4067
        %v4174 = vsel %vm2395, %v3916, %v4069
        %v4175 = vsel %vm2395, %v4052, %v4071
        %v4176 = vsel %vm2400, %v4172, %v4081
        %v4177 = vsel %vm2400, %v4173, %v4083
        %v4178 = vsel %vm2400, %v4174, %v4085
        %v4179 = vsel %vm2400, %v4175, %v4087
        %v4180 = vsel %vm2405, %v4176, %v4097
        %v4181 = vsel %vm2405, %v4177, %v4099
        %v4182 = vsel %vm2405, %v4178, %v4101
        %v4183 = vsel %vm2405, %v4179, %v4103
        %v4184 = vsel %vm2410, %v4180, %v4113
        %v4185 = vsel %vm2410, %v4181, %v4115
        %v4186 = vsel %vm2410, %v4182, %v4117
        %v4187 = vsel %vm2410, %v4183, %v4119
        %v4188 = vsel %vm2415, %v4184, %v4129
        %v4189 = vsel %vm2415, %v4185, %v4131
        %v4190 = vsel %vm2415, %v4186, %v4133
        %v4191 = vsel %vm2415, %v4187, %v4135
        %v4192 = vsel %vm2420, %v4188, %v4145
        %v4193 = vsel %vm2420, %v4189, %v4147
        %v4194 = vsel %vm2420, %v4190, %v4149
        %v4195 = vsel %vm2420, %v4191, %v4151
        %v4196 = vsel %vm2425, %v4192, %v4161
        %v4197 = vsel %vm2425, %v4193, %v4163
        %v4198 = vsel %vm2425, %v4194, %v4165
        %v4199 = vsel %vm2425, %v4195, %v4167
        %v4200 = vpack.c.bf16 %v4197, %v4196
        %v4201 = vpack.c.bf16 %v4199, %v4198
        %v4203 = vsel %vm2400, %v911, 0
        %v4206 = vsel %vm2400, %v912, 0
        %4208 = vmatprep.subr.bf16.mxu0 0
        %4209 = vmatpush1.bf16.msra.mxu0 0
        %4210 = vmatprep.subr.bf16.mxu0 0
        %4211 = vmatpush1.bf16.msra.mxu0 0
        %4212 = vmatprep.subr.bf16.mxu0 0
        %4213 = vmatpush1.bf16.msra.mxu0 0
        %4214 = vmatprep.subr.bf16.mxu0 0
        %4215 = vmatpush1.bf16.msra.mxu0 0
        %4216 = vmatprep.subr.bf16.mxu0 0
        %4217 = vmatpush1.bf16.msra.mxu0 0
        %4218 = vmatprep.subr.bf16.mxu0 0
        %4219 = vmatpush1.bf16.msra.mxu0 0
        %4220 = vmatprep.subr.bf16.mxu0 0
        %4221 = vmatpush1.bf16.msra.mxu0 %v4201
        %4222 = vmatprep.subr.bf16.mxu0 0
        %4223 = vmatpush1.bf16.msra.mxu0 %v4200
        %4224 = vmatprep.subr.bf16.mxu0 0
        %4225 = vmatpush2.bf16.msra.mxu0 0
        %4226 = vmatprep.subr.bf16.mxu0 0
        %4227 = vmatpush2.bf16.msra.mxu0 0
        %4228 = vmatprep.subr.bf16.mxu0 0
        %4229 = vmatpush2.bf16.msra.mxu0 0
        %4230 = vmatprep.subr.bf16.mxu0 0
        %4231 = vmatpush2.bf16.msra.mxu0 0
        %4232 = vmatprep.subr.bf16.mxu0 0
        %4233 = vmatpush2.bf16.msra.mxu0 0
        %4234 = vmatprep.subr.bf16.mxu0 0
        %4235 = vmatpush2.bf16.msra.mxu0 0
        %4236 = vmatprep.subr.bf16.mxu0 0
        %4237 = vmatpush2.bf16.msra.mxu0 0
        %4238 = vmatprep.subr.bf16.mxu0 0
        %4239 = vmatpush2.bf16.msra.mxu0 0
        %4240 = vmatprep.mubr.bf16.mxu0 0
        %4241 = vmatmul.mubr.bf16.gmra.mxu0 %v4203
        %v4242 = vpop.f32.mrf.mxu0
        %v4243 = vadd.f32 0.0, %v4242
        %v4244 = vpop.f32.mrf.mxu0
        %v4245 = vpop.f32.mrf.mxu0
        %v4246 = vadd.f32 0.0, %v4245
        %v4247 = vpop.f32.mrf.mxu0
        %4248 = vmatprep.mubr.bf16.mxu0 0
        %4249 = vmatmul.mubr.bf16.gmra.mxu0 %v4206
        %v4250 = vpop.f32.mrf.mxu0
        %v4251 = vadd.f32 0.0, %v4250
        %v4252 = vpop.f32.mrf.mxu0
        %v4253 = vpop.f32.mrf.mxu0
        %v4254 = vadd.f32 0.0, %v4253
        %v4255 = vpop.f32.mrf.mxu0
        %4256 = vdwg.mxu0
        %v4257 = vadd.f32 %v3342, %v4243
        %v4258 = vadd.f32 %v3345, %v4246
        %v4259 = vadd.f32 %v3350, %v4251
        %v4260 = vadd.f32 %v3353, %v4254
        %v4261 = vld [vmem:[#allocation2 + $0x1] sm:$0xff]
        %v4262 = vld [vmem:[#allocation2 + $0x11] sm:$0xff]
        %v4263 = vld [vmem:[#allocation2 + $0x21] sm:$0xff]
        %v4264 = vld [vmem:[#allocation2 + $0x31] sm:$0xff]
        %v4265 = vld [vmem:[#allocation2 + $0x41] sm:$0xff]
        %v4266 = vld [vmem:[#allocation2 + $0x51] sm:$0xff]
        %v4267 = vld [vmem:[#allocation2 + $0x61] sm:$0xff]
        %v4268 = vld [vmem:[#allocation2 + $0x71] sm:$0xff]
        %v4269 = vld [vmem:[#allocation2 + $0x81] sm:$0xff]
        %v4270 = vld [vmem:[#allocation2 + $0x91] sm:$0xff]
        %v4271 = vld [vmem:[#allocation2 + $0xa1] sm:$0xff]
        %v4272 = vld [vmem:[#allocation2 + $0xb1] sm:$0xff]
        %v4273 = vld [vmem:[#allocation2 + $0xc1] sm:$0xff]
        %v4274 = vld [vmem:[#allocation2 + $0xd1] sm:$0xff]
        %v4275 = vld [vmem:[#allocation2 + $0xe1] sm:$0xff]
        %v4276 = vld [vmem:[#allocation2 + $0xf1] sm:$0xff]
        %v4277 = vld [vmem:[#allocation2 + $0x101] sm:$0xff]
        %v4278 = vld [vmem:[#allocation2 + $0x111] sm:$0xff]
        %v4279 = vld [vmem:[#allocation2 + $0x121] sm:$0xff]
        %v4280 = vld [vmem:[#allocation2 + $0x131] sm:$0xff]
        %v4281 = vld [vmem:[#allocation2 + $0x141] sm:$0xff]
        %v4282 = vld [vmem:[#allocation2 + $0x151] sm:$0xff]
        %v4283 = vld [vmem:[#allocation2 + $0x161] sm:$0xff]
        %v4284 = vld [vmem:[#allocation2 + $0x171] sm:$0xff]
        %v4285 = vld [vmem:[#allocation2 + $0x181] sm:$0xff]
        %v4286 = vld [vmem:[#allocation2 + $0x191] sm:$0xff]
        %v4287 = vld [vmem:[#allocation2 + $0x1a1] sm:$0xff]
        %v4288 = vld [vmem:[#allocation2 + $0x1b1] sm:$0xff]
        %v4289 = vld [vmem:[#allocation2 + $0x1c1] sm:$0xff]
        %v4290 = vld [vmem:[#allocation2 + $0x1d1] sm:$0xff]
        %v4291 = vld [vmem:[#allocation2 + $0x1e1] sm:$0xff]
        %v4292 = vld [vmem:[#allocation2 + $0x1f1] sm:$0xff]
        %v4293 = vcombine.low %v4261, %v4263
        %v4294 = vcombine.high %v4261, %v4263
        %v4296 = vunpack.c.l.s4 1983009808
        %v4297 = vunpack.c.0.s8 %v4296
        %v4298 = vlaneseq
        %v4299 = vshrl.u32 %v4298, 7
        %v4300 = vsub.s32 %v4297, %v4299
        %v4301 = vrot.slane %v4293, %v4300
        %v4303 = vunpack.c.l.s4 1983009808
        %v4304 = vunpack.c.0.s8 %v4303
        %v4305 = vlaneseq
        %v4306 = vshrl.u32 %v4305, 7
        %v4307 = vsub.s32 %v4304, %v4306
        %v4308 = vrot.slane %v4294, %v4307
        %v4309 = vcombine.low %v4262, %v4264
        %v4310 = vcombine.high %v4262, %v4264
        %v4312 = vunpack.c.l.s4 1983009808
        %v4313 = vunpack.c.0.s8 %v4312
        %v4314 = vlaneseq
        %v4315 = vshrl.u32 %v4314, 7
        %v4316 = vsub.s32 %v4313, %v4315
        %v4317 = vrot.slane %v4309, %v4316
        %v4319 = vunpack.c.l.s4 1983009808
        %v4320 = vunpack.c.0.s8 %v4319
        %v4321 = vlaneseq
        %v4322 = vshrl.u32 %v4321, 7
        %v4323 = vsub.s32 %v4320, %v4322
        %v4324 = vrot.slane %v4310, %v4323
        %v4325 = vcombine.low %v4265, %v4267
        %v4326 = vcombine.high %v4265, %v4267
        %v4328 = vunpack.c.l.s4 1983009808
        %v4329 = vunpack.c.0.s8 %v4328
        %v4330 = vlaneseq
        %v4331 = vshrl.u32 %v4330, 7
        %v4332 = vsub.s32 %v4329, %v4331
        %v4333 = vrot.slane %v4325, %v4332
        %v4335 = vunpack.c.l.s4 1983009808
        %v4336 = vunpack.c.0.s8 %v4335
        %v4337 = vlaneseq
        %v4338 = vshrl.u32 %v4337, 7
        %v4339 = vsub.s32 %v4336, %v4338
        %v4340 = vrot.slane %v4326, %v4339
        %v4341 = vcombine.low %v4266, %v4268
        %v4342 = vcombine.high %v4266, %v4268
        %v4344 = vunpack.c.l.s4 1983009808
        %v4345 = vunpack.c.0.s8 %v4344
        %v4346 = vlaneseq
        %v4347 = vshrl.u32 %v4346, 7
        %v4348 = vsub.s32 %v4345, %v4347
        %v4349 = vrot.slane %v4341, %v4348
        %v4351 = vunpack.c.l.s4 1983009808
        %v4352 = vunpack.c.0.s8 %v4351
        %v4353 = vlaneseq
        %v4354 = vshrl.u32 %v4353, 7
        %v4355 = vsub.s32 %v4352, %v4354
        %v4356 = vrot.slane %v4342, %v4355
        %v4357 = vcombine.low %v4301, %v4317
        %v4358 = vcombine.high %v4301, %v4317
        %v4360 = vunpack.c.l.s4 1934713408
        %v4361 = vunpack.c.0.s8 %v4360
        %v4362 = vlaneseq
        %v4363 = vshrl.u32 %v4362, 7
        %v4364 = vsub.s32 %v4361, %v4363
        %v4365 = vrot.slane %v4357, %v4364
        %v4367 = vunpack.c.l.s4 1934713408
        %v4368 = vunpack.c.0.s8 %v4367
        %v4369 = vlaneseq
        %v4370 = vshrl.u32 %v4369, 7
        %v4371 = vsub.s32 %v4368, %v4370
        %v4372 = vrot.slane %v4358, %v4371
        %v4373 = vcombine.low %v4308, %v4324
        %v4374 = vcombine.high %v4308, %v4324
        %v4376 = vunpack.c.l.s4 1934713408
        %v4377 = vunpack.c.0.s8 %v4376
        %v4378 = vlaneseq
        %v4379 = vshrl.u32 %v4378, 7
        %v4380 = vsub.s32 %v4377, %v4379
        %v4381 = vrot.slane %v4373, %v4380
        %v4383 = vunpack.c.l.s4 1934713408
        %v4384 = vunpack.c.0.s8 %v4383
        %v4385 = vlaneseq
        %v4386 = vshrl.u32 %v4385, 7
        %v4387 = vsub.s32 %v4384, %v4386
        %v4388 = vrot.slane %v4374, %v4387
        %v4389 = vcombine.low %v4333, %v4349
        %v4390 = vcombine.high %v4333, %v4349
        %v4392 = vunpack.c.l.s4 1934713408
        %v4393 = vunpack.c.0.s8 %v4392
        %v4394 = vlaneseq
        %v4395 = vshrl.u32 %v4394, 7
        %v4396 = vsub.s32 %v4393, %v4395
        %v4397 = vrot.slane %v4389, %v4396
        %v4399 = vunpack.c.l.s4 1934713408
        %v4400 = vunpack.c.0.s8 %v4399
        %v4401 = vlaneseq
        %v4402 = vshrl.u32 %v4401, 7
        %v4403 = vsub.s32 %v4400, %v4402
        %v4404 = vrot.slane %v4390, %v4403
        %v4405 = vcombine.low %v4340, %v4356
        %v4406 = vcombine.high %v4340, %v4356
        %v4408 = vunpack.c.l.s4 1934713408
        %v4409 = vunpack.c.0.s8 %v4408
        %v4410 = vlaneseq
        %v4411 = vshrl.u32 %v4410, 7
        %v4412 = vsub.s32 %v4409, %v4411
        %v4413 = vrot.slane %v4405, %v4412
        %v4415 = vunpack.c.l.s4 1934713408
        %v4416 = vunpack.c.0.s8 %v4415
        %v4417 = vlaneseq
        %v4418 = vshrl.u32 %v4417, 7
        %v4419 = vsub.s32 %v4416, %v4418
        %v4420 = vrot.slane %v4406, %v4419
        %v4421 = vcombine.low %v4365, %v4397
        %v4422 = vcombine.high %v4365, %v4397
        %v4423 = vcombine.low %v4372, %v4404
        %v4424 = vcombine.high %v4372, %v4404
        %v4425 = vcombine.low %v4381, %v4413
        %v4426 = vcombine.high %v4381, %v4413
        %v4427 = vcombine.low %v4388, %v4420
        %v4428 = vcombine.high %v4388, %v4420
        %v4429 = vcombine.low %v4269, %v4271
        %v4430 = vcombine.high %v4269, %v4271
        %v4432 = vunpack.c.l.s4 1983009808
        %v4433 = vunpack.c.0.s8 %v4432
        %v4434 = vlaneseq
        %v4435 = vshrl.u32 %v4434, 7
        %v4436 = vsub.s32 %v4433, %v4435
        %v4437 = vrot.slane %v4429, %v4436
        %v4439 = vunpack.c.l.s4 1983009808
        %v4440 = vunpack.c.0.s8 %v4439
        %v4441 = vlaneseq
        %v4442 = vshrl.u32 %v4441, 7
        %v4443 = vsub.s32 %v4440, %v4442
        %v4444 = vrot.slane %v4430, %v4443
        %v4445 = vcombine.low %v4270, %v4272
        %v4446 = vcombine.high %v4270, %v4272
        %v4448 = vunpack.c.l.s4 1983009808
        %v4449 = vunpack.c.0.s8 %v4448
        %v4450 = vlaneseq
        %v4451 = vshrl.u32 %v4450, 7
        %v4452 = vsub.s32 %v4449, %v4451
        %v4453 = vrot.slane %v4445, %v4452
        %v4455 = vunpack.c.l.s4 1983009808
        %v4456 = vunpack.c.0.s8 %v4455
        %v4457 = vlaneseq
        %v4458 = vshrl.u32 %v4457, 7
        %v4459 = vsub.s32 %v4456, %v4458
        %v4460 = vrot.slane %v4446, %v4459
        %v4461 = vcombine.low %v4273, %v4275
        %v4462 = vcombine.high %v4273, %v4275
        %v4464 = vunpack.c.l.s4 1983009808
        %v4465 = vunpack.c.0.s8 %v4464
        %v4466 = vlaneseq
        %v4467 = vshrl.u32 %v4466, 7
        %v4468 = vsub.s32 %v4465, %v4467
        %v4469 = vrot.slane %v4461, %v4468
        %v4471 = vunpack.c.l.s4 1983009808
        %v4472 = vunpack.c.0.s8 %v4471
        %v4473 = vlaneseq
        %v4474 = vshrl.u32 %v4473, 7
        %v4475 = vsub.s32 %v4472, %v4474
        %v4476 = vrot.slane %v4462, %v4475
        %v4477 = vcombine.low %v4274, %v4276
        %v4478 = vcombine.high %v4274, %v4276
        %v4480 = vunpack.c.l.s4 1983009808
        %v4481 = vunpack.c.0.s8 %v4480
        %v4482 = vlaneseq
        %v4483 = vshrl.u32 %v4482, 7
        %v4484 = vsub.s32 %v4481, %v4483
        %v4485 = vrot.slane %v4477, %v4484
        %v4487 = vunpack.c.l.s4 1983009808
        %v4488 = vunpack.c.0.s8 %v4487
        %v4489 = vlaneseq
        %v4490 = vshrl.u32 %v4489, 7
        %v4491 = vsub.s32 %v4488, %v4490
        %v4492 = vrot.slane %v4478, %v4491
        %v4493 = vcombine.low %v4437, %v4453
        %v4494 = vcombine.high %v4437, %v4453
        %v4496 = vunpack.c.l.s4 1934713408
        %v4497 = vunpack.c.0.s8 %v4496
        %v4498 = vlaneseq
        %v4499 = vshrl.u32 %v4498, 7
        %v4500 = vsub.s32 %v4497, %v4499
        %v4501 = vrot.slane %v4493, %v4500
        %v4503 = vunpack.c.l.s4 1934713408
        %v4504 = vunpack.c.0.s8 %v4503
        %v4505 = vlaneseq
        %v4506 = vshrl.u32 %v4505, 7
        %v4507 = vsub.s32 %v4504, %v4506
        %v4508 = vrot.slane %v4494, %v4507
        %v4509 = vcombine.low %v4444, %v4460
        %v4510 = vcombine.high %v4444, %v4460
        %v4512 = vunpack.c.l.s4 1934713408
        %v4513 = vunpack.c.0.s8 %v4512
        %v4514 = vlaneseq
        %v4515 = vshrl.u32 %v4514, 7
        %v4516 = vsub.s32 %v4513, %v4515
        %v4517 = vrot.slane %v4509, %v4516
        %v4519 = vunpack.c.l.s4 1934713408
        %v4520 = vunpack.c.0.s8 %v4519
        %v4521 = vlaneseq
        %v4522 = vshrl.u32 %v4521, 7
        %v4523 = vsub.s32 %v4520, %v4522
        %v4524 = vrot.slane %v4510, %v4523
        %v4525 = vcombine.low %v4469, %v4485
        %v4526 = vcombine.high %v4469, %v4485
        %v4528 = vunpack.c.l.s4 1934713408
        %v4529 = vunpack.c.0.s8 %v4528
        %v4530 = vlaneseq
        %v4531 = vshrl.u32 %v4530, 7
        %v4532 = vsub.s32 %v4529, %v4531
        %v4533 = vrot.slane %v4525, %v4532
        %v4535 = vunpack.c.l.s4 1934713408
        %v4536 = vunpack.c.0.s8 %v4535
        %v4537 = vlaneseq
        %v4538 = vshrl.u32 %v4537, 7
        %v4539 = vsub.s32 %v4536, %v4538
        %v4540 = vrot.slane %v4526, %v4539
        %v4541 = vcombine.low %v4476, %v4492
        %v4542 = vcombine.high %v4476, %v4492
        %v4544 = vunpack.c.l.s4 1934713408
        %v4545 = vunpack.c.0.s8 %v4544
        %v4546 = vlaneseq
        %v4547 = vshrl.u32 %v4546, 7
        %v4548 = vsub.s32 %v4545, %v4547
        %v4549 = vrot.slane %v4541, %v4548
        %v4551 = vunpack.c.l.s4 1934713408
        %v4552 = vunpack.c.0.s8 %v4551
        %v4553 = vlaneseq
        %v4554 = vshrl.u32 %v4553, 7
        %v4555 = vsub.s32 %v4552, %v4554
        %v4556 = vrot.slane %v4542, %v4555
        %v4557 = vcombine.low %v4501, %v4533
        %v4558 = vcombine.high %v4501, %v4533
        %v4559 = vcombine.low %v4508, %v4540
        %v4560 = vcombine.high %v4508, %v4540
        %v4561 = vcombine.low %v4517, %v4549
        %v4562 = vcombine.high %v4517, %v4549
        %v4563 = vcombine.low %v4524, %v4556
        %v4564 = vcombine.high %v4524, %v4556
        %v4565 = vcombine.low %v4277, %v4279
        %v4566 = vcombine.high %v4277, %v4279
        %v4568 = vunpack.c.l.s4 1983009808
        %v4569 = vunpack.c.0.s8 %v4568
        %v4570 = vlaneseq
        %v4571 = vshrl.u32 %v4570, 7
        %v4572 = vsub.s32 %v4569, %v4571
        %v4573 = vrot.slane %v4565, %v4572
        %v4575 = vunpack.c.l.s4 1983009808
        %v4576 = vunpack.c.0.s8 %v4575
        %v4577 = vlaneseq
        %v4578 = vshrl.u32 %v4577, 7
        %v4579 = vsub.s32 %v4576, %v4578
        %v4580 = vrot.slane %v4566, %v4579
        %v4581 = vcombine.low %v4278, %v4280
        %v4582 = vcombine.high %v4278, %v4280
        %v4584 = vunpack.c.l.s4 1983009808
        %v4585 = vunpack.c.0.s8 %v4584
        %v4586 = vlaneseq
        %v4587 = vshrl.u32 %v4586, 7
        %v4588 = vsub.s32 %v4585, %v4587
        %v4589 = vrot.slane %v4581, %v4588
        %v4591 = vunpack.c.l.s4 1983009808
        %v4592 = vunpack.c.0.s8 %v4591
        %v4593 = vlaneseq
        %v4594 = vshrl.u32 %v4593, 7
        %v4595 = vsub.s32 %v4592, %v4594
        %v4596 = vrot.slane %v4582, %v4595
        %v4597 = vcombine.low %v4281, %v4283
        %v4598 = vcombine.high %v4281, %v4283
        %v4600 = vunpack.c.l.s4 1983009808
        %v4601 = vunpack.c.0.s8 %v4600
        %v4602 = vlaneseq
        %v4603 = vshrl.u32 %v4602, 7
        %v4604 = vsub.s32 %v4601, %v4603
        %v4605 = vrot.slane %v4597, %v4604
        %v4607 = vunpack.c.l.s4 1983009808
        %v4608 = vunpack.c.0.s8 %v4607
        %v4609 = vlaneseq
        %v4610 = vshrl.u32 %v4609, 7
        %v4611 = vsub.s32 %v4608, %v4610
        %v4612 = vrot.slane %v4598, %v4611
        %v4613 = vcombine.low %v4282, %v4284
        %v4614 = vcombine.high %v4282, %v4284
        %v4616 = vunpack.c.l.s4 1983009808
        %v4617 = vunpack.c.0.s8 %v4616
        %v4618 = vlaneseq
        %v4619 = vshrl.u32 %v4618, 7
        %v4620 = vsub.s32 %v4617, %v4619
        %v4621 = vrot.slane %v4613, %v4620
        %v4623 = vunpack.c.l.s4 1983009808
        %v4624 = vunpack.c.0.s8 %v4623
        %v4625 = vlaneseq
        %v4626 = vshrl.u32 %v4625, 7
        %v4627 = vsub.s32 %v4624, %v4626
        %v4628 = vrot.slane %v4614, %v4627
        %v4629 = vcombine.low %v4573, %v4589
        %v4630 = vcombine.high %v4573, %v4589
        %v4632 = vunpack.c.l.s4 1934713408
        %v4633 = vunpack.c.0.s8 %v4632
        %v4634 = vlaneseq
        %v4635 = vshrl.u32 %v4634, 7
        %v4636 = vsub.s32 %v4633, %v4635
        %v4637 = vrot.slane %v4629, %v4636
        %v4639 = vunpack.c.l.s4 1934713408
        %v4640 = vunpack.c.0.s8 %v4639
        %v4641 = vlaneseq
        %v4642 = vshrl.u32 %v4641, 7
        %v4643 = vsub.s32 %v4640, %v4642
        %v4644 = vrot.slane %v4630, %v4643
        %v4645 = vcombine.low %v4580, %v4596
        %v4646 = vcombine.high %v4580, %v4596
        %v4648 = vunpack.c.l.s4 1934713408
        %v4649 = vunpack.c.0.s8 %v4648
        %v4650 = vlaneseq
        %v4651 = vshrl.u32 %v4650, 7
        %v4652 = vsub.s32 %v4649, %v4651
        %v4653 = vrot.slane %v4645, %v4652
        %v4655 = vunpack.c.l.s4 1934713408
        %v4656 = vunpack.c.0.s8 %v4655
        %v4657 = vlaneseq
        %v4658 = vshrl.u32 %v4657, 7
        %v4659 = vsub.s32 %v4656, %v4658
        %v4660 = vrot.slane %v4646, %v4659
        %v4661 = vcombine.low %v4605, %v4621
        %v4662 = vcombine.high %v4605, %v4621
        %v4664 = vunpack.c.l.s4 1934713408
        %v4665 = vunpack.c.0.s8 %v4664
        %v4666 = vlaneseq
        %v4667 = vshrl.u32 %v4666, 7
        %v4668 = vsub.s32 %v4665, %v4667
        %v4669 = vrot.slane %v4661, %v4668
        %v4671 = vunpack.c.l.s4 1934713408
        %v4672 = vunpack.c.0.s8 %v4671
        %v4673 = vlaneseq
        %v4674 = vshrl.u32 %v4673, 7
        %v4675 = vsub.s32 %v4672, %v4674
        %v4676 = vrot.slane %v4662, %v4675
        %v4677 = vcombine.low %v4612, %v4628
        %v4678 = vcombine.high %v4612, %v4628
        %v4680 = vunpack.c.l.s4 1934713408
        %v4681 = vunpack.c.0.s8 %v4680
        %v4682 = vlaneseq
        %v4683 = vshrl.u32 %v4682, 7
        %v4684 = vsub.s32 %v4681, %v4683
        %v4685 = vrot.slane %v4677, %v4684
        %v4687 = vunpack.c.l.s4 1934713408
        %v4688 = vunpack.c.0.s8 %v4687
        %v4689 = vlaneseq
        %v4690 = vshrl.u32 %v4689, 7
        %v4691 = vsub.s32 %v4688, %v4690
        %v4692 = vrot.slane %v4678, %v4691
        %v4693 = vcombine.low %v4637, %v4669
        %v4694 = vcombine.high %v4637, %v4669
        %v4695 = vcombine.low %v4644, %v4676
        %v4696 = vcombine.high %v4644, %v4676
        %v4697 = vcombine.low %v4653, %v4685
        %v4698 = vcombine.high %v4653, %v4685
        %v4699 = vcombine.low %v4660, %v4692
        %v4700 = vcombine.high %v4660, %v4692
        %v4701 = vcombine.low %v4285, %v4287
        %v4702 = vcombine.high %v4285, %v4287
        %v4704 = vunpack.c.l.s4 1983009808
        %v4705 = vunpack.c.0.s8 %v4704
        %v4706 = vlaneseq
        %v4707 = vshrl.u32 %v4706, 7
        %v4708 = vsub.s32 %v4705, %v4707
        %v4709 = vrot.slane %v4701, %v4708
        %v4711 = vunpack.c.l.s4 1983009808
        %v4712 = vunpack.c.0.s8 %v4711
        %v4713 = vlaneseq
        %v4714 = vshrl.u32 %v4713, 7
        %v4715 = vsub.s32 %v4712, %v4714
        %v4716 = vrot.slane %v4702, %v4715
        %v4717 = vcombine.low %v4286, %v4288
        %v4718 = vcombine.high %v4286, %v4288
        %v4720 = vunpack.c.l.s4 1983009808
        %v4721 = vunpack.c.0.s8 %v4720
        %v4722 = vlaneseq
        %v4723 = vshrl.u32 %v4722, 7
        %v4724 = vsub.s32 %v4721, %v4723
        %v4725 = vrot.slane %v4717, %v4724
        %v4727 = vunpack.c.l.s4 1983009808
        %v4728 = vunpack.c.0.s8 %v4727
        %v4729 = vlaneseq
        %v4730 = vshrl.u32 %v4729, 7
        %v4731 = vsub.s32 %v4728, %v4730
        %v4732 = vrot.slane %v4718, %v4731
        %v4733 = vcombine.low %v4289, %v4291
        %v4734 = vcombine.high %v4289, %v4291
        %v4736 = vunpack.c.l.s4 1983009808
        %v4737 = vunpack.c.0.s8 %v4736
        %v4738 = vlaneseq
        %v4739 = vshrl.u32 %v4738, 7
        %v4740 = vsub.s32 %v4737, %v4739
        %v4741 = vrot.slane %v4733, %v4740
        %v4743 = vunpack.c.l.s4 1983009808
        %v4744 = vunpack.c.0.s8 %v4743
        %v4745 = vlaneseq
        %v4746 = vshrl.u32 %v4745, 7
        %v4747 = vsub.s32 %v4744, %v4746
        %v4748 = vrot.slane %v4734, %v4747
        %v4749 = vcombine.low %v4290, %v4292
        %v4750 = vcombine.high %v4290, %v4292
        %v4752 = vunpack.c.l.s4 1983009808
        %v4753 = vunpack.c.0.s8 %v4752
        %v4754 = vlaneseq
        %v4755 = vshrl.u32 %v4754, 7
        %v4756 = vsub.s32 %v4753, %v4755
        %v4757 = vrot.slane %v4749, %v4756
        %v4759 = vunpack.c.l.s4 1983009808
        %v4760 = vunpack.c.0.s8 %v4759
        %v4761 = vlaneseq
        %v4762 = vshrl.u32 %v4761, 7
        %v4763 = vsub.s32 %v4760, %v4762
        %v4764 = vrot.slane %v4750, %v4763
        %v4765 = vcombine.low %v4709, %v4725
        %v4766 = vcombine.high %v4709, %v4725
        %v4768 = vunpack.c.l.s4 1934713408
        %v4769 = vunpack.c.0.s8 %v4768
        %v4770 = vlaneseq
        %v4771 = vshrl.u32 %v4770, 7
        %v4772 = vsub.s32 %v4769, %v4771
        %v4773 = vrot.slane %v4765, %v4772
        %v4775 = vunpack.c.l.s4 1934713408
        %v4776 = vunpack.c.0.s8 %v4775
        %v4777 = vlaneseq
        %v4778 = vshrl.u32 %v4777, 7
        %v4779 = vsub.s32 %v4776, %v4778
        %v4780 = vrot.slane %v4766, %v4779
        %v4781 = vcombine.low %v4716, %v4732
        %v4782 = vcombine.high %v4716, %v4732
        %v4784 = vunpack.c.l.s4 1934713408
        %v4785 = vunpack.c.0.s8 %v4784
        %v4786 = vlaneseq
        %v4787 = vshrl.u32 %v4786, 7
        %v4788 = vsub.s32 %v4785, %v4787
        %v4789 = vrot.slane %v4781, %v4788
        %v4791 = vunpack.c.l.s4 1934713408
        %v4792 = vunpack.c.0.s8 %v4791
        %v4793 = vlaneseq
        %v4794 = vshrl.u32 %v4793, 7
        %v4795 = vsub.s32 %v4792, %v4794
        %v4796 = vrot.slane %v4782, %v4795
        %v4797 = vcombine.low %v4741, %v4757
        %v4798 = vcombine.high %v4741, %v4757
        %v4800 = vunpack.c.l.s4 1934713408
        %v4801 = vunpack.c.0.s8 %v4800
        %v4802 = vlaneseq
        %v4803 = vshrl.u32 %v4802, 7
        %v4804 = vsub.s32 %v4801, %v4803
        %v4805 = vrot.slane %v4797, %v4804
        %v4807 = vunpack.c.l.s4 1934713408
        %v4808 = vunpack.c.0.s8 %v4807
        %v4809 = vlaneseq
        %v4810 = vshrl.u32 %v4809, 7
        %v4811 = vsub.s32 %v4808, %v4810
        %v4812 = vrot.slane %v4798, %v4811
        %v4813 = vcombine.low %v4748, %v4764
        %v4814 = vcombine.high %v4748, %v4764
        %v4816 = vunpack.c.l.s4 1934713408
        %v4817 = vunpack.c.0.s8 %v4816
        %v4818 = vlaneseq
        %v4819 = vshrl.u32 %v4818, 7
        %v4820 = vsub.s32 %v4817, %v4819
        %v4821 = vrot.slane %v4813, %v4820
        %v4823 = vunpack.c.l.s4 1934713408
        %v4824 = vunpack.c.0.s8 %v4823
        %v4825 = vlaneseq
        %v4826 = vshrl.u32 %v4825, 7
        %v4827 = vsub.s32 %v4824, %v4826
        %v4828 = vrot.slane %v4814, %v4827
        %v4829 = vcombine.low %v4773, %v4805
        %v4830 = vcombine.high %v4773, %v4805
        %v4831 = vcombine.low %v4780, %v4812
        %v4832 = vcombine.high %v4780, %v4812
        %v4833 = vcombine.low %v4789, %v4821
        %v4834 = vcombine.high %v4789, %v4821
        %v4835 = vcombine.low %v4796, %v4828
        %v4836 = vcombine.high %v4796, %v4828
        %4841 = vrot.lane.b32.xlu0 %v4422, 16
        %v4842 = vpop.permute.xlu0 %4841
        %4843 = vrot.lane.b32.xlu0 %v4558, 16
        %v4844 = vpop.permute.xlu0 %4843
        %4845 = vrot.lane.b32.xlu0 %v4694, 16
        %v4846 = vpop.permute.xlu0 %4845
        %4847 = vrot.lane.b32.xlu0 %v4830, 16
        %v4848 = vpop.permute.xlu0 %4847
        %4857 = vrot.lane.b32.xlu0 %v4423, 32
        %v4858 = vpop.permute.xlu0 %4857
        %4859 = vrot.lane.b32.xlu0 %v4559, 32
        %v4860 = vpop.permute.xlu0 %4859
        %4861 = vrot.lane.b32.xlu0 %v4695, 32
        %v4862 = vpop.permute.xlu0 %4861
        %4863 = vrot.lane.b32.xlu0 %v4831, 32
        %v4864 = vpop.permute.xlu0 %4863
        %4873 = vrot.lane.b32.xlu0 %v4424, 48
        %v4874 = vpop.permute.xlu0 %4873
        %4875 = vrot.lane.b32.xlu0 %v4560, 48
        %v4876 = vpop.permute.xlu0 %4875
        %4877 = vrot.lane.b32.xlu0 %v4696, 48
        %v4878 = vpop.permute.xlu0 %4877
        %4879 = vrot.lane.b32.xlu0 %v4832, 48
        %v4880 = vpop.permute.xlu0 %4879
        %4889 = vrot.lane.b32.xlu0 %v4425, 64
        %v4890 = vpop.permute.xlu0 %4889
        %4891 = vrot.lane.b32.xlu0 %v4561, 64
        %v4892 = vpop.permute.xlu0 %4891
        %4893 = vrot.lane.b32.xlu0 %v4697, 64
        %v4894 = vpop.permute.xlu0 %4893
        %4895 = vrot.lane.b32.xlu0 %v4833, 64
        %v4896 = vpop.permute.xlu0 %4895
        %4905 = vrot.lane.b32.xlu0 %v4426, 80
        %v4906 = vpop.permute.xlu0 %4905
        %4907 = vrot.lane.b32.xlu0 %v4562, 80
        %v4908 = vpop.permute.xlu0 %4907
        %4909 = vrot.lane.b32.xlu0 %v4698, 80
        %v4910 = vpop.permute.xlu0 %4909
        %4911 = vrot.lane.b32.xlu0 %v4834, 80
        %v4912 = vpop.permute.xlu0 %4911
        %4921 = vrot.lane.b32.xlu0 %v4427, 96
        %v4922 = vpop.permute.xlu0 %4921
        %4923 = vrot.lane.b32.xlu0 %v4563, 96
        %v4924 = vpop.permute.xlu0 %4923
        %4925 = vrot.lane.b32.xlu0 %v4699, 96
        %v4926 = vpop.permute.xlu0 %4925
        %4927 = vrot.lane.b32.xlu0 %v4835, 96
        %v4928 = vpop.permute.xlu0 %4927
        %4937 = vrot.lane.b32.xlu0 %v4428, 112
        %v4938 = vpop.permute.xlu0 %4937
        %4939 = vrot.lane.b32.xlu0 %v4564, 112
        %v4940 = vpop.permute.xlu0 %4939
        %4941 = vrot.lane.b32.xlu0 %v4700, 112
        %v4942 = vpop.permute.xlu0 %4941
        %4943 = vrot.lane.b32.xlu0 %v4836, 112
        %v4944 = vpop.permute.xlu0 %4943
        %v4949 = vsel %vm2395, %v4421, %v4842
        %v4950 = vsel %vm2395, %v4557, %v4844
        %v4951 = vsel %vm2395, %v4693, %v4846
        %v4952 = vsel %vm2395, %v4829, %v4848
        %v4953 = vsel %vm2400, %v4949, %v4858
        %v4954 = vsel %vm2400, %v4950, %v4860
        %v4955 = vsel %vm2400, %v4951, %v4862
        %v4956 = vsel %vm2400, %v4952, %v4864
        %v4957 = vsel %vm2405, %v4953, %v4874
        %v4958 = vsel %vm2405, %v4954, %v4876
        %v4959 = vsel %vm2405, %v4955, %v4878
        %v4960 = vsel %vm2405, %v4956, %v4880
        %v4961 = vsel %vm2410, %v4957, %v4890
        %v4962 = vsel %vm2410, %v4958, %v4892
        %v4963 = vsel %vm2410, %v4959, %v4894
        %v4964 = vsel %vm2410, %v4960, %v4896
        %v4965 = vsel %vm2415, %v4961, %v4906
        %v4966 = vsel %vm2415, %v4962, %v4908
        %v4967 = vsel %vm2415, %v4963, %v4910
        %v4968 = vsel %vm2415, %v4964, %v4912
        %v4969 = vsel %vm2420, %v4965, %v4922
        %v4970 = vsel %vm2420, %v4966, %v4924
        %v4971 = vsel %vm2420, %v4967, %v4926
        %v4972 = vsel %vm2420, %v4968, %v4928
        %v4973 = vsel %vm2425, %v4969, %v4938
        %v4974 = vsel %vm2425, %v4970, %v4940
        %v4975 = vsel %vm2425, %v4971, %v4942
        %v4976 = vsel %vm2425, %v4972, %v4944
        %v4977 = vpack.c.bf16 %v4974, %v4973
        %v4978 = vpack.c.bf16 %v4976, %v4975
        %v4980 = vsel %vm2400, %v913, 0
        %v4983 = vsel %vm2400, %v914, 0
        %4985 = vmatprep.subr.bf16.mxu0 0
        %4986 = vmatpush1.bf16.msra.mxu0 0
        %4987 = vmatprep.subr.bf16.mxu0 0
        %4988 = vmatpush1.bf16.msra.mxu0 0
        %4989 = vmatprep.subr.bf16.mxu0 0
        %4990 = vmatpush1.bf16.msra.mxu0 0
        %4991 = vmatprep.subr.bf16.mxu0 0
        %4992 = vmatpush1.bf16.msra.mxu0 0
        %4993 = vmatprep.subr.bf16.mxu0 0
        %4994 = vmatpush1.bf16.msra.mxu0 0
        %4995 = vmatprep.subr.bf16.mxu0 0
        %4996 = vmatpush1.bf16.msra.mxu0 0
        %4997 = vmatprep.subr.bf16.mxu0 0
        %4998 = vmatpush1.bf16.msra.mxu0 %v4978
        %4999 = vmatprep.subr.bf16.mxu0 0
        %5000 = vmatpush1.bf16.msra.mxu0 %v4977
        %5001 = vmatprep.subr.bf16.mxu0 0
        %5002 = vmatpush2.bf16.msra.mxu0 0
        %5003 = vmatprep.subr.bf16.mxu0 0
        %5004 = vmatpush2.bf16.msra.mxu0 0
        %5005 = vmatprep.subr.bf16.mxu0 0
        %5006 = vmatpush2.bf16.msra.mxu0 0
        %5007 = vmatprep.subr.bf16.mxu0 0
        %5008 = vmatpush2.bf16.msra.mxu0 0
        %5009 = vmatprep.subr.bf16.mxu0 0
        %5010 = vmatpush2.bf16.msra.mxu0 0
        %5011 = vmatprep.subr.bf16.mxu0 0
        %5012 = vmatpush2.bf16.msra.mxu0 0
        %5013 = vmatprep.subr.bf16.mxu0 0
        %5014 = vmatpush2.bf16.msra.mxu0 0
        %5015 = vmatprep.subr.bf16.mxu0 0
        %5016 = vmatpush2.bf16.msra.mxu0 0
        %5017 = vmatprep.mubr.bf16.mxu0 0
        %5018 = vmatmul.mubr.bf16.gmra.mxu0 %v4980
        %v5019 = vpop.f32.mrf.mxu0
        %v5020 = vadd.f32 0.0, %v5019
        %v5021 = vpop.f32.mrf.mxu0
        %v5022 = vpop.f32.mrf.mxu0
        %v5023 = vadd.f32 0.0, %v5022
        %v5024 = vpop.f32.mrf.mxu0
        %5025 = vmatprep.mubr.bf16.mxu0 0
        %5026 = vmatmul.mubr.bf16.gmra.mxu0 %v4983
        %v5027 = vpop.f32.mrf.mxu0
        %v5028 = vadd.f32 0.0, %v5027
        %v5029 = vpop.f32.mrf.mxu0
        %v5030 = vpop.f32.mrf.mxu0
        %v5031 = vadd.f32 0.0, %v5030
        %v5032 = vpop.f32.mrf.mxu0
        %5033 = vdwg.mxu0
        %v5034 = vadd.f32 %v4257, %v5020
        %v5035 = vadd.f32 %v4258, %v5023
        %v5036 = vadd.f32 %v4259, %v5028
        %v5037 = vadd.f32 %v4260, %v5031
        %v5038 = vld [vmem:[#allocation2 + $0x1] sm:$0xff]
        %v5039 = vld [vmem:[#allocation2 + $0x11] sm:$0xff]
        %v5040 = vld [vmem:[#allocation2 + $0x21] sm:$0xff]
        %v5041 = vld [vmem:[#allocation2 + $0x31] sm:$0xff]
        %v5042 = vld [vmem:[#allocation2 + $0x41] sm:$0xff]
        %v5043 = vld [vmem:[#allocation2 + $0x51] sm:$0xff]
        %v5044 = vld [vmem:[#allocation2 + $0x61] sm:$0xff]
        %v5045 = vld [vmem:[#allocation2 + $0x71] sm:$0xff]
        %v5046 = vld [vmem:[#allocation2 + $0x81] sm:$0xff]
        %v5047 = vld [vmem:[#allocation2 + $0x91] sm:$0xff]
        %v5048 = vld [vmem:[#allocation2 + $0xa1] sm:$0xff]
        %v5049 = vld [vmem:[#allocation2 + $0xb1] sm:$0xff]
        %v5050 = vld [vmem:[#allocation2 + $0xc1] sm:$0xff]
        %v5051 = vld [vmem:[#allocation2 + $0xd1] sm:$0xff]
        %v5052 = vld [vmem:[#allocation2 + $0xe1] sm:$0xff]
        %v5053 = vld [vmem:[#allocation2 + $0xf1] sm:$0xff]
        %v5054 = vld [vmem:[#allocation2 + $0x101] sm:$0xff]
        %v5055 = vld [vmem:[#allocation2 + $0x111] sm:$0xff]
        %v5056 = vld [vmem:[#allocation2 + $0x121] sm:$0xff]
        %v5057 = vld [vmem:[#allocation2 + $0x131] sm:$0xff]
        %v5058 = vld [vmem:[#allocation2 + $0x141] sm:$0xff]
        %v5059 = vld [vmem:[#allocation2 + $0x151] sm:$0xff]
        %v5060 = vld [vmem:[#allocation2 + $0x161] sm:$0xff]
        %v5061 = vld [vmem:[#allocation2 + $0x171] sm:$0xff]
        %v5062 = vld [vmem:[#allocation2 + $0x181] sm:$0xff]
        %v5063 = vld [vmem:[#allocation2 + $0x191] sm:$0xff]
        %v5064 = vld [vmem:[#allocation2 + $0x1a1] sm:$0xff]
        %v5065 = vld [vmem:[#allocation2 + $0x1b1] sm:$0xff]
        %v5066 = vld [vmem:[#allocation2 + $0x1c1] sm:$0xff]
        %v5067 = vld [vmem:[#allocation2 + $0x1d1] sm:$0xff]
        %v5068 = vld [vmem:[#allocation2 + $0x1e1] sm:$0xff]
        %v5069 = vld [vmem:[#allocation2 + $0x1f1] sm:$0xff]
        %5102 = vrot.lane.b32.xlu0 %v5038, 127
        %v5103 = vpop.permute.xlu0 %5102
        %5104 = vrot.lane.b32.xlu0 %v5039, 127
        %v5105 = vpop.permute.xlu0 %5104
        %5106 = vrot.lane.b32.xlu0 %v5040, 127
        %v5107 = vpop.permute.xlu0 %5106
        %5108 = vrot.lane.b32.xlu0 %v5041, 127
        %v5109 = vpop.permute.xlu0 %5108
        %5110 = vrot.lane.b32.xlu0 %v5042, 127
        %v5111 = vpop.permute.xlu0 %5110
        %5112 = vrot.lane.b32.xlu0 %v5043, 127
        %v5113 = vpop.permute.xlu0 %5112
        %5114 = vrot.lane.b32.xlu0 %v5044, 127
        %v5115 = vpop.permute.xlu0 %5114
        %5116 = vrot.lane.b32.xlu0 %v5045, 127
        %v5117 = vpop.permute.xlu0 %5116
        %5118 = vrot.lane.b32.xlu0 %v5046, 127
        %v5119 = vpop.permute.xlu0 %5118
        %5120 = vrot.lane.b32.xlu0 %v5047, 127
        %v5121 = vpop.permute.xlu0 %5120
        %5122 = vrot.lane.b32.xlu0 %v5048, 127
        %v5123 = vpop.permute.xlu0 %5122
        %5124 = vrot.lane.b32.xlu0 %v5049, 127
        %v5125 = vpop.permute.xlu0 %5124
        %5126 = vrot.lane.b32.xlu0 %v5050, 127
        %v5127 = vpop.permute.xlu0 %5126
        %5128 = vrot.lane.b32.xlu0 %v5051, 127
        %v5129 = vpop.permute.xlu0 %5128
        %5130 = vrot.lane.b32.xlu0 %v5052, 127
        %v5131 = vpop.permute.xlu0 %5130
        %5132 = vrot.lane.b32.xlu0 %v5053, 127
        %v5133 = vpop.permute.xlu0 %5132
        %5134 = vrot.lane.b32.xlu0 %v5054, 127
        %v5135 = vpop.permute.xlu0 %5134
        %5136 = vrot.lane.b32.xlu0 %v5055, 127
        %v5137 = vpop.permute.xlu0 %5136
        %5138 = vrot.lane.b32.xlu0 %v5056, 127
        %v5139 = vpop.permute.xlu0 %5138
        %5140 = vrot.lane.b32.xlu0 %v5057, 127
        %v5141 = vpop.permute.xlu0 %5140
        %5142 = vrot.lane.b32.xlu0 %v5058, 127
        %v5143 = vpop.permute.xlu0 %5142
        %5144 = vrot.lane.b32.xlu0 %v5059, 127
        %v5145 = vpop.permute.xlu0 %5144
        %5146 = vrot.lane.b32.xlu0 %v5060, 127
        %v5147 = vpop.permute.xlu0 %5146
        %5148 = vrot.lane.b32.xlu0 %v5061, 127
        %v5149 = vpop.permute.xlu0 %5148
        %5150 = vrot.lane.b32.xlu0 %v5062, 127
        %v5151 = vpop.permute.xlu0 %5150
        %5152 = vrot.lane.b32.xlu0 %v5063, 127
        %v5153 = vpop.permute.xlu0 %5152
        %5154 = vrot.lane.b32.xlu0 %v5064, 127
        %v5155 = vpop.permute.xlu0 %5154
        %5156 = vrot.lane.b32.xlu0 %v5065, 127
        %v5157 = vpop.permute.xlu0 %5156
        %5158 = vrot.lane.b32.xlu0 %v5066, 127
        %v5159 = vpop.permute.xlu0 %5158
        %5160 = vrot.lane.b32.xlu0 %v5067, 127
        %v5161 = vpop.permute.xlu0 %5160
        %5162 = vrot.lane.b32.xlu0 %v5068, 127
        %v5163 = vpop.permute.xlu0 %5162
        %5164 = vrot.lane.b32.xlu0 %v5069, 127
        %v5165 = vpop.permute.xlu0 %5164
        %v5198 = vcombine.low %v5103, %v5107
        %v5199 = vcombine.high %v5103, %v5107
        %v5201 = vunpack.c.l.s4 1983009808
        %v5202 = vunpack.c.0.s8 %v5201
        %v5203 = vlaneseq
        %v5204 = vshrl.u32 %v5203, 7
        %v5205 = vsub.s32 %v5202, %v5204
        %v5206 = vrot.slane %v5198, %v5205
        %v5208 = vunpack.c.l.s4 1983009808
        %v5209 = vunpack.c.0.s8 %v5208
        %v5210 = vlaneseq
        %v5211 = vshrl.u32 %v5210, 7
        %v5212 = vsub.s32 %v5209, %v5211
        %v5213 = vrot.slane %v5199, %v5212
        %v5214 = vcombine.low %v5105, %v5109
        %v5215 = vcombine.high %v5105, %v5109
        %v5217 = vunpack.c.l.s4 1983009808
        %v5218 = vunpack.c.0.s8 %v5217
        %v5219 = vlaneseq
        %v5220 = vshrl.u32 %v5219, 7
        %v5221 = vsub.s32 %v5218, %v5220
        %v5222 = vrot.slane %v5214, %v5221
        %v5224 = vunpack.c.l.s4 1983009808
        %v5225 = vunpack.c.0.s8 %v5224
        %v5226 = vlaneseq
        %v5227 = vshrl.u32 %v5226, 7
        %v5228 = vsub.s32 %v5225, %v5227
        %v5229 = vrot.slane %v5215, %v5228
        %v5230 = vcombine.low %v5111, %v5115
        %v5231 = vcombine.high %v5111, %v5115
        %v5233 = vunpack.c.l.s4 1983009808
        %v5234 = vunpack.c.0.s8 %v5233
        %v5235 = vlaneseq
        %v5236 = vshrl.u32 %v5235, 7
        %v5237 = vsub.s32 %v5234, %v5236
        %v5238 = vrot.slane %v5230, %v5237
        %v5240 = vunpack.c.l.s4 1983009808
        %v5241 = vunpack.c.0.s8 %v5240
        %v5242 = vlaneseq
        %v5243 = vshrl.u32 %v5242, 7
        %v5244 = vsub.s32 %v5241, %v5243
        %v5245 = vrot.slane %v5231, %v5244
        %v5246 = vcombine.low %v5113, %v5117
        %v5247 = vcombine.high %v5113, %v5117
        %v5249 = vunpack.c.l.s4 1983009808
        %v5250 = vunpack.c.0.s8 %v5249
        %v5251 = vlaneseq
        %v5252 = vshrl.u32 %v5251, 7
        %v5253 = vsub.s32 %v5250, %v5252
        %v5254 = vrot.slane %v5246, %v5253
        %v5256 = vunpack.c.l.s4 1983009808
        %v5257 = vunpack.c.0.s8 %v5256
        %v5258 = vlaneseq
        %v5259 = vshrl.u32 %v5258, 7
        %v5260 = vsub.s32 %v5257, %v5259
        %v5261 = vrot.slane %v5247, %v5260
        %v5262 = vcombine.low %v5206, %v5222
        %v5263 = vcombine.high %v5206, %v5222
        %v5265 = vunpack.c.l.s4 1934713408
        %v5266 = vunpack.c.0.s8 %v5265
        %v5267 = vlaneseq
        %v5268 = vshrl.u32 %v5267, 7
        %v5269 = vsub.s32 %v5266, %v5268
        %v5270 = vrot.slane %v5262, %v5269
        %v5272 = vunpack.c.l.s4 1934713408
        %v5273 = vunpack.c.0.s8 %v5272
        %v5274 = vlaneseq
        %v5275 = vshrl.u32 %v5274, 7
        %v5276 = vsub.s32 %v5273, %v5275
        %v5277 = vrot.slane %v5263, %v5276
        %v5278 = vcombine.low %v5213, %v5229
        %v5279 = vcombine.high %v5213, %v5229
        %v5281 = vunpack.c.l.s4 1934713408
        %v5282 = vunpack.c.0.s8 %v5281
        %v5283 = vlaneseq
        %v5284 = vshrl.u32 %v5283, 7
        %v5285 = vsub.s32 %v5282, %v5284
        %v5286 = vrot.slane %v5278, %v5285
        %v5288 = vunpack.c.l.s4 1934713408
        %v5289 = vunpack.c.0.s8 %v5288
        %v5290 = vlaneseq
        %v5291 = vshrl.u32 %v5290, 7
        %v5292 = vsub.s32 %v5289, %v5291
        %v5293 = vrot.slane %v5279, %v5292
        %v5294 = vcombine.low %v5238, %v5254
        %v5295 = vcombine.high %v5238, %v5254
        %v5297 = vunpack.c.l.s4 1934713408
        %v5298 = vunpack.c.0.s8 %v5297
        %v5299 = vlaneseq
        %v5300 = vshrl.u32 %v5299, 7
        %v5301 = vsub.s32 %v5298, %v5300
        %v5302 = vrot.slane %v5294, %v5301
        %v5304 = vunpack.c.l.s4 1934713408
        %v5305 = vunpack.c.0.s8 %v5304
        %v5306 = vlaneseq
        %v5307 = vshrl.u32 %v5306, 7
        %v5308 = vsub.s32 %v5305, %v5307
        %v5309 = vrot.slane %v5295, %v5308
        %v5310 = vcombine.low %v5245, %v5261
        %v5311 = vcombine.high %v5245, %v5261
        %v5313 = vunpack.c.l.s4 1934713408
        %v5314 = vunpack.c.0.s8 %v5313
        %v5315 = vlaneseq
        %v5316 = vshrl.u32 %v5315, 7
        %v5317 = vsub.s32 %v5314, %v5316
        %v5318 = vrot.slane %v5310, %v5317
        %v5320 = vunpack.c.l.s4 1934713408
        %v5321 = vunpack.c.0.s8 %v5320
        %v5322 = vlaneseq
        %v5323 = vshrl.u32 %v5322, 7
        %v5324 = vsub.s32 %v5321, %v5323
        %v5325 = vrot.slane %v5311, %v5324
        %v5326 = vcombine.low %v5270, %v5302
        %v5327 = vcombine.high %v5270, %v5302
        %v5328 = vcombine.low %v5277, %v5309
        %v5329 = vcombine.high %v5277, %v5309
        %v5330 = vcombine.low %v5286, %v5318
        %v5331 = vcombine.high %v5286, %v5318
        %v5332 = vcombine.low %v5293, %v5325
        %v5333 = vcombine.high %v5293, %v5325
        %v5334 = vcombine.low %v5119, %v5123
        %v5335 = vcombine.high %v5119, %v5123
        %v5337 = vunpack.c.l.s4 1983009808
        %v5338 = vunpack.c.0.s8 %v5337
        %v5339 = vlaneseq
        %v5340 = vshrl.u32 %v5339, 7
        %v5341 = vsub.s32 %v5338, %v5340
        %v5342 = vrot.slane %v5334, %v5341
        %v5344 = vunpack.c.l.s4 1983009808
        %v5345 = vunpack.c.0.s8 %v5344
        %v5346 = vlaneseq
        %v5347 = vshrl.u32 %v5346, 7
        %v5348 = vsub.s32 %v5345, %v5347
        %v5349 = vrot.slane %v5335, %v5348
        %v5350 = vcombine.low %v5121, %v5125
        %v5351 = vcombine.high %v5121, %v5125
        %v5353 = vunpack.c.l.s4 1983009808
        %v5354 = vunpack.c.0.s8 %v5353
        %v5355 = vlaneseq
        %v5356 = vshrl.u32 %v5355, 7
        %v5357 = vsub.s32 %v5354, %v5356
        %v5358 = vrot.slane %v5350, %v5357
        %v5360 = vunpack.c.l.s4 1983009808
        %v5361 = vunpack.c.0.s8 %v5360
        %v5362 = vlaneseq
        %v5363 = vshrl.u32 %v5362, 7
        %v5364 = vsub.s32 %v5361, %v5363
        %v5365 = vrot.slane %v5351, %v5364
        %v5366 = vcombine.low %v5127, %v5131
        %v5367 = vcombine.high %v5127, %v5131
        %v5369 = vunpack.c.l.s4 1983009808
        %v5370 = vunpack.c.0.s8 %v5369
        %v5371 = vlaneseq
        %v5372 = vshrl.u32 %v5371, 7
        %v5373 = vsub.s32 %v5370, %v5372
        %v5374 = vrot.slane %v5366, %v5373
        %v5376 = vunpack.c.l.s4 1983009808
        %v5377 = vunpack.c.0.s8 %v5376
        %v5378 = vlaneseq
        %v5379 = vshrl.u32 %v5378, 7
        %v5380 = vsub.s32 %v5377, %v5379
        %v5381 = vrot.slane %v5367, %v5380
        %v5382 = vcombine.low %v5129, %v5133
        %v5383 = vcombine.high %v5129, %v5133
        %v5385 = vunpack.c.l.s4 1983009808
        %v5386 = vunpack.c.0.s8 %v5385
        %v5387 = vlaneseq
        %v5388 = vshrl.u32 %v5387, 7
        %v5389 = vsub.s32 %v5386, %v5388
        %v5390 = vrot.slane %v5382, %v5389
        %v5392 = vunpack.c.l.s4 1983009808
        %v5393 = vunpack.c.0.s8 %v5392
        %v5394 = vlaneseq
        %v5395 = vshrl.u32 %v5394, 7
        %v5396 = vsub.s32 %v5393, %v5395
        %v5397 = vrot.slane %v5383, %v5396
        %v5398 = vcombine.low %v5342, %v5358
        %v5399 = vcombine.high %v5342, %v5358
        %v5401 = vunpack.c.l.s4 1934713408
        %v5402 = vunpack.c.0.s8 %v5401
        %v5403 = vlaneseq
        %v5404 = vshrl.u32 %v5403, 7
        %v5405 = vsub.s32 %v5402, %v5404
        %v5406 = vrot.slane %v5398, %v5405
        %v5408 = vunpack.c.l.s4 1934713408
        %v5409 = vunpack.c.0.s8 %v5408
        %v5410 = vlaneseq
        %v5411 = vshrl.u32 %v5410, 7
        %v5412 = vsub.s32 %v5409, %v5411
        %v5413 = vrot.slane %v5399, %v5412
        %v5414 = vcombine.low %v5349, %v5365
        %v5415 = vcombine.high %v5349, %v5365
        %v5417 = vunpack.c.l.s4 1934713408
        %v5418 = vunpack.c.0.s8 %v5417
        %v5419 = vlaneseq
        %v5420 = vshrl.u32 %v5419, 7
        %v5421 = vsub.s32 %v5418, %v5420
        %v5422 = vrot.slane %v5414, %v5421
        %v5424 = vunpack.c.l.s4 1934713408
        %v5425 = vunpack.c.0.s8 %v5424
        %v5426 = vlaneseq
        %v5427 = vshrl.u32 %v5426, 7
        %v5428 = vsub.s32 %v5425, %v5427
        %v5429 = vrot.slane %v5415, %v5428
        %v5430 = vcombine.low %v5374, %v5390
        %v5431 = vcombine.high %v5374, %v5390
        %v5433 = vunpack.c.l.s4 1934713408
        %v5434 = vunpack.c.0.s8 %v5433
        %v5435 = vlaneseq
        %v5436 = vshrl.u32 %v5435, 7
        %v5437 = vsub.s32 %v5434, %v5436
        %v5438 = vrot.slane %v5430, %v5437
        %v5440 = vunpack.c.l.s4 1934713408
        %v5441 = vunpack.c.0.s8 %v5440
        %v5442 = vlaneseq
        %v5443 = vshrl.u32 %v5442, 7
        %v5444 = vsub.s32 %v5441, %v5443
        %v5445 = vrot.slane %v5431, %v5444
        %v5446 = vcombine.low %v5381, %v5397
        %v5447 = vcombine.high %v5381, %v5397
        %v5449 = vunpack.c.l.s4 1934713408
        %v5450 = vunpack.c.0.s8 %v5449
        %v5451 = vlaneseq
        %v5452 = vshrl.u32 %v5451, 7
        %v5453 = vsub.s32 %v5450, %v5452
        %v5454 = vrot.slane %v5446, %v5453
        %v5456 = vunpack.c.l.s4 1934713408
        %v5457 = vunpack.c.0.s8 %v5456
        %v5458 = vlaneseq
        %v5459 = vshrl.u32 %v5458, 7
        %v5460 = vsub.s32 %v5457, %v5459
        %v5461 = vrot.slane %v5447, %v5460
        %v5462 = vcombine.low %v5406, %v5438
        %v5463 = vcombine.high %v5406, %v5438
        %v5464 = vcombine.low %v5413, %v5445
        %v5465 = vcombine.high %v5413, %v5445
        %v5466 = vcombine.low %v5422, %v5454
        %v5467 = vcombine.high %v5422, %v5454
        %v5468 = vcombine.low %v5429, %v5461
        %v5469 = vcombine.high %v5429, %v5461
        %v5470 = vcombine.low %v5135, %v5139
        %v5471 = vcombine.high %v5135, %v5139
        %v5473 = vunpack.c.l.s4 1983009808
        %v5474 = vunpack.c.0.s8 %v5473
        %v5475 = vlaneseq
        %v5476 = vshrl.u32 %v5475, 7
        %v5477 = vsub.s32 %v5474, %v5476
        %v5478 = vrot.slane %v5470, %v5477
        %v5480 = vunpack.c.l.s4 1983009808
        %v5481 = vunpack.c.0.s8 %v5480
        %v5482 = vlaneseq
        %v5483 = vshrl.u32 %v5482, 7
        %v5484 = vsub.s32 %v5481, %v5483
        %v5485 = vrot.slane %v5471, %v5484
        %v5486 = vcombine.low %v5137, %v5141
        %v5487 = vcombine.high %v5137, %v5141
        %v5489 = vunpack.c.l.s4 1983009808
        %v5490 = vunpack.c.0.s8 %v5489
        %v5491 = vlaneseq
        %v5492 = vshrl.u32 %v5491, 7
        %v5493 = vsub.s32 %v5490, %v5492
        %v5494 = vrot.slane %v5486, %v5493
        %v5496 = vunpack.c.l.s4 1983009808
        %v5497 = vunpack.c.0.s8 %v5496
        %v5498 = vlaneseq
        %v5499 = vshrl.u32 %v5498, 7
        %v5500 = vsub.s32 %v5497, %v5499
        %v5501 = vrot.slane %v5487, %v5500
        %v5502 = vcombine.low %v5143, %v5147
        %v5503 = vcombine.high %v5143, %v5147
        %v5505 = vunpack.c.l.s4 1983009808
        %v5506 = vunpack.c.0.s8 %v5505
        %v5507 = vlaneseq
        %v5508 = vshrl.u32 %v5507, 7
        %v5509 = vsub.s32 %v5506, %v5508
        %v5510 = vrot.slane %v5502, %v5509
        %v5512 = vunpack.c.l.s4 1983009808
        %v5513 = vunpack.c.0.s8 %v5512
        %v5514 = vlaneseq
        %v5515 = vshrl.u32 %v5514, 7
        %v5516 = vsub.s32 %v5513, %v5515
        %v5517 = vrot.slane %v5503, %v5516
        %v5518 = vcombine.low %v5145, %v5149
        %v5519 = vcombine.high %v5145, %v5149
        %v5521 = vunpack.c.l.s4 1983009808
        %v5522 = vunpack.c.0.s8 %v5521
        %v5523 = vlaneseq
        %v5524 = vshrl.u32 %v5523, 7
        %v5525 = vsub.s32 %v5522, %v5524
        %v5526 = vrot.slane %v5518, %v5525
        %v5528 = vunpack.c.l.s4 1983009808
        %v5529 = vunpack.c.0.s8 %v5528
        %v5530 = vlaneseq
        %v5531 = vshrl.u32 %v5530, 7
        %v5532 = vsub.s32 %v5529, %v5531
        %v5533 = vrot.slane %v5519, %v5532
        %v5534 = vcombine.low %v5478, %v5494
        %v5535 = vcombine.high %v5478, %v5494
        %v5537 = vunpack.c.l.s4 1934713408
        %v5538 = vunpack.c.0.s8 %v5537
        %v5539 = vlaneseq
        %v5540 = vshrl.u32 %v5539, 7
        %v5541 = vsub.s32 %v5538, %v5540
        %v5542 = vrot.slane %v5534, %v5541
        %v5544 = vunpack.c.l.s4 1934713408
        %v5545 = vunpack.c.0.s8 %v5544
        %v5546 = vlaneseq
        %v5547 = vshrl.u32 %v5546, 7
        %v5548 = vsub.s32 %v5545, %v5547
        %v5549 = vrot.slane %v5535, %v5548
        %v5550 = vcombine.low %v5485, %v5501
        %v5551 = vcombine.high %v5485, %v5501
        %v5553 = vunpack.c.l.s4 1934713408
        %v5554 = vunpack.c.0.s8 %v5553
        %v5555 = vlaneseq
        %v5556 = vshrl.u32 %v5555, 7
        %v5557 = vsub.s32 %v5554, %v5556
        %v5558 = vrot.slane %v5550, %v5557
        %v5560 = vunpack.c.l.s4 1934713408
        %v5561 = vunpack.c.0.s8 %v5560
        %v5562 = vlaneseq
        %v5563 = vshrl.u32 %v5562, 7
        %v5564 = vsub.s32 %v5561, %v5563
        %v5565 = vrot.slane %v5551, %v5564
        %v5566 = vcombine.low %v5510, %v5526
        %v5567 = vcombine.high %v5510, %v5526
        %v5569 = vunpack.c.l.s4 1934713408
        %v5570 = vunpack.c.0.s8 %v5569
        %v5571 = vlaneseq
        %v5572 = vshrl.u32 %v5571, 7
        %v5573 = vsub.s32 %v5570, %v5572
        %v5574 = vrot.slane %v5566, %v5573
        %v5576 = vunpack.c.l.s4 1934713408
        %v5577 = vunpack.c.0.s8 %v5576
        %v5578 = vlaneseq
        %v5579 = vshrl.u32 %v5578, 7
        %v5580 = vsub.s32 %v5577, %v5579
        %v5581 = vrot.slane %v5567, %v5580
        %v5582 = vcombine.low %v5517, %v5533
        %v5583 = vcombine.high %v5517, %v5533
        %v5585 = vunpack.c.l.s4 1934713408
        %v5586 = vunpack.c.0.s8 %v5585
        %v5587 = vlaneseq
        %v5588 = vshrl.u32 %v5587, 7
        %v5589 = vsub.s32 %v5586, %v5588
        %v5590 = vrot.slane %v5582, %v5589
        %v5592 = vunpack.c.l.s4 1934713408
        %v5593 = vunpack.c.0.s8 %v5592
        %v5594 = vlaneseq
        %v5595 = vshrl.u32 %v5594, 7
        %v5596 = vsub.s32 %v5593, %v5595
        %v5597 = vrot.slane %v5583, %v5596
        %v5598 = vcombine.low %v5542, %v5574
        %v5599 = vcombine.high %v5542, %v5574
        %v5600 = vcombine.low %v5549, %v5581
        %v5601 = vcombine.high %v5549, %v5581
        %v5602 = vcombine.low %v5558, %v5590
        %v5603 = vcombine.high %v5558, %v5590
        %v5604 = vcombine.low %v5565, %v5597
        %v5605 = vcombine.high %v5565, %v5597
        %v5606 = vcombine.low %v5151, %v5155
        %v5607 = vcombine.high %v5151, %v5155
        %v5609 = vunpack.c.l.s4 1983009808
        %v5610 = vunpack.c.0.s8 %v5609
        %v5611 = vlaneseq
        %v5612 = vshrl.u32 %v5611, 7
        %v5613 = vsub.s32 %v5610, %v5612
        %v5614 = vrot.slane %v5606, %v5613
        %v5616 = vunpack.c.l.s4 1983009808
        %v5617 = vunpack.c.0.s8 %v5616
        %v5618 = vlaneseq
        %v5619 = vshrl.u32 %v5618, 7
        %v5620 = vsub.s32 %v5617, %v5619
        %v5621 = vrot.slane %v5607, %v5620
        %v5622 = vcombine.low %v5153, %v5157
        %v5623 = vcombine.high %v5153, %v5157
        %v5625 = vunpack.c.l.s4 1983009808
        %v5626 = vunpack.c.0.s8 %v5625
        %v5627 = vlaneseq
        %v5628 = vshrl.u32 %v5627, 7
        %v5629 = vsub.s32 %v5626, %v5628
        %v5630 = vrot.slane %v5622, %v5629
        %v5632 = vunpack.c.l.s4 1983009808
        %v5633 = vunpack.c.0.s8 %v5632
        %v5634 = vlaneseq
        %v5635 = vshrl.u32 %v5634, 7
        %v5636 = vsub.s32 %v5633, %v5635
        %v5637 = vrot.slane %v5623, %v5636
        %v5638 = vcombine.low %v5159, %v5163
        %v5639 = vcombine.high %v5159, %v5163
        %v5641 = vunpack.c.l.s4 1983009808
        %v5642 = vunpack.c.0.s8 %v5641
        %v5643 = vlaneseq
        %v5644 = vshrl.u32 %v5643, 7
        %v5645 = vsub.s32 %v5642, %v5644
        %v5646 = vrot.slane %v5638, %v5645
        %v5648 = vunpack.c.l.s4 1983009808
        %v5649 = vunpack.c.0.s8 %v5648
        %v5650 = vlaneseq
        %v5651 = vshrl.u32 %v5650, 7
        %v5652 = vsub.s32 %v5649, %v5651
        %v5653 = vrot.slane %v5639, %v5652
        %v5654 = vcombine.low %v5161, %v5165
        %v5655 = vcombine.high %v5161, %v5165
        %v5657 = vunpack.c.l.s4 1983009808
        %v5658 = vunpack.c.0.s8 %v5657
        %v5659 = vlaneseq
        %v5660 = vshrl.u32 %v5659, 7
        %v5661 = vsub.s32 %v5658, %v5660
        %v5662 = vrot.slane %v5654, %v5661
        %v5664 = vunpack.c.l.s4 1983009808
        %v5665 = vunpack.c.0.s8 %v5664
        %v5666 = vlaneseq
        %v5667 = vshrl.u32 %v5666, 7
        %v5668 = vsub.s32 %v5665, %v5667
        %v5669 = vrot.slane %v5655, %v5668
        %v5670 = vcombine.low %v5614, %v5630
        %v5671 = vcombine.high %v5614, %v5630
        %v5673 = vunpack.c.l.s4 1934713408
        %v5674 = vunpack.c.0.s8 %v5673
        %v5675 = vlaneseq
        %v5676 = vshrl.u32 %v5675, 7
        %v5677 = vsub.s32 %v5674, %v5676
        %v5678 = vrot.slane %v5670, %v5677
        %v5680 = vunpack.c.l.s4 1934713408
        %v5681 = vunpack.c.0.s8 %v5680
        %v5682 = vlaneseq
        %v5683 = vshrl.u32 %v5682, 7
        %v5684 = vsub.s32 %v5681, %v5683
        %v5685 = vrot.slane %v5671, %v5684
        %v5686 = vcombine.low %v5621, %v5637
        %v5687 = vcombine.high %v5621, %v5637
        %v5689 = vunpack.c.l.s4 1934713408
        %v5690 = vunpack.c.0.s8 %v5689
        %v5691 = vlaneseq
        %v5692 = vshrl.u32 %v5691, 7
        %v5693 = vsub.s32 %v5690, %v5692
        %v5694 = vrot.slane %v5686, %v5693
        %v5696 = vunpack.c.l.s4 1934713408
        %v5697 = vunpack.c.0.s8 %v5696
        %v5698 = vlaneseq
        %v5699 = vshrl.u32 %v5698, 7
        %v5700 = vsub.s32 %v5697, %v5699
        %v5701 = vrot.slane %v5687, %v5700
        %v5702 = vcombine.low %v5646, %v5662
        %v5703 = vcombine.high %v5646, %v5662
        %v5705 = vunpack.c.l.s4 1934713408
        %v5706 = vunpack.c.0.s8 %v5705
        %v5707 = vlaneseq
        %v5708 = vshrl.u32 %v5707, 7
        %v5709 = vsub.s32 %v5706, %v5708
        %v5710 = vrot.slane %v5702, %v5709
        %v5712 = vunpack.c.l.s4 1934713408
        %v5713 = vunpack.c.0.s8 %v5712
        %v5714 = vlaneseq
        %v5715 = vshrl.u32 %v5714, 7
        %v5716 = vsub.s32 %v5713, %v5715
        %v5717 = vrot.slane %v5703, %v5716
        %v5718 = vcombine.low %v5653, %v5669
        %v5719 = vcombine.high %v5653, %v5669
        %v5721 = vunpack.c.l.s4 1934713408
        %v5722 = vunpack.c.0.s8 %v5721
        %v5723 = vlaneseq
        %v5724 = vshrl.u32 %v5723, 7
        %v5725 = vsub.s32 %v5722, %v5724
        %v5726 = vrot.slane %v5718, %v5725
        %v5728 = vunpack.c.l.s4 1934713408
        %v5729 = vunpack.c.0.s8 %v5728
        %v5730 = vlaneseq
        %v5731 = vshrl.u32 %v5730, 7
        %v5732 = vsub.s32 %v5729, %v5731
        %v5733 = vrot.slane %v5719, %v5732
        %v5734 = vcombine.low %v5678, %v5710
        %v5735 = vcombine.high %v5678, %v5710
        %v5736 = vcombine.low %v5685, %v5717
        %v5737 = vcombine.high %v5685, %v5717
        %v5738 = vcombine.low %v5694, %v5726
        %v5739 = vcombine.high %v5694, %v5726
        %v5740 = vcombine.low %v5701, %v5733
        %v5741 = vcombine.high %v5701, %v5733
        %5746 = vrot.lane.b32.xlu0 %v5327, 16
        %v5747 = vpop.permute.xlu0 %5746
        %5748 = vrot.lane.b32.xlu0 %v5463, 16
        %v5749 = vpop.permute.xlu0 %5748
        %5750 = vrot.lane.b32.xlu0 %v5599, 16
        %v5751 = vpop.permute.xlu0 %5750
        %5752 = vrot.lane.b32.xlu0 %v5735, 16
        %v5753 = vpop.permute.xlu0 %5752
        %5762 = vrot.lane.b32.xlu0 %v5328, 32
        %v5763 = vpop.permute.xlu0 %5762
        %5764 = vrot.lane.b32.xlu0 %v5464, 32
        %v5765 = vpop.permute.xlu0 %5764
        %5766 = vrot.lane.b32.xlu0 %v5600, 32
        %v5767 = vpop.permute.xlu0 %5766
        %5768 = vrot.lane.b32.xlu0 %v5736, 32
        %v5769 = vpop.permute.xlu0 %5768
        %5778 = vrot.lane.b32.xlu0 %v5329, 48
        %v5779 = vpop.permute.xlu0 %5778
        %5780 = vrot.lane.b32.xlu0 %v5465, 48
        %v5781 = vpop.permute.xlu0 %5780
        %5782 = vrot.lane.b32.xlu0 %v5601, 48
        %v5783 = vpop.permute.xlu0 %5782
        %5784 = vrot.lane.b32.xlu0 %v5737, 48
        %v5785 = vpop.permute.xlu0 %5784
        %5794 = vrot.lane.b32.xlu0 %v5330, 64
        %v5795 = vpop.permute.xlu0 %5794
        %5796 = vrot.lane.b32.xlu0 %v5466, 64
        %v5797 = vpop.permute.xlu0 %5796
        %5798 = vrot.lane.b32.xlu0 %v5602, 64
        %v5799 = vpop.permute.xlu0 %5798
        %5800 = vrot.lane.b32.xlu0 %v5738, 64
        %v5801 = vpop.permute.xlu0 %5800
        %5810 = vrot.lane.b32.xlu0 %v5331, 80
        %v5811 = vpop.permute.xlu0 %5810
        %5812 = vrot.lane.b32.xlu0 %v5467, 80
        %v5813 = vpop.permute.xlu0 %5812
        %5814 = vrot.lane.b32.xlu0 %v5603, 80
        %v5815 = vpop.permute.xlu0 %5814
        %5816 = vrot.lane.b32.xlu0 %v5739, 80
        %v5817 = vpop.permute.xlu0 %5816
        %5826 = vrot.lane.b32.xlu0 %v5332, 96
        %v5827 = vpop.permute.xlu0 %5826
        %5828 = vrot.lane.b32.xlu0 %v5468, 96
        %v5829 = vpop.permute.xlu0 %5828
        %5830 = vrot.lane.b32.xlu0 %v5604, 96
        %v5831 = vpop.permute.xlu0 %5830
        %5832 = vrot.lane.b32.xlu0 %v5740, 96
        %v5833 = vpop.permute.xlu0 %5832
        %5842 = vrot.lane.b32.xlu0 %v5333, 112
        %v5843 = vpop.permute.xlu0 %5842
        %5844 = vrot.lane.b32.xlu0 %v5469, 112
        %v5845 = vpop.permute.xlu0 %5844
        %5846 = vrot.lane.b32.xlu0 %v5605, 112
        %v5847 = vpop.permute.xlu0 %5846
        %5848 = vrot.lane.b32.xlu0 %v5741, 112
        %v5849 = vpop.permute.xlu0 %5848
        %v5854 = vsel %vm2395, %v5326, %v5747
        %v5855 = vsel %vm2395, %v5462, %v5749
        %v5856 = vsel %vm2395, %v5598, %v5751
        %v5857 = vsel %vm2395, %v5734, %v5753
        %v5858 = vsel %vm2400, %v5854, %v5763
        %v5859 = vsel %vm2400, %v5855, %v5765
        %v5860 = vsel %vm2400, %v5856, %v5767
        %v5861 = vsel %vm2400, %v5857, %v5769
        %v5862 = vsel %vm2405, %v5858, %v5779
        %v5863 = vsel %vm2405, %v5859, %v5781
        %v5864 = vsel %vm2405, %v5860, %v5783
        %v5865 = vsel %vm2405, %v5861, %v5785
        %v5866 = vsel %vm2410, %v5862, %v5795
        %v5867 = vsel %vm2410, %v5863, %v5797
        %v5868 = vsel %vm2410, %v5864, %v5799
        %v5869 = vsel %vm2410, %v5865, %v5801
        %v5870 = vsel %vm2415, %v5866, %v5811
        %v5871 = vsel %vm2415, %v5867, %v5813
        %v5872 = vsel %vm2415, %v5868, %v5815
        %v5873 = vsel %vm2415, %v5869, %v5817
        %v5874 = vsel %vm2420, %v5870, %v5827
        %v5875 = vsel %vm2420, %v5871, %v5829
        %v5876 = vsel %vm2420, %v5872, %v5831
        %v5877 = vsel %vm2420, %v5873, %v5833
        %v5878 = vsel %vm2425, %v5874, %v5843
        %v5879 = vsel %vm2425, %v5875, %v5845
        %v5880 = vsel %vm2425, %v5876, %v5847
        %v5881 = vsel %vm2425, %v5877, %v5849
        %v5882 = vpack.c.bf16 %v5879, %v5878
        %v5883 = vpack.c.bf16 %v5881, %v5880
        %v5885 = vsel %vm2400, %v915, 0
        %v5888 = vsel %vm2400, %v916, 0
        %5890 = vmatprep.subr.bf16.mxu0 0
        %5891 = vmatpush1.bf16.msra.mxu0 0
        %5892 = vmatprep.subr.bf16.mxu0 0
        %5893 = vmatpush1.bf16.msra.mxu0 0
        %5894 = vmatprep.subr.bf16.mxu0 0
        %5895 = vmatpush1.bf16.msra.mxu0 0
        %5896 = vmatprep.subr.bf16.mxu0 0
        %5897 = vmatpush1.bf16.msra.mxu0 0
        %5898 = vmatprep.subr.bf16.mxu0 0
        %5899 = vmatpush1.bf16.msra.mxu0 0
        %5900 = vmatprep.subr.bf16.mxu0 0
        %5901 = vmatpush1.bf16.msra.mxu0 0
        %5902 = vmatprep.subr.bf16.mxu0 0
        %5903 = vmatpush1.bf16.msra.mxu0 %v5883
        %5904 = vmatprep.subr.bf16.mxu0 0
        %5905 = vmatpush1.bf16.msra.mxu0 %v5882
        %5906 = vmatprep.subr.bf16.mxu0 0
        %5907 = vmatpush2.bf16.msra.mxu0 0
        %5908 = vmatprep.subr.bf16.mxu0 0
        %5909 = vmatpush2.bf16.msra.mxu0 0
        %5910 = vmatprep.subr.bf16.mxu0 0
        %5911 = vmatpush2.bf16.msra.mxu0 0
        %5912 = vmatprep.subr.bf16.mxu0 0
        %5913 = vmatpush2.bf16.msra.mxu0 0
        %5914 = vmatprep.subr.bf16.mxu0 0
        %5915 = vmatpush2.bf16.msra.mxu0 0
        %5916 = vmatprep.subr.bf16.mxu0 0
        %5917 = vmatpush2.bf16.msra.mxu0 0
        %5918 = vmatprep.subr.bf16.mxu0 0
        %5919 = vmatpush2.bf16.msra.mxu0 0
        %5920 = vmatprep.subr.bf16.mxu0 0
        %5921 = vmatpush2.bf16.msra.mxu0 0
        %5922 = vmatprep.mubr.bf16.mxu0 0
        %5923 = vmatmul.mubr.bf16.gmra.mxu0 %v5885
        %v5924 = vpop.f32.mrf.mxu0
        %v5925 = vadd.f32 0.0, %v5924
        %v5926 = vpop.f32.mrf.mxu0
        %v5927 = vpop.f32.mrf.mxu0
        %v5928 = vadd.f32 0.0, %v5927
        %v5929 = vpop.f32.mrf.mxu0
        %5930 = vmatprep.mubr.bf16.mxu0 0
        %5931 = vmatmul.mubr.bf16.gmra.mxu0 %v5888
        %v5932 = vpop.f32.mrf.mxu0
        %v5933 = vadd.f32 0.0, %v5932
        %v5934 = vpop.f32.mrf.mxu0
        %v5935 = vpop.f32.mrf.mxu0
        %v5936 = vadd.f32 0.0, %v5935
        %v5937 = vpop.f32.mrf.mxu0
        %5938 = vdwg.mxu0
        %v5939 = vadd.f32 %v5034, %v5925
        %v5940 = vadd.f32 %v5035, %v5928
        %v5941 = vadd.f32 %v5036, %v5933
        %v5942 = vadd.f32 %v5037, %v5936
        %v5943 = vld [vmem:[#allocation2 + $0x1] sm:$0xff]
        %v5944 = vld [vmem:[#allocation2 + $0x11] sm:$0xff]
        %v5945 = vld [vmem:[#allocation2 + $0x21] sm:$0xff]
        %v5946 = vld [vmem:[#allocation2 + $0x31] sm:$0xff]
        %v5947 = vld [vmem:[#allocation2 + $0x41] sm:$0xff]
        %v5948 = vld [vmem:[#allocation2 + $0x51] sm:$0xff]
        %v5949 = vld [vmem:[#allocation2 + $0x61] sm:$0xff]
        %v5950 = vld [vmem:[#allocation2 + $0x71] sm:$0xff]
        %v5951 = vld [vmem:[#allocation2 + $0x81] sm:$0xff]
        %v5952 = vld [vmem:[#allocation2 + $0x91] sm:$0xff]
        %v5953 = vld [vmem:[#allocation2 + $0xa1] sm:$0xff]
        %v5954 = vld [vmem:[#allocation2 + $0xb1] sm:$0xff]
        %v5955 = vld [vmem:[#allocation2 + $0xc1] sm:$0xff]
        %v5956 = vld [vmem:[#allocation2 + $0xd1] sm:$0xff]
        %v5957 = vld [vmem:[#allocation2 + $0xe1] sm:$0xff]
        %v5958 = vld [vmem:[#allocation2 + $0xf1] sm:$0xff]
        %v5959 = vld [vmem:[#allocation2 + $0x101] sm:$0xff]
        %v5960 = vld [vmem:[#allocation2 + $0x111] sm:$0xff]
        %v5961 = vld [vmem:[#allocation2 + $0x121] sm:$0xff]
        %v5962 = vld [vmem:[#allocation2 + $0x131] sm:$0xff]
        %v5963 = vld [vmem:[#allocation2 + $0x141] sm:$0xff]
        %v5964 = vld [vmem:[#allocation2 + $0x151] sm:$0xff]
        %v5965 = vld [vmem:[#allocation2 + $0x161] sm:$0xff]
        %v5966 = vld [vmem:[#allocation2 + $0x171] sm:$0xff]
        %v5967 = vld [vmem:[#allocation2 + $0x181] sm:$0xff]
        %v5968 = vld [vmem:[#allocation2 + $0x191] sm:$0xff]
        %v5969 = vld [vmem:[#allocation2 + $0x1a1] sm:$0xff]
        %v5970 = vld [vmem:[#allocation2 + $0x1b1] sm:$0xff]
        %v5971 = vld [vmem:[#allocation2 + $0x1c1] sm:$0xff]
        %v5972 = vld [vmem:[#allocation2 + $0x1d1] sm:$0xff]
        %v5973 = vld [vmem:[#allocation2 + $0x1e1] sm:$0xff]
        %v5974 = vld [vmem:[#allocation2 + $0x1f1] sm:$0xff]
        %6007 = vrot.lane.b32.xlu0 %v5943, 126
        %v6008 = vpop.permute.xlu0 %6007
        %6009 = vrot.lane.b32.xlu0 %v5944, 126
        %v6010 = vpop.permute.xlu0 %6009
        %6011 = vrot.lane.b32.xlu0 %v5945, 126
        %v6012 = vpop.permute.xlu0 %6011
        %6013 = vrot.lane.b32.xlu0 %v5946, 126
        %v6014 = vpop.permute.xlu0 %6013
        %6015 = vrot.lane.b32.xlu0 %v5947, 126
        %v6016 = vpop.permute.xlu0 %6015
        %6017 = vrot.lane.b32.xlu0 %v5948, 126
        %v6018 = vpop.permute.xlu0 %6017
        %6019 = vrot.lane.b32.xlu0 %v5949, 126
        %v6020 = vpop.permute.xlu0 %6019
        %6021 = vrot.lane.b32.xlu0 %v5950, 126
        %v6022 = vpop.permute.xlu0 %6021
        %6023 = vrot.lane.b32.xlu0 %v5951, 126
        %v6024 = vpop.permute.xlu0 %6023
        %6025 = vrot.lane.b32.xlu0 %v5952, 126
        %v6026 = vpop.permute.xlu0 %6025
        %6027 = vrot.lane.b32.xlu0 %v5953, 126
        %v6028 = vpop.permute.xlu0 %6027
        %6029 = vrot.lane.b32.xlu0 %v5954, 126
        %v6030 = vpop.permute.xlu0 %6029
        %6031 = vrot.lane.b32.xlu0 %v5955, 126
        %v6032 = vpop.permute.xlu0 %6031
        %6033 = vrot.lane.b32.xlu0 %v5956, 126
        %v6034 = vpop.permute.xlu0 %6033
        %6035 = vrot.lane.b32.xlu0 %v5957, 126
        %v6036 = vpop.permute.xlu0 %6035
        %6037 = vrot.lane.b32.xlu0 %v5958, 126
        %v6038 = vpop.permute.xlu0 %6037
        %6039 = vrot.lane.b32.xlu0 %v5959, 126
        %v6040 = vpop.permute.xlu0 %6039
        %6041 = vrot.lane.b32.xlu0 %v5960, 126
        %v6042 = vpop.permute.xlu0 %6041
        %6043 = vrot.lane.b32.xlu0 %v5961, 126
        %v6044 = vpop.permute.xlu0 %6043
        %6045 = vrot.lane.b32.xlu0 %v5962, 126
        %v6046 = vpop.permute.xlu0 %6045
        %6047 = vrot.lane.b32.xlu0 %v5963, 126
        %v6048 = vpop.permute.xlu0 %6047
        %6049 = vrot.lane.b32.xlu0 %v5964, 126
        %v6050 = vpop.permute.xlu0 %6049
        %6051 = vrot.lane.b32.xlu0 %v5965, 126
        %v6052 = vpop.permute.xlu0 %6051
        %6053 = vrot.lane.b32.xlu0 %v5966, 126
        %v6054 = vpop.permute.xlu0 %6053
        %6055 = vrot.lane.b32.xlu0 %v5967, 126
        %v6056 = vpop.permute.xlu0 %6055
        %6057 = vrot.lane.b32.xlu0 %v5968, 126
        %v6058 = vpop.permute.xlu0 %6057
        %6059 = vrot.lane.b32.xlu0 %v5969, 126
        %v6060 = vpop.permute.xlu0 %6059
        %6061 = vrot.lane.b32.xlu0 %v5970, 126
        %v6062 = vpop.permute.xlu0 %6061
        %6063 = vrot.lane.b32.xlu0 %v5971, 126
        %v6064 = vpop.permute.xlu0 %6063
        %6065 = vrot.lane.b32.xlu0 %v5972, 126
        %v6066 = vpop.permute.xlu0 %6065
        %6067 = vrot.lane.b32.xlu0 %v5973, 126
        %v6068 = vpop.permute.xlu0 %6067
        %6069 = vrot.lane.b32.xlu0 %v5974, 126
        %v6070 = vpop.permute.xlu0 %6069
        %v6103 = vcombine.low %v6008, %v6012
        %v6104 = vcombine.high %v6008, %v6012
        %v6106 = vunpack.c.l.s4 1983009808
        %v6107 = vunpack.c.0.s8 %v6106
        %v6108 = vlaneseq
        %v6109 = vshrl.u32 %v6108, 7
        %v6110 = vsub.s32 %v6107, %v6109
        %v6111 = vrot.slane %v6103, %v6110
        %v6113 = vunpack.c.l.s4 1983009808
        %v6114 = vunpack.c.0.s8 %v6113
        %v6115 = vlaneseq
        %v6116 = vshrl.u32 %v6115, 7
        %v6117 = vsub.s32 %v6114, %v6116
        %v6118 = vrot.slane %v6104, %v6117
        %v6119 = vcombine.low %v6010, %v6014
        %v6120 = vcombine.high %v6010, %v6014
        %v6122 = vunpack.c.l.s4 1983009808
        %v6123 = vunpack.c.0.s8 %v6122
        %v6124 = vlaneseq
        %v6125 = vshrl.u32 %v6124, 7
        %v6126 = vsub.s32 %v6123, %v6125
        %v6127 = vrot.slane %v6119, %v6126
        %v6129 = vunpack.c.l.s4 1983009808
        %v6130 = vunpack.c.0.s8 %v6129
        %v6131 = vlaneseq
        %v6132 = vshrl.u32 %v6131, 7
        %v6133 = vsub.s32 %v6130, %v6132
        %v6134 = vrot.slane %v6120, %v6133
        %v6135 = vcombine.low %v6016, %v6020
        %v6136 = vcombine.high %v6016, %v6020
        %v6138 = vunpack.c.l.s4 1983009808
        %v6139 = vunpack.c.0.s8 %v6138
        %v6140 = vlaneseq
        %v6141 = vshrl.u32 %v6140, 7
        %v6142 = vsub.s32 %v6139, %v6141
        %v6143 = vrot.slane %v6135, %v6142
        %v6145 = vunpack.c.l.s4 1983009808
        %v6146 = vunpack.c.0.s8 %v6145
        %v6147 = vlaneseq
        %v6148 = vshrl.u32 %v6147, 7
        %v6149 = vsub.s32 %v6146, %v6148
        %v6150 = vrot.slane %v6136, %v6149
        %v6151 = vcombine.low %v6018, %v6022
        %v6152 = vcombine.high %v6018, %v6022
        %v6154 = vunpack.c.l.s4 1983009808
        %v6155 = vunpack.c.0.s8 %v6154
        %v6156 = vlaneseq
        %v6157 = vshrl.u32 %v6156, 7
        %v6158 = vsub.s32 %v6155, %v6157
        %v6159 = vrot.slane %v6151, %v6158
        %v6161 = vunpack.c.l.s4 1983009808
        %v6162 = vunpack.c.0.s8 %v6161
        %v6163 = vlaneseq
        %v6164 = vshrl.u32 %v6163, 7
        %v6165 = vsub.s32 %v6162, %v6164
        %v6166 = vrot.slane %v6152, %v6165
        %v6167 = vcombine.low %v6111, %v6127
        %v6168 = vcombine.high %v6111, %v6127
        %v6170 = vunpack.c.l.s4 1934713408
        %v6171 = vunpack.c.0.s8 %v6170
        %v6172 = vlaneseq
        %v6173 = vshrl.u32 %v6172, 7
        %v6174 = vsub.s32 %v6171, %v6173
        %v6175 = vrot.slane %v6167, %v6174
        %v6177 = vunpack.c.l.s4 1934713408
        %v6178 = vunpack.c.0.s8 %v6177
        %v6179 = vlaneseq
        %v6180 = vshrl.u32 %v6179, 7
        %v6181 = vsub.s32 %v6178, %v6180
        %v6182 = vrot.slane %v6168, %v6181
        %v6183 = vcombine.low %v6118, %v6134
        %v6184 = vcombine.high %v6118, %v6134
        %v6186 = vunpack.c.l.s4 1934713408
        %v6187 = vunpack.c.0.s8 %v6186
        %v6188 = vlaneseq
        %v6189 = vshrl.u32 %v6188, 7
        %v6190 = vsub.s32 %v6187, %v6189
        %v6191 = vrot.slane %v6183, %v6190
        %v6193 = vunpack.c.l.s4 1934713408
        %v6194 = vunpack.c.0.s8 %v6193
        %v6195 = vlaneseq
        %v6196 = vshrl.u32 %v6195, 7
        %v6197 = vsub.s32 %v6194, %v6196
        %v6198 = vrot.slane %v6184, %v6197
        %v6199 = vcombine.low %v6143, %v6159
        %v6200 = vcombine.high %v6143, %v6159
        %v6202 = vunpack.c.l.s4 1934713408
        %v6203 = vunpack.c.0.s8 %v6202
        %v6204 = vlaneseq
        %v6205 = vshrl.u32 %v6204, 7
        %v6206 = vsub.s32 %v6203, %v6205
        %v6207 = vrot.slane %v6199, %v6206
        %v6209 = vunpack.c.l.s4 1934713408
        %v6210 = vunpack.c.0.s8 %v6209
        %v6211 = vlaneseq
        %v6212 = vshrl.u32 %v6211, 7
        %v6213 = vsub.s32 %v6210, %v6212
        %v6214 = vrot.slane %v6200, %v6213
        %v6215 = vcombine.low %v6150, %v6166
        %v6216 = vcombine.high %v6150, %v6166
        %v6218 = vunpack.c.l.s4 1934713408
        %v6219 = vunpack.c.0.s8 %v6218
        %v6220 = vlaneseq
        %v6221 = vshrl.u32 %v6220, 7
        %v6222 = vsub.s32 %v6219, %v6221
        %v6223 = vrot.slane %v6215, %v6222
        %v6225 = vunpack.c.l.s4 1934713408
        %v6226 = vunpack.c.0.s8 %v6225
        %v6227 = vlaneseq
        %v6228 = vshrl.u32 %v6227, 7
        %v6229 = vsub.s32 %v6226, %v6228
        %v6230 = vrot.slane %v6216, %v6229
        %v6231 = vcombine.low %v6175, %v6207
        %v6232 = vcombine.high %v6175, %v6207
        %v6233 = vcombine.low %v6182, %v6214
        %v6234 = vcombine.high %v6182, %v6214
        %v6235 = vcombine.low %v6191, %v6223
        %v6236 = vcombine.high %v6191, %v6223
        %v6237 = vcombine.low %v6198, %v6230
        %v6238 = vcombine.high %v6198, %v6230
        %v6239 = vcombine.low %v6024, %v6028
        %v6240 = vcombine.high %v6024, %v6028
        %v6242 = vunpack.c.l.s4 1983009808
        %v6243 = vunpack.c.0.s8 %v6242
        %v6244 = vlaneseq
        %v6245 = vshrl.u32 %v6244, 7
        %v6246 = vsub.s32 %v6243, %v6245
        %v6247 = vrot.slane %v6239, %v6246
        %v6249 = vunpack.c.l.s4 1983009808
        %v6250 = vunpack.c.0.s8 %v6249
        %v6251 = vlaneseq
        %v6252 = vshrl.u32 %v6251, 7
        %v6253 = vsub.s32 %v6250, %v6252
        %v6254 = vrot.slane %v6240, %v6253
        %v6255 = vcombine.low %v6026, %v6030
        %v6256 = vcombine.high %v6026, %v6030
        %v6258 = vunpack.c.l.s4 1983009808
        %v6259 = vunpack.c.0.s8 %v6258
        %v6260 = vlaneseq
        %v6261 = vshrl.u32 %v6260, 7
        %v6262 = vsub.s32 %v6259, %v6261
        %v6263 = vrot.slane %v6255, %v6262
        %v6265 = vunpack.c.l.s4 1983009808
        %v6266 = vunpack.c.0.s8 %v6265
        %v6267 = vlaneseq
        %v6268 = vshrl.u32 %v6267, 7
        %v6269 = vsub.s32 %v6266, %v6268
        %v6270 = vrot.slane %v6256, %v6269
        %v6271 = vcombine.low %v6032, %v6036
        %v6272 = vcombine.high %v6032, %v6036
        %v6274 = vunpack.c.l.s4 1983009808
        %v6275 = vunpack.c.0.s8 %v6274
        %v6276 = vlaneseq
        %v6277 = vshrl.u32 %v6276, 7
        %v6278 = vsub.s32 %v6275, %v6277
        %v6279 = vrot.slane %v6271, %v6278
        %v6281 = vunpack.c.l.s4 1983009808
        %v6282 = vunpack.c.0.s8 %v6281
        %v6283 = vlaneseq
        %v6284 = vshrl.u32 %v6283, 7
        %v6285 = vsub.s32 %v6282, %v6284
        %v6286 = vrot.slane %v6272, %v6285
        %v6287 = vcombine.low %v6034, %v6038
        %v6288 = vcombine.high %v6034, %v6038
        %v6290 = vunpack.c.l.s4 1983009808
        %v6291 = vunpack.c.0.s8 %v6290
        %v6292 = vlaneseq
        %v6293 = vshrl.u32 %v6292, 7
        %v6294 = vsub.s32 %v6291, %v6293
        %v6295 = vrot.slane %v6287, %v6294
        %v6297 = vunpack.c.l.s4 1983009808
        %v6298 = vunpack.c.0.s8 %v6297
        %v6299 = vlaneseq
        %v6300 = vshrl.u32 %v6299, 7
        %v6301 = vsub.s32 %v6298, %v6300
        %v6302 = vrot.slane %v6288, %v6301
        %v6303 = vcombine.low %v6247, %v6263
        %v6304 = vcombine.high %v6247, %v6263
        %v6306 = vunpack.c.l.s4 1934713408
        %v6307 = vunpack.c.0.s8 %v6306
        %v6308 = vlaneseq
        %v6309 = vshrl.u32 %v6308, 7
        %v6310 = vsub.s32 %v6307, %v6309
        %v6311 = vrot.slane %v6303, %v6310
        %v6313 = vunpack.c.l.s4 1934713408
        %v6314 = vunpack.c.0.s8 %v6313
        %v6315 = vlaneseq
        %v6316 = vshrl.u32 %v6315, 7
        %v6317 = vsub.s32 %v6314, %v6316
        %v6318 = vrot.slane %v6304, %v6317
        %v6319 = vcombine.low %v6254, %v6270
        %v6320 = vcombine.high %v6254, %v6270
        %v6322 = vunpack.c.l.s4 1934713408
        %v6323 = vunpack.c.0.s8 %v6322
        %v6324 = vlaneseq
        %v6325 = vshrl.u32 %v6324, 7
        %v6326 = vsub.s32 %v6323, %v6325
        %v6327 = vrot.slane %v6319, %v6326
        %v6329 = vunpack.c.l.s4 1934713408
        %v6330 = vunpack.c.0.s8 %v6329
        %v6331 = vlaneseq
        %v6332 = vshrl.u32 %v6331, 7
        %v6333 = vsub.s32 %v6330, %v6332
        %v6334 = vrot.slane %v6320, %v6333
        %v6335 = vcombine.low %v6279, %v6295
        %v6336 = vcombine.high %v6279, %v6295
        %v6338 = vunpack.c.l.s4 1934713408
        %v6339 = vunpack.c.0.s8 %v6338
        %v6340 = vlaneseq
        %v6341 = vshrl.u32 %v6340, 7
        %v6342 = vsub.s32 %v6339, %v6341
        %v6343 = vrot.slane %v6335, %v6342
        %v6345 = vunpack.c.l.s4 1934713408
        %v6346 = vunpack.c.0.s8 %v6345
        %v6347 = vlaneseq
        %v6348 = vshrl.u32 %v6347, 7
        %v6349 = vsub.s32 %v6346, %v6348
        %v6350 = vrot.slane %v6336, %v6349
        %v6351 = vcombine.low %v6286, %v6302
        %v6352 = vcombine.high %v6286, %v6302
        %v6354 = vunpack.c.l.s4 1934713408
        %v6355 = vunpack.c.0.s8 %v6354
        %v6356 = vlaneseq
        %v6357 = vshrl.u32 %v6356, 7
        %v6358 = vsub.s32 %v6355, %v6357
        %v6359 = vrot.slane %v6351, %v6358
        %v6361 = vunpack.c.l.s4 1934713408
        %v6362 = vunpack.c.0.s8 %v6361
        %v6363 = vlaneseq
        %v6364 = vshrl.u32 %v6363, 7
        %v6365 = vsub.s32 %v6362, %v6364
        %v6366 = vrot.slane %v6352, %v6365
        %v6367 = vcombine.low %v6311, %v6343
        %v6368 = vcombine.high %v6311, %v6343
        %v6369 = vcombine.low %v6318, %v6350
        %v6370 = vcombine.high %v6318, %v6350
        %v6371 = vcombine.low %v6327, %v6359
        %v6372 = vcombine.high %v6327, %v6359
        %v6373 = vcombine.low %v6334, %v6366
        %v6374 = vcombine.high %v6334, %v6366
        %v6375 = vcombine.low %v6040, %v6044
        %v6376 = vcombine.high %v6040, %v6044
        %v6378 = vunpack.c.l.s4 1983009808
        %v6379 = vunpack.c.0.s8 %v6378
        %v6380 = vlaneseq
        %v6381 = vshrl.u32 %v6380, 7
        %v6382 = vsub.s32 %v6379, %v6381
        %v6383 = vrot.slane %v6375, %v6382
        %v6385 = vunpack.c.l.s4 1983009808
        %v6386 = vunpack.c.0.s8 %v6385
        %v6387 = vlaneseq
        %v6388 = vshrl.u32 %v6387, 7
        %v6389 = vsub.s32 %v6386, %v6388
        %v6390 = vrot.slane %v6376, %v6389
        %v6391 = vcombine.low %v6042, %v6046
        %v6392 = vcombine.high %v6042, %v6046
        %v6394 = vunpack.c.l.s4 1983009808
        %v6395 = vunpack.c.0.s8 %v6394
        %v6396 = vlaneseq
        %v6397 = vshrl.u32 %v6396, 7
        %v6398 = vsub.s32 %v6395, %v6397
        %v6399 = vrot.slane %v6391, %v6398
        %v6401 = vunpack.c.l.s4 1983009808
        %v6402 = vunpack.c.0.s8 %v6401
        %v6403 = vlaneseq
        %v6404 = vshrl.u32 %v6403, 7
        %v6405 = vsub.s32 %v6402, %v6404
        %v6406 = vrot.slane %v6392, %v6405
        %v6407 = vcombine.low %v6048, %v6052
        %v6408 = vcombine.high %v6048, %v6052
        %v6410 = vunpack.c.l.s4 1983009808
        %v6411 = vunpack.c.0.s8 %v6410
        %v6412 = vlaneseq
        %v6413 = vshrl.u32 %v6412, 7
        %v6414 = vsub.s32 %v6411, %v6413
        %v6415 = vrot.slane %v6407, %v6414
        %v6417 = vunpack.c.l.s4 1983009808
        %v6418 = vunpack.c.0.s8 %v6417
        %v6419 = vlaneseq
        %v6420 = vshrl.u32 %v6419, 7
        %v6421 = vsub.s32 %v6418, %v6420
        %v6422 = vrot.slane %v6408, %v6421
        %v6423 = vcombine.low %v6050, %v6054
        %v6424 = vcombine.high %v6050, %v6054
        %v6426 = vunpack.c.l.s4 1983009808
        %v6427 = vunpack.c.0.s8 %v6426
        %v6428 = vlaneseq
        %v6429 = vshrl.u32 %v6428, 7
        %v6430 = vsub.s32 %v6427, %v6429
        %v6431 = vrot.slane %v6423, %v6430
        %v6433 = vunpack.c.l.s4 1983009808
        %v6434 = vunpack.c.0.s8 %v6433
        %v6435 = vlaneseq
        %v6436 = vshrl.u32 %v6435, 7
        %v6437 = vsub.s32 %v6434, %v6436
        %v6438 = vrot.slane %v6424, %v6437
        %v6439 = vcombine.low %v6383, %v6399
        %v6440 = vcombine.high %v6383, %v6399
        %v6442 = vunpack.c.l.s4 1934713408
        %v6443 = vunpack.c.0.s8 %v6442
        %v6444 = vlaneseq
        %v6445 = vshrl.u32 %v6444, 7
        %v6446 = vsub.s32 %v6443, %v6445
        %v6447 = vrot.slane %v6439, %v6446
        %v6449 = vunpack.c.l.s4 1934713408
        %v6450 = vunpack.c.0.s8 %v6449
        %v6451 = vlaneseq
        %v6452 = vshrl.u32 %v6451, 7
        %v6453 = vsub.s32 %v6450, %v6452
        %v6454 = vrot.slane %v6440, %v6453
        %v6455 = vcombine.low %v6390, %v6406
        %v6456 = vcombine.high %v6390, %v6406
        %v6458 = vunpack.c.l.s4 1934713408
        %v6459 = vunpack.c.0.s8 %v6458
        %v6460 = vlaneseq
        %v6461 = vshrl.u32 %v6460, 7
        %v6462 = vsub.s32 %v6459, %v6461
        %v6463 = vrot.slane %v6455, %v6462
        %v6465 = vunpack.c.l.s4 1934713408
        %v6466 = vunpack.c.0.s8 %v6465
        %v6467 = vlaneseq
        %v6468 = vshrl.u32 %v6467, 7
        %v6469 = vsub.s32 %v6466, %v6468
        %v6470 = vrot.slane %v6456, %v6469
        %v6471 = vcombine.low %v6415, %v6431
        %v6472 = vcombine.high %v6415, %v6431
        %v6474 = vunpack.c.l.s4 1934713408
        %v6475 = vunpack.c.0.s8 %v6474
        %v6476 = vlaneseq
        %v6477 = vshrl.u32 %v6476, 7
        %v6478 = vsub.s32 %v6475, %v6477
        %v6479 = vrot.slane %v6471, %v6478
        %v6481 = vunpack.c.l.s4 1934713408
        %v6482 = vunpack.c.0.s8 %v6481
        %v6483 = vlaneseq
        %v6484 = vshrl.u32 %v6483, 7
        %v6485 = vsub.s32 %v6482, %v6484
        %v6486 = vrot.slane %v6472, %v6485
        %v6487 = vcombine.low %v6422, %v6438
        %v6488 = vcombine.high %v6422, %v6438
        %v6490 = vunpack.c.l.s4 1934713408
        %v6491 = vunpack.c.0.s8 %v6490
        %v6492 = vlaneseq
        %v6493 = vshrl.u32 %v6492, 7
        %v6494 = vsub.s32 %v6491, %v6493
        %v6495 = vrot.slane %v6487, %v6494
        %v6497 = vunpack.c.l.s4 1934713408
        %v6498 = vunpack.c.0.s8 %v6497
        %v6499 = vlaneseq
        %v6500 = vshrl.u32 %v6499, 7
        %v6501 = vsub.s32 %v6498, %v6500
        %v6502 = vrot.slane %v6488, %v6501
        %v6503 = vcombine.low %v6447, %v6479
        %v6504 = vcombine.high %v6447, %v6479
        %v6505 = vcombine.low %v6454, %v6486
        %v6506 = vcombine.high %v6454, %v6486
        %v6507 = vcombine.low %v6463, %v6495
        %v6508 = vcombine.high %v6463, %v6495
        %v6509 = vcombine.low %v6470, %v6502
        %v6510 = vcombine.high %v6470, %v6502
        %v6511 = vcombine.low %v6056, %v6060
        %v6512 = vcombine.high %v6056, %v6060
        %v6514 = vunpack.c.l.s4 1983009808
        %v6515 = vunpack.c.0.s8 %v6514
        %v6516 = vlaneseq
        %v6517 = vshrl.u32 %v6516, 7
        %v6518 = vsub.s32 %v6515, %v6517
        %v6519 = vrot.slane %v6511, %v6518
        %v6521 = vunpack.c.l.s4 1983009808
        %v6522 = vunpack.c.0.s8 %v6521
        %v6523 = vlaneseq
        %v6524 = vshrl.u32 %v6523, 7
        %v6525 = vsub.s32 %v6522, %v6524
        %v6526 = vrot.slane %v6512, %v6525
        %v6527 = vcombine.low %v6058, %v6062
        %v6528 = vcombine.high %v6058, %v6062
        %v6530 = vunpack.c.l.s4 1983009808
        %v6531 = vunpack.c.0.s8 %v6530
        %v6532 = vlaneseq
        %v6533 = vshrl.u32 %v6532, 7
        %v6534 = vsub.s32 %v6531, %v6533
        %v6535 = vrot.slane %v6527, %v6534
        %v6537 = vunpack.c.l.s4 1983009808
        %v6538 = vunpack.c.0.s8 %v6537
        %v6539 = vlaneseq
        %v6540 = vshrl.u32 %v6539, 7
        %v6541 = vsub.s32 %v6538, %v6540
        %v6542 = vrot.slane %v6528, %v6541
        %v6543 = vcombine.low %v6064, %v6068
        %v6544 = vcombine.high %v6064, %v6068
        %v6546 = vunpack.c.l.s4 1983009808
        %v6547 = vunpack.c.0.s8 %v6546
        %v6548 = vlaneseq
        %v6549 = vshrl.u32 %v6548, 7
        %v6550 = vsub.s32 %v6547, %v6549
        %v6551 = vrot.slane %v6543, %v6550
        %v6553 = vunpack.c.l.s4 1983009808
        %v6554 = vunpack.c.0.s8 %v6553
        %v6555 = vlaneseq
        %v6556 = vshrl.u32 %v6555, 7
        %v6557 = vsub.s32 %v6554, %v6556
        %v6558 = vrot.slane %v6544, %v6557
        %v6559 = vcombine.low %v6066, %v6070
        %v6560 = vcombine.high %v6066, %v6070
        %v6562 = vunpack.c.l.s4 1983009808
        %v6563 = vunpack.c.0.s8 %v6562
        %v6564 = vlaneseq
        %v6565 = vshrl.u32 %v6564, 7
        %v6566 = vsub.s32 %v6563, %v6565
        %v6567 = vrot.slane %v6559, %v6566
        %v6569 = vunpack.c.l.s4 1983009808
        %v6570 = vunpack.c.0.s8 %v6569
        %v6571 = vlaneseq
        %v6572 = vshrl.u32 %v6571, 7
        %v6573 = vsub.s32 %v6570, %v6572
        %v6574 = vrot.slane %v6560, %v6573
        %v6575 = vcombine.low %v6519, %v6535
        %v6576 = vcombine.high %v6519, %v6535
        %v6578 = vunpack.c.l.s4 1934713408
        %v6579 = vunpack.c.0.s8 %v6578
        %v6580 = vlaneseq
        %v6581 = vshrl.u32 %v6580, 7
        %v6582 = vsub.s32 %v6579, %v6581
        %v6583 = vrot.slane %v6575, %v6582
        %v6585 = vunpack.c.l.s4 1934713408
        %v6586 = vunpack.c.0.s8 %v6585
        %v6587 = vlaneseq
        %v6588 = vshrl.u32 %v6587, 7
        %v6589 = vsub.s32 %v6586, %v6588
        %v6590 = vrot.slane %v6576, %v6589
        %v6591 = vcombine.low %v6526, %v6542
        %v6592 = vcombine.high %v6526, %v6542
        %v6594 = vunpack.c.l.s4 1934713408
        %v6595 = vunpack.c.0.s8 %v6594
        %v6596 = vlaneseq
        %v6597 = vshrl.u32 %v6596, 7
        %v6598 = vsub.s32 %v6595, %v6597
        %v6599 = vrot.slane %v6591, %v6598
        %v6601 = vunpack.c.l.s4 1934713408
        %v6602 = vunpack.c.0.s8 %v6601
        %v6603 = vlaneseq
        %v6604 = vshrl.u32 %v6603, 7
        %v6605 = vsub.s32 %v6602, %v6604
        %v6606 = vrot.slane %v6592, %v6605
        %v6607 = vcombine.low %v6551, %v6567
        %v6608 = vcombine.high %v6551, %v6567
        %v6610 = vunpack.c.l.s4 1934713408
        %v6611 = vunpack.c.0.s8 %v6610
        %v6612 = vlaneseq
        %v6613 = vshrl.u32 %v6612, 7
        %v6614 = vsub.s32 %v6611, %v6613
        %v6615 = vrot.slane %v6607, %v6614
        %v6617 = vunpack.c.l.s4 1934713408
        %v6618 = vunpack.c.0.s8 %v6617
        %v6619 = vlaneseq
        %v6620 = vshrl.u32 %v6619, 7
        %v6621 = vsub.s32 %v6618, %v6620
        %v6622 = vrot.slane %v6608, %v6621
        %v6623 = vcombine.low %v6558, %v6574
        %v6624 = vcombine.high %v6558, %v6574
        %v6626 = vunpack.c.l.s4 1934713408
        %v6627 = vunpack.c.0.s8 %v6626
        %v6628 = vlaneseq
        %v6629 = vshrl.u32 %v6628, 7
        %v6630 = vsub.s32 %v6627, %v6629
        %v6631 = vrot.slane %v6623, %v6630
        %v6633 = vunpack.c.l.s4 1934713408
        %v6634 = vunpack.c.0.s8 %v6633
        %v6635 = vlaneseq
        %v6636 = vshrl.u32 %v6635, 7
        %v6637 = vsub.s32 %v6634, %v6636
        %v6638 = vrot.slane %v6624, %v6637
        %v6639 = vcombine.low %v6583, %v6615
        %v6640 = vcombine.high %v6583, %v6615
        %v6641 = vcombine.low %v6590, %v6622
        %v6642 = vcombine.high %v6590, %v6622
        %v6643 = vcombine.low %v6599, %v6631
        %v6644 = vcombine.high %v6599, %v6631
        %v6645 = vcombine.low %v6606, %v6638
        %v6646 = vcombine.high %v6606, %v6638
        %6651 = vrot.lane.b32.xlu0 %v6232, 16
        %v6652 = vpop.permute.xlu0 %6651
        %6653 = vrot.lane.b32.xlu0 %v6368, 16
        %v6654 = vpop.permute.xlu0 %6653
        %6655 = vrot.lane.b32.xlu0 %v6504, 16
        %v6656 = vpop.permute.xlu0 %6655
        %6657 = vrot.lane.b32.xlu0 %v6640, 16
        %v6658 = vpop.permute.xlu0 %6657
        %6667 = vrot.lane.b32.xlu0 %v6233, 32
        %v6668 = vpop.permute.xlu0 %6667
        %6669 = vrot.lane.b32.xlu0 %v6369, 32
        %v6670 = vpop.permute.xlu0 %6669
        %6671 = vrot.lane.b32.xlu0 %v6505, 32
        %v6672 = vpop.permute.xlu0 %6671
        %6673 = vrot.lane.b32.xlu0 %v6641, 32
        %v6674 = vpop.permute.xlu0 %6673
        %6683 = vrot.lane.b32.xlu0 %v6234, 48
        %v6684 = vpop.permute.xlu0 %6683
        %6685 = vrot.lane.b32.xlu0 %v6370, 48
        %v6686 = vpop.permute.xlu0 %6685
        %6687 = vrot.lane.b32.xlu0 %v6506, 48
        %v6688 = vpop.permute.xlu0 %6687
        %6689 = vrot.lane.b32.xlu0 %v6642, 48
        %v6690 = vpop.permute.xlu0 %6689
        %6699 = vrot.lane.b32.xlu0 %v6235, 64
        %v6700 = vpop.permute.xlu0 %6699
        %6701 = vrot.lane.b32.xlu0 %v6371, 64
        %v6702 = vpop.permute.xlu0 %6701
        %6703 = vrot.lane.b32.xlu0 %v6507, 64
        %v6704 = vpop.permute.xlu0 %6703
        %6705 = vrot.lane.b32.xlu0 %v6643, 64
        %v6706 = vpop.permute.xlu0 %6705
        %6715 = vrot.lane.b32.xlu0 %v6236, 80
        %v6716 = vpop.permute.xlu0 %6715
        %6717 = vrot.lane.b32.xlu0 %v6372, 80
        %v6718 = vpop.permute.xlu0 %6717
        %6719 = vrot.lane.b32.xlu0 %v6508, 80
        %v6720 = vpop.permute.xlu0 %6719
        %6721 = vrot.lane.b32.xlu0 %v6644, 80
        %v6722 = vpop.permute.xlu0 %6721
        %6731 = vrot.lane.b32.xlu0 %v6237, 96
        %v6732 = vpop.permute.xlu0 %6731
        %6733 = vrot.lane.b32.xlu0 %v6373, 96
        %v6734 = vpop.permute.xlu0 %6733
        %6735 = vrot.lane.b32.xlu0 %v6509, 96
        %v6736 = vpop.permute.xlu0 %6735
        %6737 = vrot.lane.b32.xlu0 %v6645, 96
        %v6738 = vpop.permute.xlu0 %6737
        %6747 = vrot.lane.b32.xlu0 %v6238, 112
        %v6748 = vpop.permute.xlu0 %6747
        %6749 = vrot.lane.b32.xlu0 %v6374, 112
        %v6750 = vpop.permute.xlu0 %6749
        %6751 = vrot.lane.b32.xlu0 %v6510, 112
        %v6752 = vpop.permute.xlu0 %6751
        %6753 = vrot.lane.b32.xlu0 %v6646, 112
        %v6754 = vpop.permute.xlu0 %6753
        %v6759 = vsel %vm2395, %v6231, %v6652
        %v6760 = vsel %vm2395, %v6367, %v6654
        %v6761 = vsel %vm2395, %v6503, %v6656
        %v6762 = vsel %vm2395, %v6639, %v6658
        %v6763 = vsel %vm2400, %v6759, %v6668
        %v6764 = vsel %vm2400, %v6760, %v6670
        %v6765 = vsel %vm2400, %v6761, %v6672
        %v6766 = vsel %vm2400, %v6762, %v6674
        %v6767 = vsel %vm2405, %v6763, %v6684
        %v6768 = vsel %vm2405, %v6764, %v6686
        %v6769 = vsel %vm2405, %v6765, %v6688
        %v6770 = vsel %vm2405, %v6766, %v6690
        %v6771 = vsel %vm2410, %v6767, %v6700
        %v6772 = vsel %vm2410, %v6768, %v6702
        %v6773 = vsel %vm2410, %v6769, %v6704
        %v6774 = vsel %vm2410, %v6770, %v6706
        %v6775 = vsel %vm2415, %v6771, %v6716
        %v6776 = vsel %vm2415, %v6772, %v6718
        %v6777 = vsel %vm2415, %v6773, %v6720
        %v6778 = vsel %vm2415, %v6774, %v6722
        %v6779 = vsel %vm2420, %v6775, %v6732
        %v6780 = vsel %vm2420, %v6776, %v6734
        %v6781 = vsel %vm2420, %v6777, %v6736
        %v6782 = vsel %vm2420, %v6778, %v6738
        %v6783 = vsel %vm2425, %v6779, %v6748
        %v6784 = vsel %vm2425, %v6780, %v6750
        %v6785 = vsel %vm2425, %v6781, %v6752
        %v6786 = vsel %vm2425, %v6782, %v6754
        %v6787 = vpack.c.bf16 %v6784, %v6783
        %v6788 = vpack.c.bf16 %v6786, %v6785
        %v6790 = vsel %vm2400, %v917, 0
        %v6793 = vsel %vm2400, %v918, 0
        %6795 = vmatprep.subr.bf16.mxu0 0
        %6796 = vmatpush1.bf16.msra.mxu0 0
        %6797 = vmatprep.subr.bf16.mxu0 0
        %6798 = vmatpush1.bf16.msra.mxu0 0
        %6799 = vmatprep.subr.bf16.mxu0 0
        %6800 = vmatpush1.bf16.msra.mxu0 0
        %6801 = vmatprep.subr.bf16.mxu0 0
        %6802 = vmatpush1.bf16.msra.mxu0 0
        %6803 = vmatprep.subr.bf16.mxu0 0
        %6804 = vmatpush1.bf16.msra.mxu0 0
        %6805 = vmatprep.subr.bf16.mxu0 0
        %6806 = vmatpush1.bf16.msra.mxu0 0
        %6807 = vmatprep.subr.bf16.mxu0 0
        %6808 = vmatpush1.bf16.msra.mxu0 %v6788
        %6809 = vmatprep.subr.bf16.mxu0 0
        %6810 = vmatpush1.bf16.msra.mxu0 %v6787
        %6811 = vmatprep.subr.bf16.mxu0 0
        %6812 = vmatpush2.bf16.msra.mxu0 0
        %6813 = vmatprep.subr.bf16.mxu0 0
        %6814 = vmatpush2.bf16.msra.mxu0 0
        %6815 = vmatprep.subr.bf16.mxu0 0
        %6816 = vmatpush2.bf16.msra.mxu0 0
        %6817 = vmatprep.subr.bf16.mxu0 0
        %6818 = vmatpush2.bf16.msra.mxu0 0
        %6819 = vmatprep.subr.bf16.mxu0 0
        %6820 = vmatpush2.bf16.msra.mxu0 0
        %6821 = vmatprep.subr.bf16.mxu0 0
        %6822 = vmatpush2.bf16.msra.mxu0 0
        %6823 = vmatprep.subr.bf16.mxu0 0
        %6824 = vmatpush2.bf16.msra.mxu0 0
        %6825 = vmatprep.subr.bf16.mxu0 0
        %6826 = vmatpush2.bf16.msra.mxu0 0
        %6827 = vmatprep.mubr.bf16.mxu0 0
        %6828 = vmatmul.mubr.bf16.gmra.mxu0 %v6790
        %v6829 = vpop.f32.mrf.mxu0
        %v6830 = vadd.f32 0.0, %v6829
        %v6831 = vpop.f32.mrf.mxu0
        %v6832 = vpop.f32.mrf.mxu0
        %v6833 = vadd.f32 0.0, %v6832
        %v6834 = vpop.f32.mrf.mxu0
        %6835 = vmatprep.mubr.bf16.mxu0 0
        %6836 = vmatmul.mubr.bf16.gmra.mxu0 %v6793
        %v6837 = vpop.f32.mrf.mxu0
        %v6838 = vadd.f32 0.0, %v6837
        %v6839 = vpop.f32.mrf.mxu0
        %v6840 = vpop.f32.mrf.mxu0
        %v6841 = vadd.f32 0.0, %v6840
        %v6842 = vpop.f32.mrf.mxu0
        %6843 = vdwg.mxu0
        %v6844 = vadd.f32 %v5939, %v6830
        %v6845 = vadd.f32 %v5940, %v6833
        %v6846 = vadd.f32 %v5941, %v6838
        %v6847 = vadd.f32 %v5942, %v6841
        %v6848 = vld [vmem:[#allocation2 + $0x2] sm:$0xff]
        %v6849 = vld [vmem:[#allocation2 + $0x12] sm:$0xff]
        %v6850 = vld [vmem:[#allocation2 + $0x22] sm:$0xff]
        %v6851 = vld [vmem:[#allocation2 + $0x32] sm:$0xff]
        %v6852 = vld [vmem:[#allocation2 + $0x42] sm:$0xff]
        %v6853 = vld [vmem:[#allocation2 + $0x52] sm:$0xff]
        %v6854 = vld [vmem:[#allocation2 + $0x62] sm:$0xff]
        %v6855 = vld [vmem:[#allocation2 + $0x72] sm:$0xff]
        %v6856 = vld [vmem:[#allocation2 + $0x82] sm:$0xff]
        %v6857 = vld [vmem:[#allocation2 + $0x92] sm:$0xff]
        %v6858 = vld [vmem:[#allocation2 + $0xa2] sm:$0xff]
        %v6859 = vld [vmem:[#allocation2 + $0xb2] sm:$0xff]
        %v6860 = vld [vmem:[#allocation2 + $0xc2] sm:$0xff]
        %v6861 = vld [vmem:[#allocation2 + $0xd2] sm:$0xff]
        %v6862 = vld [vmem:[#allocation2 + $0xe2] sm:$0xff]
        %v6863 = vld [vmem:[#allocation2 + $0xf2] sm:$0xff]
        %v6864 = vld [vmem:[#allocation2 + $0x102] sm:$0xff]
        %v6865 = vld [vmem:[#allocation2 + $0x112] sm:$0xff]
        %v6866 = vld [vmem:[#allocation2 + $0x122] sm:$0xff]
        %v6867 = vld [vmem:[#allocation2 + $0x132] sm:$0xff]
        %v6868 = vld [vmem:[#allocation2 + $0x142] sm:$0xff]
        %v6869 = vld [vmem:[#allocation2 + $0x152] sm:$0xff]
        %v6870 = vld [vmem:[#allocation2 + $0x162] sm:$0xff]
        %v6871 = vld [vmem:[#allocation2 + $0x172] sm:$0xff]
        %v6872 = vld [vmem:[#allocation2 + $0x182] sm:$0xff]
        %v6873 = vld [vmem:[#allocation2 + $0x192] sm:$0xff]
        %v6874 = vld [vmem:[#allocation2 + $0x1a2] sm:$0xff]
        %v6875 = vld [vmem:[#allocation2 + $0x1b2] sm:$0xff]
        %v6876 = vld [vmem:[#allocation2 + $0x1c2] sm:$0xff]
        %v6877 = vld [vmem:[#allocation2 + $0x1d2] sm:$0xff]
        %v6878 = vld [vmem:[#allocation2 + $0x1e2] sm:$0xff]
        %v6879 = vld [vmem:[#allocation2 + $0x1f2] sm:$0xff]
        %v6880 = vcombine.low %v6848, %v6850
        %v6881 = vcombine.high %v6848, %v6850
        %v6883 = vunpack.c.l.s4 1983009808
        %v6884 = vunpack.c.0.s8 %v6883
        %v6885 = vlaneseq
        %v6886 = vshrl.u32 %v6885, 7
        %v6887 = vsub.s32 %v6884, %v6886
        %v6888 = vrot.slane %v6880, %v6887
        %v6890 = vunpack.c.l.s4 1983009808
        %v6891 = vunpack.c.0.s8 %v6890
        %v6892 = vlaneseq
        %v6893 = vshrl.u32 %v6892, 7
        %v6894 = vsub.s32 %v6891, %v6893
        %v6895 = vrot.slane %v6881, %v6894
        %v6896 = vcombine.low %v6849, %v6851
        %v6897 = vcombine.high %v6849, %v6851
        %v6899 = vunpack.c.l.s4 1983009808
        %v6900 = vunpack.c.0.s8 %v6899
        %v6901 = vlaneseq
        %v6902 = vshrl.u32 %v6901, 7
        %v6903 = vsub.s32 %v6900, %v6902
        %v6904 = vrot.slane %v6896, %v6903
        %v6906 = vunpack.c.l.s4 1983009808
        %v6907 = vunpack.c.0.s8 %v6906
        %v6908 = vlaneseq
        %v6909 = vshrl.u32 %v6908, 7
        %v6910 = vsub.s32 %v6907, %v6909
        %v6911 = vrot.slane %v6897, %v6910
        %v6912 = vcombine.low %v6852, %v6854
        %v6913 = vcombine.high %v6852, %v6854
        %v6915 = vunpack.c.l.s4 1983009808
        %v6916 = vunpack.c.0.s8 %v6915
        %v6917 = vlaneseq
        %v6918 = vshrl.u32 %v6917, 7
        %v6919 = vsub.s32 %v6916, %v6918
        %v6920 = vrot.slane %v6912, %v6919
        %v6922 = vunpack.c.l.s4 1983009808
        %v6923 = vunpack.c.0.s8 %v6922
        %v6924 = vlaneseq
        %v6925 = vshrl.u32 %v6924, 7
        %v6926 = vsub.s32 %v6923, %v6925
        %v6927 = vrot.slane %v6913, %v6926
        %v6928 = vcombine.low %v6853, %v6855
        %v6929 = vcombine.high %v6853, %v6855
        %v6931 = vunpack.c.l.s4 1983009808
        %v6932 = vunpack.c.0.s8 %v6931
        %v6933 = vlaneseq
        %v6934 = vshrl.u32 %v6933, 7
        %v6935 = vsub.s32 %v6932, %v6934
        %v6936 = vrot.slane %v6928, %v6935
        %v6938 = vunpack.c.l.s4 1983009808
        %v6939 = vunpack.c.0.s8 %v6938
        %v6940 = vlaneseq
        %v6941 = vshrl.u32 %v6940, 7
        %v6942 = vsub.s32 %v6939, %v6941
        %v6943 = vrot.slane %v6929, %v6942
        %v6944 = vcombine.low %v6888, %v6904
        %v6945 = vcombine.high %v6888, %v6904
        %v6947 = vunpack.c.l.s4 1934713408
        %v6948 = vunpack.c.0.s8 %v6947
        %v6949 = vlaneseq
        %v6950 = vshrl.u32 %v6949, 7
        %v6951 = vsub.s32 %v6948, %v6950
        %v6952 = vrot.slane %v6944, %v6951
        %v6954 = vunpack.c.l.s4 1934713408
        %v6955 = vunpack.c.0.s8 %v6954
        %v6956 = vlaneseq
        %v6957 = vshrl.u32 %v6956, 7
        %v6958 = vsub.s32 %v6955, %v6957
        %v6959 = vrot.slane %v6945, %v6958
        %v6960 = vcombine.low %v6895, %v6911
        %v6961 = vcombine.high %v6895, %v6911
        %v6963 = vunpack.c.l.s4 1934713408
        %v6964 = vunpack.c.0.s8 %v6963
        %v6965 = vlaneseq
        %v6966 = vshrl.u32 %v6965, 7
        %v6967 = vsub.s32 %v6964, %v6966
        %v6968 = vrot.slane %v6960, %v6967
        %v6970 = vunpack.c.l.s4 1934713408
        %v6971 = vunpack.c.0.s8 %v6970
        %v6972 = vlaneseq
        %v6973 = vshrl.u32 %v6972, 7
        %v6974 = vsub.s32 %v6971, %v6973
        %v6975 = vrot.slane %v6961, %v6974
        %v6976 = vcombine.low %v6920, %v6936
        %v6977 = vcombine.high %v6920, %v6936
        %v6979 = vunpack.c.l.s4 1934713408
        %v6980 = vunpack.c.0.s8 %v6979
        %v6981 = vlaneseq
        %v6982 = vshrl.u32 %v6981, 7
        %v6983 = vsub.s32 %v6980, %v6982
        %v6984 = vrot.slane %v6976, %v6983
        %v6986 = vunpack.c.l.s4 1934713408
        %v6987 = vunpack.c.0.s8 %v6986
        %v6988 = vlaneseq
        %v6989 = vshrl.u32 %v6988, 7
        %v6990 = vsub.s32 %v6987, %v6989
        %v6991 = vrot.slane %v6977, %v6990
        %v6992 = vcombine.low %v6927, %v6943
        %v6993 = vcombine.high %v6927, %v6943
        %v6995 = vunpack.c.l.s4 1934713408
        %v6996 = vunpack.c.0.s8 %v6995
        %v6997 = vlaneseq
        %v6998 = vshrl.u32 %v6997, 7
        %v6999 = vsub.s32 %v6996, %v6998
        %v7000 = vrot.slane %v6992, %v6999
        %v7002 = vunpack.c.l.s4 1934713408
        %v7003 = vunpack.c.0.s8 %v7002
        %v7004 = vlaneseq
        %v7005 = vshrl.u32 %v7004, 7
        %v7006 = vsub.s32 %v7003, %v7005
        %v7007 = vrot.slane %v6993, %v7006
        %v7008 = vcombine.low %v6952, %v6984
        %v7009 = vcombine.high %v6952, %v6984
        %v7010 = vcombine.low %v6959, %v6991
        %v7011 = vcombine.high %v6959, %v6991
        %v7012 = vcombine.low %v6968, %v7000
        %v7013 = vcombine.high %v6968, %v7000
        %v7014 = vcombine.low %v6975, %v7007
        %v7015 = vcombine.high %v6975, %v7007
        %v7016 = vcombine.low %v6856, %v6858
        %v7017 = vcombine.high %v6856, %v6858
        %v7019 = vunpack.c.l.s4 1983009808
        %v7020 = vunpack.c.0.s8 %v7019
        %v7021 = vlaneseq
        %v7022 = vshrl.u32 %v7021, 7
        %v7023 = vsub.s32 %v7020, %v7022
        %v7024 = vrot.slane %v7016, %v7023
        %v7026 = vunpack.c.l.s4 1983009808
        %v7027 = vunpack.c.0.s8 %v7026
        %v7028 = vlaneseq
        %v7029 = vshrl.u32 %v7028, 7
        %v7030 = vsub.s32 %v7027, %v7029
        %v7031 = vrot.slane %v7017, %v7030
        %v7032 = vcombine.low %v6857, %v6859
        %v7033 = vcombine.high %v6857, %v6859
        %v7035 = vunpack.c.l.s4 1983009808
        %v7036 = vunpack.c.0.s8 %v7035
        %v7037 = vlaneseq
        %v7038 = vshrl.u32 %v7037, 7
        %v7039 = vsub.s32 %v7036, %v7038
        %v7040 = vrot.slane %v7032, %v7039
        %v7042 = vunpack.c.l.s4 1983009808
        %v7043 = vunpack.c.0.s8 %v7042
        %v7044 = vlaneseq
        %v7045 = vshrl.u32 %v7044, 7
        %v7046 = vsub.s32 %v7043, %v7045
        %v7047 = vrot.slane %v7033, %v7046
        %v7048 = vcombine.low %v6860, %v6862
        %v7049 = vcombine.high %v6860, %v6862
        %v7051 = vunpack.c.l.s4 1983009808
        %v7052 = vunpack.c.0.s8 %v7051
        %v7053 = vlaneseq
        %v7054 = vshrl.u32 %v7053, 7
        %v7055 = vsub.s32 %v7052, %v7054
        %v7056 = vrot.slane %v7048, %v7055
        %v7058 = vunpack.c.l.s4 1983009808
        %v7059 = vunpack.c.0.s8 %v7058
        %v7060 = vlaneseq
        %v7061 = vshrl.u32 %v7060, 7
        %v7062 = vsub.s32 %v7059, %v7061
        %v7063 = vrot.slane %v7049, %v7062
        %v7064 = vcombine.low %v6861, %v6863
        %v7065 = vcombine.high %v6861, %v6863
        %v7067 = vunpack.c.l.s4 1983009808
        %v7068 = vunpack.c.0.s8 %v7067
        %v7069 = vlaneseq
        %v7070 = vshrl.u32 %v7069, 7
        %v7071 = vsub.s32 %v7068, %v7070
        %v7072 = vrot.slane %v7064, %v7071
        %v7074 = vunpack.c.l.s4 1983009808
        %v7075 = vunpack.c.0.s8 %v7074
        %v7076 = vlaneseq
        %v7077 = vshrl.u32 %v7076, 7
        %v7078 = vsub.s32 %v7075, %v7077
        %v7079 = vrot.slane %v7065, %v7078
        %v7080 = vcombine.low %v7024, %v7040
        %v7081 = vcombine.high %v7024, %v7040
        %v7083 = vunpack.c.l.s4 1934713408
        %v7084 = vunpack.c.0.s8 %v7083
        %v7085 = vlaneseq
        %v7086 = vshrl.u32 %v7085, 7
        %v7087 = vsub.s32 %v7084, %v7086
        %v7088 = vrot.slane %v7080, %v7087
        %v7090 = vunpack.c.l.s4 1934713408
        %v7091 = vunpack.c.0.s8 %v7090
        %v7092 = vlaneseq
        %v7093 = vshrl.u32 %v7092, 7
        %v7094 = vsub.s32 %v7091, %v7093
        %v7095 = vrot.slane %v7081, %v7094
        %v7096 = vcombine.low %v7031, %v7047
        %v7097 = vcombine.high %v7031, %v7047
        %v7099 = vunpack.c.l.s4 1934713408
        %v7100 = vunpack.c.0.s8 %v7099
        %v7101 = vlaneseq
        %v7102 = vshrl.u32 %v7101, 7
        %v7103 = vsub.s32 %v7100, %v7102
        %v7104 = vrot.slane %v7096, %v7103
        %v7106 = vunpack.c.l.s4 1934713408
        %v7107 = vunpack.c.0.s8 %v7106
        %v7108 = vlaneseq
        %v7109 = vshrl.u32 %v7108, 7
        %v7110 = vsub.s32 %v7107, %v7109
        %v7111 = vrot.slane %v7097, %v7110
        %v7112 = vcombine.low %v7056, %v7072
        %v7113 = vcombine.high %v7056, %v7072
        %v7115 = vunpack.c.l.s4 1934713408
        %v7116 = vunpack.c.0.s8 %v7115
        %v7117 = vlaneseq
        %v7118 = vshrl.u32 %v7117, 7
        %v7119 = vsub.s32 %v7116, %v7118
        %v7120 = vrot.slane %v7112, %v7119
        %v7122 = vunpack.c.l.s4 1934713408
        %v7123 = vunpack.c.0.s8 %v7122
        %v7124 = vlaneseq
        %v7125 = vshrl.u32 %v7124, 7
        %v7126 = vsub.s32 %v7123, %v7125
        %v7127 = vrot.slane %v7113, %v7126
        %v7128 = vcombine.low %v7063, %v7079
        %v7129 = vcombine.high %v7063, %v7079
        %v7131 = vunpack.c.l.s4 1934713408
        %v7132 = vunpack.c.0.s8 %v7131
        %v7133 = vlaneseq
        %v7134 = vshrl.u32 %v7133, 7
        %v7135 = vsub.s32 %v7132, %v7134
        %v7136 = vrot.slane %v7128, %v7135
        %v7138 = vunpack.c.l.s4 1934713408
        %v7139 = vunpack.c.0.s8 %v7138
        %v7140 = vlaneseq
        %v7141 = vshrl.u32 %v7140, 7
        %v7142 = vsub.s32 %v7139, %v7141
        %v7143 = vrot.slane %v7129, %v7142
        %v7144 = vcombine.low %v7088, %v7120
        %v7145 = vcombine.high %v7088, %v7120
        %v7146 = vcombine.low %v7095, %v7127
        %v7147 = vcombine.high %v7095, %v7127
        %v7148 = vcombine.low %v7104, %v7136
        %v7149 = vcombine.high %v7104, %v7136
        %v7150 = vcombine.low %v7111, %v7143
        %v7151 = vcombine.high %v7111, %v7143
        %v7152 = vcombine.low %v6864, %v6866
        %v7153 = vcombine.high %v6864, %v6866
        %v7155 = vunpack.c.l.s4 1983009808
        %v7156 = vunpack.c.0.s8 %v7155
        %v7157 = vlaneseq
        %v7158 = vshrl.u32 %v7157, 7
        %v7159 = vsub.s32 %v7156, %v7158
        %v7160 = vrot.slane %v7152, %v7159
        %v7162 = vunpack.c.l.s4 1983009808
        %v7163 = vunpack.c.0.s8 %v7162
        %v7164 = vlaneseq
        %v7165 = vshrl.u32 %v7164, 7
        %v7166 = vsub.s32 %v7163, %v7165
        %v7167 = vrot.slane %v7153, %v7166
        %v7168 = vcombine.low %v6865, %v6867
        %v7169 = vcombine.high %v6865, %v6867
        %v7171 = vunpack.c.l.s4 1983009808
        %v7172 = vunpack.c.0.s8 %v7171
        %v7173 = vlaneseq
        %v7174 = vshrl.u32 %v7173, 7
        %v7175 = vsub.s32 %v7172, %v7174
        %v7176 = vrot.slane %v7168, %v7175
        %v7178 = vunpack.c.l.s4 1983009808
        %v7179 = vunpack.c.0.s8 %v7178
        %v7180 = vlaneseq
        %v7181 = vshrl.u32 %v7180, 7
        %v7182 = vsub.s32 %v7179, %v7181
        %v7183 = vrot.slane %v7169, %v7182
        %v7184 = vcombine.low %v6868, %v6870
        %v7185 = vcombine.high %v6868, %v6870
        %v7187 = vunpack.c.l.s4 1983009808
        %v7188 = vunpack.c.0.s8 %v7187
        %v7189 = vlaneseq
        %v7190 = vshrl.u32 %v7189, 7
        %v7191 = vsub.s32 %v7188, %v7190
        %v7192 = vrot.slane %v7184, %v7191
        %v7194 = vunpack.c.l.s4 1983009808
        %v7195 = vunpack.c.0.s8 %v7194
        %v7196 = vlaneseq
        %v7197 = vshrl.u32 %v7196, 7
        %v7198 = vsub.s32 %v7195, %v7197
        %v7199 = vrot.slane %v7185, %v7198
        %v7200 = vcombine.low %v6869, %v6871
        %v7201 = vcombine.high %v6869, %v6871
        %v7203 = vunpack.c.l.s4 1983009808
        %v7204 = vunpack.c.0.s8 %v7203
        %v7205 = vlaneseq
        %v7206 = vshrl.u32 %v7205, 7
        %v7207 = vsub.s32 %v7204, %v7206
        %v7208 = vrot.slane %v7200, %v7207
        %v7210 = vunpack.c.l.s4 1983009808
        %v7211 = vunpack.c.0.s8 %v7210
        %v7212 = vlaneseq
        %v7213 = vshrl.u32 %v7212, 7
        %v7214 = vsub.s32 %v7211, %v7213
        %v7215 = vrot.slane %v7201, %v7214
        %v7216 = vcombine.low %v7160, %v7176
        %v7217 = vcombine.high %v7160, %v7176
        %v7219 = vunpack.c.l.s4 1934713408
        %v7220 = vunpack.c.0.s8 %v7219
        %v7221 = vlaneseq
        %v7222 = vshrl.u32 %v7221, 7
        %v7223 = vsub.s32 %v7220, %v7222
        %v7224 = vrot.slane %v7216, %v7223
        %v7226 = vunpack.c.l.s4 1934713408
        %v7227 = vunpack.c.0.s8 %v7226
        %v7228 = vlaneseq
        %v7229 = vshrl.u32 %v7228, 7
        %v7230 = vsub.s32 %v7227, %v7229
        %v7231 = vrot.slane %v7217, %v7230
        %v7232 = vcombine.low %v7167, %v7183
        %v7233 = vcombine.high %v7167, %v7183
        %v7235 = vunpack.c.l.s4 1934713408
        %v7236 = vunpack.c.0.s8 %v7235
        %v7237 = vlaneseq
        %v7238 = vshrl.u32 %v7237, 7
        %v7239 = vsub.s32 %v7236, %v7238
        %v7240 = vrot.slane %v7232, %v7239
        %v7242 = vunpack.c.l.s4 1934713408
        %v7243 = vunpack.c.0.s8 %v7242
        %v7244 = vlaneseq
        %v7245 = vshrl.u32 %v7244, 7
        %v7246 = vsub.s32 %v7243, %v7245
        %v7247 = vrot.slane %v7233, %v7246
        %v7248 = vcombine.low %v7192, %v7208
        %v7249 = vcombine.high %v7192, %v7208
        %v7251 = vunpack.c.l.s4 1934713408
        %v7252 = vunpack.c.0.s8 %v7251
        %v7253 = vlaneseq
        %v7254 = vshrl.u32 %v7253, 7
        %v7255 = vsub.s32 %v7252, %v7254
        %v7256 = vrot.slane %v7248, %v7255
        %v7258 = vunpack.c.l.s4 1934713408
        %v7259 = vunpack.c.0.s8 %v7258
        %v7260 = vlaneseq
        %v7261 = vshrl.u32 %v7260, 7
        %v7262 = vsub.s32 %v7259, %v7261
        %v7263 = vrot.slane %v7249, %v7262
        %v7264 = vcombine.low %v7199, %v7215
        %v7265 = vcombine.high %v7199, %v7215
        %v7267 = vunpack.c.l.s4 1934713408
        %v7268 = vunpack.c.0.s8 %v7267
        %v7269 = vlaneseq
        %v7270 = vshrl.u32 %v7269, 7
        %v7271 = vsub.s32 %v7268, %v7270
        %v7272 = vrot.slane %v7264, %v7271
        %v7274 = vunpack.c.l.s4 1934713408
        %v7275 = vunpack.c.0.s8 %v7274
        %v7276 = vlaneseq
        %v7277 = vshrl.u32 %v7276, 7
        %v7278 = vsub.s32 %v7275, %v7277
        %v7279 = vrot.slane %v7265, %v7278
        %v7280 = vcombine.low %v7224, %v7256
        %v7281 = vcombine.high %v7224, %v7256
        %v7282 = vcombine.low %v7231, %v7263
        %v7283 = vcombine.high %v7231, %v7263
        %v7284 = vcombine.low %v7240, %v7272
        %v7285 = vcombine.high %v7240, %v7272
        %v7286 = vcombine.low %v7247, %v7279
        %v7287 = vcombine.high %v7247, %v7279
        %v7288 = vcombine.low %v6872, %v6874
        %v7289 = vcombine.high %v6872, %v6874
        %v7291 = vunpack.c.l.s4 1983009808
        %v7292 = vunpack.c.0.s8 %v7291
        %v7293 = vlaneseq
        %v7294 = vshrl.u32 %v7293, 7
        %v7295 = vsub.s32 %v7292, %v7294
        %v7296 = vrot.slane %v7288, %v7295
        %v7298 = vunpack.c.l.s4 1983009808
        %v7299 = vunpack.c.0.s8 %v7298
        %v7300 = vlaneseq
        %v7301 = vshrl.u32 %v7300, 7
        %v7302 = vsub.s32 %v7299, %v7301
        %v7303 = vrot.slane %v7289, %v7302
        %v7304 = vcombine.low %v6873, %v6875
        %v7305 = vcombine.high %v6873, %v6875
        %v7307 = vunpack.c.l.s4 1983009808
        %v7308 = vunpack.c.0.s8 %v7307
        %v7309 = vlaneseq
        %v7310 = vshrl.u32 %v7309, 7
        %v7311 = vsub.s32 %v7308, %v7310
        %v7312 = vrot.slane %v7304, %v7311
        %v7314 = vunpack.c.l.s4 1983009808
        %v7315 = vunpack.c.0.s8 %v7314
        %v7316 = vlaneseq
        %v7317 = vshrl.u32 %v7316, 7
        %v7318 = vsub.s32 %v7315, %v7317
        %v7319 = vrot.slane %v7305, %v7318
        %v7320 = vcombine.low %v6876, %v6878
        %v7321 = vcombine.high %v6876, %v6878
        %v7323 = vunpack.c.l.s4 1983009808
        %v7324 = vunpack.c.0.s8 %v7323
        %v7325 = vlaneseq
        %v7326 = vshrl.u32 %v7325, 7
        %v7327 = vsub.s32 %v7324, %v7326
        %v7328 = vrot.slane %v7320, %v7327
        %v7330 = vunpack.c.l.s4 1983009808
        %v7331 = vunpack.c.0.s8 %v7330
        %v7332 = vlaneseq
        %v7333 = vshrl.u32 %v7332, 7
        %v7334 = vsub.s32 %v7331, %v7333
        %v7335 = vrot.slane %v7321, %v7334
        %v7336 = vcombine.low %v6877, %v6879
        %v7337 = vcombine.high %v6877, %v6879
        %v7339 = vunpack.c.l.s4 1983009808
        %v7340 = vunpack.c.0.s8 %v7339
        %v7341 = vlaneseq
        %v7342 = vshrl.u32 %v7341, 7
        %v7343 = vsub.s32 %v7340, %v7342
        %v7344 = vrot.slane %v7336, %v7343
        %v7346 = vunpack.c.l.s4 1983009808
        %v7347 = vunpack.c.0.s8 %v7346
        %v7348 = vlaneseq
        %v7349 = vshrl.u32 %v7348, 7
        %v7350 = vsub.s32 %v7347, %v7349
        %v7351 = vrot.slane %v7337, %v7350
        %v7352 = vcombine.low %v7296, %v7312
        %v7353 = vcombine.high %v7296, %v7312
        %v7355 = vunpack.c.l.s4 1934713408
        %v7356 = vunpack.c.0.s8 %v7355
        %v7357 = vlaneseq
        %v7358 = vshrl.u32 %v7357, 7
        %v7359 = vsub.s32 %v7356, %v7358
        %v7360 = vrot.slane %v7352, %v7359
        %v7362 = vunpack.c.l.s4 1934713408
        %v7363 = vunpack.c.0.s8 %v7362
        %v7364 = vlaneseq
        %v7365 = vshrl.u32 %v7364, 7
        %v7366 = vsub.s32 %v7363, %v7365
        %v7367 = vrot.slane %v7353, %v7366
        %v7368 = vcombine.low %v7303, %v7319
        %v7369 = vcombine.high %v7303, %v7319
        %v7371 = vunpack.c.l.s4 1934713408
        %v7372 = vunpack.c.0.s8 %v7371
        %v7373 = vlaneseq
        %v7374 = vshrl.u32 %v7373, 7
        %v7375 = vsub.s32 %v7372, %v7374
        %v7376 = vrot.slane %v7368, %v7375
        %v7378 = vunpack.c.l.s4 1934713408
        %v7379 = vunpack.c.0.s8 %v7378
        %v7380 = vlaneseq
        %v7381 = vshrl.u32 %v7380, 7
        %v7382 = vsub.s32 %v7379, %v7381
        %v7383 = vrot.slane %v7369, %v7382
        %v7384 = vcombine.low %v7328, %v7344
        %v7385 = vcombine.high %v7328, %v7344
        %v7387 = vunpack.c.l.s4 1934713408
        %v7388 = vunpack.c.0.s8 %v7387
        %v7389 = vlaneseq
        %v7390 = vshrl.u32 %v7389, 7
        %v7391 = vsub.s32 %v7388, %v7390
        %v7392 = vrot.slane %v7384, %v7391
        %v7394 = vunpack.c.l.s4 1934713408
        %v7395 = vunpack.c.0.s8 %v7394
        %v7396 = vlaneseq
        %v7397 = vshrl.u32 %v7396, 7
        %v7398 = vsub.s32 %v7395, %v7397
        %v7399 = vrot.slane %v7385, %v7398
        %v7400 = vcombine.low %v7335, %v7351
        %v7401 = vcombine.high %v7335, %v7351
        %v7403 = vunpack.c.l.s4 1934713408
        %v7404 = vunpack.c.0.s8 %v7403
        %v7405 = vlaneseq
        %v7406 = vshrl.u32 %v7405, 7
        %v7407 = vsub.s32 %v7404, %v7406
        %v7408 = vrot.slane %v7400, %v7407
        %v7410 = vunpack.c.l.s4 1934713408
        %v7411 = vunpack.c.0.s8 %v7410
        %v7412 = vlaneseq
        %v7413 = vshrl.u32 %v7412, 7
        %v7414 = vsub.s32 %v7411, %v7413
        %v7415 = vrot.slane %v7401, %v7414
        %v7416 = vcombine.low %v7360, %v7392
        %v7417 = vcombine.high %v7360, %v7392
        %v7418 = vcombine.low %v7367, %v7399
        %v7419 = vcombine.high %v7367, %v7399
        %v7420 = vcombine.low %v7376, %v7408
        %v7421 = vcombine.high %v7376, %v7408
        %v7422 = vcombine.low %v7383, %v7415
        %v7423 = vcombine.high %v7383, %v7415
        %7428 = vrot.lane.b32.xlu0 %v7009, 16
        %v7429 = vpop.permute.xlu0 %7428
        %7430 = vrot.lane.b32.xlu0 %v7145, 16
        %v7431 = vpop.permute.xlu0 %7430
        %7432 = vrot.lane.b32.xlu0 %v7281, 16
        %v7433 = vpop.permute.xlu0 %7432
        %7434 = vrot.lane.b32.xlu0 %v7417, 16
        %v7435 = vpop.permute.xlu0 %7434
        %7444 = vrot.lane.b32.xlu0 %v7010, 32
        %v7445 = vpop.permute.xlu0 %7444
        %7446 = vrot.lane.b32.xlu0 %v7146, 32
        %v7447 = vpop.permute.xlu0 %7446
        %7448 = vrot.lane.b32.xlu0 %v7282, 32
        %v7449 = vpop.permute.xlu0 %7448
        %7450 = vrot.lane.b32.xlu0 %v7418, 32
        %v7451 = vpop.permute.xlu0 %7450
        %7460 = vrot.lane.b32.xlu0 %v7011, 48
        %v7461 = vpop.permute.xlu0 %7460
        %7462 = vrot.lane.b32.xlu0 %v7147, 48
        %v7463 = vpop.permute.xlu0 %7462
        %7464 = vrot.lane.b32.xlu0 %v7283, 48
        %v7465 = vpop.permute.xlu0 %7464
        %7466 = vrot.lane.b32.xlu0 %v7419, 48
        %v7467 = vpop.permute.xlu0 %7466
        %7476 = vrot.lane.b32.xlu0 %v7012, 64
        %v7477 = vpop.permute.xlu0 %7476
        %7478 = vrot.lane.b32.xlu0 %v7148, 64
        %v7479 = vpop.permute.xlu0 %7478
        %7480 = vrot.lane.b32.xlu0 %v7284, 64
        %v7481 = vpop.permute.xlu0 %7480
        %7482 = vrot.lane.b32.xlu0 %v7420, 64
        %v7483 = vpop.permute.xlu0 %7482
        %7492 = vrot.lane.b32.xlu0 %v7013, 80
        %v7493 = vpop.permute.xlu0 %7492
        %7494 = vrot.lane.b32.xlu0 %v7149, 80
        %v7495 = vpop.permute.xlu0 %7494
        %7496 = vrot.lane.b32.xlu0 %v7285, 80
        %v7497 = vpop.permute.xlu0 %7496
        %7498 = vrot.lane.b32.xlu0 %v7421, 80
        %v7499 = vpop.permute.xlu0 %7498
        %7508 = vrot.lane.b32.xlu0 %v7014, 96
        %v7509 = vpop.permute.xlu0 %7508
        %7510 = vrot.lane.b32.xlu0 %v7150, 96
        %v7511 = vpop.permute.xlu0 %7510
        %7512 = vrot.lane.b32.xlu0 %v7286, 96
        %v7513 = vpop.permute.xlu0 %7512
        %7514 = vrot.lane.b32.xlu0 %v7422, 96
        %v7515 = vpop.permute.xlu0 %7514
        %7524 = vrot.lane.b32.xlu0 %v7015, 112
        %v7525 = vpop.permute.xlu0 %7524
        %7526 = vrot.lane.b32.xlu0 %v7151, 112
        %v7527 = vpop.permute.xlu0 %7526
        %7528 = vrot.lane.b32.xlu0 %v7287, 112
        %v7529 = vpop.permute.xlu0 %7528
        %7530 = vrot.lane.b32.xlu0 %v7423, 112
        %v7531 = vpop.permute.xlu0 %7530
        %v7536 = vsel %vm2395, %v7008, %v7429
        %v7537 = vsel %vm2395, %v7144, %v7431
        %v7538 = vsel %vm2395, %v7280, %v7433
        %v7539 = vsel %vm2395, %v7416, %v7435
        %v7540 = vsel %vm2400, %v7536, %v7445
        %v7541 = vsel %vm2400, %v7537, %v7447
        %v7542 = vsel %vm2400, %v7538, %v7449
        %v7543 = vsel %vm2400, %v7539, %v7451
        %v7544 = vsel %vm2405, %v7540, %v7461
        %v7545 = vsel %vm2405, %v7541, %v7463
        %v7546 = vsel %vm2405, %v7542, %v7465
        %v7547 = vsel %vm2405, %v7543, %v7467
        %v7548 = vsel %vm2410, %v7544, %v7477
        %v7549 = vsel %vm2410, %v7545, %v7479
        %v7550 = vsel %vm2410, %v7546, %v7481
        %v7551 = vsel %vm2410, %v7547, %v7483
        %v7552 = vsel %vm2415, %v7548, %v7493
        %v7553 = vsel %vm2415, %v7549, %v7495
        %v7554 = vsel %vm2415, %v7550, %v7497
        %v7555 = vsel %vm2415, %v7551, %v7499
        %v7556 = vsel %vm2420, %v7552, %v7509
        %v7557 = vsel %vm2420, %v7553, %v7511
        %v7558 = vsel %vm2420, %v7554, %v7513
        %v7559 = vsel %vm2420, %v7555, %v7515
        %v7560 = vsel %vm2425, %v7556, %v7525
        %v7561 = vsel %vm2425, %v7557, %v7527
        %v7562 = vsel %vm2425, %v7558, %v7529
        %v7563 = vsel %vm2425, %v7559, %v7531
        %v7564 = vpack.c.bf16 %v7561, %v7560
        %v7565 = vpack.c.bf16 %v7563, %v7562
        %v7567 = vsel %vm2400, %v919, 0
        %v7570 = vsel %vm2400, %v920, 0
        %7572 = vmatprep.subr.bf16.mxu0 0
        %7573 = vmatpush1.bf16.msra.mxu0 0
        %7574 = vmatprep.subr.bf16.mxu0 0
        %7575 = vmatpush1.bf16.msra.mxu0 0
        %7576 = vmatprep.subr.bf16.mxu0 0
        %7577 = vmatpush1.bf16.msra.mxu0 0
        %7578 = vmatprep.subr.bf16.mxu0 0
        %7579 = vmatpush1.bf16.msra.mxu0 0
        %7580 = vmatprep.subr.bf16.mxu0 0
        %7581 = vmatpush1.bf16.msra.mxu0 0
        %7582 = vmatprep.subr.bf16.mxu0 0
        %7583 = vmatpush1.bf16.msra.mxu0 0
        %7584 = vmatprep.subr.bf16.mxu0 0
        %7585 = vmatpush1.bf16.msra.mxu0 %v7565
        %7586 = vmatprep.subr.bf16.mxu0 0
        %7587 = vmatpush1.bf16.msra.mxu0 %v7564
        %7588 = vmatprep.subr.bf16.mxu0 0
        %7589 = vmatpush2.bf16.msra.mxu0 0
        %7590 = vmatprep.subr.bf16.mxu0 0
        %7591 = vmatpush2.bf16.msra.mxu0 0
        %7592 = vmatprep.subr.bf16.mxu0 0
        %7593 = vmatpush2.bf16.msra.mxu0 0
        %7594 = vmatprep.subr.bf16.mxu0 0
        %7595 = vmatpush2.bf16.msra.mxu0 0
        %7596 = vmatprep.subr.bf16.mxu0 0
        %7597 = vmatpush2.bf16.msra.mxu0 0
        %7598 = vmatprep.subr.bf16.mxu0 0
        %7599 = vmatpush2.bf16.msra.mxu0 0
        %7600 = vmatprep.subr.bf16.mxu0 0
        %7601 = vmatpush2.bf16.msra.mxu0 0
        %7602 = vmatprep.subr.bf16.mxu0 0
        %7603 = vmatpush2.bf16.msra.mxu0 0
        %7604 = vmatprep.mubr.bf16.mxu0 0
        %7605 = vmatmul.mubr.bf16.gmra.mxu0 %v7567
        %v7606 = vpop.f32.mrf.mxu0
        %v7607 = vadd.f32 0.0, %v7606
        %v7608 = vpop.f32.mrf.mxu0
        %v7609 = vpop.f32.mrf.mxu0
        %v7610 = vadd.f32 0.0, %v7609
        %v7611 = vpop.f32.mrf.mxu0
        %7612 = vmatprep.mubr.bf16.mxu0 0
        %7613 = vmatmul.mubr.bf16.gmra.mxu0 %v7570
        %v7614 = vpop.f32.mrf.mxu0
        %v7615 = vadd.f32 0.0, %v7614
        %v7616 = vpop.f32.mrf.mxu0
        %v7617 = vpop.f32.mrf.mxu0
        %v7618 = vadd.f32 0.0, %v7617
        %v7619 = vpop.f32.mrf.mxu0
        %7620 = vdwg.mxu0
        %v7621 = vadd.f32 %v6844, %v7607
        %v7622 = vadd.f32 %v6845, %v7610
        %v7623 = vadd.f32 %v6846, %v7615
        %v7624 = vadd.f32 %v6847, %v7618
        %v7625 = vld [vmem:[#allocation2 + $0x2] sm:$0xff]
        %v7626 = vld [vmem:[#allocation2 + $0x12] sm:$0xff]
        %v7627 = vld [vmem:[#allocation2 + $0x22] sm:$0xff]
        %v7628 = vld [vmem:[#allocation2 + $0x32] sm:$0xff]
        %v7629 = vld [vmem:[#allocation2 + $0x42] sm:$0xff]
        %v7630 = vld [vmem:[#allocation2 + $0x52] sm:$0xff]
        %v7631 = vld [vmem:[#allocation2 + $0x62] sm:$0xff]
        %v7632 = vld [vmem:[#allocation2 + $0x72] sm:$0xff]
        %v7633 = vld [vmem:[#allocation2 + $0x82] sm:$0xff]
        %v7634 = vld [vmem:[#allocation2 + $0x92] sm:$0xff]
        %v7635 = vld [vmem:[#allocation2 + $0xa2] sm:$0xff]
        %v7636 = vld [vmem:[#allocation2 + $0xb2] sm:$0xff]
        %v7637 = vld [vmem:[#allocation2 + $0xc2] sm:$0xff]
        %v7638 = vld [vmem:[#allocation2 + $0xd2] sm:$0xff]
        %v7639 = vld [vmem:[#allocation2 + $0xe2] sm:$0xff]
        %v7640 = vld [vmem:[#allocation2 + $0xf2] sm:$0xff]
        %v7641 = vld [vmem:[#allocation2 + $0x102] sm:$0xff]
        %v7642 = vld [vmem:[#allocation2 + $0x112] sm:$0xff]
        %v7643 = vld [vmem:[#allocation2 + $0x122] sm:$0xff]
        %v7644 = vld [vmem:[#allocation2 + $0x132] sm:$0xff]
        %v7645 = vld [vmem:[#allocation2 + $0x142] sm:$0xff]
        %v7646 = vld [vmem:[#allocation2 + $0x152] sm:$0xff]
        %v7647 = vld [vmem:[#allocation2 + $0x162] sm:$0xff]
        %v7648 = vld [vmem:[#allocation2 + $0x172] sm:$0xff]
        %v7649 = vld [vmem:[#allocation2 + $0x182] sm:$0xff]
        %v7650 = vld [vmem:[#allocation2 + $0x192] sm:$0xff]
        %v7651 = vld [vmem:[#allocation2 + $0x1a2] sm:$0xff]
        %v7652 = vld [vmem:[#allocation2 + $0x1b2] sm:$0xff]
        %v7653 = vld [vmem:[#allocation2 + $0x1c2] sm:$0xff]
        %v7654 = vld [vmem:[#allocation2 + $0x1d2] sm:$0xff]
        %v7655 = vld [vmem:[#allocation2 + $0x1e2] sm:$0xff]
        %v7656 = vld [vmem:[#allocation2 + $0x1f2] sm:$0xff]
        %7689 = vrot.lane.b32.xlu0 %v7625, 127
        %v7690 = vpop.permute.xlu0 %7689
        %7691 = vrot.lane.b32.xlu0 %v7626, 127
        %v7692 = vpop.permute.xlu0 %7691
        %7693 = vrot.lane.b32.xlu0 %v7627, 127
        %v7694 = vpop.permute.xlu0 %7693
        %7695 = vrot.lane.b32.xlu0 %v7628, 127
        %v7696 = vpop.permute.xlu0 %7695
        %7697 = vrot.lane.b32.xlu0 %v7629, 127
        %v7698 = vpop.permute.xlu0 %7697
        %7699 = vrot.lane.b32.xlu0 %v7630, 127
        %v7700 = vpop.permute.xlu0 %7699
        %7701 = vrot.lane.b32.xlu0 %v7631, 127
        %v7702 = vpop.permute.xlu0 %7701
        %7703 = vrot.lane.b32.xlu0 %v7632, 127
        %v7704 = vpop.permute.xlu0 %7703
        %7705 = vrot.lane.b32.xlu0 %v7633, 127
        %v7706 = vpop.permute.xlu0 %7705
        %7707 = vrot.lane.b32.xlu0 %v7634, 127
        %v7708 = vpop.permute.xlu0 %7707
        %7709 = vrot.lane.b32.xlu0 %v7635, 127
        %v7710 = vpop.permute.xlu0 %7709
        %7711 = vrot.lane.b32.xlu0 %v7636, 127
        %v7712 = vpop.permute.xlu0 %7711
        %7713 = vrot.lane.b32.xlu0 %v7637, 127
        %v7714 = vpop.permute.xlu0 %7713
        %7715 = vrot.lane.b32.xlu0 %v7638, 127
        %v7716 = vpop.permute.xlu0 %7715
        %7717 = vrot.lane.b32.xlu0 %v7639, 127
        %v7718 = vpop.permute.xlu0 %7717
        %7719 = vrot.lane.b32.xlu0 %v7640, 127
        %v7720 = vpop.permute.xlu0 %7719
        %7721 = vrot.lane.b32.xlu0 %v7641, 127
        %v7722 = vpop.permute.xlu0 %7721
        %7723 = vrot.lane.b32.xlu0 %v7642, 127
        %v7724 = vpop.permute.xlu0 %7723
        %7725 = vrot.lane.b32.xlu0 %v7643, 127
        %v7726 = vpop.permute.xlu0 %7725
        %7727 = vrot.lane.b32.xlu0 %v7644, 127
        %v7728 = vpop.permute.xlu0 %7727
        %7729 = vrot.lane.b32.xlu0 %v7645, 127
        %v7730 = vpop.permute.xlu0 %7729
        %7731 = vrot.lane.b32.xlu0 %v7646, 127
        %v7732 = vpop.permute.xlu0 %7731
        %7733 = vrot.lane.b32.xlu0 %v7647, 127
        %v7734 = vpop.permute.xlu0 %7733
        %7735 = vrot.lane.b32.xlu0 %v7648, 127
        %v7736 = vpop.permute.xlu0 %7735
        %7737 = vrot.lane.b32.xlu0 %v7649, 127
        %v7738 = vpop.permute.xlu0 %7737
        %7739 = vrot.lane.b32.xlu0 %v7650, 127
        %v7740 = vpop.permute.xlu0 %7739
        %7741 = vrot.lane.b32.xlu0 %v7651, 127
        %v7742 = vpop.permute.xlu0 %7741
        %7743 = vrot.lane.b32.xlu0 %v7652, 127
        %v7744 = vpop.permute.xlu0 %7743
        %7745 = vrot.lane.b32.xlu0 %v7653, 127
        %v7746 = vpop.permute.xlu0 %7745
        %7747 = vrot.lane.b32.xlu0 %v7654, 127
        %v7748 = vpop.permute.xlu0 %7747
        %7749 = vrot.lane.b32.xlu0 %v7655, 127
        %v7750 = vpop.permute.xlu0 %7749
        %7751 = vrot.lane.b32.xlu0 %v7656, 127
        %v7752 = vpop.permute.xlu0 %7751
        %v7785 = vcombine.low %v7690, %v7694
        %v7786 = vcombine.high %v7690, %v7694
        %v7788 = vunpack.c.l.s4 1983009808
        %v7789 = vunpack.c.0.s8 %v7788
        %v7790 = vlaneseq
        %v7791 = vshrl.u32 %v7790, 7
        %v7792 = vsub.s32 %v7789, %v7791
        %v7793 = vrot.slane %v7785, %v7792
        %v7795 = vunpack.c.l.s4 1983009808
        %v7796 = vunpack.c.0.s8 %v7795
        %v7797 = vlaneseq
        %v7798 = vshrl.u32 %v7797, 7
        %v7799 = vsub.s32 %v7796, %v7798
        %v7800 = vrot.slane %v7786, %v7799
        %v7801 = vcombine.low %v7692, %v7696
        %v7802 = vcombine.high %v7692, %v7696
        %v7804 = vunpack.c.l.s4 1983009808
        %v7805 = vunpack.c.0.s8 %v7804
        %v7806 = vlaneseq
        %v7807 = vshrl.u32 %v7806, 7
        %v7808 = vsub.s32 %v7805, %v7807
        %v7809 = vrot.slane %v7801, %v7808
        %v7811 = vunpack.c.l.s4 1983009808
        %v7812 = vunpack.c.0.s8 %v7811
        %v7813 = vlaneseq
        %v7814 = vshrl.u32 %v7813, 7
        %v7815 = vsub.s32 %v7812, %v7814
        %v7816 = vrot.slane %v7802, %v7815
        %v7817 = vcombine.low %v7698, %v7702
        %v7818 = vcombine.high %v7698, %v7702
        %v7820 = vunpack.c.l.s4 1983009808
        %v7821 = vunpack.c.0.s8 %v7820
        %v7822 = vlaneseq
        %v7823 = vshrl.u32 %v7822, 7
        %v7824 = vsub.s32 %v7821, %v7823
        %v7825 = vrot.slane %v7817, %v7824
        %v7827 = vunpack.c.l.s4 1983009808
        %v7828 = vunpack.c.0.s8 %v7827
        %v7829 = vlaneseq
        %v7830 = vshrl.u32 %v7829, 7
        %v7831 = vsub.s32 %v7828, %v7830
        %v7832 = vrot.slane %v7818, %v7831
        %v7833 = vcombine.low %v7700, %v7704
        %v7834 = vcombine.high %v7700, %v7704
        %v7836 = vunpack.c.l.s4 1983009808
        %v7837 = vunpack.c.0.s8 %v7836
        %v7838 = vlaneseq
        %v7839 = vshrl.u32 %v7838, 7
        %v7840 = vsub.s32 %v7837, %v7839
        %v7841 = vrot.slane %v7833, %v7840
        %v7843 = vunpack.c.l.s4 1983009808
        %v7844 = vunpack.c.0.s8 %v7843
        %v7845 = vlaneseq
        %v7846 = vshrl.u32 %v7845, 7
        %v7847 = vsub.s32 %v7844, %v7846
        %v7848 = vrot.slane %v7834, %v7847
        %v7849 = vcombine.low %v7793, %v7809
        %v7850 = vcombine.high %v7793, %v7809
        %v7852 = vunpack.c.l.s4 1934713408
        %v7853 = vunpack.c.0.s8 %v7852
        %v7854 = vlaneseq
        %v7855 = vshrl.u32 %v7854, 7
        %v7856 = vsub.s32 %v7853, %v7855
        %v7857 = vrot.slane %v7849, %v7856
        %v7859 = vunpack.c.l.s4 1934713408
        %v7860 = vunpack.c.0.s8 %v7859
        %v7861 = vlaneseq
        %v7862 = vshrl.u32 %v7861, 7
        %v7863 = vsub.s32 %v7860, %v7862
        %v7864 = vrot.slane %v7850, %v7863
        %v7865 = vcombine.low %v7800, %v7816
        %v7866 = vcombine.high %v7800, %v7816
        %v7868 = vunpack.c.l.s4 1934713408
        %v7869 = vunpack.c.0.s8 %v7868
        %v7870 = vlaneseq
        %v7871 = vshrl.u32 %v7870, 7
        %v7872 = vsub.s32 %v7869, %v7871
        %v7873 = vrot.slane %v7865, %v7872
        %v7875 = vunpack.c.l.s4 1934713408
        %v7876 = vunpack.c.0.s8 %v7875
        %v7877 = vlaneseq
        %v7878 = vshrl.u32 %v7877, 7
        %v7879 = vsub.s32 %v7876, %v7878
        %v7880 = vrot.slane %v7866, %v7879
        %v7881 = vcombine.low %v7825, %v7841
        %v7882 = vcombine.high %v7825, %v7841
        %v7884 = vunpack.c.l.s4 1934713408
        %v7885 = vunpack.c.0.s8 %v7884
        %v7886 = vlaneseq
        %v7887 = vshrl.u32 %v7886, 7
        %v7888 = vsub.s32 %v7885, %v7887
        %v7889 = vrot.slane %v7881, %v7888
        %v7891 = vunpack.c.l.s4 1934713408
        %v7892 = vunpack.c.0.s8 %v7891
        %v7893 = vlaneseq
        %v7894 = vshrl.u32 %v7893, 7
        %v7895 = vsub.s32 %v7892, %v7894
        %v7896 = vrot.slane %v7882, %v7895
        %v7897 = vcombine.low %v7832, %v7848
        %v7898 = vcombine.high %v7832, %v7848
        %v7900 = vunpack.c.l.s4 1934713408
        %v7901 = vunpack.c.0.s8 %v7900
        %v7902 = vlaneseq
        %v7903 = vshrl.u32 %v7902, 7
        %v7904 = vsub.s32 %v7901, %v7903
        %v7905 = vrot.slane %v7897, %v7904
        %v7907 = vunpack.c.l.s4 1934713408
        %v7908 = vunpack.c.0.s8 %v7907
        %v7909 = vlaneseq
        %v7910 = vshrl.u32 %v7909, 7
        %v7911 = vsub.s32 %v7908, %v7910
        %v7912 = vrot.slane %v7898, %v7911
        %v7913 = vcombine.low %v7857, %v7889
        %v7914 = vcombine.high %v7857, %v7889
        %v7915 = vcombine.low %v7864, %v7896
        %v7916 = vcombine.high %v7864, %v7896
        %v7917 = vcombine.low %v7873, %v7905
        %v7918 = vcombine.high %v7873, %v7905
        %v7919 = vcombine.low %v7880, %v7912
        %v7920 = vcombine.high %v7880, %v7912
        %v7921 = vcombine.low %v7706, %v7710
        %v7922 = vcombine.high %v7706, %v7710
        %v7924 = vunpack.c.l.s4 1983009808
        %v7925 = vunpack.c.0.s8 %v7924
        %v7926 = vlaneseq
        %v7927 = vshrl.u32 %v7926, 7
        %v7928 = vsub.s32 %v7925, %v7927
        %v7929 = vrot.slane %v7921, %v7928
        %v7931 = vunpack.c.l.s4 1983009808
        %v7932 = vunpack.c.0.s8 %v7931
        %v7933 = vlaneseq
        %v7934 = vshrl.u32 %v7933, 7
        %v7935 = vsub.s32 %v7932, %v7934
        %v7936 = vrot.slane %v7922, %v7935
        %v7937 = vcombine.low %v7708, %v7712
        %v7938 = vcombine.high %v7708, %v7712
        %v7940 = vunpack.c.l.s4 1983009808
        %v7941 = vunpack.c.0.s8 %v7940
        %v7942 = vlaneseq
        %v7943 = vshrl.u32 %v7942, 7
        %v7944 = vsub.s32 %v7941, %v7943
        %v7945 = vrot.slane %v7937, %v7944
        %v7947 = vunpack.c.l.s4 1983009808
        %v7948 = vunpack.c.0.s8 %v7947
        %v7949 = vlaneseq
        %v7950 = vshrl.u32 %v7949, 7
        %v7951 = vsub.s32 %v7948, %v7950
        %v7952 = vrot.slane %v7938, %v7951
        %v7953 = vcombine.low %v7714, %v7718
        %v7954 = vcombine.high %v7714, %v7718
        %v7956 = vunpack.c.l.s4 1983009808
        %v7957 = vunpack.c.0.s8 %v7956
        %v7958 = vlaneseq
        %v7959 = vshrl.u32 %v7958, 7
        %v7960 = vsub.s32 %v7957, %v7959
        %v7961 = vrot.slane %v7953, %v7960
        %v7963 = vunpack.c.l.s4 1983009808
        %v7964 = vunpack.c.0.s8 %v7963
        %v7965 = vlaneseq
        %v7966 = vshrl.u32 %v7965, 7
        %v7967 = vsub.s32 %v7964, %v7966
        %v7968 = vrot.slane %v7954, %v7967
        %v7969 = vcombine.low %v7716, %v7720
        %v7970 = vcombine.high %v7716, %v7720
        %v7972 = vunpack.c.l.s4 1983009808
        %v7973 = vunpack.c.0.s8 %v7972
        %v7974 = vlaneseq
        %v7975 = vshrl.u32 %v7974, 7
        %v7976 = vsub.s32 %v7973, %v7975
        %v7977 = vrot.slane %v7969, %v7976
        %v7979 = vunpack.c.l.s4 1983009808
        %v7980 = vunpack.c.0.s8 %v7979
        %v7981 = vlaneseq
        %v7982 = vshrl.u32 %v7981, 7
        %v7983 = vsub.s32 %v7980, %v7982
        %v7984 = vrot.slane %v7970, %v7983
        %v7985 = vcombine.low %v7929, %v7945
        %v7986 = vcombine.high %v7929, %v7945
        %v7988 = vunpack.c.l.s4 1934713408
        %v7989 = vunpack.c.0.s8 %v7988
        %v7990 = vlaneseq
        %v7991 = vshrl.u32 %v7990, 7
        %v7992 = vsub.s32 %v7989, %v7991
        %v7993 = vrot.slane %v7985, %v7992
        %v7995 = vunpack.c.l.s4 1934713408
        %v7996 = vunpack.c.0.s8 %v7995
        %v7997 = vlaneseq
        %v7998 = vshrl.u32 %v7997, 7
        %v7999 = vsub.s32 %v7996, %v7998
        %v8000 = vrot.slane %v7986, %v7999
        %v8001 = vcombine.low %v7936, %v7952
        %v8002 = vcombine.high %v7936, %v7952
        %v8004 = vunpack.c.l.s4 1934713408
        %v8005 = vunpack.c.0.s8 %v8004
        %v8006 = vlaneseq
        %v8007 = vshrl.u32 %v8006, 7
        %v8008 = vsub.s32 %v8005, %v8007
        %v8009 = vrot.slane %v8001, %v8008
        %v8011 = vunpack.c.l.s4 1934713408
        %v8012 = vunpack.c.0.s8 %v8011
        %v8013 = vlaneseq
        %v8014 = vshrl.u32 %v8013, 7
        %v8015 = vsub.s32 %v8012, %v8014
        %v8016 = vrot.slane %v8002, %v8015
        %v8017 = vcombine.low %v7961, %v7977
        %v8018 = vcombine.high %v7961, %v7977
        %v8020 = vunpack.c.l.s4 1934713408
        %v8021 = vunpack.c.0.s8 %v8020
        %v8022 = vlaneseq
        %v8023 = vshrl.u32 %v8022, 7
        %v8024 = vsub.s32 %v8021, %v8023
        %v8025 = vrot.slane %v8017, %v8024
        %v8027 = vunpack.c.l.s4 1934713408
        %v8028 = vunpack.c.0.s8 %v8027
        %v8029 = vlaneseq
        %v8030 = vshrl.u32 %v8029, 7
        %v8031 = vsub.s32 %v8028, %v8030
        %v8032 = vrot.slane %v8018, %v8031
        %v8033 = vcombine.low %v7968, %v7984
        %v8034 = vcombine.high %v7968, %v7984
        %v8036 = vunpack.c.l.s4 1934713408
        %v8037 = vunpack.c.0.s8 %v8036
        %v8038 = vlaneseq
        %v8039 = vshrl.u32 %v8038, 7
        %v8040 = vsub.s32 %v8037, %v8039
        %v8041 = vrot.slane %v8033, %v8040
        %v8043 = vunpack.c.l.s4 1934713408
        %v8044 = vunpack.c.0.s8 %v8043
        %v8045 = vlaneseq
        %v8046 = vshrl.u32 %v8045, 7
        %v8047 = vsub.s32 %v8044, %v8046
        %v8048 = vrot.slane %v8034, %v8047
        %v8049 = vcombine.low %v7993, %v8025
        %v8050 = vcombine.high %v7993, %v8025
        %v8051 = vcombine.low %v8000, %v8032
        %v8052 = vcombine.high %v8000, %v8032
        %v8053 = vcombine.low %v8009, %v8041
        %v8054 = vcombine.high %v8009, %v8041
        %v8055 = vcombine.low %v8016, %v8048
        %v8056 = vcombine.high %v8016, %v8048
        %v8057 = vcombine.low %v7722, %v7726
        %v8058 = vcombine.high %v7722, %v7726
        %v8060 = vunpack.c.l.s4 1983009808
        %v8061 = vunpack.c.0.s8 %v8060
        %v8062 = vlaneseq
        %v8063 = vshrl.u32 %v8062, 7
        %v8064 = vsub.s32 %v8061, %v8063
        %v8065 = vrot.slane %v8057, %v8064
        %v8067 = vunpack.c.l.s4 1983009808
        %v8068 = vunpack.c.0.s8 %v8067
        %v8069 = vlaneseq
        %v8070 = vshrl.u32 %v8069, 7
        %v8071 = vsub.s32 %v8068, %v8070
        %v8072 = vrot.slane %v8058, %v8071
        %v8073 = vcombine.low %v7724, %v7728
        %v8074 = vcombine.high %v7724, %v7728
        %v8076 = vunpack.c.l.s4 1983009808
        %v8077 = vunpack.c.0.s8 %v8076
        %v8078 = vlaneseq
        %v8079 = vshrl.u32 %v8078, 7
        %v8080 = vsub.s32 %v8077, %v8079
        %v8081 = vrot.slane %v8073, %v8080
        %v8083 = vunpack.c.l.s4 1983009808
        %v8084 = vunpack.c.0.s8 %v8083
        %v8085 = vlaneseq
        %v8086 = vshrl.u32 %v8085, 7
        %v8087 = vsub.s32 %v8084, %v8086
        %v8088 = vrot.slane %v8074, %v8087
        %v8089 = vcombine.low %v7730, %v7734
        %v8090 = vcombine.high %v7730, %v7734
        %v8092 = vunpack.c.l.s4 1983009808
        %v8093 = vunpack.c.0.s8 %v8092
        %v8094 = vlaneseq
        %v8095 = vshrl.u32 %v8094, 7
        %v8096 = vsub.s32 %v8093, %v8095
        %v8097 = vrot.slane %v8089, %v8096
        %v8099 = vunpack.c.l.s4 1983009808
        %v8100 = vunpack.c.0.s8 %v8099
        %v8101 = vlaneseq
        %v8102 = vshrl.u32 %v8101, 7
        %v8103 = vsub.s32 %v8100, %v8102
        %v8104 = vrot.slane %v8090, %v8103
        %v8105 = vcombine.low %v7732, %v7736
        %v8106 = vcombine.high %v7732, %v7736
        %v8108 = vunpack.c.l.s4 1983009808
        %v8109 = vunpack.c.0.s8 %v8108
        %v8110 = vlaneseq
        %v8111 = vshrl.u32 %v8110, 7
        %v8112 = vsub.s32 %v8109, %v8111
        %v8113 = vrot.slane %v8105, %v8112
        %v8115 = vunpack.c.l.s4 1983009808
        %v8116 = vunpack.c.0.s8 %v8115
        %v8117 = vlaneseq
        %v8118 = vshrl.u32 %v8117, 7
        %v8119 = vsub.s32 %v8116, %v8118
        %v8120 = vrot.slane %v8106, %v8119
        %v8121 = vcombine.low %v8065, %v8081
        %v8122 = vcombine.high %v8065, %v8081
        %v8124 = vunpack.c.l.s4 1934713408
        %v8125 = vunpack.c.0.s8 %v8124
        %v8126 = vlaneseq
        %v8127 = vshrl.u32 %v8126, 7
        %v8128 = vsub.s32 %v8125, %v8127
        %v8129 = vrot.slane %v8121, %v8128
        %v8131 = vunpack.c.l.s4 1934713408
        %v8132 = vunpack.c.0.s8 %v8131
        %v8133 = vlaneseq
        %v8134 = vshrl.u32 %v8133, 7
        %v8135 = vsub.s32 %v8132, %v8134
        %v8136 = vrot.slane %v8122, %v8135
        %v8137 = vcombine.low %v8072, %v8088
        %v8138 = vcombine.high %v8072, %v8088
        %v8140 = vunpack.c.l.s4 1934713408
        %v8141 = vunpack.c.0.s8 %v8140
        %v8142 = vlaneseq
        %v8143 = vshrl.u32 %v8142, 7
        %v8144 = vsub.s32 %v8141, %v8143
        %v8145 = vrot.slane %v8137, %v8144
        %v8147 = vunpack.c.l.s4 1934713408
        %v8148 = vunpack.c.0.s8 %v8147
        %v8149 = vlaneseq
        %v8150 = vshrl.u32 %v8149, 7
        %v8151 = vsub.s32 %v8148, %v8150
        %v8152 = vrot.slane %v8138, %v8151
        %v8153 = vcombine.low %v8097, %v8113
        %v8154 = vcombine.high %v8097, %v8113
        %v8156 = vunpack.c.l.s4 1934713408
        %v8157 = vunpack.c.0.s8 %v8156
        %v8158 = vlaneseq
        %v8159 = vshrl.u32 %v8158, 7
        %v8160 = vsub.s32 %v8157, %v8159
        %v8161 = vrot.slane %v8153, %v8160
        %v8163 = vunpack.c.l.s4 1934713408
        %v8164 = vunpack.c.0.s8 %v8163
        %v8165 = vlaneseq
        %v8166 = vshrl.u32 %v8165, 7
        %v8167 = vsub.s32 %v8164, %v8166
        %v8168 = vrot.slane %v8154, %v8167
        %v8169 = vcombine.low %v8104, %v8120
        %v8170 = vcombine.high %v8104, %v8120
        %v8172 = vunpack.c.l.s4 1934713408
        %v8173 = vunpack.c.0.s8 %v8172
        %v8174 = vlaneseq
        %v8175 = vshrl.u32 %v8174, 7
        %v8176 = vsub.s32 %v8173, %v8175
        %v8177 = vrot.slane %v8169, %v8176
        %v8179 = vunpack.c.l.s4 1934713408
        %v8180 = vunpack.c.0.s8 %v8179
        %v8181 = vlaneseq
        %v8182 = vshrl.u32 %v8181, 7
        %v8183 = vsub.s32 %v8180, %v8182
        %v8184 = vrot.slane %v8170, %v8183
        %v8185 = vcombine.low %v8129, %v8161
        %v8186 = vcombine.high %v8129, %v8161
        %v8187 = vcombine.low %v8136, %v8168
        %v8188 = vcombine.high %v8136, %v8168
        %v8189 = vcombine.low %v8145, %v8177
        %v8190 = vcombine.high %v8145, %v8177
        %v8191 = vcombine.low %v8152, %v8184
        %v8192 = vcombine.high %v8152, %v8184
        %v8193 = vcombine.low %v7738, %v7742
        %v8194 = vcombine.high %v7738, %v7742
        %v8196 = vunpack.c.l.s4 1983009808
        %v8197 = vunpack.c.0.s8 %v8196
        %v8198 = vlaneseq
        %v8199 = vshrl.u32 %v8198, 7
        %v8200 = vsub.s32 %v8197, %v8199
        %v8201 = vrot.slane %v8193, %v8200
        %v8203 = vunpack.c.l.s4 1983009808
        %v8204 = vunpack.c.0.s8 %v8203
        %v8205 = vlaneseq
        %v8206 = vshrl.u32 %v8205, 7
        %v8207 = vsub.s32 %v8204, %v8206
        %v8208 = vrot.slane %v8194, %v8207
        %v8209 = vcombine.low %v7740, %v7744
        %v8210 = vcombine.high %v7740, %v7744
        %v8212 = vunpack.c.l.s4 1983009808
        %v8213 = vunpack.c.0.s8 %v8212
        %v8214 = vlaneseq
        %v8215 = vshrl.u32 %v8214, 7
        %v8216 = vsub.s32 %v8213, %v8215
        %v8217 = vrot.slane %v8209, %v8216
        %v8219 = vunpack.c.l.s4 1983009808
        %v8220 = vunpack.c.0.s8 %v8219
        %v8221 = vlaneseq
        %v8222 = vshrl.u32 %v8221, 7
        %v8223 = vsub.s32 %v8220, %v8222
        %v8224 = vrot.slane %v8210, %v8223
        %v8225 = vcombine.low %v7746, %v7750
        %v8226 = vcombine.high %v7746, %v7750
        %v8228 = vunpack.c.l.s4 1983009808
        %v8229 = vunpack.c.0.s8 %v8228
        %v8230 = vlaneseq
        %v8231 = vshrl.u32 %v8230, 7
        %v8232 = vsub.s32 %v8229, %v8231
        %v8233 = vrot.slane %v8225, %v8232
        %v8235 = vunpack.c.l.s4 1983009808
        %v8236 = vunpack.c.0.s8 %v8235
        %v8237 = vlaneseq
        %v8238 = vshrl.u32 %v8237, 7
        %v8239 = vsub.s32 %v8236, %v8238
        %v8240 = vrot.slane %v8226, %v8239
        %v8241 = vcombine.low %v7748, %v7752
        %v8242 = vcombine.high %v7748, %v7752
        %v8244 = vunpack.c.l.s4 1983009808
        %v8245 = vunpack.c.0.s8 %v8244
        %v8246 = vlaneseq
        %v8247 = vshrl.u32 %v8246, 7
        %v8248 = vsub.s32 %v8245, %v8247
        %v8249 = vrot.slane %v8241, %v8248
        %v8251 = vunpack.c.l.s4 1983009808
        %v8252 = vunpack.c.0.s8 %v8251
        %v8253 = vlaneseq
        %v8254 = vshrl.u32 %v8253, 7
        %v8255 = vsub.s32 %v8252, %v8254
        %v8256 = vrot.slane %v8242, %v8255
        %v8257 = vcombine.low %v8201, %v8217
        %v8258 = vcombine.high %v8201, %v8217
        %v8260 = vunpack.c.l.s4 1934713408
        %v8261 = vunpack.c.0.s8 %v8260
        %v8262 = vlaneseq
        %v8263 = vshrl.u32 %v8262, 7
        %v8264 = vsub.s32 %v8261, %v8263
        %v8265 = vrot.slane %v8257, %v8264
        %v8267 = vunpack.c.l.s4 1934713408
        %v8268 = vunpack.c.0.s8 %v8267
        %v8269 = vlaneseq
        %v8270 = vshrl.u32 %v8269, 7
        %v8271 = vsub.s32 %v8268, %v8270
        %v8272 = vrot.slane %v8258, %v8271
        %v8273 = vcombine.low %v8208, %v8224
        %v8274 = vcombine.high %v8208, %v8224
        %v8276 = vunpack.c.l.s4 1934713408
        %v8277 = vunpack.c.0.s8 %v8276
        %v8278 = vlaneseq
        %v8279 = vshrl.u32 %v8278, 7
        %v8280 = vsub.s32 %v8277, %v8279
        %v8281 = vrot.slane %v8273, %v8280
        %v8283 = vunpack.c.l.s4 1934713408
        %v8284 = vunpack.c.0.s8 %v8283
        %v8285 = vlaneseq
        %v8286 = vshrl.u32 %v8285, 7
        %v8287 = vsub.s32 %v8284, %v8286
        %v8288 = vrot.slane %v8274, %v8287
        %v8289 = vcombine.low %v8233, %v8249
        %v8290 = vcombine.high %v8233, %v8249
        %v8292 = vunpack.c.l.s4 1934713408
        %v8293 = vunpack.c.0.s8 %v8292
        %v8294 = vlaneseq
        %v8295 = vshrl.u32 %v8294, 7
        %v8296 = vsub.s32 %v8293, %v8295
        %v8297 = vrot.slane %v8289, %v8296
        %v8299 = vunpack.c.l.s4 1934713408
        %v8300 = vunpack.c.0.s8 %v8299
        %v8301 = vlaneseq
        %v8302 = vshrl.u32 %v8301, 7
        %v8303 = vsub.s32 %v8300, %v8302
        %v8304 = vrot.slane %v8290, %v8303
        %v8305 = vcombine.low %v8240, %v8256
        %v8306 = vcombine.high %v8240, %v8256
        %v8308 = vunpack.c.l.s4 1934713408
        %v8309 = vunpack.c.0.s8 %v8308
        %v8310 = vlaneseq
        %v8311 = vshrl.u32 %v8310, 7
        %v8312 = vsub.s32 %v8309, %v8311
        %v8313 = vrot.slane %v8305, %v8312
        %v8315 = vunpack.c.l.s4 1934713408
        %v8316 = vunpack.c.0.s8 %v8315
        %v8317 = vlaneseq
        %v8318 = vshrl.u32 %v8317, 7
        %v8319 = vsub.s32 %v8316, %v8318
        %v8320 = vrot.slane %v8306, %v8319
        %v8321 = vcombine.low %v8265, %v8297
        %v8322 = vcombine.high %v8265, %v8297
        %v8323 = vcombine.low %v8272, %v8304
        %v8324 = vcombine.high %v8272, %v8304
        %v8325 = vcombine.low %v8281, %v8313
        %v8326 = vcombine.high %v8281, %v8313
        %v8327 = vcombine.low %v8288, %v8320
        %v8328 = vcombine.high %v8288, %v8320
        %8333 = vrot.lane.b32.xlu0 %v7914, 16
        %v8334 = vpop.permute.xlu0 %8333
        %8335 = vrot.lane.b32.xlu0 %v8050, 16
        %v8336 = vpop.permute.xlu0 %8335
        %8337 = vrot.lane.b32.xlu0 %v8186, 16
        %v8338 = vpop.permute.xlu0 %8337
        %8339 = vrot.lane.b32.xlu0 %v8322, 16
        %v8340 = vpop.permute.xlu0 %8339
        %8349 = vrot.lane.b32.xlu0 %v7915, 32
        %v8350 = vpop.permute.xlu0 %8349
        %8351 = vrot.lane.b32.xlu0 %v8051, 32
        %v8352 = vpop.permute.xlu0 %8351
        %8353 = vrot.lane.b32.xlu0 %v8187, 32
        %v8354 = vpop.permute.xlu0 %8353
        %8355 = vrot.lane.b32.xlu0 %v8323, 32
        %v8356 = vpop.permute.xlu0 %8355
        %8365 = vrot.lane.b32.xlu0 %v7916, 48
        %v8366 = vpop.permute.xlu0 %8365
        %8367 = vrot.lane.b32.xlu0 %v8052, 48
        %v8368 = vpop.permute.xlu0 %8367
        %8369 = vrot.lane.b32.xlu0 %v8188, 48
        %v8370 = vpop.permute.xlu0 %8369
        %8371 = vrot.lane.b32.xlu0 %v8324, 48
        %v8372 = vpop.permute.xlu0 %8371
        %8381 = vrot.lane.b32.xlu0 %v7917, 64
        %v8382 = vpop.permute.xlu0 %8381
        %8383 = vrot.lane.b32.xlu0 %v8053, 64
        %v8384 = vpop.permute.xlu0 %8383
        %8385 = vrot.lane.b32.xlu0 %v8189, 64
        %v8386 = vpop.permute.xlu0 %8385
        %8387 = vrot.lane.b32.xlu0 %v8325, 64
        %v8388 = vpop.permute.xlu0 %8387
        %8397 = vrot.lane.b32.xlu0 %v7918, 80
        %v8398 = vpop.permute.xlu0 %8397
        %8399 = vrot.lane.b32.xlu0 %v8054, 80
        %v8400 = vpop.permute.xlu0 %8399
        %8401 = vrot.lane.b32.xlu0 %v8190, 80
        %v8402 = vpop.permute.xlu0 %8401
        %8403 = vrot.lane.b32.xlu0 %v8326, 80
        %v8404 = vpop.permute.xlu0 %8403
        %8413 = vrot.lane.b32.xlu0 %v7919, 96
        %v8414 = vpop.permute.xlu0 %8413
        %8415 = vrot.lane.b32.xlu0 %v8055, 96
        %v8416 = vpop.permute.xlu0 %8415
        %8417 = vrot.lane.b32.xlu0 %v8191, 96
        %v8418 = vpop.permute.xlu0 %8417
        %8419 = vrot.lane.b32.xlu0 %v8327, 96
        %v8420 = vpop.permute.xlu0 %8419
        %8429 = vrot.lane.b32.xlu0 %v7920, 112
        %v8430 = vpop.permute.xlu0 %8429
        %8431 = vrot.lane.b32.xlu0 %v8056, 112
        %v8432 = vpop.permute.xlu0 %8431
        %8433 = vrot.lane.b32.xlu0 %v8192, 112
        %v8434 = vpop.permute.xlu0 %8433
        %8435 = vrot.lane.b32.xlu0 %v8328, 112
        %v8436 = vpop.permute.xlu0 %8435
        %v8441 = vsel %vm2395, %v7913, %v8334
        %v8442 = vsel %vm2395, %v8049, %v8336
        %v8443 = vsel %vm2395, %v8185, %v8338
        %v8444 = vsel %vm2395, %v8321, %v8340
        %v8445 = vsel %vm2400, %v8441, %v8350
        %v8446 = vsel %vm2400, %v8442, %v8352
        %v8447 = vsel %vm2400, %v8443, %v8354
        %v8448 = vsel %vm2400, %v8444, %v8356
        %v8449 = vsel %vm2405, %v8445, %v8366
        %v8450 = vsel %vm2405, %v8446, %v8368
        %v8451 = vsel %vm2405, %v8447, %v8370
        %v8452 = vsel %vm2405, %v8448, %v8372
        %v8453 = vsel %vm2410, %v8449, %v8382
        %v8454 = vsel %vm2410, %v8450, %v8384
        %v8455 = vsel %vm2410, %v8451, %v8386
        %v8456 = vsel %vm2410, %v8452, %v8388
        %v8457 = vsel %vm2415, %v8453, %v8398
        %v8458 = vsel %vm2415, %v8454, %v8400
        %v8459 = vsel %vm2415, %v8455, %v8402
        %v8460 = vsel %vm2415, %v8456, %v8404
        %v8461 = vsel %vm2420, %v8457, %v8414
        %v8462 = vsel %vm2420, %v8458, %v8416
        %v8463 = vsel %vm2420, %v8459, %v8418
        %v8464 = vsel %vm2420, %v8460, %v8420
        %v8465 = vsel %vm2425, %v8461, %v8430
        %v8466 = vsel %vm2425, %v8462, %v8432
        %v8467 = vsel %vm2425, %v8463, %v8434
        %v8468 = vsel %vm2425, %v8464, %v8436
        %v8469 = vpack.c.bf16 %v8466, %v8465
        %v8470 = vpack.c.bf16 %v8468, %v8467
        %v8472 = vsel %vm2400, %v921, 0
        %v8475 = vsel %vm2400, %v922, 0
        %8477 = vmatprep.subr.bf16.mxu0 0
        %8478 = vmatpush1.bf16.msra.mxu0 0
        %8479 = vmatprep.subr.bf16.mxu0 0
        %8480 = vmatpush1.bf16.msra.mxu0 0
        %8481 = vmatprep.subr.bf16.mxu0 0
        %8482 = vmatpush1.bf16.msra.mxu0 0
        %8483 = vmatprep.subr.bf16.mxu0 0
        %8484 = vmatpush1.bf16.msra.mxu0 0
        %8485 = vmatprep.subr.bf16.mxu0 0
        %8486 = vmatpush1.bf16.msra.mxu0 0
        %8487 = vmatprep.subr.bf16.mxu0 0
        %8488 = vmatpush1.bf16.msra.mxu0 0
        %8489 = vmatprep.subr.bf16.mxu0 0
        %8490 = vmatpush1.bf16.msra.mxu0 %v8470
        %8491 = vmatprep.subr.bf16.mxu0 0
        %8492 = vmatpush1.bf16.msra.mxu0 %v8469
        %8493 = vmatprep.subr.bf16.mxu0 0
        %8494 = vmatpush2.bf16.msra.mxu0 0
        %8495 = vmatprep.subr.bf16.mxu0 0
        %8496 = vmatpush2.bf16.msra.mxu0 0
        %8497 = vmatprep.subr.bf16.mxu0 0
        %8498 = vmatpush2.bf16.msra.mxu0 0
        %8499 = vmatprep.subr.bf16.mxu0 0
        %8500 = vmatpush2.bf16.msra.mxu0 0
        %8501 = vmatprep.subr.bf16.mxu0 0
        %8502 = vmatpush2.bf16.msra.mxu0 0
        %8503 = vmatprep.subr.bf16.mxu0 0
        %8504 = vmatpush2.bf16.msra.mxu0 0
        %8505 = vmatprep.subr.bf16.mxu0 0
        %8506 = vmatpush2.bf16.msra.mxu0 0
        %8507 = vmatprep.subr.bf16.mxu0 0
        %8508 = vmatpush2.bf16.msra.mxu0 0
        %8509 = vmatprep.mubr.bf16.mxu0 0
        %8510 = vmatmul.mubr.bf16.gmra.mxu0 %v8472
        %v8511 = vpop.f32.mrf.mxu0
        %v8512 = vadd.f32 0.0, %v8511
        %v8513 = vpop.f32.mrf.mxu0
        %v8514 = vpop.f32.mrf.mxu0
        %v8515 = vadd.f32 0.0, %v8514
        %v8516 = vpop.f32.mrf.mxu0
        %8517 = vmatprep.mubr.bf16.mxu0 0
        %8518 = vmatmul.mubr.bf16.gmra.mxu0 %v8475
        %v8519 = vpop.f32.mrf.mxu0
        %v8520 = vadd.f32 0.0, %v8519
        %v8521 = vpop.f32.mrf.mxu0
        %v8522 = vpop.f32.mrf.mxu0
        %v8523 = vadd.f32 0.0, %v8522
        %v8524 = vpop.f32.mrf.mxu0
        %8525 = vdwg.mxu0
        %v8526 = vadd.f32 %v7621, %v8512
        %v8527 = vadd.f32 %v7622, %v8515
        %v8528 = vadd.f32 %v7623, %v8520
        %v8529 = vadd.f32 %v7624, %v8523
        %v8530 = vld [vmem:[#allocation2 + $0x2] sm:$0xff]
        %v8531 = vld [vmem:[#allocation2 + $0x12] sm:$0xff]
        %v8532 = vld [vmem:[#allocation2 + $0x22] sm:$0xff]
        %v8533 = vld [vmem:[#allocation2 + $0x32] sm:$0xff]
        %v8534 = vld [vmem:[#allocation2 + $0x42] sm:$0xff]
        %v8535 = vld [vmem:[#allocation2 + $0x52] sm:$0xff]
        %v8536 = vld [vmem:[#allocation2 + $0x62] sm:$0xff]
        %v8537 = vld [vmem:[#allocation2 + $0x72] sm:$0xff]
        %v8538 = vld [vmem:[#allocation2 + $0x82] sm:$0xff]
        %v8539 = vld [vmem:[#allocation2 + $0x92] sm:$0xff]
        %v8540 = vld [vmem:[#allocation2 + $0xa2] sm:$0xff]
        %v8541 = vld [vmem:[#allocation2 + $0xb2] sm:$0xff]
        %v8542 = vld [vmem:[#allocation2 + $0xc2] sm:$0xff]
        %v8543 = vld [vmem:[#allocation2 + $0xd2] sm:$0xff]
        %v8544 = vld [vmem:[#allocation2 + $0xe2] sm:$0xff]
        %v8545 = vld [vmem:[#allocation2 + $0xf2] sm:$0xff]
        %v8546 = vld [vmem:[#allocation2 + $0x102] sm:$0xff]
        %v8547 = vld [vmem:[#allocation2 + $0x112] sm:$0xff]
        %v8548 = vld [vmem:[#allocation2 + $0x122] sm:$0xff]
        %v8549 = vld [vmem:[#allocation2 + $0x132] sm:$0xff]
        %v8550 = vld [vmem:[#allocation2 + $0x142] sm:$0xff]
        %v8551 = vld [vmem:[#allocation2 + $0x152] sm:$0xff]
        %v8552 = vld [vmem:[#allocation2 + $0x162] sm:$0xff]
        %v8553 = vld [vmem:[#allocation2 + $0x172] sm:$0xff]
        %v8554 = vld [vmem:[#allocation2 + $0x182] sm:$0xff]
        %v8555 = vld [vmem:[#allocation2 + $0x192] sm:$0xff]
        %v8556 = vld [vmem:[#allocation2 + $0x1a2] sm:$0xff]
        %v8557 = vld [vmem:[#allocation2 + $0x1b2] sm:$0xff]
        %v8558 = vld [vmem:[#allocation2 + $0x1c2] sm:$0xff]
        %v8559 = vld [vmem:[#allocation2 + $0x1d2] sm:$0xff]
        %v8560 = vld [vmem:[#allocation2 + $0x1e2] sm:$0xff]
        %v8561 = vld [vmem:[#allocation2 + $0x1f2] sm:$0xff]
        %8594 = vrot.lane.b32.xlu0 %v8530, 126
        %v8595 = vpop.permute.xlu0 %8594
        %8596 = vrot.lane.b32.xlu0 %v8531, 126
        %v8597 = vpop.permute.xlu0 %8596
        %8598 = vrot.lane.b32.xlu0 %v8532, 126
        %v8599 = vpop.permute.xlu0 %8598
        %8600 = vrot.lane.b32.xlu0 %v8533, 126
        %v8601 = vpop.permute.xlu0 %8600
        %8602 = vrot.lane.b32.xlu0 %v8534, 126
        %v8603 = vpop.permute.xlu0 %8602
        %8604 = vrot.lane.b32.xlu0 %v8535, 126
        %v8605 = vpop.permute.xlu0 %8604
        %8606 = vrot.lane.b32.xlu0 %v8536, 126
        %v8607 = vpop.permute.xlu0 %8606
        %8608 = vrot.lane.b32.xlu0 %v8537, 126
        %v8609 = vpop.permute.xlu0 %8608
        %8610 = vrot.lane.b32.xlu0 %v8538, 126
        %v8611 = vpop.permute.xlu0 %8610
        %8612 = vrot.lane.b32.xlu0 %v8539, 126
        %v8613 = vpop.permute.xlu0 %8612
        %8614 = vrot.lane.b32.xlu0 %v8540, 126
        %v8615 = vpop.permute.xlu0 %8614
        %8616 = vrot.lane.b32.xlu0 %v8541, 126
        %v8617 = vpop.permute.xlu0 %8616
        %8618 = vrot.lane.b32.xlu0 %v8542, 126
        %v8619 = vpop.permute.xlu0 %8618
        %8620 = vrot.lane.b32.xlu0 %v8543, 126
        %v8621 = vpop.permute.xlu0 %8620
        %8622 = vrot.lane.b32.xlu0 %v8544, 126
        %v8623 = vpop.permute.xlu0 %8622
        %8624 = vrot.lane.b32.xlu0 %v8545, 126
        %v8625 = vpop.permute.xlu0 %8624
        %8626 = vrot.lane.b32.xlu0 %v8546, 126
        %v8627 = vpop.permute.xlu0 %8626
        %8628 = vrot.lane.b32.xlu0 %v8547, 126
        %v8629 = vpop.permute.xlu0 %8628
        %8630 = vrot.lane.b32.xlu0 %v8548, 126
        %v8631 = vpop.permute.xlu0 %8630
        %8632 = vrot.lane.b32.xlu0 %v8549, 126
        %v8633 = vpop.permute.xlu0 %8632
        %8634 = vrot.lane.b32.xlu0 %v8550, 126
        %v8635 = vpop.permute.xlu0 %8634
        %8636 = vrot.lane.b32.xlu0 %v8551, 126
        %v8637 = vpop.permute.xlu0 %8636
        %8638 = vrot.lane.b32.xlu0 %v8552, 126
        %v8639 = vpop.permute.xlu0 %8638
        %8640 = vrot.lane.b32.xlu0 %v8553, 126
        %v8641 = vpop.permute.xlu0 %8640
        %8642 = vrot.lane.b32.xlu0 %v8554, 126
        %v8643 = vpop.permute.xlu0 %8642
        %8644 = vrot.lane.b32.xlu0 %v8555, 126
        %v8645 = vpop.permute.xlu0 %8644
        %8646 = vrot.lane.b32.xlu0 %v8556, 126
        %v8647 = vpop.permute.xlu0 %8646
        %8648 = vrot.lane.b32.xlu0 %v8557, 126
        %v8649 = vpop.permute.xlu0 %8648
        %8650 = vrot.lane.b32.xlu0 %v8558, 126
        %v8651 = vpop.permute.xlu0 %8650
        %8652 = vrot.lane.b32.xlu0 %v8559, 126
        %v8653 = vpop.permute.xlu0 %8652
        %8654 = vrot.lane.b32.xlu0 %v8560, 126
        %v8655 = vpop.permute.xlu0 %8654
        %8656 = vrot.lane.b32.xlu0 %v8561, 126
        %v8657 = vpop.permute.xlu0 %8656
        %v8690 = vcombine.low %v8595, %v8599
        %v8691 = vcombine.high %v8595, %v8599
        %v8693 = vunpack.c.l.s4 1983009808
        %v8694 = vunpack.c.0.s8 %v8693
        %v8695 = vlaneseq
        %v8696 = vshrl.u32 %v8695, 7
        %v8697 = vsub.s32 %v8694, %v8696
        %v8698 = vrot.slane %v8690, %v8697
        %v8700 = vunpack.c.l.s4 1983009808
        %v8701 = vunpack.c.0.s8 %v8700
        %v8702 = vlaneseq
        %v8703 = vshrl.u32 %v8702, 7
        %v8704 = vsub.s32 %v8701, %v8703
        %v8705 = vrot.slane %v8691, %v8704
        %v8706 = vcombine.low %v8597, %v8601
        %v8707 = vcombine.high %v8597, %v8601
        %v8709 = vunpack.c.l.s4 1983009808
        %v8710 = vunpack.c.0.s8 %v8709
        %v8711 = vlaneseq
        %v8712 = vshrl.u32 %v8711, 7
        %v8713 = vsub.s32 %v8710, %v8712
        %v8714 = vrot.slane %v8706, %v8713
        %v8716 = vunpack.c.l.s4 1983009808
        %v8717 = vunpack.c.0.s8 %v8716
        %v8718 = vlaneseq
        %v8719 = vshrl.u32 %v8718, 7
        %v8720 = vsub.s32 %v8717, %v8719
        %v8721 = vrot.slane %v8707, %v8720
        %v8722 = vcombine.low %v8603, %v8607
        %v8723 = vcombine.high %v8603, %v8607
        %v8725 = vunpack.c.l.s4 1983009808
        %v8726 = vunpack.c.0.s8 %v8725
        %v8727 = vlaneseq
        %v8728 = vshrl.u32 %v8727, 7
        %v8729 = vsub.s32 %v8726, %v8728
        %v8730 = vrot.slane %v8722, %v8729
        %v8732 = vunpack.c.l.s4 1983009808
        %v8733 = vunpack.c.0.s8 %v8732
        %v8734 = vlaneseq
        %v8735 = vshrl.u32 %v8734, 7
        %v8736 = vsub.s32 %v8733, %v8735
        %v8737 = vrot.slane %v8723, %v8736
        %v8738 = vcombine.low %v8605, %v8609
        %v8739 = vcombine.high %v8605, %v8609
        %v8741 = vunpack.c.l.s4 1983009808
        %v8742 = vunpack.c.0.s8 %v8741
        %v8743 = vlaneseq
        %v8744 = vshrl.u32 %v8743, 7
        %v8745 = vsub.s32 %v8742, %v8744
        %v8746 = vrot.slane %v8738, %v8745
        %v8748 = vunpack.c.l.s4 1983009808
        %v8749 = vunpack.c.0.s8 %v8748
        %v8750 = vlaneseq
        %v8751 = vshrl.u32 %v8750, 7
        %v8752 = vsub.s32 %v8749, %v8751
        %v8753 = vrot.slane %v8739, %v8752
        %v8754 = vcombine.low %v8698, %v8714
        %v8755 = vcombine.high %v8698, %v8714
        %v8757 = vunpack.c.l.s4 1934713408
        %v8758 = vunpack.c.0.s8 %v8757
        %v8759 = vlaneseq
        %v8760 = vshrl.u32 %v8759, 7
        %v8761 = vsub.s32 %v8758, %v8760
        %v8762 = vrot.slane %v8754, %v8761
        %v8764 = vunpack.c.l.s4 1934713408
        %v8765 = vunpack.c.0.s8 %v8764
        %v8766 = vlaneseq
        %v8767 = vshrl.u32 %v8766, 7
        %v8768 = vsub.s32 %v8765, %v8767
        %v8769 = vrot.slane %v8755, %v8768
        %v8770 = vcombine.low %v8705, %v8721
        %v8771 = vcombine.high %v8705, %v8721
        %v8773 = vunpack.c.l.s4 1934713408
        %v8774 = vunpack.c.0.s8 %v8773
        %v8775 = vlaneseq
        %v8776 = vshrl.u32 %v8775, 7
        %v8777 = vsub.s32 %v8774, %v8776
        %v8778 = vrot.slane %v8770, %v8777
        %v8780 = vunpack.c.l.s4 1934713408
        %v8781 = vunpack.c.0.s8 %v8780
        %v8782 = vlaneseq
        %v8783 = vshrl.u32 %v8782, 7
        %v8784 = vsub.s32 %v8781, %v8783
        %v8785 = vrot.slane %v8771, %v8784
        %v8786 = vcombine.low %v8730, %v8746
        %v8787 = vcombine.high %v8730, %v8746
        %v8789 = vunpack.c.l.s4 1934713408
        %v8790 = vunpack.c.0.s8 %v8789
        %v8791 = vlaneseq
        %v8792 = vshrl.u32 %v8791, 7
        %v8793 = vsub.s32 %v8790, %v8792
        %v8794 = vrot.slane %v8786, %v8793
        %v8796 = vunpack.c.l.s4 1934713408
        %v8797 = vunpack.c.0.s8 %v8796
        %v8798 = vlaneseq
        %v8799 = vshrl.u32 %v8798, 7
        %v8800 = vsub.s32 %v8797, %v8799
        %v8801 = vrot.slane %v8787, %v8800
        %v8802 = vcombine.low %v8737, %v8753
        %v8803 = vcombine.high %v8737, %v8753
        %v8805 = vunpack.c.l.s4 1934713408
        %v8806 = vunpack.c.0.s8 %v8805
        %v8807 = vlaneseq
        %v8808 = vshrl.u32 %v8807, 7
        %v8809 = vsub.s32 %v8806, %v8808
        %v8810 = vrot.slane %v8802, %v8809
        %v8812 = vunpack.c.l.s4 1934713408
        %v8813 = vunpack.c.0.s8 %v8812
        %v8814 = vlaneseq
        %v8815 = vshrl.u32 %v8814, 7
        %v8816 = vsub.s32 %v8813, %v8815
        %v8817 = vrot.slane %v8803, %v8816
        %v8818 = vcombine.low %v8762, %v8794
        %v8819 = vcombine.high %v8762, %v8794
        %v8820 = vcombine.low %v8769, %v8801
        %v8821 = vcombine.high %v8769, %v8801
        %v8822 = vcombine.low %v8778, %v8810
        %v8823 = vcombine.high %v8778, %v8810
        %v8824 = vcombine.low %v8785, %v8817
        %v8825 = vcombine.high %v8785, %v8817
        %v8826 = vcombine.low %v8611, %v8615
        %v8827 = vcombine.high %v8611, %v8615
        %v8829 = vunpack.c.l.s4 1983009808
        %v8830 = vunpack.c.0.s8 %v8829
        %v8831 = vlaneseq
        %v8832 = vshrl.u32 %v8831, 7
        %v8833 = vsub.s32 %v8830, %v8832
        %v8834 = vrot.slane %v8826, %v8833
        %v8836 = vunpack.c.l.s4 1983009808
        %v8837 = vunpack.c.0.s8 %v8836
        %v8838 = vlaneseq
        %v8839 = vshrl.u32 %v8838, 7
        %v8840 = vsub.s32 %v8837, %v8839
        %v8841 = vrot.slane %v8827, %v8840
        %v8842 = vcombine.low %v8613, %v8617
        %v8843 = vcombine.high %v8613, %v8617
        %v8845 = vunpack.c.l.s4 1983009808
        %v8846 = vunpack.c.0.s8 %v8845
        %v8847 = vlaneseq
        %v8848 = vshrl.u32 %v8847, 7
        %v8849 = vsub.s32 %v8846, %v8848
        %v8850 = vrot.slane %v8842, %v8849
        %v8852 = vunpack.c.l.s4 1983009808
        %v8853 = vunpack.c.0.s8 %v8852
        %v8854 = vlaneseq
        %v8855 = vshrl.u32 %v8854, 7
        %v8856 = vsub.s32 %v8853, %v8855
        %v8857 = vrot.slane %v8843, %v8856
        %v8858 = vcombine.low %v8619, %v8623
        %v8859 = vcombine.high %v8619, %v8623
        %v8861 = vunpack.c.l.s4 1983009808
        %v8862 = vunpack.c.0.s8 %v8861
        %v8863 = vlaneseq
        %v8864 = vshrl.u32 %v8863, 7
        %v8865 = vsub.s32 %v8862, %v8864
        %v8866 = vrot.slane %v8858, %v8865
        %v8868 = vunpack.c.l.s4 1983009808
        %v8869 = vunpack.c.0.s8 %v8868
        %v8870 = vlaneseq
        %v8871 = vshrl.u32 %v8870, 7
        %v8872 = vsub.s32 %v8869, %v8871
        %v8873 = vrot.slane %v8859, %v8872
        %v8874 = vcombine.low %v8621, %v8625
        %v8875 = vcombine.high %v8621, %v8625
        %v8877 = vunpack.c.l.s4 1983009808
        %v8878 = vunpack.c.0.s8 %v8877
        %v8879 = vlaneseq
        %v8880 = vshrl.u32 %v8879, 7
        %v8881 = vsub.s32 %v8878, %v8880
        %v8882 = vrot.slane %v8874, %v8881
        %v8884 = vunpack.c.l.s4 1983009808
        %v8885 = vunpack.c.0.s8 %v8884
        %v8886 = vlaneseq
        %v8887 = vshrl.u32 %v8886, 7
        %v8888 = vsub.s32 %v8885, %v8887
        %v8889 = vrot.slane %v8875, %v8888
        %v8890 = vcombine.low %v8834, %v8850
        %v8891 = vcombine.high %v8834, %v8850
        %v8893 = vunpack.c.l.s4 1934713408
        %v8894 = vunpack.c.0.s8 %v8893
        %v8895 = vlaneseq
        %v8896 = vshrl.u32 %v8895, 7
        %v8897 = vsub.s32 %v8894, %v8896
        %v8898 = vrot.slane %v8890, %v8897
        %v8900 = vunpack.c.l.s4 1934713408
        %v8901 = vunpack.c.0.s8 %v8900
        %v8902 = vlaneseq
        %v8903 = vshrl.u32 %v8902, 7
        %v8904 = vsub.s32 %v8901, %v8903
        %v8905 = vrot.slane %v8891, %v8904
        %v8906 = vcombine.low %v8841, %v8857
        %v8907 = vcombine.high %v8841, %v8857
        %v8909 = vunpack.c.l.s4 1934713408
        %v8910 = vunpack.c.0.s8 %v8909
        %v8911 = vlaneseq
        %v8912 = vshrl.u32 %v8911, 7
        %v8913 = vsub.s32 %v8910, %v8912
        %v8914 = vrot.slane %v8906, %v8913
        %v8916 = vunpack.c.l.s4 1934713408
        %v8917 = vunpack.c.0.s8 %v8916
        %v8918 = vlaneseq
        %v8919 = vshrl.u32 %v8918, 7
        %v8920 = vsub.s32 %v8917, %v8919
        %v8921 = vrot.slane %v8907, %v8920
        %v8922 = vcombine.low %v8866, %v8882
        %v8923 = vcombine.high %v8866, %v8882
        %v8925 = vunpack.c.l.s4 1934713408
        %v8926 = vunpack.c.0.s8 %v8925
        %v8927 = vlaneseq
        %v8928 = vshrl.u32 %v8927, 7
        %v8929 = vsub.s32 %v8926, %v8928
        %v8930 = vrot.slane %v8922, %v8929
        %v8932 = vunpack.c.l.s4 1934713408
        %v8933 = vunpack.c.0.s8 %v8932
        %v8934 = vlaneseq
        %v8935 = vshrl.u32 %v8934, 7
        %v8936 = vsub.s32 %v8933, %v8935
        %v8937 = vrot.slane %v8923, %v8936
        %v8938 = vcombine.low %v8873, %v8889
        %v8939 = vcombine.high %v8873, %v8889
        %v8941 = vunpack.c.l.s4 1934713408
        %v8942 = vunpack.c.0.s8 %v8941
        %v8943 = vlaneseq
        %v8944 = vshrl.u32 %v8943, 7
        %v8945 = vsub.s32 %v8942, %v8944
        %v8946 = vrot.slane %v8938, %v8945
        %v8948 = vunpack.c.l.s4 1934713408
        %v8949 = vunpack.c.0.s8 %v8948
        %v8950 = vlaneseq
        %v8951 = vshrl.u32 %v8950, 7
        %v8952 = vsub.s32 %v8949, %v8951
        %v8953 = vrot.slane %v8939, %v8952
        %v8954 = vcombine.low %v8898, %v8930
        %v8955 = vcombine.high %v8898, %v8930
        %v8956 = vcombine.low %v8905, %v8937
        %v8957 = vcombine.high %v8905, %v8937
        %v8958 = vcombine.low %v8914, %v8946
        %v8959 = vcombine.high %v8914, %v8946
        %v8960 = vcombine.low %v8921, %v8953
        %v8961 = vcombine.high %v8921, %v8953
        %v8962 = vcombine.low %v8627, %v8631
        %v8963 = vcombine.high %v8627, %v8631
        %v8965 = vunpack.c.l.s4 1983009808
        %v8966 = vunpack.c.0.s8 %v8965
        %v8967 = vlaneseq
        %v8968 = vshrl.u32 %v8967, 7
        %v8969 = vsub.s32 %v8966, %v8968
        %v8970 = vrot.slane %v8962, %v8969
        %v8972 = vunpack.c.l.s4 1983009808
        %v8973 = vunpack.c.0.s8 %v8972
        %v8974 = vlaneseq
        %v8975 = vshrl.u32 %v8974, 7
        %v8976 = vsub.s32 %v8973, %v8975
        %v8977 = vrot.slane %v8963, %v8976
        %v8978 = vcombine.low %v8629, %v8633
        %v8979 = vcombine.high %v8629, %v8633
        %v8981 = vunpack.c.l.s4 1983009808
        %v8982 = vunpack.c.0.s8 %v8981
        %v8983 = vlaneseq
        %v8984 = vshrl.u32 %v8983, 7
        %v8985 = vsub.s32 %v8982, %v8984
        %v8986 = vrot.slane %v8978, %v8985
        %v8988 = vunpack.c.l.s4 1983009808
        %v8989 = vunpack.c.0.s8 %v8988
        %v8990 = vlaneseq
        %v8991 = vshrl.u32 %v8990, 7
        %v8992 = vsub.s32 %v8989, %v8991
        %v8993 = vrot.slane %v8979, %v8992
        %v8994 = vcombine.low %v8635, %v8639
        %v8995 = vcombine.high %v8635, %v8639
        %v8997 = vunpack.c.l.s4 1983009808
        %v8998 = vunpack.c.0.s8 %v8997
        %v8999 = vlaneseq
        %v9000 = vshrl.u32 %v8999, 7
        %v9001 = vsub.s32 %v8998, %v9000
        %v9002 = vrot.slane %v8994, %v9001
        %v9004 = vunpack.c.l.s4 1983009808
        %v9005 = vunpack.c.0.s8 %v9004
        %v9006 = vlaneseq
        %v9007 = vshrl.u32 %v9006, 7
        %v9008 = vsub.s32 %v9005, %v9007
        %v9009 = vrot.slane %v8995, %v9008
        %v9010 = vcombine.low %v8637, %v8641
        %v9011 = vcombine.high %v8637, %v8641
        %v9013 = vunpack.c.l.s4 1983009808
        %v9014 = vunpack.c.0.s8 %v9013
        %v9015 = vlaneseq
        %v9016 = vshrl.u32 %v9015, 7
        %v9017 = vsub.s32 %v9014, %v9016
        %v9018 = vrot.slane %v9010, %v9017
        %v9020 = vunpack.c.l.s4 1983009808
        %v9021 = vunpack.c.0.s8 %v9020
        %v9022 = vlaneseq
        %v9023 = vshrl.u32 %v9022, 7
        %v9024 = vsub.s32 %v9021, %v9023
        %v9025 = vrot.slane %v9011, %v9024
        %v9026 = vcombine.low %v8970, %v8986
        %v9027 = vcombine.high %v8970, %v8986
        %v9029 = vunpack.c.l.s4 1934713408
        %v9030 = vunpack.c.0.s8 %v9029
        %v9031 = vlaneseq
        %v9032 = vshrl.u32 %v9031, 7
        %v9033 = vsub.s32 %v9030, %v9032
        %v9034 = vrot.slane %v9026, %v9033
        %v9036 = vunpack.c.l.s4 1934713408
        %v9037 = vunpack.c.0.s8 %v9036
        %v9038 = vlaneseq
        %v9039 = vshrl.u32 %v9038, 7
        %v9040 = vsub.s32 %v9037, %v9039
        %v9041 = vrot.slane %v9027, %v9040
        %v9042 = vcombine.low %v8977, %v8993
        %v9043 = vcombine.high %v8977, %v8993
        %v9045 = vunpack.c.l.s4 1934713408
        %v9046 = vunpack.c.0.s8 %v9045
        %v9047 = vlaneseq
        %v9048 = vshrl.u32 %v9047, 7
        %v9049 = vsub.s32 %v9046, %v9048
        %v9050 = vrot.slane %v9042, %v9049
        %v9052 = vunpack.c.l.s4 1934713408
        %v9053 = vunpack.c.0.s8 %v9052
        %v9054 = vlaneseq
        %v9055 = vshrl.u32 %v9054, 7
        %v9056 = vsub.s32 %v9053, %v9055
        %v9057 = vrot.slane %v9043, %v9056
        %v9058 = vcombine.low %v9002, %v9018
        %v9059 = vcombine.high %v9002, %v9018
        %v9061 = vunpack.c.l.s4 1934713408
        %v9062 = vunpack.c.0.s8 %v9061
        %v9063 = vlaneseq
        %v9064 = vshrl.u32 %v9063, 7
        %v9065 = vsub.s32 %v9062, %v9064
        %v9066 = vrot.slane %v9058, %v9065
        %v9068 = vunpack.c.l.s4 1934713408
        %v9069 = vunpack.c.0.s8 %v9068
        %v9070 = vlaneseq
        %v9071 = vshrl.u32 %v9070, 7
        %v9072 = vsub.s32 %v9069, %v9071
        %v9073 = vrot.slane %v9059, %v9072
        %v9074 = vcombine.low %v9009, %v9025
        %v9075 = vcombine.high %v9009, %v9025
        %v9077 = vunpack.c.l.s4 1934713408
        %v9078 = vunpack.c.0.s8 %v9077
        %v9079 = vlaneseq
        %v9080 = vshrl.u32 %v9079, 7
        %v9081 = vsub.s32 %v9078, %v9080
        %v9082 = vrot.slane %v9074, %v9081
        %v9084 = vunpack.c.l.s4 1934713408
        %v9085 = vunpack.c.0.s8 %v9084
        %v9086 = vlaneseq
        %v9087 = vshrl.u32 %v9086, 7
        %v9088 = vsub.s32 %v9085, %v9087
        %v9089 = vrot.slane %v9075, %v9088
        %v9090 = vcombine.low %v9034, %v9066
        %v9091 = vcombine.high %v9034, %v9066
        %v9092 = vcombine.low %v9041, %v9073
        %v9093 = vcombine.high %v9041, %v9073
        %v9094 = vcombine.low %v9050, %v9082
        %v9095 = vcombine.high %v9050, %v9082
        %v9096 = vcombine.low %v9057, %v9089
        %v9097 = vcombine.high %v9057, %v9089
        %v9098 = vcombine.low %v8643, %v8647
        %v9099 = vcombine.high %v8643, %v8647
        %v9101 = vunpack.c.l.s4 1983009808
        %v9102 = vunpack.c.0.s8 %v9101
        %v9103 = vlaneseq
        %v9104 = vshrl.u32 %v9103, 7
        %v9105 = vsub.s32 %v9102, %v9104
        %v9106 = vrot.slane %v9098, %v9105
        %v9108 = vunpack.c.l.s4 1983009808
        %v9109 = vunpack.c.0.s8 %v9108
        %v9110 = vlaneseq
        %v9111 = vshrl.u32 %v9110, 7
        %v9112 = vsub.s32 %v9109, %v9111
        %v9113 = vrot.slane %v9099, %v9112
        %v9114 = vcombine.low %v8645, %v8649
        %v9115 = vcombine.high %v8645, %v8649
        %v9117 = vunpack.c.l.s4 1983009808
        %v9118 = vunpack.c.0.s8 %v9117
        %v9119 = vlaneseq
        %v9120 = vshrl.u32 %v9119, 7
        %v9121 = vsub.s32 %v9118, %v9120
        %v9122 = vrot.slane %v9114, %v9121
        %v9124 = vunpack.c.l.s4 1983009808
        %v9125 = vunpack.c.0.s8 %v9124
        %v9126 = vlaneseq
        %v9127 = vshrl.u32 %v9126, 7
        %v9128 = vsub.s32 %v9125, %v9127
        %v9129 = vrot.slane %v9115, %v9128
        %v9130 = vcombine.low %v8651, %v8655
        %v9131 = vcombine.high %v8651, %v8655
        %v9133 = vunpack.c.l.s4 1983009808
        %v9134 = vunpack.c.0.s8 %v9133
        %v9135 = vlaneseq
        %v9136 = vshrl.u32 %v9135, 7
        %v9137 = vsub.s32 %v9134, %v9136
        %v9138 = vrot.slane %v9130, %v9137
        %v9140 = vunpack.c.l.s4 1983009808
        %v9141 = vunpack.c.0.s8 %v9140
        %v9142 = vlaneseq
        %v9143 = vshrl.u32 %v9142, 7
        %v9144 = vsub.s32 %v9141, %v9143
        %v9145 = vrot.slane %v9131, %v9144
        %v9146 = vcombine.low %v8653, %v8657
        %v9147 = vcombine.high %v8653, %v8657
        %v9149 = vunpack.c.l.s4 1983009808
        %v9150 = vunpack.c.0.s8 %v9149
        %v9151 = vlaneseq
        %v9152 = vshrl.u32 %v9151, 7
        %v9153 = vsub.s32 %v9150, %v9152
        %v9154 = vrot.slane %v9146, %v9153
        %v9156 = vunpack.c.l.s4 1983009808
        %v9157 = vunpack.c.0.s8 %v9156
        %v9158 = vlaneseq
        %v9159 = vshrl.u32 %v9158, 7
        %v9160 = vsub.s32 %v9157, %v9159
        %v9161 = vrot.slane %v9147, %v9160
        %v9162 = vcombine.low %v9106, %v9122
        %v9163 = vcombine.high %v9106, %v9122
        %v9165 = vunpack.c.l.s4 1934713408
        %v9166 = vunpack.c.0.s8 %v9165
        %v9167 = vlaneseq
        %v9168 = vshrl.u32 %v9167, 7
        %v9169 = vsub.s32 %v9166, %v9168
        %v9170 = vrot.slane %v9162, %v9169
        %v9172 = vunpack.c.l.s4 1934713408
        %v9173 = vunpack.c.0.s8 %v9172
        %v9174 = vlaneseq
        %v9175 = vshrl.u32 %v9174, 7
        %v9176 = vsub.s32 %v9173, %v9175
        %v9177 = vrot.slane %v9163, %v9176
        %v9178 = vcombine.low %v9113, %v9129
        %v9179 = vcombine.high %v9113, %v9129
        %v9181 = vunpack.c.l.s4 1934713408
        %v9182 = vunpack.c.0.s8 %v9181
        %v9183 = vlaneseq
        %v9184 = vshrl.u32 %v9183, 7
        %v9185 = vsub.s32 %v9182, %v9184
        %v9186 = vrot.slane %v9178, %v9185
        %v9188 = vunpack.c.l.s4 1934713408
        %v9189 = vunpack.c.0.s8 %v9188
        %v9190 = vlaneseq
        %v9191 = vshrl.u32 %v9190, 7
        %v9192 = vsub.s32 %v9189, %v9191
        %v9193 = vrot.slane %v9179, %v9192
        %v9194 = vcombine.low %v9138, %v9154
        %v9195 = vcombine.high %v9138, %v9154
        %v9197 = vunpack.c.l.s4 1934713408
        %v9198 = vunpack.c.0.s8 %v9197
        %v9199 = vlaneseq
        %v9200 = vshrl.u32 %v9199, 7
        %v9201 = vsub.s32 %v9198, %v9200
        %v9202 = vrot.slane %v9194, %v9201
        %v9204 = vunpack.c.l.s4 1934713408
        %v9205 = vunpack.c.0.s8 %v9204
        %v9206 = vlaneseq
        %v9207 = vshrl.u32 %v9206, 7
        %v9208 = vsub.s32 %v9205, %v9207
        %v9209 = vrot.slane %v9195, %v9208
        %v9210 = vcombine.low %v9145, %v9161
        %v9211 = vcombine.high %v9145, %v9161
        %v9213 = vunpack.c.l.s4 1934713408
        %v9214 = vunpack.c.0.s8 %v9213
        %v9215 = vlaneseq
        %v9216 = vshrl.u32 %v9215, 7
        %v9217 = vsub.s32 %v9214, %v9216
        %v9218 = vrot.slane %v9210, %v9217
        %v9220 = vunpack.c.l.s4 1934713408
        %v9221 = vunpack.c.0.s8 %v9220
        %v9222 = vlaneseq
        %v9223 = vshrl.u32 %v9222, 7
        %v9224 = vsub.s32 %v9221, %v9223
        %v9225 = vrot.slane %v9211, %v9224
        %v9226 = vcombine.low %v9170, %v9202
        %v9227 = vcombine.high %v9170, %v9202
        %v9228 = vcombine.low %v9177, %v9209
        %v9229 = vcombine.high %v9177, %v9209
        %v9230 = vcombine.low %v9186, %v9218
        %v9231 = vcombine.high %v9186, %v9218
        %v9232 = vcombine.low %v9193, %v9225
        %v9233 = vcombine.high %v9193, %v9225
        %9238 = vrot.lane.b32.xlu0 %v8819, 16
        %v9239 = vpop.permute.xlu0 %9238
        %9240 = vrot.lane.b32.xlu0 %v8955, 16
        %v9241 = vpop.permute.xlu0 %9240
        %9242 = vrot.lane.b32.xlu0 %v9091, 16
        %v9243 = vpop.permute.xlu0 %9242
        %9244 = vrot.lane.b32.xlu0 %v9227, 16
        %v9245 = vpop.permute.xlu0 %9244
        %9254 = vrot.lane.b32.xlu0 %v8820, 32
        %v9255 = vpop.permute.xlu0 %9254
        %9256 = vrot.lane.b32.xlu0 %v8956, 32
        %v9257 = vpop.permute.xlu0 %9256
        %9258 = vrot.lane.b32.xlu0 %v9092, 32
        %v9259 = vpop.permute.xlu0 %9258
        %9260 = vrot.lane.b32.xlu0 %v9228, 32
        %v9261 = vpop.permute.xlu0 %9260
        %9270 = vrot.lane.b32.xlu0 %v8821, 48
        %v9271 = vpop.permute.xlu0 %9270
        %9272 = vrot.lane.b32.xlu0 %v8957, 48
        %v9273 = vpop.permute.xlu0 %9272
        %9274 = vrot.lane.b32.xlu0 %v9093, 48
        %v9275 = vpop.permute.xlu0 %9274
        %9276 = vrot.lane.b32.xlu0 %v9229, 48
        %v9277 = vpop.permute.xlu0 %9276
        %9286 = vrot.lane.b32.xlu0 %v8822, 64
        %v9287 = vpop.permute.xlu0 %9286
        %9288 = vrot.lane.b32.xlu0 %v8958, 64
        %v9289 = vpop.permute.xlu0 %9288
        %9290 = vrot.lane.b32.xlu0 %v9094, 64
        %v9291 = vpop.permute.xlu0 %9290
        %9292 = vrot.lane.b32.xlu0 %v9230, 64
        %v9293 = vpop.permute.xlu0 %9292
        %9302 = vrot.lane.b32.xlu0 %v8823, 80
        %v9303 = vpop.permute.xlu0 %9302
        %9304 = vrot.lane.b32.xlu0 %v8959, 80
        %v9305 = vpop.permute.xlu0 %9304
        %9306 = vrot.lane.b32.xlu0 %v9095, 80
        %v9307 = vpop.permute.xlu0 %9306
        %9308 = vrot.lane.b32.xlu0 %v9231, 80
        %v9309 = vpop.permute.xlu0 %9308
        %9318 = vrot.lane.b32.xlu0 %v8824, 96
        %v9319 = vpop.permute.xlu0 %9318
        %9320 = vrot.lane.b32.xlu0 %v8960, 96
        %v9321 = vpop.permute.xlu0 %9320
        %9322 = vrot.lane.b32.xlu0 %v9096, 96
        %v9323 = vpop.permute.xlu0 %9322
        %9324 = vrot.lane.b32.xlu0 %v9232, 96
        %v9325 = vpop.permute.xlu0 %9324
        %9334 = vrot.lane.b32.xlu0 %v8825, 112
        %v9335 = vpop.permute.xlu0 %9334
        %9336 = vrot.lane.b32.xlu0 %v8961, 112
        %v9337 = vpop.permute.xlu0 %9336
        %9338 = vrot.lane.b32.xlu0 %v9097, 112
        %v9339 = vpop.permute.xlu0 %9338
        %9340 = vrot.lane.b32.xlu0 %v9233, 112
        %v9341 = vpop.permute.xlu0 %9340
        %v9346 = vsel %vm2395, %v8818, %v9239
        %v9347 = vsel %vm2395, %v8954, %v9241
        %v9348 = vsel %vm2395, %v9090, %v9243
        %v9349 = vsel %vm2395, %v9226, %v9245
        %v9350 = vsel %vm2400, %v9346, %v9255
        %v9351 = vsel %vm2400, %v9347, %v9257
        %v9352 = vsel %vm2400, %v9348, %v9259
        %v9353 = vsel %vm2400, %v9349, %v9261
        %v9354 = vsel %vm2405, %v9350, %v9271
        %v9355 = vsel %vm2405, %v9351, %v9273
        %v9356 = vsel %vm2405, %v9352, %v9275
        %v9357 = vsel %vm2405, %v9353, %v9277
        %v9358 = vsel %vm2410, %v9354, %v9287
        %v9359 = vsel %vm2410, %v9355, %v9289
        %v9360 = vsel %vm2410, %v9356, %v9291
        %v9361 = vsel %vm2410, %v9357, %v9293
        %v9362 = vsel %vm2415, %v9358, %v9303
        %v9363 = vsel %vm2415, %v9359, %v9305
        %v9364 = vsel %vm2415, %v9360, %v9307
        %v9365 = vsel %vm2415, %v9361, %v9309
        %v9366 = vsel %vm2420, %v9362, %v9319
        %v9367 = vsel %vm2420, %v9363, %v9321
        %v9368 = vsel %vm2420, %v9364, %v9323
        %v9369 = vsel %vm2420, %v9365, %v9325
        %v9370 = vsel %vm2425, %v9366, %v9335
        %v9371 = vsel %vm2425, %v9367, %v9337
        %v9372 = vsel %vm2425, %v9368, %v9339
        %v9373 = vsel %vm2425, %v9369, %v9341
        %v9374 = vpack.c.bf16 %v9371, %v9370
        %v9375 = vpack.c.bf16 %v9373, %v9372
        %v9377 = vsel %vm2400, %v923, 0
        %v9380 = vsel %vm2400, %v924, 0
        %9382 = vmatprep.subr.bf16.mxu0 0
        %9383 = vmatpush1.bf16.msra.mxu0 0
        %9384 = vmatprep.subr.bf16.mxu0 0
        %9385 = vmatpush1.bf16.msra.mxu0 0
        %9386 = vmatprep.subr.bf16.mxu0 0
        %9387 = vmatpush1.bf16.msra.mxu0 0
        %9388 = vmatprep.subr.bf16.mxu0 0
        %9389 = vmatpush1.bf16.msra.mxu0 0
        %9390 = vmatprep.subr.bf16.mxu0 0
        %9391 = vmatpush1.bf16.msra.mxu0 0
        %9392 = vmatprep.subr.bf16.mxu0 0
        %9393 = vmatpush1.bf16.msra.mxu0 0
        %9394 = vmatprep.subr.bf16.mxu0 0
        %9395 = vmatpush1.bf16.msra.mxu0 %v9375
        %9396 = vmatprep.subr.bf16.mxu0 0
        %9397 = vmatpush1.bf16.msra.mxu0 %v9374
        %9398 = vmatprep.subr.bf16.mxu0 0
        %9399 = vmatpush2.bf16.msra.mxu0 0
        %9400 = vmatprep.subr.bf16.mxu0 0
        %9401 = vmatpush2.bf16.msra.mxu0 0
        %9402 = vmatprep.subr.bf16.mxu0 0
        %9403 = vmatpush2.bf16.msra.mxu0 0
        %9404 = vmatprep.subr.bf16.mxu0 0
        %9405 = vmatpush2.bf16.msra.mxu0 0
        %9406 = vmatprep.subr.bf16.mxu0 0
        %9407 = vmatpush2.bf16.msra.mxu0 0
        %9408 = vmatprep.subr.bf16.mxu0 0
        %9409 = vmatpush2.bf16.msra.mxu0 0
        %9410 = vmatprep.subr.bf16.mxu0 0
        %9411 = vmatpush2.bf16.msra.mxu0 0
        %9412 = vmatprep.subr.bf16.mxu0 0
        %9413 = vmatpush2.bf16.msra.mxu0 0
        %9414 = vmatprep.mubr.bf16.mxu0 0
        %9415 = vmatmul.mubr.bf16.gmra.mxu0 %v9377
        %v9416 = vpop.f32.mrf.mxu0
        %v9417 = vadd.f32 0.0, %v9416
        %v9418 = vpop.f32.mrf.mxu0
        %v9419 = vpop.f32.mrf.mxu0
        %v9420 = vadd.f32 0.0, %v9419
        %v9421 = vpop.f32.mrf.mxu0
        %9422 = vmatprep.mubr.bf16.mxu0 0
        %9423 = vmatmul.mubr.bf16.gmra.mxu0 %v9380
        %v9424 = vpop.f32.mrf.mxu0
        %v9425 = vadd.f32 0.0, %v9424
        %v9426 = vpop.f32.mrf.mxu0
        %v9427 = vpop.f32.mrf.mxu0
        %v9428 = vadd.f32 0.0, %v9427
        %v9429 = vpop.f32.mrf.mxu0
        %9430 = vdwg.mxu0
        %v9431 = vadd.f32 %v8526, %v9417
        %v9432 = vadd.f32 %v8527, %v9420
        %v9433 = vadd.f32 %v8528, %v9425
        %v9434 = vadd.f32 %v8529, %v9428
        %v9435 = vld [vmem:[%s5] sm:$0xff]
        %v9436 = vld [vmem:[%s5 + $0x8] sm:$0xff]
        %v9437 = vld [vmem:[%s5 + $0x10] sm:$0xff]
        %v9438 = vld [vmem:[%s5 + $0x18] sm:$0xff]
        %9440 = vset.pattern.permute.xlu0 0
        %9441 = vperm.xlu0 %9440, %v9435
        %v9442 = vpop.permute.xlu0 %9441
        %9445 = vset.pattern.permute.xlu0 0
        %9446 = vperm.xlu0 %9445, %v9436
        %v9447 = vpop.permute.xlu0 %9446
        %9450 = vset.pattern.permute.xlu0 0
        %9451 = vperm.xlu0 %9450, %v9437
        %v9452 = vpop.permute.xlu0 %9451
        %9455 = vset.pattern.permute.xlu0 0
        %9456 = vperm.xlu0 %9455, %v9438
        %v9457 = vpop.permute.xlu0 %9456
        %v9459 = vadd.f32 %v9431, %v9442
        %v9460 = vadd.f32 %v9432, %v9447
        %v9461 = vadd.f32 %v9433, %v9452
        %v9462 = vadd.f32 %v9434, %v9457
        %9463 = vst [vmem:[%s817] sm:$0xff] %v9459
        %9464 = vst [vmem:[%s817 + $0x8] sm:$0xff] %v9460
        %9465 = vst [vmem:[%s817 + $0x10] sm:$0xff] %v9461
        %9466 = vst [vmem:[%s817 + $0x18] sm:$0xff] %v9462
        %s9467 = sand.u32 %s203, 1
        %s9468 = sand.u32 %s203, 1
        %s9469 = smul.addr %s9468, 32
        %s9470 = scalar_lea.vmem [#allocation6], %s9469
        // Predicated region
        $region159: #{cas_forward.3} parent=145 // pred_check
          %p9471 = pneg %p213
        $region160: #{cas_forward.3} parent=145 // pred_check_branch
          %9473 = sbr.rel (%p9471) target = $region162
        $region161: #{cas_forward.3} parent=145 // pred_region
          %s9474 = smul.addr %s21, 8
          %s9475 = sadd.s32 %s22, %s9474
          %s9476 = smul.addr %s9475, 8
          %s9477 = scalar_lea.vmem %s6, %s9476
          // Predicated region
          $region163: #{cas_forward.3} parent=161 // pred_check
            _
          $region164: #{cas_forward.3} parent=161 // pred_check_branch
            %9479 = sbr.rel (0) target = $region166
          $region165: #{cas_forward.3} parent=161 // pred_region
            // Predicated region
            $region167: #{cas_forward.3} parent=165 // pred_check
              _
            $region168: #{cas_forward.3} parent=165 // pred_check_branch
              %9481 = sbr.rel (0) target = $region170
            $region169: #{cas_forward.3} parent=165 // pred_region
              // Predicated region
              $region182: #{cas_forward.3} parent=169 // pred_check
                _
              $region183: #{cas_forward.3} parent=169 // pred_check_branch
                %9503 = sbr.rel (0) target = $region185
              $region184: #{cas_forward.3} parent=169 // pred_region
                loop: start=0, step=1, limit=1
                $region186: #{cas_forward.3} parent=184 // loop_pre_header
                  _
                $region187: #{cas_forward.3} parent=184 // loop_header
                  %s9505 = sphi 0, %s9509
                  %p9506 = scmp.ge.s32.totalorder %s9505, 1
                  %s9510 = sphi %s9470, %s9470
                  %s9511 = sphi %s9477, %s9477
                $region188: #{cas_forward.3} parent=184 // loop_header_branch
                  %9508 = sbr.rel (%p9506) target = $region192
                $region189: #{cas_forward.3} parent=184 // loop_body
                  %v9512 = vld [vmem:[%s9510] sm:$0xff]
                  %9513 = vst [vmem:[%s9511] sm:$0xff] %v9512
                  %v9514 = vld [vmem:[%s9510 + $0x8] sm:$0xff]
                  %9515 = vst [vmem:[%s9511 + $0x10] sm:$0xff] %v9514
                  %v9516 = vld [vmem:[%s9510 + $0x10] sm:$0xff]
                  %9517 = vst [vmem:[%s9511 + $0x20] sm:$0xff] %v9516
                  %v9518 = vld [vmem:[%s9510 + $0x18] sm:$0xff]
                  %9519 = vst [vmem:[%s9511 + $0x30] sm:$0xff] %v9518
                $region190: #{cas_forward.3} parent=184 // loop_footer
                  %s9509 = sadd.s32 1, %s9505
                $region191: #{cas_forward.3} parent=184 // loop_footer_branch
                  %9504 = sbr.rel target = $region187
                $region192: #{cas_forward.3} parent=184 // loop_exit
                  _
              $region185: #{cas_forward.3} parent=169 // pred_fallthru
                _
              // Predicated region
              $region193: #{cas_forward.3} parent=169 // pred_check
                _
              $region194: #{cas_forward.3} parent=169 // pred_check_branch
                %9521 = sbr.rel target = $region196
              $region195: #{cas_forward.3} parent=169 // pred_region
                _
              $region196: #{cas_forward.3} parent=169 // pred_fallthru
                _
            $region170: #{cas_forward.3} parent=165 // pred_fallthru
              _
            // Predicated region
            $region171: #{cas_forward.3} parent=165 // pred_check
              _
            $region172: #{cas_forward.3} parent=165 // pred_check_branch
              %9483 = sbr.rel target = $region174
            $region173: #{cas_forward.3} parent=165 // pred_region
              %s9485 = ssub.s32 256, 1
              loop: start=0, step=1, limit=1
              $region175: #{cas_forward.3} parent=173 // loop_pre_header
                _
              $region176: #{cas_forward.3} parent=173 // loop_header
                %s9487 = sphi 0, %s9491
                %p9488 = scmp.ge.s32.totalorder %s9487, 1
                %s9492 = sphi %s9470, %s9470
                %s9493 = sphi %s9477, %s9477
              $region177: #{cas_forward.3} parent=173 // loop_header_branch
                %9490 = sbr.rel (%p9488) target = $region181
              $region178: #{cas_forward.3} parent=173 // loop_body
                %v9494 = vld [vmem:[%s9492] sm:%s9485]
                %9495 = vst [vmem:[%s9493] sm:%s9485] %v9494
                %v9496 = vld [vmem:[%s9492 + $0x8] sm:%s9485]
                %9497 = vst [vmem:[%s9493 + $0x10] sm:%s9485] %v9496
                %v9498 = vld [vmem:[%s9492 + $0x10] sm:%s9485]
                %9499 = vst [vmem:[%s9493 + $0x20] sm:%s9485] %v9498
                %v9500 = vld [vmem:[%s9492 + $0x18] sm:%s9485]
                %9501 = vst [vmem:[%s9493 + $0x30] sm:%s9485] %v9500
              $region179: #{cas_forward.3} parent=173 // loop_footer
                %s9491 = sadd.s32 1, %s9487
              $region180: #{cas_forward.3} parent=173 // loop_footer_branch
                %9486 = sbr.rel target = $region176
              $region181: #{cas_forward.3} parent=173 // loop_exit
                _
            $region174: #{cas_forward.3} parent=165 // pred_fallthru
              _
          $region166: #{cas_forward.3} parent=161 // pred_fallthru
            _
          %9522 = vnop
        $region162: #{cas_forward.3} parent=145 // pred_fallthru
          _
      $region146: #{cas_forward.3} parent=5 // pred_fallthru
        _
      %p9523 = scmp.le.s32.totalorder 2, %s12
      // Predicated region
      $region197: #{cas_forward.3} parent=5 // pred_check
        %p9524 = pneg %p9523
      $region198: #{cas_forward.3} parent=5 // pred_check_branch
        %9526 = sbr.rel (%p9524) target = $region200
      $region199: #{cas_forward.3} parent=5 // pred_region
        %s9527 = ssub.s32 %s12, 2
        // Predicated region
        $region201: #{cas_forward.3} parent=199 // pred_check
          %p9528 = pneg %p219
        $region202: #{cas_forward.3} parent=199 // pred_check_branch
          %9530 = sbr.rel (%p9528) target = $region204
        $region203: #{cas_forward.3} parent=199 // pred_region
          %s9531 = sand.u32 %s204, 1
          %s9532 = sand.u32 %s204, 1
          %s9533 = smul.addr %s9532, 32
          %s9534 = scalar_lea.vmem [#allocation6], %s9533
        $region204: #{cas_forward.3} parent=199 // pred_fallthru
          _
      $region200: #{cas_forward.3} parent=5 // pred_fallthru
        _
    $region6: #{cas_forward.3} parent=1 // loop_footer
      %s16 = sadd.s32 1, %s12
    $region7: #{cas_forward.3} parent=1 // loop_footer_branch
      %11 = sbr.rel target = $region3
    $region8: #{cas_forward.3} parent=1 // loop_exit
      _

</llo_original>
